<compile_context>
chip_gen: v6e
topology: v6e:2x2x1
jax: 0.10.0
libtpu: 0.0.40
codegen_flags: <defaults>
</compile_context>

<pallas_src>
import numpy as np
import jax
import jax.numpy as jnp
from jax.experimental import pallas as pl
from jax.experimental.pallas import tpu as pltpu

EPS = 1e-5
_K = 3        # conv kernel size
_N_CONV = 5   # number of conv blocks


# --------------------------------------------------------------------------
# Constant-matrix builders (host side, one time at init).
# --------------------------------------------------------------------------

def _row_select(n, h, ho, kh):
    """A_kh[(b*ho+i), (b*h+r)] = 1 iff r == 2*i + kh - 1 (and 0 <= r < h)."""
    a = np.zeros((n * ho, n * h), np.float32)
    for b in range(n):
        for i in range(ho):
            r = 2 * i + kh - 1
            if 0 <= r < h:
                a[b * ho + i, b * h + r] = 1.0
    return a


def _col_weight(weight, w, wo, kh):
    """B_kh[(s*cin+ci), (j*cout+co)] = sum_kw [s == 2*j+kw-1] * W[co,ci,kh,kw].

    `weight` is in torch Conv2d layout (Cout, Cin, 3, 3).  Right-multiplying
    by B_kh performs, in one matmul, both the kw column selection (with zero
    padding) and the Cin -> Cout channel mixing for kernel row kh.
    """
    cout, cin, _, _ = weight.shape
    b = np.zeros((w * cin, wo * cout), np.float32)
    for kw in range(_K):
        wt = weight[:, :, kh, kw].T                      # (cin, cout)
        for j in range(wo):
            s = 2 * j + kw - 1
            if 0 <= s < w:
                b[s * cin:(s + 1) * cin, j * cout:(j + 1) * cout] += wt
    return b


def _chan_reduce(wo, c):
    """red[(j*c+cc), cc] = 1 : right-multiply to sum the Wo lane groups."""
    r = np.zeros((wo * c, c), np.float32)
    for j in range(wo):
        r[j * c:(j + 1) * c, :] += np.eye(c, dtype=np.float32)
    return r


# --------------------------------------------------------------------------
# The fused Pallas kernel.
# --------------------------------------------------------------------------

def _encoder_kernel(*refs):
    x_ref = refs[0]
    conv_refs = refs[1:1 + 5 * _N_CONV]
    se_ref, so_ref, w1_ref, gb1_ref, w2_ref, b2_ref = refs[1 + 5 * _N_CONV:-2]
    o_ref, pooled_ref = refs[-2], refs[-1]

    x = x_ref[...]                                       # (N*H, W*Cin) f32

    for l in range(_N_CONV):
        a_ref, b_ref, red_ref, bc_ref, gb_ref = conv_refs[5 * l:5 * l + 5]

        # ---- Conv2d(3x3, stride 2, pad 1):  Y = sum_kh (A_kh @ X) @ B_kh ----
        # A_kh is 0/1 (exact f32 row gather); B_kh carries the weights in
        # bf16 (MXU-native), accumulation in f32.
        y = jnp.zeros((a_ref.shape[1], b_ref.shape[2]), jnp.float32)
        for kh in range(_K):
            t = jnp.dot(a_ref[kh], x, preferred_element_type=jnp.float32)
            y = y + jnp.dot(t.astype(jnp.bfloat16), b_ref[kh],
                            preferred_element_type=jnp.float32)

        # ---- BatchNorm2d (training-mode batch stats, biased var) + ReLU ----
        # Channels repeat every Cout lanes: `red` sums the Wo lane groups,
        # `bc` broadcasts per-channel scale/shift back over the lanes.  The
        # conv bias is dropped (cancels under BN) and the BN affine is folded
        # into one scale/shift FMA.
        gb = gb_ref[...]                                 # (2, Cout): [gamma; beta]
        cout = gb.shape[1]
        rows, cols = y.shape
        count = float(rows * (cols // cout))             # N * Ho * Wo
        chan1 = jnp.dot(y, red_ref[...], preferred_element_type=jnp.float32)
        chan2 = jnp.dot(y * y, red_ref[...], preferred_element_type=jnp.float32)
        mean_c = jnp.sum(chan1, axis=0, keepdims=True) / count       # (1, Cout)
        ex2_c = jnp.sum(chan2, axis=0, keepdims=True) / count
        var_c = ex2_c - mean_c * mean_c
        scale_c = gb[0:1, :] * jax.lax.rsqrt(var_c + EPS)
        shift_c = gb[1:2, :] - mean_c * scale_c
        which = jax.lax.broadcasted_iota(jnp.int32, (2, cout), 0)
        ss = jnp.where(which == 0, scale_c, shift_c)                  # (2, Cout)
        ssf = jnp.dot(ss, bc_ref[...], preferred_element_type=jnp.float32)
        x = jnp.maximum(y * ssf[0:1, :] + ssf[1:2, :], 0.0)           # next input

    # ---- MaxPool2d(2): 2x2 spatial -> 1x1 ---------------------------------
    c5 = w1_ref.shape[0]
    ev = jnp.dot(se_ref[...], x, preferred_element_type=jnp.float32)  # rows 2n
    od = jnp.dot(so_ref[...], x, preferred_element_type=jnp.float32)  # rows 2n+1
    m = jnp.maximum(ev, od)                                           # (N, 2*C5)
    pooled = jnp.maximum(m[:, :c5], m[:, c5:])                        # (N, C5)
    pooled_ref[...] = pooled    # exposed for validation (128-byte store)

    # ---- fc1: Linear (bias cancels under BN) + BatchNorm1d + ReLU ---------
    h = jnp.dot(pooled.astype(jnp.bfloat16), w1_ref[...],
                preferred_element_type=jnp.float32)                   # (N, F1)
    mean = jnp.mean(h, axis=0, keepdims=True)
    var = jnp.mean(h * h, axis=0, keepdims=True) - mean * mean
    gb1 = gb1_ref[...]
    hn = (h - mean) * jax.lax.rsqrt(var + EPS)
    h = jnp.maximum(hn * gb1[0:1, :] + gb1[1:2, :], 0.0)

    # ---- fc2: Linear -------------------------------------------------------
    o_ref[...] = jnp.dot(h.astype(jnp.bfloat16), w2_ref[...],
                         preferred_element_type=jnp.float32) + b2_ref[...]


# --------------------------------------------------------------------------
# pallas_call wrapper.
# --------------------------------------------------------------------------

def _full_spec(shape):
    nd = len(shape)
    return pl.BlockSpec(shape, lambda i, nd=nd: (0,) * nd)


def encoder_forward(x_nchw, params):
    n, cin, h, w = x_nchw.shape
    # NCHW -> lane-dense (N*H, W*Cin) layout (one-time, tiny).
    x0 = jnp.transpose(x_nchw, (0, 2, 3, 1)).reshape(n * h, w * cin)

    ops = [x0]
    for lyr in params["conv"]:
        ops += [lyr["A"], lyr["B"], lyr["red"], lyr["bc"], lyr["gb"]]
    ops += [params["se"], params["so"], params["w1"], params["gb1"],
            params["w2"], params["b2"]]

    c5 = params["w1"].shape[0]
    n_out = params["w2"].shape[1]
    out, pooled = pl.pallas_call(
        _encoder_kernel,
        grid=(1,),
        in_specs=[_full_spec(o.shape) for o in ops],
        out_specs=(_full_spec((n, n_out)), _full_spec((n, c5))),
        out_shape=(jax.ShapeDtypeStruct((n, n_out), jnp.float32),
                   jax.ShapeDtypeStruct((n, c5), jnp.float32)),
        compiler_params=pltpu.CompilerParams(
            dimension_semantics=("arbitrary",)),
    )(*ops)
    return out, pooled


# --------------------------------------------------------------------------
# Parameter init (kernel operands + raw torch-layout weights for reference).
# --------------------------------------------------------------------------

def init_params(key, conv_dims, fc_dims, n, h, w):
    assert len(conv_dims) == 6 and len(fc_dims) == 3
    raw = {"conv": []}
    ker = {"conv": []}
    cur_h, cur_w = h, w
    for l in range(_N_CONV):
        cin, cout = conv_dims[l], conv_dims[l + 1]
        key, kw_ = jax.random.split(key)
        wconv = 0.1 * jax.random.normal(kw_, (cout, cin, 3, 3), jnp.float32)
        gamma = jnp.ones((cout,), jnp.float32)
        beta = jnp.zeros((cout,), jnp.float32)
        raw["conv"].append((wconv, gamma, beta))

        ho, wo = cur_h // 2, cur_w // 2
        wnp = np.asarray(wconv)
        a_stack = np.stack([_row_select(n, cur_h, ho, kh) for kh in range(_K)])
        b_stack = np.stack([_col_weight(wnp, cur_w, wo, kh) for kh in range(_K)])
        red = _chan_reduce(wo, cout)
        ker["conv"].append(dict(
            A=jnp.asarray(a_stack, jnp.float32),          # exact 0/1 gather
            B=jnp.asarray(b_stack, jnp.bfloat16),         # bf16 MXU operand
            red=jnp.asarray(red, jnp.float32),
            bc=jnp.asarray(red.T.copy(), jnp.float32),
            gb=jnp.stack([gamma, beta], axis=0),          # (2, Cout)
        ))
        cur_h, cur_w = ho, wo

    # MaxPool row selectors: conv5 output rows are n*cur_h + i (cur_h == 2).
    se = np.zeros((n, n * cur_h), np.float32)
    so = np.zeros((n, n * cur_h), np.float32)
    for b in range(n):
        se[b, b * cur_h + 0] = 1.0
        so[b, b * cur_h + 1] = 1.0

    assert fc_dims[0] == conv_dims[5] * (cur_h // 2) * (cur_w // 2)

    key, k1, k2, k3 = jax.random.split(key, 4)
    w1 = 0.1 * jax.random.normal(k1, (fc_dims[1], fc_dims[0]), jnp.float32)
    g1 = jnp.ones((1, fc_dims[1]), jnp.float32)
    b1 = jnp.zeros((1, fc_dims[1]), jnp.float32)
    w2 = 0.1 * jax.random.normal(k2, (fc_dims[2], fc_dims[1]), jnp.float32)
    b2 = 0.1 * jax.random.normal(k3, (1, fc_dims[2]), jnp.float32)
    raw["fc1"] = (w1, g1, b1)
    raw["fc2"] = (w2, b2)

    ker.update(
        se=jnp.asarray(se), so=jnp.asarray(so),
        w1=jnp.asarray(w1.T, jnp.bfloat16),
        gb1=jnp.concatenate([g1, b1], axis=0),            # (2, F1)
        w2=jnp.asarray(w2.T, jnp.bfloat16),
        b2=b2,
    )
    return ker, raw


# --------------------------------------------------------------------------
# Pure-JAX (XLA, f32) reference for validation.
# --------------------------------------------------------------------------

def encoder_reference(x_nchw, raw):
    # Conv2d / fc1 biases omitted: they cancel exactly under training-mode BN.
    hp = jax.lax.Precision.HIGHEST
    x = x_nchw
    for (wc, gamma, beta) in raw["conv"]:
        x = jax.lax.conv_general_dilated(
            x, wc, window_strides=(2, 2), padding=((1, 1), (1, 1)),
            dimension_numbers=("NCHW", "OIHW", "NCHW"), precision=hp)
        mean = jnp.mean(x, axis=(0, 2, 3), keepdims=True)
        var = jnp.mean((x - mean) ** 2, axis=(0, 2, 3), keepdims=True)
        g = gamma.reshape(1, -1, 1, 1)
        b = beta.reshape(1, -1, 1, 1)
        x = jnp.maximum((x - mean) * jax.lax.rsqrt(var + EPS) * g + b, 0.0)
    n, c, h, w = x.shape
    pooled = x.reshape(n, c, h // 2, 2, w // 2, 2).max(axis=(3, 5)).reshape(n, c)
    w1, g1, b1 = raw["fc1"]
    hfc = jnp.dot(pooled, w1.T, precision=hp)
    mean = jnp.mean(hfc, axis=0, keepdims=True)
    var = jnp.mean((hfc - mean) ** 2, axis=0, keepdims=True)
    hfc = jnp.maximum((hfc - mean) * jax.lax.rsqrt(var + EPS) * g1 + b1, 0.0)
    w2, b2 = raw["fc2"]
    return jnp.dot(hfc, w2.T, precision=hp) + b2, pooled


# --------------------------------------------------------------------------
# main
# --------------------------------------------------------------------------

if __name__ == "__main__":
    # 64 -> 32 -> 16 -> 8 -> 4 -> 2 (five stride-2 convs) -> 1 (MaxPool2d(2));
    # FC_dims[0] == Conv2d_dims[5] * 1 * 1.
    Conv2d_dims = [4, 8, 8, 8, 8, 16]
    FC_dims = [16, 32, 8]
    N, H, W = 2, 64, 64

    key = jax.random.PRNGKey(0)
    key, kx = jax.random.split(key)
    x = jax.random.normal(kx, (N, Conv2d_dims[0], H, W), jnp.float32)

    ker_params, raw_params = init_params(key, Conv2d_dims, FC_dims, N, H, W)

    out, pooled = jax.block_until_ready(
        jax.jit(encoder_forward)(x, ker_params))
    assert out.shape == (N, FC_dims[2]), out.shape
    assert bool(jnp.all(jnp.isfinite(out)))

    # Numerical sanity check of the fused conv stack + pool against the f32
    # XLA reference.  (The comparison point is the pooled features: the final
    # fc1 BatchNorm over a batch of 2 is ill-conditioned w.r.t. the
    # intentional bf16 MXU rounding, so the end output is only checked for
    # shape / finiteness.)
    ref_out, ref_pooled = jax.block_until_ready(encoder_reference(x, raw_params))
    assert ref_out.shape == out.shape
    err = float(jnp.max(jnp.abs(pooled - ref_pooled)))
    scale = float(jnp.max(jnp.abs(ref_pooled)))
    assert err <= 0.1 + 0.05 * scale, (err, scale)

    print("KERNEL_OK")
</pallas_src>

<mosaic_0001>
module attributes {stable_mosaic.version = 11 : i64} {
  func.func @_encoder_kernel(%arg0: i32, %arg1: memref<128x256xf32, #tpu.memory_space<vmem>>, %arg2: memref<3x64x128xf32, #tpu.memory_space<vmem>>, %arg3: memref<3x256x256xbf16, #tpu.memory_space<vmem>>, %arg4: memref<256x8xf32, #tpu.memory_space<vmem>>, %arg5: memref<8x256xf32, #tpu.memory_space<vmem>>, %arg6: memref<2x8xf32, #tpu.memory_space<vmem>>, %arg7: memref<3x32x64xf32, #tpu.memory_space<vmem>>, %arg8: memref<3x256x128xbf16, #tpu.memory_space<vmem>>, %arg9: memref<128x8xf32, #tpu.memory_space<vmem>>, %arg10: memref<8x128xf32, #tpu.memory_space<vmem>>, %arg11: memref<2x8xf32, #tpu.memory_space<vmem>>, %arg12: memref<3x16x32xf32, #tpu.memory_space<vmem>>, %arg13: memref<3x128x64xbf16, #tpu.memory_space<vmem>>, %arg14: memref<64x8xf32, #tpu.memory_space<vmem>>, %arg15: memref<8x64xf32, #tpu.memory_space<vmem>>, %arg16: memref<2x8xf32, #tpu.memory_space<vmem>>, %arg17: memref<3x8x16xf32, #tpu.memory_space<vmem>>, %arg18: memref<3x64x32xbf16, #tpu.memory_space<vmem>>, %arg19: memref<32x8xf32, #tpu.memory_space<vmem>>, %arg20: memref<8x32xf32, #tpu.memory_space<vmem>>, %arg21: memref<2x8xf32, #tpu.memory_space<vmem>>, %arg22: memref<3x4x8xf32, #tpu.memory_space<vmem>>, %arg23: memref<3x32x32xbf16, #tpu.memory_space<vmem>>, %arg24: memref<32x16xf32, #tpu.memory_space<vmem>>, %arg25: memref<16x32xf32, #tpu.memory_space<vmem>>, %arg26: memref<2x16xf32, #tpu.memory_space<vmem>>, %arg27: memref<2x4xf32, #tpu.memory_space<vmem>>, %arg28: memref<2x4xf32, #tpu.memory_space<vmem>>, %arg29: memref<16x32xbf16, #tpu.memory_space<vmem>>, %arg30: memref<2x32xf32, #tpu.memory_space<vmem>>, %arg31: memref<32x8xbf16, #tpu.memory_space<vmem>>, %arg32: memref<1x8xf32, #tpu.memory_space<vmem>>, %arg33: memref<2x8xf32, #tpu.memory_space<vmem>>, %arg34: memref<2x16xf32, #tpu.memory_space<vmem>>) attributes {dimension_semantics = [#tpu.dimension_semantics<arbitrary>], iteration_bounds = array<i64: 1>, scalar_prefetch = 0 : i64, scratch_operands = 0 : i64, tpu.core_type = #tpu.core_type<tc>, window_params = [{pipeline_mode = #tpu.pipeline_mode<synchronous>, transform_indices = @transform_0, window_bounds = array<i64: 128, 256>}, {pipeline_mode = #tpu.pipeline_mode<synchronous>, transform_indices = @transform_1, window_bounds = array<i64: 3, 64, 128>}, {pipeline_mode = #tpu.pipeline_mode<synchronous>, transform_indices = @transform_2, window_bounds = array<i64: 3, 256, 256>}, {pipeline_mode = #tpu.pipeline_mode<synchronous>, transform_indices = @transform_3, window_bounds = array<i64: 256, 8>}, {pipeline_mode = #tpu.pipeline_mode<synchronous>, transform_indices = @transform_4, window_bounds = array<i64: 8, 256>}, {pipeline_mode = #tpu.pipeline_mode<synchronous>, transform_indices = @transform_5, window_bounds = array<i64: 2, 8>}, {pipeline_mode = #tpu.pipeline_mode<synchronous>, transform_indices = @transform_6, window_bounds = array<i64: 3, 32, 64>}, {pipeline_mode = #tpu.pipeline_mode<synchronous>, transform_indices = @transform_7, window_bounds = array<i64: 3, 256, 128>}, {pipeline_mode = #tpu.pipeline_mode<synchronous>, transform_indices = @transform_8, window_bounds = array<i64: 128, 8>}, {pipeline_mode = #tpu.pipeline_mode<synchronous>, transform_indices = @transform_9, window_bounds = array<i64: 8, 128>}, {pipeline_mode = #tpu.pipeline_mode<synchronous>, transform_indices = @transform_10, window_bounds = array<i64: 2, 8>}, {pipeline_mode = #tpu.pipeline_mode<synchronous>, transform_indices = @transform_11, window_bounds = array<i64: 3, 16, 32>}, {pipeline_mode = #tpu.pipeline_mode<synchronous>, transform_indices = @transform_12, window_bounds = array<i64: 3, 128, 64>}, {pipeline_mode = #tpu.pipeline_mode<synchronous>, transform_indices = @transform_13, window_bounds = array<i64: 64, 8>}, {pipeline_mode = #tpu.pipeline_mode<synchronous>, transform_indices = @transform_14, window_bounds = array<i64: 8, 64>}, {pipeline_mode = #tpu.pipeline_mode<synchronous>, transform_indices = @transform_15, window_bounds = array<i64: 2, 8>}, {pipeline_mode = #tpu.pipeline_mode<synchronous>, transform_indices = @transform_16, window_bounds = array<i64: 3, 8, 16>}, {pipeline_mode = #tpu.pipeline_mode<synchronous>, transform_indices = @transform_17, window_bounds = array<i64: 3, 64, 32>}, {pipeline_mode = #tpu.pipeline_mode<synchronous>, transform_indices = @transform_18, window_bounds = array<i64: 32, 8>}, {pipeline_mode = #tpu.pipeline_mode<synchronous>, transform_indices = @transform_19, window_bounds = array<i64: 8, 32>}, {pipeline_mode = #tpu.pipeline_mode<synchronous>, transform_indices = @transform_20, window_bounds = array<i64: 2, 8>}, {pipeline_mode = #tpu.pipeline_mode<synchronous>, transform_indices = @transform_21, window_bounds = array<i64: 3, 4, 8>}, {pipeline_mode = #tpu.pipeline_mode<synchronous>, transform_indices = @transform_22, window_bounds = array<i64: 3, 32, 32>}, {pipeline_mode = #tpu.pipeline_mode<synchronous>, transform_indices = @transform_23, window_bounds = array<i64: 32, 16>}, {pipeline_mode = #tpu.pipeline_mode<synchronous>, transform_indices = @transform_24, window_bounds = array<i64: 16, 32>}, {pipeline_mode = #tpu.pipeline_mode<synchronous>, transform_indices = @transform_25, window_bounds = array<i64: 2, 16>}, {pipeline_mode = #tpu.pipeline_mode<synchronous>, transform_indices = @transform_26, window_bounds = array<i64: 2, 4>}, {pipeline_mode = #tpu.pipeline_mode<synchronous>, transform_indices = @transform_27, window_bounds = array<i64: 2, 4>}, {pipeline_mode = #tpu.pipeline_mode<synchronous>, transform_indices = @transform_28, window_bounds = array<i64: 16, 32>}, {pipeline_mode = #tpu.pipeline_mode<synchronous>, transform_indices = @transform_29, window_bounds = array<i64: 2, 32>}, {pipeline_mode = #tpu.pipeline_mode<synchronous>, transform_indices = @transform_30, window_bounds = array<i64: 32, 8>}, {pipeline_mode = #tpu.pipeline_mode<synchronous>, transform_indices = @transform_31, window_bounds = array<i64: 1, 8>}, {pipeline_mode = #tpu.pipeline_mode<synchronous>, transform_indices = @transform_32, window_bounds = array<i64: 2, 8>}, {pipeline_mode = #tpu.pipeline_mode<synchronous>, transform_indices = @transform_33, window_bounds = array<i64: 2, 16>}]} {
    %c0 = arith.constant 0 : index
    %c0_0 = arith.constant 0 : index
    %0 = vector.load %arg1[%c0, %c0_0] : memref<128x256xf32, #tpu.memory_space<vmem>>, vector<128x256xf32>
    %cst = arith.constant 0.000000e+00 : f32
    %1 = vector.broadcast %cst : f32 to vector<64x256xf32>
    %c0_1 = arith.constant 0 : index
    %c0_2 = arith.constant 0 : index
    %c0_3 = arith.constant 0 : index
    %2 = vector.load %arg2[%c0_1, %c0_2, %c0_3] : memref<3x64x128xf32, #tpu.memory_space<vmem>>, vector<1x64x128xf32>
    %3 = vector.shape_cast %2 : vector<1x64x128xf32> to vector<64x128xf32>
    %cst_4 = arith.constant dense<0.000000e+00> : vector<64x256xf32>
    %4 = tpu.matmul %3, %0, %cst_4 {dimension_numbers = #tpu.dot_dimension_numbers<[1], [0], [0], [1], [0, 0, 1, 1], [], []>} : vector<64x128xf32>, vector<128x256xf32>, vector<64x256xf32> -> vector<64x256xf32>
    %5 = arith.truncf %4 : vector<64x256xf32> to vector<64x256xbf16>
    %c0_5 = arith.constant 0 : index
    %c0_6 = arith.constant 0 : index
    %c0_7 = arith.constant 0 : index
    %6 = vector.load %arg3[%c0_5, %c0_6, %c0_7] : memref<3x256x256xbf16, #tpu.memory_space<vmem>>, vector<1x256x256xbf16>
    %7 = vector.shape_cast %6 : vector<1x256x256xbf16> to vector<256x256xbf16>
    %cst_8 = arith.constant dense<0.000000e+00> : vector<64x256xf32>
    %8 = tpu.matmul %5, %7, %cst_8 {dimension_numbers = #tpu.dot_dimension_numbers<[1], [0], [0], [1], [0, 0, 1, 1], [], []>} : vector<64x256xbf16>, vector<256x256xbf16>, vector<64x256xf32> -> vector<64x256xf32>
    %9 = arith.addf %1, %8 : vector<64x256xf32>
    %c1 = arith.constant 1 : index
    %c0_9 = arith.constant 0 : index
    %c0_10 = arith.constant 0 : index
    %10 = vector.load %arg2[%c1, %c0_9, %c0_10] : memref<3x64x128xf32, #tpu.memory_space<vmem>>, vector<1x64x128xf32>
    %11 = vector.shape_cast %10 : vector<1x64x128xf32> to vector<64x128xf32>
    %cst_11 = arith.constant dense<0.000000e+00> : vector<64x256xf32>
    %12 = tpu.matmul %11, %0, %cst_11 {dimension_numbers = #tpu.dot_dimension_numbers<[1], [0], [0], [1], [0, 0, 1, 1], [], []>} : vector<64x128xf32>, vector<128x256xf32>, vector<64x256xf32> -> vector<64x256xf32>
    %13 = arith.truncf %12 : vector<64x256xf32> to vector<64x256xbf16>
    %c1_12 = arith.constant 1 : index
    %c0_13 = arith.constant 0 : index
    %c0_14 = arith.constant 0 : index
    %14 = vector.load %arg3[%c1_12, %c0_13, %c0_14] : memref<3x256x256xbf16, #tpu.memory_space<vmem>>, vector<1x256x256xbf16>
    %15 = vector.shape_cast %14 : vector<1x256x256xbf16> to vector<256x256xbf16>
    %cst_15 = arith.constant dense<0.000000e+00> : vector<64x256xf32>
    %16 = tpu.matmul %13, %15, %cst_15 {dimension_numbers = #tpu.dot_dimension_numbers<[1], [0], [0], [1], [0, 0, 1, 1], [], []>} : vector<64x256xbf16>, vector<256x256xbf16>, vector<64x256xf32> -> vector<64x256xf32>
    %17 = arith.addf %9, %16 : vector<64x256xf32>
    %c2 = arith.constant 2 : index
    %c0_16 = arith.constant 0 : index
    %c0_17 = arith.constant 0 : index
    %18 = vector.load %arg2[%c2, %c0_16, %c0_17] : memref<3x64x128xf32, #tpu.memory_space<vmem>>, vector<1x64x128xf32>
    %19 = vector.shape_cast %18 : vector<1x64x128xf32> to vector<64x128xf32>
    %cst_18 = arith.constant dense<0.000000e+00> : vector<64x256xf32>
    %20 = tpu.matmul %19, %0, %cst_18 {dimension_numbers = #tpu.dot_dimension_numbers<[1], [0], [0], [1], [0, 0, 1, 1], [], []>} : vector<64x128xf32>, vector<128x256xf32>, vector<64x256xf32> -> vector<64x256xf32>
    %21 = arith.truncf %20 : vector<64x256xf32> to vector<64x256xbf16>
    %c2_19 = arith.constant 2 : index
    %c0_20 = arith.constant 0 : index
    %c0_21 = arith.constant 0 : index
    %22 = vector.load %arg3[%c2_19, %c0_20, %c0_21] : memref<3x256x256xbf16, #tpu.memory_space<vmem>>, vector<1x256x256xbf16>
    %23 = vector.shape_cast %22 : vector<1x256x256xbf16> to vector<256x256xbf16>
    %cst_22 = arith.constant dense<0.000000e+00> : vector<64x256xf32>
    %24 = tpu.matmul %21, %23, %cst_22 {dimension_numbers = #tpu.dot_dimension_numbers<[1], [0], [0], [1], [0, 0, 1, 1], [], []>} : vector<64x256xbf16>, vector<256x256xbf16>, vector<64x256xf32> -> vector<64x256xf32>
    %25 = arith.addf %17, %24 : vector<64x256xf32>
    %c0_23 = arith.constant 0 : index
    %c0_24 = arith.constant 0 : index
    %26 = vector.load %arg6[%c0_23, %c0_24] : memref<2x8xf32, #tpu.memory_space<vmem>>, vector<2x8xf32>
    %c0_25 = arith.constant 0 : index
    %c0_26 = arith.constant 0 : index
    %27 = vector.load %arg4[%c0_25, %c0_26] : memref<256x8xf32, #tpu.memory_space<vmem>>, vector<256x8xf32>
    %cst_27 = arith.constant dense<0.000000e+00> : vector<64x8xf32>
    %28 = tpu.matmul %25, %27, %cst_27 {dimension_numbers = #tpu.dot_dimension_numbers<[1], [0], [0], [1], [0, 0, 1, 1], [], []>} : vector<64x256xf32>, vector<256x8xf32>, vector<64x8xf32> -> vector<64x8xf32>
    %29 = arith.mulf %25, %25 : vector<64x256xf32>
    %c0_28 = arith.constant 0 : index
    %c0_29 = arith.constant 0 : index
    %30 = vector.load %arg4[%c0_28, %c0_29] : memref<256x8xf32, #tpu.memory_space<vmem>>, vector<256x8xf32>
    %cst_30 = arith.constant dense<0.000000e+00> : vector<64x8xf32>
    %31 = tpu.matmul %29, %30, %cst_30 {dimension_numbers = #tpu.dot_dimension_numbers<[1], [0], [0], [1], [0, 0, 1, 1], [], []>} : vector<64x256xf32>, vector<256x8xf32>, vector<64x8xf32> -> vector<64x8xf32>
    %cst_31 = arith.constant dense<0.000000e+00> : vector<8xf32>
    %32 = vector.multi_reduction <add>, %28, %cst_31 [0] : vector<64x8xf32> to vector<8xf32>
    %33 = vector.shape_cast %32 : vector<8xf32> to vector<1x8xf32>
    %cst_32 = arith.constant 2.048000e+03 : f32
    %34 = vector.broadcast %cst_32 : f32 to vector<1x8xf32>
    %35 = arith.divf %33, %34 : vector<1x8xf32>
    %cst_33 = arith.constant dense<0.000000e+00> : vector<8xf32>
    %36 = vector.multi_reduction <add>, %31, %cst_33 [0] : vector<64x8xf32> to vector<8xf32>
    %37 = vector.shape_cast %36 : vector<8xf32> to vector<1x8xf32>
    %cst_34 = arith.constant 2.048000e+03 : f32
    %38 = vector.broadcast %cst_34 : f32 to vector<1x8xf32>
    %39 = arith.divf %37, %38 : vector<1x8xf32>
    %40 = arith.mulf %35, %35 : vector<1x8xf32>
    %41 = arith.subf %39, %40 : vector<1x8xf32>
    %42 = vector.extract_strided_slice %26 {offsets = [0, 0], sizes = [1, 8], strides = [1, 1]} : vector<2x8xf32> to vector<1x8xf32>
    %cst_35 = arith.constant 9.99999974E-6 : f32
    %43 = vector.broadcast %cst_35 : f32 to vector<1x8xf32>
    %44 = arith.addf %41, %43 : vector<1x8xf32>
    %45 = math.rsqrt %44 : vector<1x8xf32>
    %46 = arith.mulf %42, %45 : vector<1x8xf32>
    %47 = vector.extract_strided_slice %26 {offsets = [1, 0], sizes = [1, 8], strides = [1, 1]} : vector<2x8xf32> to vector<1x8xf32>
    %48 = arith.mulf %35, %46 : vector<1x8xf32>
    %49 = arith.subf %47, %48 : vector<1x8xf32>
    %50 = tpu.iota {dimensions = array<i32: 0>} : vector<2x8xi32>
    %c0_i32 = arith.constant 0 : i32
    %51 = vector.broadcast %c0_i32 : i32 to vector<2x8xi32>
    %52 = arith.cmpi eq, %50, %51 : vector<2x8xi32>
    %53 = vector.shape_cast %46 : vector<1x8xf32> to vector<1x8xf32>
    %54 = vector.broadcast %53 : vector<1x8xf32> to vector<2x8xf32>
    %55 = vector.shape_cast %49 : vector<1x8xf32> to vector<1x8xf32>
    %56 = vector.broadcast %55 : vector<1x8xf32> to vector<2x8xf32>
    %57 = arith.select %52, %54, %56 : vector<2x8xi1>, vector<2x8xf32>
    %c0_36 = arith.constant 0 : index
    %c0_37 = arith.constant 0 : index
    %58 = vector.load %arg5[%c0_36, %c0_37] : memref<8x256xf32, #tpu.memory_space<vmem>>, vector<8x256xf32>
    %cst_38 = arith.constant dense<0.000000e+00> : vector<2x256xf32>
    %59 = tpu.matmul %57, %58, %cst_38 {dimension_numbers = #tpu.dot_dimension_numbers<[1], [0], [0], [1], [0, 0, 1, 1], [], []>} : vector<2x8xf32>, vector<8x256xf32>, vector<2x256xf32> -> vector<2x256xf32>
    %60 = vector.extract_strided_slice %59 {offsets = [0, 0], sizes = [1, 256], strides = [1, 1]} : vector<2x256xf32> to vector<1x256xf32>
    %61 = vector.broadcast %60 : vector<1x256xf32> to vector<64x256xf32>
    %62 = arith.mulf %25, %61 : vector<64x256xf32>
    %63 = vector.extract_strided_slice %59 {offsets = [1, 0], sizes = [1, 256], strides = [1, 1]} : vector<2x256xf32> to vector<1x256xf32>
    %64 = vector.broadcast %63 : vector<1x256xf32> to vector<64x256xf32>
    %65 = arith.addf %62, %64 : vector<64x256xf32>
    %cst_39 = arith.constant 0.000000e+00 : f32
    %66 = vector.broadcast %cst_39 : f32 to vector<64x256xf32>
    %67 = arith.maximumf %65, %66 : vector<64x256xf32>
    %cst_40 = arith.constant 0.000000e+00 : f32
    %68 = vector.broadcast %cst_40 : f32 to vector<32x128xf32>
    %c0_41 = arith.constant 0 : index
    %c0_42 = arith.constant 0 : index
    %c0_43 = arith.constant 0 : index
    %69 = vector.load %arg7[%c0_41, %c0_42, %c0_43] : memref<3x32x64xf32, #tpu.memory_space<vmem>>, vector<1x32x64xf32>
    %70 = vector.shape_cast %69 : vector<1x32x64xf32> to vector<32x64xf32>
    %cst_44 = arith.constant dense<0.000000e+00> : vector<32x256xf32>
    %71 = tpu.matmul %70, %67, %cst_44 {dimension_numbers = #tpu.dot_dimension_numbers<[1], [0], [0], [1], [0, 0, 1, 1], [], []>} : vector<32x64xf32>, vector<64x256xf32>, vector<32x256xf32> -> vector<32x256xf32>
    %72 = arith.truncf %71 : vector<32x256xf32> to vector<32x256xbf16>
    %c0_45 = arith.constant 0 : index
    %c0_46 = arith.constant 0 : index
    %c0_47 = arith.constant 0 : index
    %73 = vector.load %arg8[%c0_45, %c0_46, %c0_47] : memref<3x256x128xbf16, #tpu.memory_space<vmem>>, vector<1x256x128xbf16>
    %74 = vector.shape_cast %73 : vector<1x256x128xbf16> to vector<256x128xbf16>
    %cst_48 = arith.constant dense<0.000000e+00> : vector<32x128xf32>
    %75 = tpu.matmul %72, %74, %cst_48 {dimension_numbers = #tpu.dot_dimension_numbers<[1], [0], [0], [1], [0, 0, 1, 1], [], []>} : vector<32x256xbf16>, vector<256x128xbf16>, vector<32x128xf32> -> vector<32x128xf32>
    %76 = arith.addf %68, %75 : vector<32x128xf32>
    %c1_49 = arith.constant 1 : index
    %c0_50 = arith.constant 0 : index
    %c0_51 = arith.constant 0 : index
    %77 = vector.load %arg7[%c1_49, %c0_50, %c0_51] : memref<3x32x64xf32, #tpu.memory_space<vmem>>, vector<1x32x64xf32>
    %78 = vector.shape_cast %77 : vector<1x32x64xf32> to vector<32x64xf32>
    %cst_52 = arith.constant dense<0.000000e+00> : vector<32x256xf32>
    %79 = tpu.matmul %78, %67, %cst_52 {dimension_numbers = #tpu.dot_dimension_numbers<[1], [0], [0], [1], [0, 0, 1, 1], [], []>} : vector<32x64xf32>, vector<64x256xf32>, vector<32x256xf32> -> vector<32x256xf32>
    %80 = arith.truncf %79 : vector<32x256xf32> to vector<32x256xbf16>
    %c1_53 = arith.constant 1 : index
    %c0_54 = arith.constant 0 : index
    %c0_55 = arith.constant 0 : index
    %81 = vector.load %arg8[%c1_53, %c0_54, %c0_55] : memref<3x256x128xbf16, #tpu.memory_space<vmem>>, vector<1x256x128xbf16>
    %82 = vector.shape_cast %81 : vector<1x256x128xbf16> to vector<256x128xbf16>
    %cst_56 = arith.constant dense<0.000000e+00> : vector<32x128xf32>
    %83 = tpu.matmul %80, %82, %cst_56 {dimension_numbers = #tpu.dot_dimension_numbers<[1], [0], [0], [1], [0, 0, 1, 1], [], []>} : vector<32x256xbf16>, vector<256x128xbf16>, vector<32x128xf32> -> vector<32x128xf32>
    %84 = arith.addf %76, %83 : vector<32x128xf32>
    %c2_57 = arith.constant 2 : index
    %c0_58 = arith.constant 0 : index
    %c0_59 = arith.constant 0 : index
    %85 = vector.load %arg7[%c2_57, %c0_58, %c0_59] : memref<3x32x64xf32, #tpu.memory_space<vmem>>, vector<1x32x64xf32>
    %86 = vector.shape_cast %85 : vector<1x32x64xf32> to vector<32x64xf32>
    %cst_60 = arith.constant dense<0.000000e+00> : vector<32x256xf32>
    %87 = tpu.matmul %86, %67, %cst_60 {dimension_numbers = #tpu.dot_dimension_numbers<[1], [0], [0], [1], [0, 0, 1, 1], [], []>} : vector<32x64xf32>, vector<64x256xf32>, vector<32x256xf32> -> vector<32x256xf32>
    %88 = arith.truncf %87 : vector<32x256xf32> to vector<32x256xbf16>
    %c2_61 = arith.constant 2 : index
    %c0_62 = arith.constant 0 : index
    %c0_63 = arith.constant 0 : index
    %89 = vector.load %arg8[%c2_61, %c0_62, %c0_63] : memref<3x256x128xbf16, #tpu.memory_space<vmem>>, vector<1x256x128xbf16>
    %90 = vector.shape_cast %89 : vector<1x256x128xbf16> to vector<256x128xbf16>
    %cst_64 = arith.constant dense<0.000000e+00> : vector<32x128xf32>
    %91 = tpu.matmul %88, %90, %cst_64 {dimension_numbers = #tpu.dot_dimension_numbers<[1], [0], [0], [1], [0, 0, 1, 1], [], []>} : vector<32x256xbf16>, vector<256x128xbf16>, vector<32x128xf32> -> vector<32x128xf32>
    %92 = arith.addf %84, %91 : vector<32x128xf32>
    %c0_65 = arith.constant 0 : index
    %c0_66 = arith.constant 0 : index
    %93 = vector.load %arg11[%c0_65, %c0_66] : memref<2x8xf32, #tpu.memory_space<vmem>>, vector<2x8xf32>
    %c0_67 = arith.constant 0 : index
    %c0_68 = arith.constant 0 : index
    %94 = vector.load %arg9[%c0_67, %c0_68] : memref<128x8xf32, #tpu.memory_space<vmem>>, vector<128x8xf32>
    %cst_69 = arith.constant dense<0.000000e+00> : vector<32x8xf32>
    %95 = tpu.matmul %92, %94, %cst_69 {dimension_numbers = #tpu.dot_dimension_numbers<[1], [0], [0], [1], [0, 0, 1, 1], [], []>} : vector<32x128xf32>, vector<128x8xf32>, vector<32x8xf32> -> vector<32x8xf32>
    %96 = arith.mulf %92, %92 : vector<32x128xf32>
    %c0_70 = arith.constant 0 : index
    %c0_71 = arith.constant 0 : index
    %97 = vector.load %arg9[%c0_70, %c0_71] : memref<128x8xf32, #tpu.memory_space<vmem>>, vector<128x8xf32>
    %cst_72 = arith.constant dense<0.000000e+00> : vector<32x8xf32>
    %98 = tpu.matmul %96, %97, %cst_72 {dimension_numbers = #tpu.dot_dimension_numbers<[1], [0], [0], [1], [0, 0, 1, 1], [], []>} : vector<32x128xf32>, vector<128x8xf32>, vector<32x8xf32> -> vector<32x8xf32>
    %cst_73 = arith.constant dense<0.000000e+00> : vector<8xf32>
    %99 = vector.multi_reduction <add>, %95, %cst_73 [0] : vector<32x8xf32> to vector<8xf32>
    %100 = vector.shape_cast %99 : vector<8xf32> to vector<1x8xf32>
    %cst_74 = arith.constant 5.120000e+02 : f32
    %101 = vector.broadcast %cst_74 : f32 to vector<1x8xf32>
    %102 = arith.divf %100, %101 : vector<1x8xf32>
    %cst_75 = arith.constant dense<0.000000e+00> : vector<8xf32>
    %103 = vector.multi_reduction <add>, %98, %cst_75 [0] : vector<32x8xf32> to vector<8xf32>
    %104 = vector.shape_cast %103 : vector<8xf32> to vector<1x8xf32>
    %cst_76 = arith.constant 5.120000e+02 : f32
    %105 = vector.broadcast %cst_76 : f32 to vector<1x8xf32>
    %106 = arith.divf %104, %105 : vector<1x8xf32>
    %107 = arith.mulf %102, %102 : vector<1x8xf32>
    %108 = arith.subf %106, %107 : vector<1x8xf32>
    %109 = vector.extract_strided_slice %93 {offsets = [0, 0], sizes = [1, 8], strides = [1, 1]} : vector<2x8xf32> to vector<1x8xf32>
    %cst_77 = arith.constant 9.99999974E-6 : f32
    %110 = vector.broadcast %cst_77 : f32 to vector<1x8xf32>
    %111 = arith.addf %108, %110 : vector<1x8xf32>
    %112 = math.rsqrt %111 : vector<1x8xf32>
    %113 = arith.mulf %109, %112 : vector<1x8xf32>
    %114 = vector.extract_strided_slice %93 {offsets = [1, 0], sizes = [1, 8], strides = [1, 1]} : vector<2x8xf32> to vector<1x8xf32>
    %115 = arith.mulf %102, %113 : vector<1x8xf32>
    %116 = arith.subf %114, %115 : vector<1x8xf32>
    %117 = tpu.iota {dimensions = array<i32: 0>} : vector<2x8xi32>
    %c0_i32_78 = arith.constant 0 : i32
    %118 = vector.broadcast %c0_i32_78 : i32 to vector<2x8xi32>
    %119 = arith.cmpi eq, %117, %118 : vector<2x8xi32>
    %120 = vector.shape_cast %113 : vector<1x8xf32> to vector<1x8xf32>
    %121 = vector.broadcast %120 : vector<1x8xf32> to vector<2x8xf32>
    %122 = vector.shape_cast %116 : vector<1x8xf32> to vector<1x8xf32>
    %123 = vector.broadcast %122 : vector<1x8xf32> to vector<2x8xf32>
    %124 = arith.select %119, %121, %123 : vector<2x8xi1>, vector<2x8xf32>
    %c0_79 = arith.constant 0 : index
    %c0_80 = arith.constant 0 : index
    %125 = vector.load %arg10[%c0_79, %c0_80] : memref<8x128xf32, #tpu.memory_space<vmem>>, vector<8x128xf32>
    %cst_81 = arith.constant dense<0.000000e+00> : vector<2x128xf32>
    %126 = tpu.matmul %124, %125, %cst_81 {dimension_numbers = #tpu.dot_dimension_numbers<[1], [0], [0], [1], [0, 0, 1, 1], [], []>} : vector<2x8xf32>, vector<8x128xf32>, vector<2x128xf32> -> vector<2x128xf32>
    %127 = vector.extract_strided_slice %126 {offsets = [0, 0], sizes = [1, 128], strides = [1, 1]} : vector<2x128xf32> to vector<1x128xf32>
    %128 = vector.broadcast %127 : vector<1x128xf32> to vector<32x128xf32>
    %129 = arith.mulf %92, %128 : vector<32x128xf32>
    %130 = vector.extract_strided_slice %126 {offsets = [1, 0], sizes = [1, 128], strides = [1, 1]} : vector<2x128xf32> to vector<1x128xf32>
    %131 = vector.broadcast %130 : vector<1x128xf32> to vector<32x128xf32>
    %132 = arith.addf %129, %131 : vector<32x128xf32>
    %cst_82 = arith.constant 0.000000e+00 : f32
    %133 = vector.broadcast %cst_82 : f32 to vector<32x128xf32>
    %134 = arith.maximumf %132, %133 : vector<32x128xf32>
    %cst_83 = arith.constant 0.000000e+00 : f32
    %135 = vector.broadcast %cst_83 : f32 to vector<16x64xf32>
    %c0_84 = arith.constant 0 : index
    %c0_85 = arith.constant 0 : index
    %c0_86 = arith.constant 0 : index
    %136 = vector.load %arg12[%c0_84, %c0_85, %c0_86] : memref<3x16x32xf32, #tpu.memory_space<vmem>>, vector<1x16x32xf32>
    %137 = vector.shape_cast %136 : vector<1x16x32xf32> to vector<16x32xf32>
    %cst_87 = arith.constant dense<0.000000e+00> : vector<16x128xf32>
    %138 = tpu.matmul %137, %134, %cst_87 {dimension_numbers = #tpu.dot_dimension_numbers<[1], [0], [0], [1], [0, 0, 1, 1], [], []>} : vector<16x32xf32>, vector<32x128xf32>, vector<16x128xf32> -> vector<16x128xf32>
    %139 = arith.truncf %138 : vector<16x128xf32> to vector<16x128xbf16>
    %c0_88 = arith.constant 0 : index
    %c0_89 = arith.constant 0 : index
    %c0_90 = arith.constant 0 : index
    %140 = vector.load %arg13[%c0_88, %c0_89, %c0_90] : memref<3x128x64xbf16, #tpu.memory_space<vmem>>, vector<1x128x64xbf16>
    %141 = vector.shape_cast %140 : vector<1x128x64xbf16> to vector<128x64xbf16>
    %cst_91 = arith.constant dense<0.000000e+00> : vector<16x64xf32>
    %142 = tpu.matmul %139, %141, %cst_91 {dimension_numbers = #tpu.dot_dimension_numbers<[1], [0], [0], [1], [0, 0, 1, 1], [], []>} : vector<16x128xbf16>, vector<128x64xbf16>, vector<16x64xf32> -> vector<16x64xf32>
    %143 = arith.addf %135, %142 : vector<16x64xf32>
    %c1_92 = arith.constant 1 : index
    %c0_93 = arith.constant 0 : index
    %c0_94 = arith.constant 0 : index
    %144 = vector.load %arg12[%c1_92, %c0_93, %c0_94] : memref<3x16x32xf32, #tpu.memory_space<vmem>>, vector<1x16x32xf32>
    %145 = vector.shape_cast %144 : vector<1x16x32xf32> to vector<16x32xf32>
    %cst_95 = arith.constant dense<0.000000e+00> : vector<16x128xf32>
    %146 = tpu.matmul %145, %134, %cst_95 {dimension_numbers = #tpu.dot_dimension_numbers<[1], [0], [0], [1], [0, 0, 1, 1], [], []>} : vector<16x32xf32>, vector<32x128xf32>, vector<16x128xf32> -> vector<16x128xf32>
    %147 = arith.truncf %146 : vector<16x128xf32> to vector<16x128xbf16>
    %c1_96 = arith.constant 1 : index
    %c0_97 = arith.constant 0 : index
    %c0_98 = arith.constant 0 : index
    %148 = vector.load %arg13[%c1_96, %c0_97, %c0_98] : memref<3x128x64xbf16, #tpu.memory_space<vmem>>, vector<1x128x64xbf16>
    %149 = vector.shape_cast %148 : vector<1x128x64xbf16> to vector<128x64xbf16>
    %cst_99 = arith.constant dense<0.000000e+00> : vector<16x64xf32>
    %150 = tpu.matmul %147, %149, %cst_99 {dimension_numbers = #tpu.dot_dimension_numbers<[1], [0], [0], [1], [0, 0, 1, 1], [], []>} : vector<16x128xbf16>, vector<128x64xbf16>, vector<16x64xf32> -> vector<16x64xf32>
    %151 = arith.addf %143, %150 : vector<16x64xf32>
    %c2_100 = arith.constant 2 : index
    %c0_101 = arith.constant 0 : index
    %c0_102 = arith.constant 0 : index
    %152 = vector.load %arg12[%c2_100, %c0_101, %c0_102] : memref<3x16x32xf32, #tpu.memory_space<vmem>>, vector<1x16x32xf32>
    %153 = vector.shape_cast %152 : vector<1x16x32xf32> to vector<16x32xf32>
    %cst_103 = arith.constant dense<0.000000e+00> : vector<16x128xf32>
    %154 = tpu.matmul %153, %134, %cst_103 {dimension_numbers = #tpu.dot_dimension_numbers<[1], [0], [0], [1], [0, 0, 1, 1], [], []>} : vector<16x32xf32>, vector<32x128xf32>, vector<16x128xf32> -> vector<16x128xf32>
    %155 = arith.truncf %154 : vector<16x128xf32> to vector<16x128xbf16>
    %c2_104 = arith.constant 2 : index
    %c0_105 = arith.constant 0 : index
    %c0_106 = arith.constant 0 : index
    %156 = vector.load %arg13[%c2_104, %c0_105, %c0_106] : memref<3x128x64xbf16, #tpu.memory_space<vmem>>, vector<1x128x64xbf16>
    %157 = vector.shape_cast %156 : vector<1x128x64xbf16> to vector<128x64xbf16>
    %cst_107 = arith.constant dense<0.000000e+00> : vector<16x64xf32>
    %158 = tpu.matmul %155, %157, %cst_107 {dimension_numbers = #tpu.dot_dimension_numbers<[1], [0], [0], [1], [0, 0, 1, 1], [], []>} : vector<16x128xbf16>, vector<128x64xbf16>, vector<16x64xf32> -> vector<16x64xf32>
    %159 = arith.addf %151, %158 : vector<16x64xf32>
    %c0_108 = arith.constant 0 : index
    %c0_109 = arith.constant 0 : index
    %160 = vector.load %arg16[%c0_108, %c0_109] : memref<2x8xf32, #tpu.memory_space<vmem>>, vector<2x8xf32>
    %c0_110 = arith.constant 0 : index
    %c0_111 = arith.constant 0 : index
    %161 = vector.load %arg14[%c0_110, %c0_111] : memref<64x8xf32, #tpu.memory_space<vmem>>, vector<64x8xf32>
    %cst_112 = arith.constant dense<0.000000e+00> : vector<16x8xf32>
    %162 = tpu.matmul %159, %161, %cst_112 {dimension_numbers = #tpu.dot_dimension_numbers<[1], [0], [0], [1], [0, 0, 1, 1], [], []>} : vector<16x64xf32>, vector<64x8xf32>, vector<16x8xf32> -> vector<16x8xf32>
    %163 = arith.mulf %159, %159 : vector<16x64xf32>
    %c0_113 = arith.constant 0 : index
    %c0_114 = arith.constant 0 : index
    %164 = vector.load %arg14[%c0_113, %c0_114] : memref<64x8xf32, #tpu.memory_space<vmem>>, vector<64x8xf32>
    %cst_115 = arith.constant dense<0.000000e+00> : vector<16x8xf32>
    %165 = tpu.matmul %163, %164, %cst_115 {dimension_numbers = #tpu.dot_dimension_numbers<[1], [0], [0], [1], [0, 0, 1, 1], [], []>} : vector<16x64xf32>, vector<64x8xf32>, vector<16x8xf32> -> vector<16x8xf32>
    %cst_116 = arith.constant dense<0.000000e+00> : vector<8xf32>
    %166 = vector.multi_reduction <add>, %162, %cst_116 [0] : vector<16x8xf32> to vector<8xf32>
    %167 = vector.shape_cast %166 : vector<8xf32> to vector<1x8xf32>
    %cst_117 = arith.constant 1.280000e+02 : f32
    %168 = vector.broadcast %cst_117 : f32 to vector<1x8xf32>
    %169 = arith.divf %167, %168 : vector<1x8xf32>
    %cst_118 = arith.constant dense<0.000000e+00> : vector<8xf32>
    %170 = vector.multi_reduction <add>, %165, %cst_118 [0] : vector<16x8xf32> to vector<8xf32>
    %171 = vector.shape_cast %170 : vector<8xf32> to vector<1x8xf32>
    %cst_119 = arith.constant 1.280000e+02 : f32
    %172 = vector.broadcast %cst_119 : f32 to vector<1x8xf32>
    %173 = arith.divf %171, %172 : vector<1x8xf32>
    %174 = arith.mulf %169, %169 : vector<1x8xf32>
    %175 = arith.subf %173, %174 : vector<1x8xf32>
    %176 = vector.extract_strided_slice %160 {offsets = [0, 0], sizes = [1, 8], strides = [1, 1]} : vector<2x8xf32> to vector<1x8xf32>
    %cst_120 = arith.constant 9.99999974E-6 : f32
    %177 = vector.broadcast %cst_120 : f32 to vector<1x8xf32>
    %178 = arith.addf %175, %177 : vector<1x8xf32>
    %179 = math.rsqrt %178 : vector<1x8xf32>
    %180 = arith.mulf %176, %179 : vector<1x8xf32>
    %181 = vector.extract_strided_slice %160 {offsets = [1, 0], sizes = [1, 8], strides = [1, 1]} : vector<2x8xf32> to vector<1x8xf32>
    %182 = arith.mulf %169, %180 : vector<1x8xf32>
    %183 = arith.subf %181, %182 : vector<1x8xf32>
    %184 = tpu.iota {dimensions = array<i32: 0>} : vector<2x8xi32>
    %c0_i32_121 = arith.constant 0 : i32
    %185 = vector.broadcast %c0_i32_121 : i32 to vector<2x8xi32>
    %186 = arith.cmpi eq, %184, %185 : vector<2x8xi32>
    %187 = vector.shape_cast %180 : vector<1x8xf32> to vector<1x8xf32>
    %188 = vector.broadcast %187 : vector<1x8xf32> to vector<2x8xf32>
    %189 = vector.shape_cast %183 : vector<1x8xf32> to vector<1x8xf32>
    %190 = vector.broadcast %189 : vector<1x8xf32> to vector<2x8xf32>
    %191 = arith.select %186, %188, %190 : vector<2x8xi1>, vector<2x8xf32>
    %c0_122 = arith.constant 0 : index
    %c0_123 = arith.constant 0 : index
    %192 = vector.load %arg15[%c0_122, %c0_123] : memref<8x64xf32, #tpu.memory_space<vmem>>, vector<8x64xf32>
    %cst_124 = arith.constant dense<0.000000e+00> : vector<2x64xf32>
    %193 = tpu.matmul %191, %192, %cst_124 {dimension_numbers = #tpu.dot_dimension_numbers<[1], [0], [0], [1], [0, 0, 1, 1], [], []>} : vector<2x8xf32>, vector<8x64xf32>, vector<2x64xf32> -> vector<2x64xf32>
    %194 = vector.extract_strided_slice %193 {offsets = [0, 0], sizes = [1, 64], strides = [1, 1]} : vector<2x64xf32> to vector<1x64xf32>
    %195 = vector.broadcast %194 : vector<1x64xf32> to vector<16x64xf32>
    %196 = arith.mulf %159, %195 : vector<16x64xf32>
    %197 = vector.extract_strided_slice %193 {offsets = [1, 0], sizes = [1, 64], strides = [1, 1]} : vector<2x64xf32> to vector<1x64xf32>
    %198 = vector.broadcast %197 : vector<1x64xf32> to vector<16x64xf32>
    %199 = arith.addf %196, %198 : vector<16x64xf32>
    %cst_125 = arith.constant 0.000000e+00 : f32
    %200 = vector.broadcast %cst_125 : f32 to vector<16x64xf32>
    %201 = arith.maximumf %199, %200 : vector<16x64xf32>
    %cst_126 = arith.constant 0.000000e+00 : f32
    %202 = vector.broadcast %cst_126 : f32 to vector<8x32xf32>
    %c0_127 = arith.constant 0 : index
    %c0_128 = arith.constant 0 : index
    %c0_129 = arith.constant 0 : index
    %203 = vector.load %arg17[%c0_127, %c0_128, %c0_129] : memref<3x8x16xf32, #tpu.memory_space<vmem>>, vector<1x8x16xf32>
    %204 = vector.shape_cast %203 : vector<1x8x16xf32> to vector<8x16xf32>
    %cst_130 = arith.constant dense<0.000000e+00> : vector<8x64xf32>
    %205 = tpu.matmul %204, %201, %cst_130 {dimension_numbers = #tpu.dot_dimension_numbers<[1], [0], [0], [1], [0, 0, 1, 1], [], []>} : vector<8x16xf32>, vector<16x64xf32>, vector<8x64xf32> -> vector<8x64xf32>
    %206 = arith.truncf %205 : vector<8x64xf32> to vector<8x64xbf16>
    %c0_131 = arith.constant 0 : index
    %c0_132 = arith.constant 0 : index
    %c0_133 = arith.constant 0 : index
    %207 = vector.load %arg18[%c0_131, %c0_132, %c0_133] : memref<3x64x32xbf16, #tpu.memory_space<vmem>>, vector<1x64x32xbf16>
    %208 = vector.shape_cast %207 : vector<1x64x32xbf16> to vector<64x32xbf16>
    %cst_134 = arith.constant dense<0.000000e+00> : vector<8x32xf32>
    %209 = tpu.matmul %206, %208, %cst_134 {dimension_numbers = #tpu.dot_dimension_numbers<[1], [0], [0], [1], [0, 0, 1, 1], [], []>} : vector<8x64xbf16>, vector<64x32xbf16>, vector<8x32xf32> -> vector<8x32xf32>
    %210 = arith.addf %202, %209 : vector<8x32xf32>
    %c1_135 = arith.constant 1 : index
    %c0_136 = arith.constant 0 : index
    %c0_137 = arith.constant 0 : index
    %211 = vector.load %arg17[%c1_135, %c0_136, %c0_137] : memref<3x8x16xf32, #tpu.memory_space<vmem>>, vector<1x8x16xf32>
    %212 = vector.shape_cast %211 : vector<1x8x16xf32> to vector<8x16xf32>
    %cst_138 = arith.constant dense<0.000000e+00> : vector<8x64xf32>
    %213 = tpu.matmul %212, %201, %cst_138 {dimension_numbers = #tpu.dot_dimension_numbers<[1], [0], [0], [1], [0, 0, 1, 1], [], []>} : vector<8x16xf32>, vector<16x64xf32>, vector<8x64xf32> -> vector<8x64xf32>
    %214 = arith.truncf %213 : vector<8x64xf32> to vector<8x64xbf16>
    %c1_139 = arith.constant 1 : index
    %c0_140 = arith.constant 0 : index
    %c0_141 = arith.constant 0 : index
    %215 = vector.load %arg18[%c1_139, %c0_140, %c0_141] : memref<3x64x32xbf16, #tpu.memory_space<vmem>>, vector<1x64x32xbf16>
    %216 = vector.shape_cast %215 : vector<1x64x32xbf16> to vector<64x32xbf16>
    %cst_142 = arith.constant dense<0.000000e+00> : vector<8x32xf32>
    %217 = tpu.matmul %214, %216, %cst_142 {dimension_numbers = #tpu.dot_dimension_numbers<[1], [0], [0], [1], [0, 0, 1, 1], [], []>} : vector<8x64xbf16>, vector<64x32xbf16>, vector<8x32xf32> -> vector<8x32xf32>
    %218 = arith.addf %210, %217 : vector<8x32xf32>
    %c2_143 = arith.constant 2 : index
    %c0_144 = arith.constant 0 : index
    %c0_145 = arith.constant 0 : index
    %219 = vector.load %arg17[%c2_143, %c0_144, %c0_145] : memref<3x8x16xf32, #tpu.memory_space<vmem>>, vector<1x8x16xf32>
    %220 = vector.shape_cast %219 : vector<1x8x16xf32> to vector<8x16xf32>
    %cst_146 = arith.constant dense<0.000000e+00> : vector<8x64xf32>
    %221 = tpu.matmul %220, %201, %cst_146 {dimension_numbers = #tpu.dot_dimension_numbers<[1], [0], [0], [1], [0, 0, 1, 1], [], []>} : vector<8x16xf32>, vector<16x64xf32>, vector<8x64xf32> -> vector<8x64xf32>
    %222 = arith.truncf %221 : vector<8x64xf32> to vector<8x64xbf16>
    %c2_147 = arith.constant 2 : index
    %c0_148 = arith.constant 0 : index
    %c0_149 = arith.constant 0 : index
    %223 = vector.load %arg18[%c2_147, %c0_148, %c0_149] : memref<3x64x32xbf16, #tpu.memory_space<vmem>>, vector<1x64x32xbf16>
    %224 = vector.shape_cast %223 : vector<1x64x32xbf16> to vector<64x32xbf16>
    %cst_150 = arith.constant dense<0.000000e+00> : vector<8x32xf32>
    %225 = tpu.matmul %222, %224, %cst_150 {dimension_numbers = #tpu.dot_dimension_numbers<[1], [0], [0], [1], [0, 0, 1, 1], [], []>} : vector<8x64xbf16>, vector<64x32xbf16>, vector<8x32xf32> -> vector<8x32xf32>
    %226 = arith.addf %218, %225 : vector<8x32xf32>
    %c0_151 = arith.constant 0 : index
    %c0_152 = arith.constant 0 : index
    %227 = vector.load %arg21[%c0_151, %c0_152] : memref<2x8xf32, #tpu.memory_space<vmem>>, vector<2x8xf32>
    %c0_153 = arith.constant 0 : index
    %c0_154 = arith.constant 0 : index
    %228 = vector.load %arg19[%c0_153, %c0_154] : memref<32x8xf32, #tpu.memory_space<vmem>>, vector<32x8xf32>
    %cst_155 = arith.constant dense<0.000000e+00> : vector<8x8xf32>
    %229 = tpu.matmul %226, %228, %cst_155 {dimension_numbers = #tpu.dot_dimension_numbers<[1], [0], [0], [1], [0, 0, 1, 1], [], []>} : vector<8x32xf32>, vector<32x8xf32>, vector<8x8xf32> -> vector<8x8xf32>
    %230 = arith.mulf %226, %226 : vector<8x32xf32>
    %c0_156 = arith.constant 0 : index
    %c0_157 = arith.constant 0 : index
    %231 = vector.load %arg19[%c0_156, %c0_157] : memref<32x8xf32, #tpu.memory_space<vmem>>, vector<32x8xf32>
    %cst_158 = arith.constant dense<0.000000e+00> : vector<8x8xf32>
    %232 = tpu.matmul %230, %231, %cst_158 {dimension_numbers = #tpu.dot_dimension_numbers<[1], [0], [0], [1], [0, 0, 1, 1], [], []>} : vector<8x32xf32>, vector<32x8xf32>, vector<8x8xf32> -> vector<8x8xf32>
    %cst_159 = arith.constant dense<0.000000e+00> : vector<8xf32>
    %233 = vector.multi_reduction <add>, %229, %cst_159 [0] : vector<8x8xf32> to vector<8xf32>
    %234 = vector.shape_cast %233 : vector<8xf32> to vector<1x8xf32>
    %cst_160 = arith.constant 3.200000e+01 : f32
    %235 = vector.broadcast %cst_160 : f32 to vector<1x8xf32>
    %236 = arith.divf %234, %235 : vector<1x8xf32>
    %cst_161 = arith.constant dense<0.000000e+00> : vector<8xf32>
    %237 = vector.multi_reduction <add>, %232, %cst_161 [0] : vector<8x8xf32> to vector<8xf32>
    %238 = vector.shape_cast %237 : vector<8xf32> to vector<1x8xf32>
    %cst_162 = arith.constant 3.200000e+01 : f32
    %239 = vector.broadcast %cst_162 : f32 to vector<1x8xf32>
    %240 = arith.divf %238, %239 : vector<1x8xf32>
    %241 = arith.mulf %236, %236 : vector<1x8xf32>
    %242 = arith.subf %240, %241 : vector<1x8xf32>
    %243 = vector.extract_strided_slice %227 {offsets = [0, 0], sizes = [1, 8], strides = [1, 1]} : vector<2x8xf32> to vector<1x8xf32>
    %cst_163 = arith.constant 9.99999974E-6 : f32
    %244 = vector.broadcast %cst_163 : f32 to vector<1x8xf32>
    %245 = arith.addf %242, %244 : vector<1x8xf32>
    %246 = math.rsqrt %245 : vector<1x8xf32>
    %247 = arith.mulf %243, %246 : vector<1x8xf32>
    %248 = vector.extract_strided_slice %227 {offsets = [1, 0], sizes = [1, 8], strides = [1, 1]} : vector<2x8xf32> to vector<1x8xf32>
    %249 = arith.mulf %236, %247 : vector<1x8xf32>
    %250 = arith.subf %248, %249 : vector<1x8xf32>
    %251 = tpu.iota {dimensions = array<i32: 0>} : vector<2x8xi32>
    %c0_i32_164 = arith.constant 0 : i32
    %252 = vector.broadcast %c0_i32_164 : i32 to vector<2x8xi32>
    %253 = arith.cmpi eq, %251, %252 : vector<2x8xi32>
    %254 = vector.shape_cast %247 : vector<1x8xf32> to vector<1x8xf32>
    %255 = vector.broadcast %254 : vector<1x8xf32> to vector<2x8xf32>
    %256 = vector.shape_cast %250 : vector<1x8xf32> to vector<1x8xf32>
    %257 = vector.broadcast %256 : vector<1x8xf32> to vector<2x8xf32>
    %258 = arith.select %253, %255, %257 : vector<2x8xi1>, vector<2x8xf32>
    %c0_165 = arith.constant 0 : index
    %c0_166 = arith.constant 0 : index
    %259 = vector.load %arg20[%c0_165, %c0_166] : memref<8x32xf32, #tpu.memory_space<vmem>>, vector<8x32xf32>
    %cst_167 = arith.constant dense<0.000000e+00> : vector<2x32xf32>
    %260 = tpu.matmul %258, %259, %cst_167 {dimension_numbers = #tpu.dot_dimension_numbers<[1], [0], [0], [1], [0, 0, 1, 1], [], []>} : vector<2x8xf32>, vector<8x32xf32>, vector<2x32xf32> -> vector<2x32xf32>
    %261 = vector.extract_strided_slice %260 {offsets = [0, 0], sizes = [1, 32], strides = [1, 1]} : vector<2x32xf32> to vector<1x32xf32>
    %262 = vector.broadcast %261 : vector<1x32xf32> to vector<8x32xf32>
    %263 = arith.mulf %226, %262 : vector<8x32xf32>
    %264 = vector.extract_strided_slice %260 {offsets = [1, 0], sizes = [1, 32], strides = [1, 1]} : vector<2x32xf32> to vector<1x32xf32>
    %265 = vector.broadcast %264 : vector<1x32xf32> to vector<8x32xf32>
    %266 = arith.addf %263, %265 : vector<8x32xf32>
    %cst_168 = arith.constant 0.000000e+00 : f32
    %267 = vector.broadcast %cst_168 : f32 to vector<8x32xf32>
    %268 = arith.maximumf %266, %267 : vector<8x32xf32>
    %cst_169 = arith.constant 0.000000e+00 : f32
    %269 = vector.broadcast %cst_169 : f32 to vector<4x32xf32>
    %c0_170 = arith.constant 0 : index
    %c0_171 = arith.constant 0 : index
    %c0_172 = arith.constant 0 : index
    %270 = vector.load %arg22[%c0_170, %c0_171, %c0_172] : memref<3x4x8xf32, #tpu.memory_space<vmem>>, vector<1x4x8xf32>
    %271 = vector.shape_cast %270 : vector<1x4x8xf32> to vector<4x8xf32>
    %cst_173 = arith.constant dense<0.000000e+00> : vector<4x32xf32>
    %272 = tpu.matmul %271, %268, %cst_173 {dimension_numbers = #tpu.dot_dimension_numbers<[1], [0], [0], [1], [0, 0, 1, 1], [], []>} : vector<4x8xf32>, vector<8x32xf32>, vector<4x32xf32> -> vector<4x32xf32>
    %273 = arith.truncf %272 : vector<4x32xf32> to vector<4x32xbf16>
    %c0_174 = arith.constant 0 : index
    %c0_175 = arith.constant 0 : index
    %c0_176 = arith.constant 0 : index
    %274 = vector.load %arg23[%c0_174, %c0_175, %c0_176] : memref<3x32x32xbf16, #tpu.memory_space<vmem>>, vector<1x32x32xbf16>
    %275 = vector.shape_cast %274 : vector<1x32x32xbf16> to vector<32x32xbf16>
    %cst_177 = arith.constant dense<0.000000e+00> : vector<4x32xf32>
    %276 = tpu.matmul %273, %275, %cst_177 {dimension_numbers = #tpu.dot_dimension_numbers<[1], [0], [0], [1], [0, 0, 1, 1], [], []>} : vector<4x32xbf16>, vector<32x32xbf16>, vector<4x32xf32> -> vector<4x32xf32>
    %277 = arith.addf %269, %276 : vector<4x32xf32>
    %c1_178 = arith.constant 1 : index
    %c0_179 = arith.constant 0 : index
    %c0_180 = arith.constant 0 : index
    %278 = vector.load %arg22[%c1_178, %c0_179, %c0_180] : memref<3x4x8xf32, #tpu.memory_space<vmem>>, vector<1x4x8xf32>
    %279 = vector.shape_cast %278 : vector<1x4x8xf32> to vector<4x8xf32>
    %cst_181 = arith.constant dense<0.000000e+00> : vector<4x32xf32>
    %280 = tpu.matmul %279, %268, %cst_181 {dimension_numbers = #tpu.dot_dimension_numbers<[1], [0], [0], [1], [0, 0, 1, 1], [], []>} : vector<4x8xf32>, vector<8x32xf32>, vector<4x32xf32> -> vector<4x32xf32>
    %281 = arith.truncf %280 : vector<4x32xf32> to vector<4x32xbf16>
    %c1_182 = arith.constant 1 : index
    %c0_183 = arith.constant 0 : index
    %c0_184 = arith.constant 0 : index
    %282 = vector.load %arg23[%c1_182, %c0_183, %c0_184] : memref<3x32x32xbf16, #tpu.memory_space<vmem>>, vector<1x32x32xbf16>
    %283 = vector.shape_cast %282 : vector<1x32x32xbf16> to vector<32x32xbf16>
    %cst_185 = arith.constant dense<0.000000e+00> : vector<4x32xf32>
    %284 = tpu.matmul %281, %283, %cst_185 {dimension_numbers = #tpu.dot_dimension_numbers<[1], [0], [0], [1], [0, 0, 1, 1], [], []>} : vector<4x32xbf16>, vector<32x32xbf16>, vector<4x32xf32> -> vector<4x32xf32>
    %285 = arith.addf %277, %284 : vector<4x32xf32>
    %c2_186 = arith.constant 2 : index
    %c0_187 = arith.constant 0 : index
    %c0_188 = arith.constant 0 : index
    %286 = vector.load %arg22[%c2_186, %c0_187, %c0_188] : memref<3x4x8xf32, #tpu.memory_space<vmem>>, vector<1x4x8xf32>
    %287 = vector.shape_cast %286 : vector<1x4x8xf32> to vector<4x8xf32>
    %cst_189 = arith.constant dense<0.000000e+00> : vector<4x32xf32>
    %288 = tpu.matmul %287, %268, %cst_189 {dimension_numbers = #tpu.dot_dimension_numbers<[1], [0], [0], [1], [0, 0, 1, 1], [], []>} : vector<4x8xf32>, vector<8x32xf32>, vector<4x32xf32> -> vector<4x32xf32>
    %289 = arith.truncf %288 : vector<4x32xf32> to vector<4x32xbf16>
    %c2_190 = arith.constant 2 : index
    %c0_191 = arith.constant 0 : index
    %c0_192 = arith.constant 0 : index
    %290 = vector.load %arg23[%c2_190, %c0_191, %c0_192] : memref<3x32x32xbf16, #tpu.memory_space<vmem>>, vector<1x32x32xbf16>
    %291 = vector.shape_cast %290 : vector<1x32x32xbf16> to vector<32x32xbf16>
    %cst_193 = arith.constant dense<0.000000e+00> : vector<4x32xf32>
    %292 = tpu.matmul %289, %291, %cst_193 {dimension_numbers = #tpu.dot_dimension_numbers<[1], [0], [0], [1], [0, 0, 1, 1], [], []>} : vector<4x32xbf16>, vector<32x32xbf16>, vector<4x32xf32> -> vector<4x32xf32>
    %293 = arith.addf %285, %292 : vector<4x32xf32>
    %c0_194 = arith.constant 0 : index
    %c0_195 = arith.constant 0 : index
    %294 = vector.load %arg26[%c0_194, %c0_195] : memref<2x16xf32, #tpu.memory_space<vmem>>, vector<2x16xf32>
    %c0_196 = arith.constant 0 : index
    %c0_197 = arith.constant 0 : index
    %295 = vector.load %arg24[%c0_196, %c0_197] : memref<32x16xf32, #tpu.memory_space<vmem>>, vector<32x16xf32>
    %cst_198 = arith.constant dense<0.000000e+00> : vector<4x16xf32>
    %296 = tpu.matmul %293, %295, %cst_198 {dimension_numbers = #tpu.dot_dimension_numbers<[1], [0], [0], [1], [0, 0, 1, 1], [], []>} : vector<4x32xf32>, vector<32x16xf32>, vector<4x16xf32> -> vector<4x16xf32>
    %297 = arith.mulf %293, %293 : vector<4x32xf32>
    %c0_199 = arith.constant 0 : index
    %c0_200 = arith.constant 0 : index
    %298 = vector.load %arg24[%c0_199, %c0_200] : memref<32x16xf32, #tpu.memory_space<vmem>>, vector<32x16xf32>
    %cst_201 = arith.constant dense<0.000000e+00> : vector<4x16xf32>
    %299 = tpu.matmul %297, %298, %cst_201 {dimension_numbers = #tpu.dot_dimension_numbers<[1], [0], [0], [1], [0, 0, 1, 1], [], []>} : vector<4x32xf32>, vector<32x16xf32>, vector<4x16xf32> -> vector<4x16xf32>
    %cst_202 = arith.constant dense<0.000000e+00> : vector<16xf32>
    %300 = vector.multi_reduction <add>, %296, %cst_202 [0] : vector<4x16xf32> to vector<16xf32>
    %301 = vector.shape_cast %300 : vector<16xf32> to vector<1x16xf32>
    %cst_203 = arith.constant 8.000000e+00 : f32
    %302 = vector.broadcast %cst_203 : f32 to vector<1x16xf32>
    %303 = arith.divf %301, %302 : vector<1x16xf32>
    %cst_204 = arith.constant dense<0.000000e+00> : vector<16xf32>
    %304 = vector.multi_reduction <add>, %299, %cst_204 [0] : vector<4x16xf32> to vector<16xf32>
    %305 = vector.shape_cast %304 : vector<16xf32> to vector<1x16xf32>
    %cst_205 = arith.constant 8.000000e+00 : f32
    %306 = vector.broadcast %cst_205 : f32 to vector<1x16xf32>
    %307 = arith.divf %305, %306 : vector<1x16xf32>
    %308 = arith.mulf %303, %303 : vector<1x16xf32>
    %309 = arith.subf %307, %308 : vector<1x16xf32>
    %310 = vector.extract_strided_slice %294 {offsets = [0, 0], sizes = [1, 16], strides = [1, 1]} : vector<2x16xf32> to vector<1x16xf32>
    %cst_206 = arith.constant 9.99999974E-6 : f32
    %311 = vector.broadcast %cst_206 : f32 to vector<1x16xf32>
    %312 = arith.addf %309, %311 : vector<1x16xf32>
    %313 = math.rsqrt %312 : vector<1x16xf32>
    %314 = arith.mulf %310, %313 : vector<1x16xf32>
    %315 = vector.extract_strided_slice %294 {offsets = [1, 0], sizes = [1, 16], strides = [1, 1]} : vector<2x16xf32> to vector<1x16xf32>
    %316 = arith.mulf %303, %314 : vector<1x16xf32>
    %317 = arith.subf %315, %316 : vector<1x16xf32>
    %318 = tpu.iota {dimensions = array<i32: 0>} : vector<2x16xi32>
    %c0_i32_207 = arith.constant 0 : i32
    %319 = vector.broadcast %c0_i32_207 : i32 to vector<2x16xi32>
    %320 = arith.cmpi eq, %318, %319 : vector<2x16xi32>
    %321 = vector.shape_cast %314 : vector<1x16xf32> to vector<1x16xf32>
    %322 = vector.broadcast %321 : vector<1x16xf32> to vector<2x16xf32>
    %323 = vector.shape_cast %317 : vector<1x16xf32> to vector<1x16xf32>
    %324 = vector.broadcast %323 : vector<1x16xf32> to vector<2x16xf32>
    %325 = arith.select %320, %322, %324 : vector<2x16xi1>, vector<2x16xf32>
    %c0_208 = arith.constant 0 : index
    %c0_209 = arith.constant 0 : index
    %326 = vector.load %arg25[%c0_208, %c0_209] : memref<16x32xf32, #tpu.memory_space<vmem>>, vector<16x32xf32>
    %cst_210 = arith.constant dense<0.000000e+00> : vector<2x32xf32>
    %327 = tpu.matmul %325, %326, %cst_210 {dimension_numbers = #tpu.dot_dimension_numbers<[1], [0], [0], [1], [0, 0, 1, 1], [], []>} : vector<2x16xf32>, vector<16x32xf32>, vector<2x32xf32> -> vector<2x32xf32>
    %328 = vector.extract_strided_slice %327 {offsets = [0, 0], sizes = [1, 32], strides = [1, 1]} : vector<2x32xf32> to vector<1x32xf32>
    %329 = vector.broadcast %328 : vector<1x32xf32> to vector<4x32xf32>
    %330 = arith.mulf %293, %329 : vector<4x32xf32>
    %331 = vector.extract_strided_slice %327 {offsets = [1, 0], sizes = [1, 32], strides = [1, 1]} : vector<2x32xf32> to vector<1x32xf32>
    %332 = vector.broadcast %331 : vector<1x32xf32> to vector<4x32xf32>
    %333 = arith.addf %330, %332 : vector<4x32xf32>
    %cst_211 = arith.constant 0.000000e+00 : f32
    %334 = vector.broadcast %cst_211 : f32 to vector<4x32xf32>
    %335 = arith.maximumf %333, %334 : vector<4x32xf32>
    %c0_212 = arith.constant 0 : index
    %c0_213 = arith.constant 0 : index
    %336 = vector.load %arg27[%c0_212, %c0_213] : memref<2x4xf32, #tpu.memory_space<vmem>>, vector<2x4xf32>
    %cst_214 = arith.constant dense<0.000000e+00> : vector<2x32xf32>
    %337 = tpu.matmul %336, %335, %cst_214 {dimension_numbers = #tpu.dot_dimension_numbers<[1], [0], [0], [1], [0, 0, 1, 1], [], []>} : vector<2x4xf32>, vector<4x32xf32>, vector<2x32xf32> -> vector<2x32xf32>
    %c0_215 = arith.constant 0 : index
    %c0_216 = arith.constant 0 : index
    %338 = vector.load %arg28[%c0_215, %c0_216] : memref<2x4xf32, #tpu.memory_space<vmem>>, vector<2x4xf32>
    %cst_217 = arith.constant dense<0.000000e+00> : vector<2x32xf32>
    %339 = tpu.matmul %338, %335, %cst_217 {dimension_numbers = #tpu.dot_dimension_numbers<[1], [0], [0], [1], [0, 0, 1, 1], [], []>} : vector<2x4xf32>, vector<4x32xf32>, vector<2x32xf32> -> vector<2x32xf32>
    %340 = arith.maximumf %337, %339 : vector<2x32xf32>
    %341 = vector.extract_strided_slice %340 {offsets = [0, 0], sizes = [2, 16], strides = [1, 1]} : vector<2x32xf32> to vector<2x16xf32>
    %342 = vector.extract_strided_slice %340 {offsets = [0, 16], sizes = [2, 16], strides = [1, 1]} : vector<2x32xf32> to vector<2x16xf32>
    %343 = arith.maximumf %341, %342 : vector<2x16xf32>
    %c0_218 = arith.constant 0 : index
    %c0_219 = arith.constant 0 : index
    %344 = vector.load %arg34[%c0_218, %c0_219] : memref<2x16xf32, #tpu.memory_space<vmem>>, vector<2x16xf32>
    tpu.vector_store %arg34[%c0_218, %c0_219], %343 {strides = array<i32>} : memref<2x16xf32, #tpu.memory_space<vmem>>, vector<2x16xf32>,
    %345 = arith.truncf %343 : vector<2x16xf32> to vector<2x16xbf16>
    %c0_220 = arith.constant 0 : index
    %c0_221 = arith.constant 0 : index
    %346 = vector.load %arg29[%c0_220, %c0_221] : memref<16x32xbf16, #tpu.memory_space<vmem>>, vector<16x32xbf16>
    %cst_222 = arith.constant dense<0.000000e+00> : vector<2x32xf32>
    %347 = tpu.matmul %345, %346, %cst_222 {dimension_numbers = #tpu.dot_dimension_numbers<[1], [0], [0], [1], [0, 0, 1, 1], [], []>} : vector<2x16xbf16>, vector<16x32xbf16>, vector<2x32xf32> -> vector<2x32xf32>
    %cst_223 = arith.constant dense<0.000000e+00> : vector<32xf32>
    %348 = vector.multi_reduction <add>, %347, %cst_223 [0] : vector<2x32xf32> to vector<32xf32>
    %349 = vector.shape_cast %348 : vector<32xf32> to vector<1x32xf32>
    %cst_224 = arith.constant 2.000000e+00 : f32
    %350 = vector.broadcast %cst_224 : f32 to vector<1x32xf32>
    %351 = arith.divf %349, %350 : vector<1x32xf32>
    %352 = arith.mulf %347, %347 : vector<2x32xf32>
    %cst_225 = arith.constant dense<0.000000e+00> : vector<32xf32>
    %353 = vector.multi_reduction <add>, %352, %cst_225 [0] : vector<2x32xf32> to vector<32xf32>
    %354 = vector.shape_cast %353 : vector<32xf32> to vector<1x32xf32>
    %cst_226 = arith.constant 2.000000e+00 : f32
    %355 = vector.broadcast %cst_226 : f32 to vector<1x32xf32>
    %356 = arith.divf %354, %355 : vector<1x32xf32>
    %357 = arith.mulf %351, %351 : vector<1x32xf32>
    %358 = arith.subf %356, %357 : vector<1x32xf32>
    %c0_227 = arith.constant 0 : index
    %c0_228 = arith.constant 0 : index
    %359 = vector.load %arg30[%c0_227, %c0_228] : memref<2x32xf32, #tpu.memory_space<vmem>>, vector<2x32xf32>
    %360 = vector.broadcast %351 : vector<1x32xf32> to vector<2x32xf32>
    %361 = arith.subf %347, %360 : vector<2x32xf32>
    %cst_229 = arith.constant 9.99999974E-6 : f32
    %362 = vector.broadcast %cst_229 : f32 to vector<1x32xf32>
    %363 = arith.addf %358, %362 : vector<1x32xf32>
    %364 = math.rsqrt %363 : vector<1x32xf32>
    %365 = vector.broadcast %364 : vector<1x32xf32> to vector<2x32xf32>
    %366 = arith.mulf %361, %365 : vector<2x32xf32>
    %367 = vector.extract_strided_slice %359 {offsets = [0, 0], sizes = [1, 32], strides = [1, 1]} : vector<2x32xf32> to vector<1x32xf32>
    %368 = vector.broadcast %367 : vector<1x32xf32> to vector<2x32xf32>
    %369 = arith.mulf %366, %368 : vector<2x32xf32>
    %370 = vector.extract_strided_slice %359 {offsets = [1, 0], sizes = [1, 32], strides = [1, 1]} : vector<2x32xf32> to vector<1x32xf32>
    %371 = vector.broadcast %370 : vector<1x32xf32> to vector<2x32xf32>
    %372 = arith.addf %369, %371 : vector<2x32xf32>
    %cst_230 = arith.constant 0.000000e+00 : f32
    %373 = vector.broadcast %cst_230 : f32 to vector<2x32xf32>
    %374 = arith.maximumf %372, %373 : vector<2x32xf32>
    %375 = arith.truncf %374 : vector<2x32xf32> to vector<2x32xbf16>
    %c0_231 = arith.constant 0 : index
    %c0_232 = arith.constant 0 : index
    %376 = vector.load %arg31[%c0_231, %c0_232] : memref<32x8xbf16, #tpu.memory_space<vmem>>, vector<32x8xbf16>
    %cst_233 = arith.constant dense<0.000000e+00> : vector<2x8xf32>
    %377 = tpu.matmul %375, %376, %cst_233 {dimension_numbers = #tpu.dot_dimension_numbers<[1], [0], [0], [1], [0, 0, 1, 1], [], []>} : vector<2x32xbf16>, vector<32x8xbf16>, vector<2x8xf32> -> vector<2x8xf32>
    %c0_234 = arith.constant 0 : index
    %c0_235 = arith.constant 0 : index
    %378 = vector.load %arg32[%c0_234, %c0_235] : memref<1x8xf32, #tpu.memory_space<vmem>>, vector<1x8xf32>
    %379 = vector.broadcast %378 : vector<1x8xf32> to vector<2x8xf32>
    %380 = arith.addf %377, %379 : vector<2x8xf32>
    %c0_236 = arith.constant 0 : index
    %c0_237 = arith.constant 0 : index
    %381 = vector.load %arg33[%c0_236, %c0_237] : memref<2x8xf32, #tpu.memory_space<vmem>>, vector<2x8xf32>
    tpu.vector_store %arg33[%c0_236, %c0_237], %380 {strides = array<i32>} : memref<2x8xf32, #tpu.memory_space<vmem>>, vector<2x8xf32>,
    return
  }
  func.func @transform_0(%arg0: i32) -> (i32, i32) {
    %c0_i32 = arith.constant 0 : i32
    %c0_i32_0 = arith.constant 0 : i32
    %c0_i32_1 = arith.constant 0 : i32
    return %c0_i32, %c0_i32_0 : i32, i32
  }
  func.func @transform_1(%arg0: i32) -> (i32, i32, i32) {
    %c0_i32 = arith.constant 0 : i32
    %c0_i32_0 = arith.constant 0 : i32
    %c0_i32_1 = arith.constant 0 : i32
    %c0_i32_2 = arith.constant 0 : i32
    return %c0_i32, %c0_i32_0, %c0_i32_1 : i32, i32, i32
  }
  func.func @transform_2(%arg0: i32) -> (i32, i32, i32) {
    %c0_i32 = arith.constant 0 : i32
    %c0_i32_0 = arith.constant 0 : i32
    %c0_i32_1 = arith.constant 0 : i32
    %c0_i32_2 = arith.constant 0 : i32
    return %c0_i32, %c0_i32_0, %c0_i32_1 : i32, i32, i32
  }
  func.func @transform_3(%arg0: i32) -> (i32, i32) {
    %c0_i32 = arith.constant 0 : i32
    %c0_i32_0 = arith.constant 0 : i32
    %c0_i32_1 = arith.constant 0 : i32
    return %c0_i32, %c0_i32_0 : i32, i32
  }
  func.func @transform_4(%arg0: i32) -> (i32, i32) {
    %c0_i32 = arith.constant 0 : i32
    %c0_i32_0 = arith.constant 0 : i32
    %c0_i32_1 = arith.constant 0 : i32
    return %c0_i32, %c0_i32_0 : i32, i32
  }
  func.func @transform_5(%arg0: i32) -> (i32, i32) {
    %c0_i32 = arith.constant 0 : i32
    %c0_i32_0 = arith.constant 0 : i32
    %c0_i32_1 = arith.constant 0 : i32
    return %c0_i32, %c0_i32_0 : i32, i32
  }
  func.func @transform_6(%arg0: i32) -> (i32, i32, i32) {
    %c0_i32 = arith.constant 0 : i32
    %c0_i32_0 = arith.constant 0 : i32
    %c0_i32_1 = arith.constant 0 : i32
    %c0_i32_2 = arith.constant 0 : i32
    return %c0_i32, %c0_i32_0, %c0_i32_1 : i32, i32, i32
  }
  func.func @transform_7(%arg0: i32) -> (i32, i32, i32) {
    %c0_i32 = arith.constant 0 : i32
    %c0_i32_0 = arith.constant 0 : i32
    %c0_i32_1 = arith.constant 0 : i32
    %c0_i32_2 = arith.constant 0 : i32
    return %c0_i32, %c0_i32_0, %c0_i32_1 : i32, i32, i32
  }
  func.func @transform_8(%arg0: i32) -> (i32, i32) {
    %c0_i32 = arith.constant 0 : i32
    %c0_i32_0 = arith.constant 0 : i32
    %c0_i32_1 = arith.constant 0 : i32
    return %c0_i32, %c0_i32_0 : i32, i32
  }
  func.func @transform_9(%arg0: i32) -> (i32, i32) {
    %c0_i32 = arith.constant 0 : i32
    %c0_i32_0 = arith.constant 0 : i32
    %c0_i32_1 = arith.constant 0 : i32
    return %c0_i32, %c0_i32_0 : i32, i32
  }
  func.func @transform_10(%arg0: i32) -> (i32, i32) {
    %c0_i32 = arith.constant 0 : i32
    %c0_i32_0 = arith.constant 0 : i32
    %c0_i32_1 = arith.constant 0 : i32
    return %c0_i32, %c0_i32_0 : i32, i32
  }
  func.func @transform_11(%arg0: i32) -> (i32, i32, i32) {
    %c0_i32 = arith.constant 0 : i32
    %c0_i32_0 = arith.constant 0 : i32
    %c0_i32_1 = arith.constant 0 : i32
    %c0_i32_2 = arith.constant 0 : i32
    return %c0_i32, %c0_i32_0, %c0_i32_1 : i32, i32, i32
  }
  func.func @transform_12(%arg0: i32) -> (i32, i32, i32) {
    %c0_i32 = arith.constant 0 : i32
    %c0_i32_0 = arith.constant 0 : i32
    %c0_i32_1 = arith.constant 0 : i32
    %c0_i32_2 = arith.constant 0 : i32
    return %c0_i32, %c0_i32_0, %c0_i32_1 : i32, i32, i32
  }
  func.func @transform_13(%arg0: i32) -> (i32, i32) {
    %c0_i32 = arith.constant 0 : i32
    %c0_i32_0 = arith.constant 0 : i32
    %c0_i32_1 = arith.constant 0 : i32
    return %c0_i32, %c0_i32_0 : i32, i32
  }
  func.func @transform_14(%arg0: i32) -> (i32, i32) {
    %c0_i32 = arith.constant 0 : i32
    %c0_i32_0 = arith.constant 0 : i32
    %c0_i32_1 = arith.constant 0 : i32
    return %c0_i32, %c0_i32_0 : i32, i32
  }
  func.func @transform_15(%arg0: i32) -> (i32, i32) {
    %c0_i32 = arith.constant 0 : i32
    %c0_i32_0 = arith.constant 0 : i32
    %c0_i32_1 = arith.constant 0 : i32
    return %c0_i32, %c0_i32_0 : i32, i32
  }
  func.func @transform_16(%arg0: i32) -> (i32, i32, i32) {
    %c0_i32 = arith.constant 0 : i32
    %c0_i32_0 = arith.constant 0 : i32
    %c0_i32_1 = arith.constant 0 : i32
    %c0_i32_2 = arith.constant 0 : i32
    return %c0_i32, %c0_i32_0, %c0_i32_1 : i32, i32, i32
  }
  func.func @transform_17(%arg0: i32) -> (i32, i32, i32) {
    %c0_i32 = arith.constant 0 : i32
    %c0_i32_0 = arith.constant 0 : i32
    %c0_i32_1 = arith.constant 0 : i32
    %c0_i32_2 = arith.constant 0 : i32
    return %c0_i32, %c0_i32_0, %c0_i32_1 : i32, i32, i32
  }
  func.func @transform_18(%arg0: i32) -> (i32, i32) {
    %c0_i32 = arith.constant 0 : i32
    %c0_i32_0 = arith.constant 0 : i32
    %c0_i32_1 = arith.constant 0 : i32
    return %c0_i32, %c0_i32_0 : i32, i32
  }
  func.func @transform_19(%arg0: i32) -> (i32, i32) {
    %c0_i32 = arith.constant 0 : i32
    %c0_i32_0 = arith.constant 0 : i32
    %c0_i32_1 = arith.constant 0 : i32
    return %c0_i32, %c0_i32_0 : i32, i32
  }
  func.func @transform_20(%arg0: i32) -> (i32, i32) {
    %c0_i32 = arith.constant 0 : i32
    %c0_i32_0 = arith.constant 0 : i32
    %c0_i32_1 = arith.constant 0 : i32
    return %c0_i32, %c0_i32_0 : i32, i32
  }
  func.func @transform_21(%arg0: i32) -> (i32, i32, i32) {
    %c0_i32 = arith.constant 0 : i32
    %c0_i32_0 = arith.constant 0 : i32
    %c0_i32_1 = arith.constant 0 : i32
    %c0_i32_2 = arith.constant 0 : i32
    return %c0_i32, %c0_i32_0, %c0_i32_1 : i32, i32, i32
  }
  func.func @transform_22(%arg0: i32) -> (i32, i32, i32) {
    %c0_i32 = arith.constant 0 : i32
    %c0_i32_0 = arith.constant 0 : i32
    %c0_i32_1 = arith.constant 0 : i32
    %c0_i32_2 = arith.constant 0 : i32
    return %c0_i32, %c0_i32_0, %c0_i32_1 : i32, i32, i32
  }
  func.func @transform_23(%arg0: i32) -> (i32, i32) {
    %c0_i32 = arith.constant 0 : i32
    %c0_i32_0 = arith.constant 0 : i32
    %c0_i32_1 = arith.constant 0 : i32
    return %c0_i32, %c0_i32_0 : i32, i32
  }
  func.func @transform_24(%arg0: i32) -> (i32, i32) {
    %c0_i32 = arith.constant 0 : i32
    %c0_i32_0 = arith.constant 0 : i32
    %c0_i32_1 = arith.constant 0 : i32
    return %c0_i32, %c0_i32_0 : i32, i32
  }
  func.func @transform_25(%arg0: i32) -> (i32, i32) {
    %c0_i32 = arith.constant 0 : i32
    %c0_i32_0 = arith.constant 0 : i32
    %c0_i32_1 = arith.constant 0 : i32
    return %c0_i32, %c0_i32_0 : i32, i32
  }
  func.func @transform_26(%arg0: i32) -> (i32, i32) {
    %c0_i32 = arith.constant 0 : i32
    %c0_i32_0 = arith.constant 0 : i32
    %c0_i32_1 = arith.constant 0 : i32
    return %c0_i32, %c0_i32_0 : i32, i32
  }
  func.func @transform_27(%arg0: i32) -> (i32, i32) {
    %c0_i32 = arith.constant 0 : i32
    %c0_i32_0 = arith.constant 0 : i32
    %c0_i32_1 = arith.constant 0 : i32
    return %c0_i32, %c0_i32_0 : i32, i32
  }
  func.func @transform_28(%arg0: i32) -> (i32, i32) {
    %c0_i32 = arith.constant 0 : i32
    %c0_i32_0 = arith.constant 0 : i32
    %c0_i32_1 = arith.constant 0 : i32
    return %c0_i32, %c0_i32_0 : i32, i32
  }
  func.func @transform_29(%arg0: i32) -> (i32, i32) {
    %c0_i32 = arith.constant 0 : i32
    %c0_i32_0 = arith.constant 0 : i32
    %c0_i32_1 = arith.constant 0 : i32
    return %c0_i32, %c0_i32_0 : i32, i32
  }
  func.func @transform_30(%arg0: i32) -> (i32, i32) {
    %c0_i32 = arith.constant 0 : i32
    %c0_i32_0 = arith.constant 0 : i32
    %c0_i32_1 = arith.constant 0 : i32
    return %c0_i32, %c0_i32_0 : i32, i32
  }
  func.func @transform_31(%arg0: i32) -> (i32, i32) {
    %c0_i32 = arith.constant 0 : i32
    %c0_i32_0 = arith.constant 0 : i32
    %c0_i32_1 = arith.constant 0 : i32
    return %c0_i32, %c0_i32_0 : i32, i32
  }
  func.func @transform_32(%arg0: i32) -> (i32, i32) {
    %c0_i32 = arith.constant 0 : i32
    %c0_i32_0 = arith.constant 0 : i32
    %c0_i32_1 = arith.constant 0 : i32
    return %c0_i32, %c0_i32_0 : i32, i32
  }
  func.func @transform_33(%arg0: i32) -> (i32, i32) {
    %c0_i32 = arith.constant 0 : i32
    %c0_i32_0 = arith.constant 0 : i32
    %c0_i32_1 = arith.constant 0 : i32
    return %c0_i32, %c0_i32_0 : i32, i32
  }
}

</mosaic_0001>

<llo_original>
// kernel: encoder_forward.1
$region0: #{encoder_forward.1}
  #allocation0 [shape = 'u32[]', space=smem, size = 0x4, offset = 0x4, fixed_abs, tag = 'smem constant byte address 0x4 - core index']
  #allocation1 [shape = 'u32[144,128]{1,0:T(1,128)}', space=vmem, size = 0x12000, scoped, tag = 'internal scratch']
  %s0 = inlined_call_operand.smem [shape: u32[34], index: -1, kind: input, shape index: {}]
  %s1 = sld [smem:[%s0]]
  %s2 = scalar_lea.smem %s0, 1
  %s3 = sld [smem:[%s2]]
  %s4 = scalar_lea.smem %s0, 2
  %s5 = sld [smem:[%s4]]
  %s6 = scalar_lea.smem %s0, 3
  %s7 = sld [smem:[%s6]]
  %s8 = scalar_lea.smem %s0, 4
  %s9 = sld [smem:[%s8]]
  %s10 = scalar_lea.smem %s0, 5
  %s11 = sld [smem:[%s10]]
  %s12 = scalar_lea.smem %s0, 6
  %s13 = sld [smem:[%s12]]
  %s14 = scalar_lea.smem %s0, 7
  %s15 = sld [smem:[%s14]]
  %s16 = scalar_lea.smem %s0, 8
  %s17 = sld [smem:[%s16]]
  %s18 = scalar_lea.smem %s0, 9
  %s19 = sld [smem:[%s18]]
  %s20 = scalar_lea.smem %s0, 10
  %s21 = sld [smem:[%s20]]
  %s22 = scalar_lea.smem %s0, 11
  %s23 = sld [smem:[%s22]]
  %s24 = scalar_lea.smem %s0, 12
  %s25 = sld [smem:[%s24]]
  %s26 = scalar_lea.smem %s0, 13
  %s27 = sld [smem:[%s26]]
  %s28 = scalar_lea.smem %s0, 14
  %s29 = sld [smem:[%s28]]
  %s30 = scalar_lea.smem %s0, 15
  %s31 = sld [smem:[%s30]]
  %s32 = scalar_lea.smem %s0, 16
  %s33 = sld [smem:[%s32]]
  %s34 = scalar_lea.smem %s0, 17
  %s35 = sld [smem:[%s34]]
  %s36 = scalar_lea.smem %s0, 18
  %s37 = sld [smem:[%s36]]
  %s38 = scalar_lea.smem %s0, 19
  %s39 = sld [smem:[%s38]]
  %s40 = scalar_lea.smem %s0, 20
  %s41 = sld [smem:[%s40]]
  %s42 = scalar_lea.smem %s0, 21
  %s43 = sld [smem:[%s42]]
  %s44 = scalar_lea.smem %s0, 22
  %s45 = sld [smem:[%s44]]
  %s46 = scalar_lea.smem %s0, 23
  %s47 = sld [smem:[%s46]]
  %s48 = scalar_lea.smem %s0, 24
  %s49 = sld [smem:[%s48]]
  %s50 = scalar_lea.smem %s0, 25
  %s51 = sld [smem:[%s50]]
  %s52 = scalar_lea.smem %s0, 26
  %s53 = sld [smem:[%s52]]
  %s54 = scalar_lea.smem %s0, 27
  %s55 = sld [smem:[%s54]]
  %s56 = scalar_lea.smem %s0, 28
  %s57 = sld [smem:[%s56]]
  %s58 = scalar_lea.smem %s0, 29
  %s59 = sld [smem:[%s58]]
  %s60 = scalar_lea.smem %s0, 30
  %s61 = sld [smem:[%s60]]
  %s62 = scalar_lea.smem %s0, 31
  %s63 = sld [smem:[%s62]]
  %s64 = scalar_lea.smem %s0, 32
  %s65 = sld [smem:[%s64]]
  %s66 = scalar_lea.smem %s0, 33
  %s67 = sld [smem:[%s66]]
  %68 = xla_tuple %s65, %s67
  %s69 = sld [smem:[#allocation0]]
  $region146: #{encoder_forward.1} parent=0
    _
  %s71 = ssub.s32 1, %s69
  %s72 = scalar_select 0, %s71, %s69
  $region1: #{encoder_forward.1} parent=0
    #allocation2 [shape = 'u8[1024]{0}', space=vmem, size = 0x400, scoped, tag = 'output window, operand 0, single buffered']
    #allocation3 [shape = 's32[1]{0}', space=sflag, size = 0x4, scoped, tag = 'scoped memory for encoder_forward.1']
    #allocation4 [shape = 'u8[1024]{0}', space=vmem, size = 0x400, scoped, tag = 'output window, operand 1, single buffered']
    #allocation5 [shape = 's32[1]{0}', space=sflag, size = 0x4, scoped, tag = 'scoped memory for encoder_forward.1']
    %73 = vsyncpa [#allocation3], 0
    %74 = vsyncpa [#allocation5], 0
    // Predicated region
    $region2: #{encoder_forward.1} parent=1 // pred_check
      _
    $region3: #{encoder_forward.1} parent=1 // pred_check_branch
      %76 = sbr.rel (0) target = $region5
    $region4: #{encoder_forward.1} parent=1 // pred_region
      _
    $region5: #{encoder_forward.1} parent=1 // pred_fallthru
      _
    // Predicated region
    $region6: #{encoder_forward.1} parent=1 // pred_check
      _
    $region7: #{encoder_forward.1} parent=1 // pred_check_branch
      %78 = sbr.rel (0) target = $region9
    $region8: #{encoder_forward.1} parent=1 // pred_region
      _
    $region9: #{encoder_forward.1} parent=1 // pred_fallthru
      _
    // Predicated region
    $region10: #{encoder_forward.1} parent=1 // pred_check
      _
    $region11: #{encoder_forward.1} parent=1 // pred_check_branch
      %80 = sbr.rel (0) target = $region13
    $region12: #{encoder_forward.1} parent=1 // pred_region
      _
    $region13: #{encoder_forward.1} parent=1 // pred_fallthru
      _
    // Predicated region
    $region14: #{encoder_forward.1} parent=1 // pred_check
      _
    $region15: #{encoder_forward.1} parent=1 // pred_check_branch
      %82 = sbr.rel (0) target = $region17
    $region16: #{encoder_forward.1} parent=1 // pred_region
      _
    $region17: #{encoder_forward.1} parent=1 // pred_fallthru
      _
    // Predicated region
    $region18: #{encoder_forward.1} parent=1 // pred_check
      _
    $region19: #{encoder_forward.1} parent=1 // pred_check_branch
      %84 = sbr.rel (0) target = $region21
    $region20: #{encoder_forward.1} parent=1 // pred_region
      _
    $region21: #{encoder_forward.1} parent=1 // pred_fallthru
      _
    // Predicated region
    $region22: #{encoder_forward.1} parent=1 // pred_check
      _
    $region23: #{encoder_forward.1} parent=1 // pred_check_branch
      %86 = sbr.rel (0) target = $region25
    $region24: #{encoder_forward.1} parent=1 // pred_region
      _
    $region25: #{encoder_forward.1} parent=1 // pred_fallthru
      _
    // Predicated region
    $region26: #{encoder_forward.1} parent=1 // pred_check
      _
    $region27: #{encoder_forward.1} parent=1 // pred_check_branch
      %88 = sbr.rel (0) target = $region29
    $region28: #{encoder_forward.1} parent=1 // pred_region
      _
    $region29: #{encoder_forward.1} parent=1 // pred_fallthru
      _
    // Predicated region
    $region30: #{encoder_forward.1} parent=1 // pred_check
      _
    $region31: #{encoder_forward.1} parent=1 // pred_check_branch
      %90 = sbr.rel (0) target = $region33
    $region32: #{encoder_forward.1} parent=1 // pred_region
      _
    $region33: #{encoder_forward.1} parent=1 // pred_fallthru
      _
    // Predicated region
    $region34: #{encoder_forward.1} parent=1 // pred_check
      _
    $region35: #{encoder_forward.1} parent=1 // pred_check_branch
      %92 = sbr.rel (0) target = $region37
    $region36: #{encoder_forward.1} parent=1 // pred_region
      _
    $region37: #{encoder_forward.1} parent=1 // pred_fallthru
      _
    // Predicated region
    $region38: #{encoder_forward.1} parent=1 // pred_check
      _
    $region39: #{encoder_forward.1} parent=1 // pred_check_branch
      %94 = sbr.rel (0) target = $region41
    $region40: #{encoder_forward.1} parent=1 // pred_region
      _
    $region41: #{encoder_forward.1} parent=1 // pred_fallthru
      _
    // Predicated region
    $region42: #{encoder_forward.1} parent=1 // pred_check
      _
    $region43: #{encoder_forward.1} parent=1 // pred_check_branch
      %96 = sbr.rel (0) target = $region45
    $region44: #{encoder_forward.1} parent=1 // pred_region
      _
    $region45: #{encoder_forward.1} parent=1 // pred_fallthru
      _
    // Predicated region
    $region46: #{encoder_forward.1} parent=1 // pred_check
      _
    $region47: #{encoder_forward.1} parent=1 // pred_check_branch
      %98 = sbr.rel (0) target = $region49
    $region48: #{encoder_forward.1} parent=1 // pred_region
      _
    $region49: #{encoder_forward.1} parent=1 // pred_fallthru
      _
    // Predicated region
    $region50: #{encoder_forward.1} parent=1 // pred_check
      _
    $region51: #{encoder_forward.1} parent=1 // pred_check_branch
      %100 = sbr.rel (0) target = $region53
    $region52: #{encoder_forward.1} parent=1 // pred_region
      _
    $region53: #{encoder_forward.1} parent=1 // pred_fallthru
      _
    // Predicated region
    $region54: #{encoder_forward.1} parent=1 // pred_check
      _
    $region55: #{encoder_forward.1} parent=1 // pred_check_branch
      %102 = sbr.rel (0) target = $region57
    $region56: #{encoder_forward.1} parent=1 // pred_region
      _
    $region57: #{encoder_forward.1} parent=1 // pred_fallthru
      _
    // Predicated region
    $region58: #{encoder_forward.1} parent=1 // pred_check
      _
    $region59: #{encoder_forward.1} parent=1 // pred_check_branch
      %104 = sbr.rel (0) target = $region61
    $region60: #{encoder_forward.1} parent=1 // pred_region
      _
    $region61: #{encoder_forward.1} parent=1 // pred_fallthru
      _
    // Predicated region
    $region62: #{encoder_forward.1} parent=1 // pred_check
      _
    $region63: #{encoder_forward.1} parent=1 // pred_check_branch
      %106 = sbr.rel (0) target = $region65
    $region64: #{encoder_forward.1} parent=1 // pred_region
      _
    $region65: #{encoder_forward.1} parent=1 // pred_fallthru
      _
    // Predicated region
    $region66: #{encoder_forward.1} parent=1 // pred_check
      _
    $region67: #{encoder_forward.1} parent=1 // pred_check_branch
      %108 = sbr.rel (0) target = $region69
    $region68: #{encoder_forward.1} parent=1 // pred_region
      _
    $region69: #{encoder_forward.1} parent=1 // pred_fallthru
      _
    // Predicated region
    $region70: #{encoder_forward.1} parent=1 // pred_check
      _
    $region71: #{encoder_forward.1} parent=1 // pred_check_branch
      %110 = sbr.rel (0) target = $region73
    $region72: #{encoder_forward.1} parent=1 // pred_region
      _
    $region73: #{encoder_forward.1} parent=1 // pred_fallthru
      _
    // Predicated region
    $region74: #{encoder_forward.1} parent=1 // pred_check
      _
    $region75: #{encoder_forward.1} parent=1 // pred_check_branch
      %112 = sbr.rel (0) target = $region77
    $region76: #{encoder_forward.1} parent=1 // pred_region
      _
    $region77: #{encoder_forward.1} parent=1 // pred_fallthru
      _
    // Predicated region
    $region78: #{encoder_forward.1} parent=1 // pred_check
      _
    $region79: #{encoder_forward.1} parent=1 // pred_check_branch
      %114 = sbr.rel (0) target = $region81
    $region80: #{encoder_forward.1} parent=1 // pred_region
      _
    $region81: #{encoder_forward.1} parent=1 // pred_fallthru
      _
    // Predicated region
    $region82: #{encoder_forward.1} parent=1 // pred_check
      _
    $region83: #{encoder_forward.1} parent=1 // pred_check_branch
      %116 = sbr.rel (0) target = $region85
    $region84: #{encoder_forward.1} parent=1 // pred_region
      _
    $region85: #{encoder_forward.1} parent=1 // pred_fallthru
      _
    // Predicated region
    $region86: #{encoder_forward.1} parent=1 // pred_check
      _
    $region87: #{encoder_forward.1} parent=1 // pred_check_branch
      %118 = sbr.rel (0) target = $region89
    $region88: #{encoder_forward.1} parent=1 // pred_region
      _
    $region89: #{encoder_forward.1} parent=1 // pred_fallthru
      _
    // Predicated region
    $region90: #{encoder_forward.1} parent=1 // pred_check
      _
    $region91: #{encoder_forward.1} parent=1 // pred_check_branch
      %120 = sbr.rel (0) target = $region93
    $region92: #{encoder_forward.1} parent=1 // pred_region
      _
    $region93: #{encoder_forward.1} parent=1 // pred_fallthru
      _
    // Predicated region
    $region94: #{encoder_forward.1} parent=1 // pred_check
      _
    $region95: #{encoder_forward.1} parent=1 // pred_check_branch
      %122 = sbr.rel (0) target = $region97
    $region96: #{encoder_forward.1} parent=1 // pred_region
      _
    $region97: #{encoder_forward.1} parent=1 // pred_fallthru
      _
    // Predicated region
    $region98: #{encoder_forward.1} parent=1 // pred_check
      _
    $region99: #{encoder_forward.1} parent=1 // pred_check_branch
      %124 = sbr.rel (0) target = $region101
    $region100: #{encoder_forward.1} parent=1 // pred_region
      _
    $region101: #{encoder_forward.1} parent=1 // pred_fallthru
      _
    // Predicated region
    $region102: #{encoder_forward.1} parent=1 // pred_check
      _
    $region103: #{encoder_forward.1} parent=1 // pred_check_branch
      %126 = sbr.rel (0) target = $region105
    $region104: #{encoder_forward.1} parent=1 // pred_region
      _
    $region105: #{encoder_forward.1} parent=1 // pred_fallthru
      _
    // Predicated region
    $region106: #{encoder_forward.1} parent=1 // pred_check
      _
    $region107: #{encoder_forward.1} parent=1 // pred_check_branch
      %128 = sbr.rel (0) target = $region109
    $region108: #{encoder_forward.1} parent=1 // pred_region
      _
    $region109: #{encoder_forward.1} parent=1 // pred_fallthru
      _
    // Predicated region
    $region110: #{encoder_forward.1} parent=1 // pred_check
      _
    $region111: #{encoder_forward.1} parent=1 // pred_check_branch
      %130 = sbr.rel (0) target = $region113
    $region112: #{encoder_forward.1} parent=1 // pred_region
      _
    $region113: #{encoder_forward.1} parent=1 // pred_fallthru
      _
    // Predicated region
    $region114: #{encoder_forward.1} parent=1 // pred_check
      _
    $region115: #{encoder_forward.1} parent=1 // pred_check_branch
      %132 = sbr.rel (0) target = $region117
    $region116: #{encoder_forward.1} parent=1 // pred_region
      _
    $region117: #{encoder_forward.1} parent=1 // pred_fallthru
      _
    // Predicated region
    $region118: #{encoder_forward.1} parent=1 // pred_check
      _
    $region119: #{encoder_forward.1} parent=1 // pred_check_branch
      %134 = sbr.rel (0) target = $region121
    $region120: #{encoder_forward.1} parent=1 // pred_region
      _
    $region121: #{encoder_forward.1} parent=1 // pred_fallthru
      _
    // Predicated region
    $region122: #{encoder_forward.1} parent=1 // pred_check
      _
    $region123: #{encoder_forward.1} parent=1 // pred_check_branch
      %136 = sbr.rel (0) target = $region125
    $region124: #{encoder_forward.1} parent=1 // pred_region
      _
    $region125: #{encoder_forward.1} parent=1 // pred_fallthru
      _
    // Predicated region
    $region126: #{encoder_forward.1} parent=1 // pred_check
      _
    $region127: #{encoder_forward.1} parent=1 // pred_check_branch
      %138 = sbr.rel (0) target = $region129
    $region128: #{encoder_forward.1} parent=1 // pred_region
      _
    $region129: #{encoder_forward.1} parent=1 // pred_fallthru
      _
    %v140 = vld [vmem:[%s1] sm:$0xff]
    %v141 = vld [vmem:[%s1 + $0x8] sm:$0xff]
    %v142 = vld [vmem:[%s1 + $0x10] sm:$0xff]
    %v143 = vld [vmem:[%s1 + $0x18] sm:$0xff]
    %v144 = vld [vmem:[%s1 + $0x20] sm:$0xff]
    %v145 = vld [vmem:[%s1 + $0x28] sm:$0xff]
    %v146 = vld [vmem:[%s1 + $0x30] sm:$0xff]
    %v147 = vld [vmem:[%s1 + $0x38] sm:$0xff]
    %v148 = vld [vmem:[%s1 + $0x40] sm:$0xff]
    %v149 = vld [vmem:[%s1 + $0x48] sm:$0xff]
    %v150 = vld [vmem:[%s1 + $0x50] sm:$0xff]
    %v151 = vld [vmem:[%s1 + $0x58] sm:$0xff]
    %v152 = vld [vmem:[%s1 + $0x60] sm:$0xff]
    %v153 = vld [vmem:[%s1 + $0x68] sm:$0xff]
    %v154 = vld [vmem:[%s1 + $0x70] sm:$0xff]
    %v155 = vld [vmem:[%s1 + $0x78] sm:$0xff]
    %v156 = vld [vmem:[%s1 + $0x80] sm:$0xff]
    %v157 = vld [vmem:[%s1 + $0x88] sm:$0xff]
    %v158 = vld [vmem:[%s1 + $0x90] sm:$0xff]
    %v159 = vld [vmem:[%s1 + $0x98] sm:$0xff]
    %v160 = vld [vmem:[%s1 + $0xa0] sm:$0xff]
    %v161 = vld [vmem:[%s1 + $0xa8] sm:$0xff]
    %v162 = vld [vmem:[%s1 + $0xb0] sm:$0xff]
    %v163 = vld [vmem:[%s1 + $0xb8] sm:$0xff]
    %v164 = vld [vmem:[%s1 + $0xc0] sm:$0xff]
    %v165 = vld [vmem:[%s1 + $0xc8] sm:$0xff]
    %v166 = vld [vmem:[%s1 + $0xd0] sm:$0xff]
    %v167 = vld [vmem:[%s1 + $0xd8] sm:$0xff]
    %v168 = vld [vmem:[%s1 + $0xe0] sm:$0xff]
    %v169 = vld [vmem:[%s1 + $0xe8] sm:$0xff]
    %v170 = vld [vmem:[%s1 + $0xf0] sm:$0xff]
    %v171 = vld [vmem:[%s1 + $0xf8] sm:$0xff]
    %v172 = vld [vmem:[%s3] sm:$0xff]
    %v173 = vld [vmem:[%s3 + $0x8] sm:$0xff]
    %v174 = vld [vmem:[%s3 + $0x10] sm:$0xff]
    %v175 = vld [vmem:[%s3 + $0x18] sm:$0xff]
    %v176 = vld [vmem:[%s3 + $0x20] sm:$0xff]
    %v177 = vld [vmem:[%s3 + $0x28] sm:$0xff]
    %v178 = vld [vmem:[%s3 + $0x30] sm:$0xff]
    %v179 = vld [vmem:[%s3 + $0x38] sm:$0xff]
    %180 = vmatprep.subr.mxu0 %v171
    %181 = vmatpush1.msra.mxu0 %v170
    %182 = vmatprep.subr.mxu0 %v169
    %183 = vmatpush1.msra.mxu0 %v168
    %184 = vmatprep.subr.mxu0 %v167
    %185 = vmatpush1.msra.mxu0 %v166
    %186 = vmatprep.subr.mxu0 %v165
    %187 = vmatpush1.msra.mxu0 %v164
    %188 = vmatprep.subr.mxu0 %v163
    %189 = vmatpush1.msra.mxu0 %v162
    %190 = vmatprep.subr.mxu0 %v161
    %191 = vmatpush1.msra.mxu0 %v160
    %192 = vmatprep.subr.mxu0 %v159
    %193 = vmatpush1.msra.mxu0 %v158
    %194 = vmatprep.subr.mxu0 %v157
    %195 = vmatpush1.msra.mxu0 %v156
    %196 = vmatprep.subr.mxu0 %v155
    %197 = vmatpush1.msra.mxu0 %v154
    %198 = vmatprep.subr.mxu0 %v153
    %199 = vmatpush1.msra.mxu0 %v152
    %200 = vmatprep.subr.mxu0 %v151
    %201 = vmatpush1.msra.mxu0 %v150
    %202 = vmatprep.subr.mxu0 %v149
    %203 = vmatpush1.msra.mxu0 %v148
    %204 = vmatprep.subr.mxu0 %v147
    %205 = vmatpush1.msra.mxu0 %v146
    %206 = vmatprep.subr.mxu0 %v145
    %207 = vmatpush1.msra.mxu0 %v144
    %208 = vmatprep.subr.mxu0 %v143
    %209 = vmatpush1.msra.mxu0 %v142
    %210 = vmatprep.subr.mxu0 %v141
    %211 = vmatpush1.msra.mxu0 %v140
    %212 = vmatprep.subr.mxu0 0.0
    %213 = vmatpush2.msra.mxu0 0.0
    %214 = vmatprep.subr.mxu0 0.0
    %215 = vmatpush2.msra.mxu0 0.0
    %216 = vmatprep.subr.mxu0 0.0
    %217 = vmatpush2.msra.mxu0 0.0
    %218 = vmatprep.subr.mxu0 0.0
    %219 = vmatpush2.msra.mxu0 0.0
    %220 = vmatprep.subr.mxu0 0.0
    %221 = vmatpush2.msra.mxu0 0.0
    %222 = vmatprep.subr.mxu0 0.0
    %223 = vmatpush2.msra.mxu0 0.0
    %224 = vmatprep.subr.mxu0 0.0
    %225 = vmatpush2.msra.mxu0 0.0
    %226 = vmatprep.subr.mxu0 0.0
    %227 = vmatpush2.msra.mxu0 0.0
    %228 = vmatprep.subr.mxu0 0.0
    %229 = vmatpush2.msra.mxu0 0.0
    %230 = vmatprep.subr.mxu0 0.0
    %231 = vmatpush2.msra.mxu0 0.0
    %232 = vmatprep.subr.mxu0 0.0
    %233 = vmatpush2.msra.mxu0 0.0
    %234 = vmatprep.subr.mxu0 0.0
    %235 = vmatpush2.msra.mxu0 0.0
    %236 = vmatprep.subr.mxu0 0.0
    %237 = vmatpush2.msra.mxu0 0.0
    %238 = vmatprep.subr.mxu0 0.0
    %239 = vmatpush2.msra.mxu0 0.0
    %240 = vmatprep.subr.mxu0 0.0
    %241 = vmatpush2.msra.mxu0 0.0
    %242 = vmatprep.subr.mxu0 0.0
    %243 = vmatpush2.msra.mxu0 0.0
    %244 = vmatprep.mubr.f32.mxu0 0.0
    %245 = vmatmul.mubr.f32.gmra.mxu0 %v172
    %v246 = vpop.f32.mrf.mxu0
    %v247 = vadd.f32 0.0, %v246
    %v248 = vpop.f32.mrf.mxu0
    %v249 = vadd.f32 0.0, %v248
    %250 = vmatprep.mubr.f32.mxu0 0.0
    %251 = vmatmul.mubr.f32.gmra.mxu0 %v173
    %v252 = vpop.f32.mrf.mxu0
    %v253 = vadd.f32 0.0, %v252
    %v254 = vpop.f32.mrf.mxu0
    %v255 = vadd.f32 0.0, %v254
    %256 = vmatprep.mubr.f32.mxu0 0.0
    %257 = vmatmul.mubr.f32.gmra.mxu0 %v174
    %v258 = vpop.f32.mrf.mxu0
    %v259 = vadd.f32 0.0, %v258
    %v260 = vpop.f32.mrf.mxu0
    %v261 = vadd.f32 0.0, %v260
    %262 = vmatprep.mubr.f32.mxu0 0.0
    %263 = vmatmul.mubr.f32.gmra.mxu0 %v175
    %v264 = vpop.f32.mrf.mxu0
    %v265 = vadd.f32 0.0, %v264
    %v266 = vpop.f32.mrf.mxu0
    %v267 = vadd.f32 0.0, %v266
    %268 = vmatprep.mubr.f32.mxu0 0.0
    %269 = vmatmul.mubr.f32.gmra.mxu0 %v176
    %v270 = vpop.f32.mrf.mxu0
    %v271 = vadd.f32 0.0, %v270
    %v272 = vpop.f32.mrf.mxu0
    %v273 = vadd.f32 0.0, %v272
    %274 = vmatprep.mubr.f32.mxu0 0.0
    %275 = vmatmul.mubr.f32.gmra.mxu0 %v177
    %v276 = vpop.f32.mrf.mxu0
    %v277 = vadd.f32 0.0, %v276
    %v278 = vpop.f32.mrf.mxu0
    %v279 = vadd.f32 0.0, %v278
    %280 = vmatprep.mubr.f32.mxu0 0.0
    %281 = vmatmul.mubr.f32.gmra.mxu0 %v178
    %v282 = vpop.f32.mrf.mxu0
    %v283 = vadd.f32 0.0, %v282
    %v284 = vpop.f32.mrf.mxu0
    %v285 = vadd.f32 0.0, %v284
    %286 = vmatprep.mubr.f32.mxu0 0.0
    %287 = vmatmul.mubr.f32.gmra.mxu0 %v179
    %v288 = vpop.f32.mrf.mxu0
    %v289 = vadd.f32 0.0, %v288
    %v290 = vpop.f32.mrf.mxu0
    %v291 = vadd.f32 0.0, %v290
    %292 = vdwg.mxu0
    %v293 = vpack.c.bf16 %v253, %v247
    %v294 = vpack.c.bf16 %v255, %v249
    %v295 = vpack.c.bf16 %v265, %v259
    %v296 = vpack.c.bf16 %v267, %v261
    %v297 = vpack.c.bf16 %v277, %v271
    %v298 = vpack.c.bf16 %v279, %v273
    %v299 = vpack.c.bf16 %v289, %v283
    %v300 = vpack.c.bf16 %v291, %v285
    %v301 = vld [vmem:[%s5] sm:$0xff]
    %v302 = vld [vmem:[%s5 + $0x8] sm:$0xff]
    %v303 = vld [vmem:[%s5 + $0x10] sm:$0xff]
    %v304 = vld [vmem:[%s5 + $0x18] sm:$0xff]
    %v305 = vld [vmem:[%s5 + $0x20] sm:$0xff]
    %v306 = vld [vmem:[%s5 + $0x28] sm:$0xff]
    %v307 = vld [vmem:[%s5 + $0x30] sm:$0xff]
    %v308 = vld [vmem:[%s5 + $0x38] sm:$0xff]
    %v309 = vld [vmem:[%s5 + $0x40] sm:$0xff]
    %v310 = vld [vmem:[%s5 + $0x48] sm:$0xff]
    %v311 = vld [vmem:[%s5 + $0x50] sm:$0xff]
    %v312 = vld [vmem:[%s5 + $0x58] sm:$0xff]
    %v313 = vld [vmem:[%s5 + $0x60] sm:$0xff]
    %v314 = vld [vmem:[%s5 + $0x68] sm:$0xff]
    %v315 = vld [vmem:[%s5 + $0x70] sm:$0xff]
    %v316 = vld [vmem:[%s5 + $0x78] sm:$0xff]
    %v317 = vld [vmem:[%s5 + $0x80] sm:$0xff]
    %v318 = vld [vmem:[%s5 + $0x88] sm:$0xff]
    %v319 = vld [vmem:[%s5 + $0x90] sm:$0xff]
    %v320 = vld [vmem:[%s5 + $0x98] sm:$0xff]
    %v321 = vld [vmem:[%s5 + $0xa0] sm:$0xff]
    %v322 = vld [vmem:[%s5 + $0xa8] sm:$0xff]
    %v323 = vld [vmem:[%s5 + $0xb0] sm:$0xff]
    %v324 = vld [vmem:[%s5 + $0xb8] sm:$0xff]
    %v325 = vld [vmem:[%s5 + $0xc0] sm:$0xff]
    %v326 = vld [vmem:[%s5 + $0xc8] sm:$0xff]
    %v327 = vld [vmem:[%s5 + $0xd0] sm:$0xff]
    %v328 = vld [vmem:[%s5 + $0xd8] sm:$0xff]
    %v329 = vld [vmem:[%s5 + $0xe0] sm:$0xff]
    %v330 = vld [vmem:[%s5 + $0xe8] sm:$0xff]
    %v331 = vld [vmem:[%s5 + $0xf0] sm:$0xff]
    %v332 = vld [vmem:[%s5 + $0xf8] sm:$0xff]
    %s333 = scalar_lea.vmem %s3, 64
    %v334 = vld [vmem:[%s333] sm:$0xff]
    %v335 = vld [vmem:[%s333 + $0x8] sm:$0xff]
    %v336 = vld [vmem:[%s333 + $0x10] sm:$0xff]
    %v337 = vld [vmem:[%s333 + $0x18] sm:$0xff]
    %v338 = vld [vmem:[%s333 + $0x20] sm:$0xff]
    %v339 = vld [vmem:[%s333 + $0x28] sm:$0xff]
    %v340 = vld [vmem:[%s333 + $0x30] sm:$0xff]
    %v341 = vld [vmem:[%s333 + $0x38] sm:$0xff]
    %342 = vmatprep.subr.mxu0 %v171
    %343 = vmatpush1.msra.mxu0 %v170
    %344 = vmatprep.subr.mxu0 %v169
    %345 = vmatpush1.msra.mxu0 %v168
    %346 = vmatprep.subr.mxu0 %v167
    %347 = vmatpush1.msra.mxu0 %v166
    %348 = vmatprep.subr.mxu0 %v165
    %349 = vmatpush1.msra.mxu0 %v164
    %350 = vmatprep.subr.mxu0 %v163
    %351 = vmatpush1.msra.mxu0 %v162
    %352 = vmatprep.subr.mxu0 %v161
    %353 = vmatpush1.msra.mxu0 %v160
    %354 = vmatprep.subr.mxu0 %v159
    %355 = vmatpush1.msra.mxu0 %v158
    %356 = vmatprep.subr.mxu0 %v157
    %357 = vmatpush1.msra.mxu0 %v156
    %358 = vmatprep.subr.mxu0 %v155
    %359 = vmatpush1.msra.mxu0 %v154
    %360 = vmatprep.subr.mxu0 %v153
    %361 = vmatpush1.msra.mxu0 %v152
    %362 = vmatprep.subr.mxu0 %v151
    %363 = vmatpush1.msra.mxu0 %v150
    %364 = vmatprep.subr.mxu0 %v149
    %365 = vmatpush1.msra.mxu0 %v148
    %366 = vmatprep.subr.mxu0 %v147
    %367 = vmatpush1.msra.mxu0 %v146
    %368 = vmatprep.subr.mxu0 %v145
    %369 = vmatpush1.msra.mxu0 %v144
    %370 = vmatprep.subr.mxu0 %v143
    %371 = vmatpush1.msra.mxu0 %v142
    %372 = vmatprep.subr.mxu0 %v141
    %373 = vmatpush1.msra.mxu0 %v140
    %374 = vmatprep.subr.mxu0 0.0
    %375 = vmatpush2.msra.mxu0 0.0
    %376 = vmatprep.subr.mxu0 0.0
    %377 = vmatpush2.msra.mxu0 0.0
    %378 = vmatprep.subr.mxu0 0.0
    %379 = vmatpush2.msra.mxu0 0.0
    %380 = vmatprep.subr.mxu0 0.0
    %381 = vmatpush2.msra.mxu0 0.0
    %382 = vmatprep.subr.mxu0 0.0
    %383 = vmatpush2.msra.mxu0 0.0
    %384 = vmatprep.subr.mxu0 0.0
    %385 = vmatpush2.msra.mxu0 0.0
    %386 = vmatprep.subr.mxu0 0.0
    %387 = vmatpush2.msra.mxu0 0.0
    %388 = vmatprep.subr.mxu0 0.0
    %389 = vmatpush2.msra.mxu0 0.0
    %390 = vmatprep.subr.mxu0 0.0
    %391 = vmatpush2.msra.mxu0 0.0
    %392 = vmatprep.subr.mxu0 0.0
    %393 = vmatpush2.msra.mxu0 0.0
    %394 = vmatprep.subr.mxu0 0.0
    %395 = vmatpush2.msra.mxu0 0.0
    %396 = vmatprep.subr.mxu0 0.0
    %397 = vmatpush2.msra.mxu0 0.0
    %398 = vmatprep.subr.mxu0 0.0
    %399 = vmatpush2.msra.mxu0 0.0
    %400 = vmatprep.subr.mxu0 0.0
    %401 = vmatpush2.msra.mxu0 0.0
    %402 = vmatprep.subr.mxu0 0.0
    %403 = vmatpush2.msra.mxu0 0.0
    %404 = vmatprep.subr.mxu0 0.0
    %405 = vmatpush2.msra.mxu0 0.0
    %406 = vmatprep.mubr.f32.mxu0 0.0
    %407 = vmatmul.mubr.f32.gmra.mxu0 %v334
    %v408 = vpop.f32.mrf.mxu0
    %v409 = vadd.f32 0.0, %v408
    %v410 = vpop.f32.mrf.mxu0
    %v411 = vadd.f32 0.0, %v410
    %412 = vmatprep.mubr.f32.mxu0 0.0
    %413 = vmatmul.mubr.f32.gmra.mxu0 %v335
    %v414 = vpop.f32.mrf.mxu0
    %v415 = vadd.f32 0.0, %v414
    %v416 = vpop.f32.mrf.mxu0
    %v417 = vadd.f32 0.0, %v416
    %418 = vmatprep.mubr.f32.mxu0 0.0
    %419 = vmatmul.mubr.f32.gmra.mxu0 %v336
    %v420 = vpop.f32.mrf.mxu0
    %v421 = vadd.f32 0.0, %v420
    %v422 = vpop.f32.mrf.mxu0
    %v423 = vadd.f32 0.0, %v422
    %424 = vmatprep.mubr.f32.mxu0 0.0
    %425 = vmatmul.mubr.f32.gmra.mxu0 %v337
    %v426 = vpop.f32.mrf.mxu0
    %v427 = vadd.f32 0.0, %v426
    %v428 = vpop.f32.mrf.mxu0
    %v429 = vadd.f32 0.0, %v428
    %430 = vmatprep.mubr.f32.mxu0 0.0
    %431 = vmatmul.mubr.f32.gmra.mxu0 %v338
    %v432 = vpop.f32.mrf.mxu0
    %v433 = vadd.f32 0.0, %v432
    %v434 = vpop.f32.mrf.mxu0
    %v435 = vadd.f32 0.0, %v434
    %436 = vmatprep.mubr.f32.mxu0 0.0
    %437 = vmatmul.mubr.f32.gmra.mxu0 %v339
    %v438 = vpop.f32.mrf.mxu0
    %v439 = vadd.f32 0.0, %v438
    %v440 = vpop.f32.mrf.mxu0
    %v441 = vadd.f32 0.0, %v440
    %442 = vmatprep.mubr.f32.mxu0 0.0
    %443 = vmatmul.mubr.f32.gmra.mxu0 %v340
    %v444 = vpop.f32.mrf.mxu0
    %v445 = vadd.f32 0.0, %v444
    %v446 = vpop.f32.mrf.mxu0
    %v447 = vadd.f32 0.0, %v446
    %448 = vmatprep.mubr.f32.mxu0 0.0
    %449 = vmatmul.mubr.f32.gmra.mxu0 %v341
    %v450 = vpop.f32.mrf.mxu0
    %v451 = vadd.f32 0.0, %v450
    %v452 = vpop.f32.mrf.mxu0
    %v453 = vadd.f32 0.0, %v452
    %454 = vdwg.mxu0
    %v455 = vpack.c.bf16 %v415, %v409
    %v456 = vpack.c.bf16 %v417, %v411
    %v457 = vpack.c.bf16 %v427, %v421
    %v458 = vpack.c.bf16 %v429, %v423
    %v459 = vpack.c.bf16 %v439, %v433
    %v460 = vpack.c.bf16 %v441, %v435
    %v461 = vpack.c.bf16 %v451, %v445
    %v462 = vpack.c.bf16 %v453, %v447
    %s463 = scalar_lea.vmem %s5, 256
    %v464 = vld [vmem:[%s463] sm:$0xff]
    %v465 = vld [vmem:[%s463 + $0x8] sm:$0xff]
    %v466 = vld [vmem:[%s463 + $0x10] sm:$0xff]
    %v467 = vld [vmem:[%s463 + $0x18] sm:$0xff]
    %v468 = vld [vmem:[%s463 + $0x20] sm:$0xff]
    %v469 = vld [vmem:[%s463 + $0x28] sm:$0xff]
    %v470 = vld [vmem:[%s463 + $0x30] sm:$0xff]
    %v471 = vld [vmem:[%s463 + $0x38] sm:$0xff]
    %v472 = vld [vmem:[%s463 + $0x40] sm:$0xff]
    %v473 = vld [vmem:[%s463 + $0x48] sm:$0xff]
    %v474 = vld [vmem:[%s463 + $0x50] sm:$0xff]
    %v475 = vld [vmem:[%s463 + $0x58] sm:$0xff]
    %v476 = vld [vmem:[%s463 + $0x60] sm:$0xff]
    %v477 = vld [vmem:[%s463 + $0x68] sm:$0xff]
    %v478 = vld [vmem:[%s463 + $0x70] sm:$0xff]
    %v479 = vld [vmem:[%s463 + $0x78] sm:$0xff]
    %v480 = vld [vmem:[%s463 + $0x80] sm:$0xff]
    %v481 = vld [vmem:[%s463 + $0x88] sm:$0xff]
    %v482 = vld [vmem:[%s463 + $0x90] sm:$0xff]
    %v483 = vld [vmem:[%s463 + $0x98] sm:$0xff]
    %v484 = vld [vmem:[%s463 + $0xa0] sm:$0xff]
    %v485 = vld [vmem:[%s463 + $0xa8] sm:$0xff]
    %v486 = vld [vmem:[%s463 + $0xb0] sm:$0xff]
    %v487 = vld [vmem:[%s463 + $0xb8] sm:$0xff]
    %v488 = vld [vmem:[%s463 + $0xc0] sm:$0xff]
    %v489 = vld [vmem:[%s463 + $0xc8] sm:$0xff]
    %v490 = vld [vmem:[%s463 + $0xd0] sm:$0xff]
    %v491 = vld [vmem:[%s463 + $0xd8] sm:$0xff]
    %v492 = vld [vmem:[%s463 + $0xe0] sm:$0xff]
    %v493 = vld [vmem:[%s463 + $0xe8] sm:$0xff]
    %v494 = vld [vmem:[%s463 + $0xf0] sm:$0xff]
    %v495 = vld [vmem:[%s463 + $0xf8] sm:$0xff]
    %v528 = vunpack.c.l.b16 %v464
    %v529 = vunpack.c.h.b16 %v464
    %v530 = vunpack.c.l.b16 %v465
    %v531 = vunpack.c.h.b16 %v465
    %v532 = vunpack.c.l.b16 %v466
    %v533 = vunpack.c.h.b16 %v466
    %v534 = vunpack.c.l.b16 %v467
    %v535 = vunpack.c.h.b16 %v467
    %v536 = vunpack.c.l.b16 %v468
    %v537 = vunpack.c.h.b16 %v468
    %v538 = vunpack.c.l.b16 %v469
    %v539 = vunpack.c.h.b16 %v469
    %v540 = vunpack.c.l.b16 %v470
    %v541 = vunpack.c.h.b16 %v470
    %v542 = vunpack.c.l.b16 %v471
    %v543 = vunpack.c.h.b16 %v471
    %v544 = vunpack.c.l.b16 %v472
    %v545 = vunpack.c.h.b16 %v472
    %v546 = vunpack.c.l.b16 %v473
    %v547 = vunpack.c.h.b16 %v473
    %v548 = vunpack.c.l.b16 %v474
    %v549 = vunpack.c.h.b16 %v474
    %v550 = vunpack.c.l.b16 %v475
    %v551 = vunpack.c.h.b16 %v475
    %v552 = vunpack.c.l.b16 %v476
    %v553 = vunpack.c.h.b16 %v476
    %v554 = vunpack.c.l.b16 %v477
    %v555 = vunpack.c.h.b16 %v477
    %v556 = vunpack.c.l.b16 %v478
    %v557 = vunpack.c.h.b16 %v478
    %v558 = vunpack.c.l.b16 %v479
    %v559 = vunpack.c.h.b16 %v479
    %v560 = vunpack.c.l.b16 %v480
    %v561 = vunpack.c.h.b16 %v480
    %v562 = vunpack.c.l.b16 %v481
    %v563 = vunpack.c.h.b16 %v481
    %v564 = vunpack.c.l.b16 %v482
    %v565 = vunpack.c.h.b16 %v482
    %v566 = vunpack.c.l.b16 %v483
    %v567 = vunpack.c.h.b16 %v483
    %v568 = vunpack.c.l.b16 %v484
    %v569 = vunpack.c.h.b16 %v484
    %v570 = vunpack.c.l.b16 %v485
    %v571 = vunpack.c.h.b16 %v485
    %v572 = vunpack.c.l.b16 %v486
    %v573 = vunpack.c.h.b16 %v486
    %v574 = vunpack.c.l.b16 %v487
    %v575 = vunpack.c.h.b16 %v487
    %v576 = vunpack.c.l.b16 %v488
    %v577 = vunpack.c.h.b16 %v488
    %v578 = vunpack.c.l.b16 %v489
    %v579 = vunpack.c.h.b16 %v489
    %v580 = vunpack.c.l.b16 %v490
    %v581 = vunpack.c.h.b16 %v490
    %v582 = vunpack.c.l.b16 %v491
    %v583 = vunpack.c.h.b16 %v491
    %v584 = vunpack.c.l.b16 %v492
    %v585 = vunpack.c.h.b16 %v492
    %v586 = vunpack.c.l.b16 %v493
    %v587 = vunpack.c.h.b16 %v493
    %v588 = vunpack.c.l.b16 %v494
    %v589 = vunpack.c.h.b16 %v494
    %v590 = vunpack.c.l.b16 %v495
    %v591 = vunpack.c.h.b16 %v495
    %v592 = vpack.c.b16 %v530, %v528
    %v593 = vpack.c.b16 %v531, %v529
    %v594 = vpack.c.b16 %v534, %v532
    %v595 = vpack.c.b16 %v535, %v533
    %v596 = vpack.c.b16 %v538, %v536
    %v597 = vpack.c.b16 %v539, %v537
    %v598 = vpack.c.b16 %v542, %v540
    %v599 = vpack.c.b16 %v543, %v541
    %v600 = vpack.c.b16 %v546, %v544
    %v601 = vpack.c.b16 %v547, %v545
    %v602 = vpack.c.b16 %v550, %v548
    %v603 = vpack.c.b16 %v551, %v549
    %v604 = vpack.c.b16 %v554, %v552
    %v605 = vpack.c.b16 %v555, %v553
    %v606 = vpack.c.b16 %v558, %v556
    %v607 = vpack.c.b16 %v559, %v557
    %v608 = vpack.c.b16 %v562, %v560
    %v609 = vpack.c.b16 %v563, %v561
    %v610 = vpack.c.b16 %v566, %v564
    %v611 = vpack.c.b16 %v567, %v565
    %v612 = vpack.c.b16 %v570, %v568
    %v613 = vpack.c.b16 %v571, %v569
    %v614 = vpack.c.b16 %v574, %v572
    %v615 = vpack.c.b16 %v575, %v573
    %v616 = vpack.c.b16 %v578, %v576
    %v617 = vpack.c.b16 %v579, %v577
    %v618 = vpack.c.b16 %v582, %v580
    %v619 = vpack.c.b16 %v583, %v581
    %v620 = vpack.c.b16 %v586, %v584
    %v621 = vpack.c.b16 %v587, %v585
    %v622 = vpack.c.b16 %v590, %v588
    %v623 = vpack.c.b16 %v591, %v589
    %656 = vmatprep.subr.bf16.mxu0 %v607
    %657 = vmatpush1.bf16.msra.mxu0 %v606
    %658 = vmatprep.subr.bf16.mxu0 %v605
    %659 = vmatpush1.bf16.msra.mxu0 %v604
    %660 = vmatprep.subr.bf16.mxu0 %v603
    %661 = vmatpush1.bf16.msra.mxu0 %v602
    %662 = vmatprep.subr.bf16.mxu0 %v601
    %663 = vmatpush1.bf16.msra.mxu0 %v600
    %664 = vmatprep.subr.bf16.mxu0 %v599
    %665 = vmatpush1.bf16.msra.mxu0 %v598
    %666 = vmatprep.subr.bf16.mxu0 %v597
    %667 = vmatpush1.bf16.msra.mxu0 %v596
    %668 = vmatprep.subr.bf16.mxu0 %v595
    %669 = vmatpush1.bf16.msra.mxu0 %v594
    %670 = vmatprep.subr.bf16.mxu0 %v593
    %671 = vmatpush1.bf16.msra.mxu0 %v592
    %672 = vmatprep.subr.bf16.mxu0 %v623
    %673 = vmatpush2.bf16.msra.mxu0 %v622
    %674 = vmatprep.subr.bf16.mxu0 %v621
    %675 = vmatpush2.bf16.msra.mxu0 %v620
    %676 = vmatprep.subr.bf16.mxu0 %v619
    %677 = vmatpush2.bf16.msra.mxu0 %v618
    %678 = vmatprep.subr.bf16.mxu0 %v617
    %679 = vmatpush2.bf16.msra.mxu0 %v616
    %680 = vmatprep.subr.bf16.mxu0 %v615
    %681 = vmatpush2.bf16.msra.mxu0 %v614
    %682 = vmatprep.subr.bf16.mxu0 %v613
    %683 = vmatpush2.bf16.msra.mxu0 %v612
    %684 = vmatprep.subr.bf16.mxu0 %v611
    %685 = vmatpush2.bf16.msra.mxu0 %v610
    %686 = vmatprep.subr.bf16.mxu0 %v609
    %687 = vmatpush2.bf16.msra.mxu0 %v608
    %688 = vmatprep.mubr.bf16.mxu0 %v456
    %689 = vmatmul.mubr.bf16.gmra.mxu0 %v455
    %v690 = vpop.f32.mrf.mxu0
    %v691 = vadd.f32 0.0, %v690
    %v692 = vpop.f32.mrf.mxu0
    %v693 = vadd.f32 0.0, %v692
    %v694 = vpop.f32.mrf.mxu0
    %v695 = vadd.f32 0.0, %v694
    %v696 = vpop.f32.mrf.mxu0
    %v697 = vadd.f32 0.0, %v696
    %698 = vmatprep.mubr.bf16.mxu0 %v458
    %699 = vmatmul.mubr.bf16.gmra.mxu0 %v457
    %v700 = vpop.f32.mrf.mxu0
    %v701 = vadd.f32 0.0, %v700
    %v702 = vpop.f32.mrf.mxu0
    %v703 = vadd.f32 0.0, %v702
    %v704 = vpop.f32.mrf.mxu0
    %v705 = vadd.f32 0.0, %v704
    %v706 = vpop.f32.mrf.mxu0
    %v707 = vadd.f32 0.0, %v706
    %708 = vmatprep.mubr.bf16.mxu0 %v460
    %709 = vmatmul.mubr.bf16.gmra.mxu0 %v459
    %v710 = vpop.f32.mrf.mxu0
    %v711 = vadd.f32 0.0, %v710
    %v712 = vpop.f32.mrf.mxu0
    %v713 = vadd.f32 0.0, %v712
    %v714 = vpop.f32.mrf.mxu0
    %v715 = vadd.f32 0.0, %v714
    %v716 = vpop.f32.mrf.mxu0
    %v717 = vadd.f32 0.0, %v716
    %718 = vmatprep.mubr.bf16.mxu0 %v462
    %719 = vmatmul.mubr.bf16.gmra.mxu0 %v461
    %v720 = vpop.f32.mrf.mxu0
    %v721 = vadd.f32 0.0, %v720
    %v722 = vpop.f32.mrf.mxu0
    %v723 = vadd.f32 0.0, %v722
    %v724 = vpop.f32.mrf.mxu0
    %v725 = vadd.f32 0.0, %v724
    %v726 = vpop.f32.mrf.mxu0
    %v727 = vadd.f32 0.0, %v726
    %728 = vdwg.mxu0
    %v761 = vunpack.c.l.b16 %v301
    %v762 = vunpack.c.h.b16 %v301
    %v763 = vunpack.c.l.b16 %v302
    %v764 = vunpack.c.h.b16 %v302
    %v765 = vunpack.c.l.b16 %v303
    %v766 = vunpack.c.h.b16 %v303
    %v767 = vunpack.c.l.b16 %v304
    %v768 = vunpack.c.h.b16 %v304
    %v769 = vunpack.c.l.b16 %v305
    %v770 = vunpack.c.h.b16 %v305
    %v771 = vunpack.c.l.b16 %v306
    %v772 = vunpack.c.h.b16 %v306
    %v773 = vunpack.c.l.b16 %v307
    %v774 = vunpack.c.h.b16 %v307
    %v775 = vunpack.c.l.b16 %v308
    %v776 = vunpack.c.h.b16 %v308
    %v777 = vunpack.c.l.b16 %v309
    %v778 = vunpack.c.h.b16 %v309
    %v779 = vunpack.c.l.b16 %v310
    %v780 = vunpack.c.h.b16 %v310
    %v781 = vunpack.c.l.b16 %v311
    %v782 = vunpack.c.h.b16 %v311
    %v783 = vunpack.c.l.b16 %v312
    %v784 = vunpack.c.h.b16 %v312
    %v785 = vunpack.c.l.b16 %v313
    %v786 = vunpack.c.h.b16 %v313
    %v787 = vunpack.c.l.b16 %v314
    %v788 = vunpack.c.h.b16 %v314
    %v789 = vunpack.c.l.b16 %v315
    %v790 = vunpack.c.h.b16 %v315
    %v791 = vunpack.c.l.b16 %v316
    %v792 = vunpack.c.h.b16 %v316
    %v793 = vunpack.c.l.b16 %v317
    %v794 = vunpack.c.h.b16 %v317
    %v795 = vunpack.c.l.b16 %v318
    %v796 = vunpack.c.h.b16 %v318
    %v797 = vunpack.c.l.b16 %v319
    %v798 = vunpack.c.h.b16 %v319
    %v799 = vunpack.c.l.b16 %v320
    %v800 = vunpack.c.h.b16 %v320
    %v801 = vunpack.c.l.b16 %v321
    %v802 = vunpack.c.h.b16 %v321
    %v803 = vunpack.c.l.b16 %v322
    %v804 = vunpack.c.h.b16 %v322
    %v805 = vunpack.c.l.b16 %v323
    %v806 = vunpack.c.h.b16 %v323
    %v807 = vunpack.c.l.b16 %v324
    %v808 = vunpack.c.h.b16 %v324
    %v809 = vunpack.c.l.b16 %v325
    %v810 = vunpack.c.h.b16 %v325
    %v811 = vunpack.c.l.b16 %v326
    %v812 = vunpack.c.h.b16 %v326
    %v813 = vunpack.c.l.b16 %v327
    %v814 = vunpack.c.h.b16 %v327
    %v815 = vunpack.c.l.b16 %v328
    %v816 = vunpack.c.h.b16 %v328
    %v817 = vunpack.c.l.b16 %v329
    %v818 = vunpack.c.h.b16 %v329
    %v819 = vunpack.c.l.b16 %v330
    %v820 = vunpack.c.h.b16 %v330
    %v821 = vunpack.c.l.b16 %v331
    %v822 = vunpack.c.h.b16 %v331
    %v823 = vunpack.c.l.b16 %v332
    %v824 = vunpack.c.h.b16 %v332
    %v825 = vpack.c.b16 %v763, %v761
    %v826 = vpack.c.b16 %v764, %v762
    %v827 = vpack.c.b16 %v767, %v765
    %v828 = vpack.c.b16 %v768, %v766
    %v829 = vpack.c.b16 %v771, %v769
    %v830 = vpack.c.b16 %v772, %v770
    %v831 = vpack.c.b16 %v775, %v773
    %v832 = vpack.c.b16 %v776, %v774
    %v833 = vpack.c.b16 %v779, %v777
    %v834 = vpack.c.b16 %v780, %v778
    %v835 = vpack.c.b16 %v783, %v781
    %v836 = vpack.c.b16 %v784, %v782
    %v837 = vpack.c.b16 %v787, %v785
    %v838 = vpack.c.b16 %v788, %v786
    %v839 = vpack.c.b16 %v791, %v789
    %v840 = vpack.c.b16 %v792, %v790
    %v841 = vpack.c.b16 %v795, %v793
    %v842 = vpack.c.b16 %v796, %v794
    %v843 = vpack.c.b16 %v799, %v797
    %v844 = vpack.c.b16 %v800, %v798
    %v845 = vpack.c.b16 %v803, %v801
    %v846 = vpack.c.b16 %v804, %v802
    %v847 = vpack.c.b16 %v807, %v805
    %v848 = vpack.c.b16 %v808, %v806
    %v849 = vpack.c.b16 %v811, %v809
    %v850 = vpack.c.b16 %v812, %v810
    %v851 = vpack.c.b16 %v815, %v813
    %v852 = vpack.c.b16 %v816, %v814
    %v853 = vpack.c.b16 %v819, %v817
    %v854 = vpack.c.b16 %v820, %v818
    %v855 = vpack.c.b16 %v823, %v821
    %v856 = vpack.c.b16 %v824, %v822
    %889 = vmatprep.subr.bf16.mxu0 %v840
    %890 = vmatpush1.bf16.msra.mxu0 %v839
    %891 = vmatprep.subr.bf16.mxu0 %v838
    %892 = vmatpush1.bf16.msra.mxu0 %v837
    %893 = vmatprep.subr.bf16.mxu0 %v836
    %894 = vmatpush1.bf16.msra.mxu0 %v835
    %895 = vmatprep.subr.bf16.mxu0 %v834
    %896 = vmatpush1.bf16.msra.mxu0 %v833
    %897 = vmatprep.subr.bf16.mxu0 %v832
    %898 = vmatpush1.bf16.msra.mxu0 %v831
    %899 = vmatprep.subr.bf16.mxu0 %v830
    %900 = vmatpush1.bf16.msra.mxu0 %v829
    %901 = vmatprep.subr.bf16.mxu0 %v828
    %902 = vmatpush1.bf16.msra.mxu0 %v827
    %903 = vmatprep.subr.bf16.mxu0 %v826
    %904 = vmatpush1.bf16.msra.mxu0 %v825
    %905 = vmatprep.subr.bf16.mxu0 %v856
    %906 = vmatpush2.bf16.msra.mxu0 %v855
    %907 = vmatprep.subr.bf16.mxu0 %v854
    %908 = vmatpush2.bf16.msra.mxu0 %v853
    %909 = vmatprep.subr.bf16.mxu0 %v852
    %910 = vmatpush2.bf16.msra.mxu0 %v851
    %911 = vmatprep.subr.bf16.mxu0 %v850
    %912 = vmatpush2.bf16.msra.mxu0 %v849
    %913 = vmatprep.subr.bf16.mxu0 %v848
    %914 = vmatpush2.bf16.msra.mxu0 %v847
    %915 = vmatprep.subr.bf16.mxu0 %v846
    %916 = vmatpush2.bf16.msra.mxu0 %v845
    %917 = vmatprep.subr.bf16.mxu0 %v844
    %918 = vmatpush2.bf16.msra.mxu0 %v843
    %919 = vmatprep.subr.bf16.mxu0 %v842
    %920 = vmatpush2.bf16.msra.mxu0 %v841
    %921 = vmatprep.mubr.bf16.mxu0 %v294
    %922 = vmatmul.mubr.bf16.gmra.mxu0 %v293
    %v923 = vpop.f32.mrf.mxu0
    %v924 = vadd.f32 %v691, %v923
    %v925 = vpop.f32.mrf.mxu0
    %v926 = vadd.f32 %v693, %v925
    %v927 = vpop.f32.mrf.mxu0
    %v928 = vadd.f32 %v695, %v927
    %v929 = vpop.f32.mrf.mxu0
    %v930 = vadd.f32 %v697, %v929
    %931 = vmatprep.mubr.bf16.mxu0 %v296
    %932 = vmatmul.mubr.bf16.gmra.mxu0 %v295
    %v933 = vpop.f32.mrf.mxu0
    %v934 = vadd.f32 %v701, %v933
    %v935 = vpop.f32.mrf.mxu0
    %v936 = vadd.f32 %v703, %v935
    %v937 = vpop.f32.mrf.mxu0
    %v938 = vadd.f32 %v705, %v937
    %v939 = vpop.f32.mrf.mxu0
    %v940 = vadd.f32 %v707, %v939
    %941 = vmatprep.mubr.bf16.mxu0 %v298
    %942 = vmatmul.mubr.bf16.gmra.mxu0 %v297
    %v943 = vpop.f32.mrf.mxu0
    %v944 = vadd.f32 %v711, %v943
    %v945 = vpop.f32.mrf.mxu0
    %v946 = vadd.f32 %v713, %v945
    %v947 = vpop.f32.mrf.mxu0
    %v948 = vadd.f32 %v715, %v947
    %v949 = vpop.f32.mrf.mxu0
    %v950 = vadd.f32 %v717, %v949
    %951 = vmatprep.mubr.bf16.mxu0 %v300
    %952 = vmatmul.mubr.bf16.gmra.mxu0 %v299
    %v953 = vpop.f32.mrf.mxu0
    %v954 = vadd.f32 %v721, %v953
    %v955 = vpop.f32.mrf.mxu0
    %v956 = vadd.f32 %v723, %v955
    %v957 = vpop.f32.mrf.mxu0
    %v958 = vadd.f32 %v725, %v957
    %v959 = vpop.f32.mrf.mxu0
    %v960 = vadd.f32 %v727, %v959
    %961 = vdwg.mxu0
    %s962 = scalar_lea.vmem %s3, 128
    %v963 = vld [vmem:[%s962] sm:$0xff]
    %v964 = vld [vmem:[%s962 + $0x8] sm:$0xff]
    %v965 = vld [vmem:[%s962 + $0x10] sm:$0xff]
    %v966 = vld [vmem:[%s962 + $0x18] sm:$0xff]
    %v967 = vld [vmem:[%s962 + $0x20] sm:$0xff]
    %v968 = vld [vmem:[%s962 + $0x28] sm:$0xff]
    %v969 = vld [vmem:[%s962 + $0x30] sm:$0xff]
    %v970 = vld [vmem:[%s962 + $0x38] sm:$0xff]
    %971 = vmatprep.subr.mxu0 %v171
    %972 = vmatpush1.msra.mxu0 %v170
    %973 = vmatprep.subr.mxu0 %v169
    %974 = vmatpush1.msra.mxu0 %v168
    %975 = vmatprep.subr.mxu0 %v167
    %976 = vmatpush1.msra.mxu0 %v166
    %977 = vmatprep.subr.mxu0 %v165
    %978 = vmatpush1.msra.mxu0 %v164
    %979 = vmatprep.subr.mxu0 %v163
    %980 = vmatpush1.msra.mxu0 %v162
    %981 = vmatprep.subr.mxu0 %v161
    %982 = vmatpush1.msra.mxu0 %v160
    %983 = vmatprep.subr.mxu0 %v159
    %984 = vmatpush1.msra.mxu0 %v158
    %985 = vmatprep.subr.mxu0 %v157
    %986 = vmatpush1.msra.mxu0 %v156
    %987 = vmatprep.subr.mxu0 %v155
    %988 = vmatpush1.msra.mxu0 %v154
    %989 = vmatprep.subr.mxu0 %v153
    %990 = vmatpush1.msra.mxu0 %v152
    %991 = vmatprep.subr.mxu0 %v151
    %992 = vmatpush1.msra.mxu0 %v150
    %993 = vmatprep.subr.mxu0 %v149
    %994 = vmatpush1.msra.mxu0 %v148
    %995 = vmatprep.subr.mxu0 %v147
    %996 = vmatpush1.msra.mxu0 %v146
    %997 = vmatprep.subr.mxu0 %v145
    %998 = vmatpush1.msra.mxu0 %v144
    %999 = vmatprep.subr.mxu0 %v143
    %1000 = vmatpush1.msra.mxu0 %v142
    %1001 = vmatprep.subr.mxu0 %v141
    %1002 = vmatpush1.msra.mxu0 %v140
    %1003 = vmatprep.subr.mxu0 0.0
    %1004 = vmatpush2.msra.mxu0 0.0
    %1005 = vmatprep.subr.mxu0 0.0
    %1006 = vmatpush2.msra.mxu0 0.0
    %1007 = vmatprep.subr.mxu0 0.0
    %1008 = vmatpush2.msra.mxu0 0.0
    %1009 = vmatprep.subr.mxu0 0.0
    %1010 = vmatpush2.msra.mxu0 0.0
    %1011 = vmatprep.subr.mxu0 0.0
    %1012 = vmatpush2.msra.mxu0 0.0
    %1013 = vmatprep.subr.mxu0 0.0
    %1014 = vmatpush2.msra.mxu0 0.0
    %1015 = vmatprep.subr.mxu0 0.0
    %1016 = vmatpush2.msra.mxu0 0.0
    %1017 = vmatprep.subr.mxu0 0.0
    %1018 = vmatpush2.msra.mxu0 0.0
    %1019 = vmatprep.subr.mxu0 0.0
    %1020 = vmatpush2.msra.mxu0 0.0
    %1021 = vmatprep.subr.mxu0 0.0
    %1022 = vmatpush2.msra.mxu0 0.0
    %1023 = vmatprep.subr.mxu0 0.0
    %1024 = vmatpush2.msra.mxu0 0.0
    %1025 = vmatprep.subr.mxu0 0.0
    %1026 = vmatpush2.msra.mxu0 0.0
    %1027 = vmatprep.subr.mxu0 0.0
    %1028 = vmatpush2.msra.mxu0 0.0
    %1029 = vmatprep.subr.mxu0 0.0
    %1030 = vmatpush2.msra.mxu0 0.0
    %1031 = vmatprep.subr.mxu0 0.0
    %1032 = vmatpush2.msra.mxu0 0.0
    %1033 = vmatprep.subr.mxu0 0.0
    %1034 = vmatpush2.msra.mxu0 0.0
    %1035 = vmatprep.mubr.f32.mxu0 0.0
    %1036 = vmatmul.mubr.f32.gmra.mxu0 %v963
    %v1037 = vpop.f32.mrf.mxu0
    %v1038 = vadd.f32 0.0, %v1037
    %v1039 = vpop.f32.mrf.mxu0
    %v1040 = vadd.f32 0.0, %v1039
    %1041 = vmatprep.mubr.f32.mxu0 0.0
    %1042 = vmatmul.mubr.f32.gmra.mxu0 %v964
    %v1043 = vpop.f32.mrf.mxu0
    %v1044 = vadd.f32 0.0, %v1043
    %v1045 = vpop.f32.mrf.mxu0
    %v1046 = vadd.f32 0.0, %v1045
    %1047 = vmatprep.mubr.f32.mxu0 0.0
    %1048 = vmatmul.mubr.f32.gmra.mxu0 %v965
    %v1049 = vpop.f32.mrf.mxu0
    %v1050 = vadd.f32 0.0, %v1049
    %v1051 = vpop.f32.mrf.mxu0
    %v1052 = vadd.f32 0.0, %v1051
    %1053 = vmatprep.mubr.f32.mxu0 0.0
    %1054 = vmatmul.mubr.f32.gmra.mxu0 %v966
    %v1055 = vpop.f32.mrf.mxu0
    %v1056 = vadd.f32 0.0, %v1055
    %v1057 = vpop.f32.mrf.mxu0
    %v1058 = vadd.f32 0.0, %v1057
    %1059 = vmatprep.mubr.f32.mxu0 0.0
    %1060 = vmatmul.mubr.f32.gmra.mxu0 %v967
    %v1061 = vpop.f32.mrf.mxu0
    %v1062 = vadd.f32 0.0, %v1061
    %v1063 = vpop.f32.mrf.mxu0
    %v1064 = vadd.f32 0.0, %v1063
    %1065 = vmatprep.mubr.f32.mxu0 0.0
    %1066 = vmatmul.mubr.f32.gmra.mxu0 %v968
    %v1067 = vpop.f32.mrf.mxu0
    %v1068 = vadd.f32 0.0, %v1067
    %v1069 = vpop.f32.mrf.mxu0
    %v1070 = vadd.f32 0.0, %v1069
    %1071 = vmatprep.mubr.f32.mxu0 0.0
    %1072 = vmatmul.mubr.f32.gmra.mxu0 %v969
    %v1073 = vpop.f32.mrf.mxu0
    %v1074 = vadd.f32 0.0, %v1073
    %v1075 = vpop.f32.mrf.mxu0
    %v1076 = vadd.f32 0.0, %v1075
    %1077 = vmatprep.mubr.f32.mxu0 0.0
    %1078 = vmatmul.mubr.f32.gmra.mxu0 %v970
    %v1079 = vpop.f32.mrf.mxu0
    %v1080 = vadd.f32 0.0, %v1079
    %v1081 = vpop.f32.mrf.mxu0
    %v1082 = vadd.f32 0.0, %v1081
    %1083 = vdwg.mxu0
    %v1084 = vpack.c.bf16 %v1044, %v1038
    %v1085 = vpack.c.bf16 %v1046, %v1040
    %v1086 = vpack.c.bf16 %v1056, %v1050
    %v1087 = vpack.c.bf16 %v1058, %v1052
    %v1088 = vpack.c.bf16 %v1068, %v1062
    %v1089 = vpack.c.bf16 %v1070, %v1064
    %v1090 = vpack.c.bf16 %v1080, %v1074
    %v1091 = vpack.c.bf16 %v1082, %v1076
    %s1092 = scalar_lea.vmem %s5, 512
    %v1093 = vld [vmem:[%s1092] sm:$0xff]
    %v1094 = vld [vmem:[%s1092 + $0x8] sm:$0xff]
    %v1095 = vld [vmem:[%s1092 + $0x10] sm:$0xff]
    %v1096 = vld [vmem:[%s1092 + $0x18] sm:$0xff]
    %v1097 = vld [vmem:[%s1092 + $0x20] sm:$0xff]
    %v1098 = vld [vmem:[%s1092 + $0x28] sm:$0xff]
    %v1099 = vld [vmem:[%s1092 + $0x30] sm:$0xff]
    %v1100 = vld [vmem:[%s1092 + $0x38] sm:$0xff]
    %v1101 = vld [vmem:[%s1092 + $0x40] sm:$0xff]
    %v1102 = vld [vmem:[%s1092 + $0x48] sm:$0xff]
    %v1103 = vld [vmem:[%s1092 + $0x50] sm:$0xff]
    %v1104 = vld [vmem:[%s1092 + $0x58] sm:$0xff]
    %v1105 = vld [vmem:[%s1092 + $0x60] sm:$0xff]
    %v1106 = vld [vmem:[%s1092 + $0x68] sm:$0xff]
    %v1107 = vld [vmem:[%s1092 + $0x70] sm:$0xff]
    %v1108 = vld [vmem:[%s1092 + $0x78] sm:$0xff]
    %v1109 = vld [vmem:[%s1092 + $0x80] sm:$0xff]
    %v1110 = vld [vmem:[%s1092 + $0x88] sm:$0xff]
    %v1111 = vld [vmem:[%s1092 + $0x90] sm:$0xff]
    %v1112 = vld [vmem:[%s1092 + $0x98] sm:$0xff]
    %v1113 = vld [vmem:[%s1092 + $0xa0] sm:$0xff]
    %v1114 = vld [vmem:[%s1092 + $0xa8] sm:$0xff]
    %v1115 = vld [vmem:[%s1092 + $0xb0] sm:$0xff]
    %v1116 = vld [vmem:[%s1092 + $0xb8] sm:$0xff]
    %v1117 = vld [vmem:[%s1092 + $0xc0] sm:$0xff]
    %v1118 = vld [vmem:[%s1092 + $0xc8] sm:$0xff]
    %v1119 = vld [vmem:[%s1092 + $0xd0] sm:$0xff]
    %v1120 = vld [vmem:[%s1092 + $0xd8] sm:$0xff]
    %v1121 = vld [vmem:[%s1092 + $0xe0] sm:$0xff]
    %v1122 = vld [vmem:[%s1092 + $0xe8] sm:$0xff]
    %v1123 = vld [vmem:[%s1092 + $0xf0] sm:$0xff]
    %v1124 = vld [vmem:[%s1092 + $0xf8] sm:$0xff]
    %v1157 = vunpack.c.l.b16 %v1093
    %v1158 = vunpack.c.h.b16 %v1093
    %v1159 = vunpack.c.l.b16 %v1094
    %v1160 = vunpack.c.h.b16 %v1094
    %v1161 = vunpack.c.l.b16 %v1095
    %v1162 = vunpack.c.h.b16 %v1095
    %v1163 = vunpack.c.l.b16 %v1096
    %v1164 = vunpack.c.h.b16 %v1096
    %v1165 = vunpack.c.l.b16 %v1097
    %v1166 = vunpack.c.h.b16 %v1097
    %v1167 = vunpack.c.l.b16 %v1098
    %v1168 = vunpack.c.h.b16 %v1098
    %v1169 = vunpack.c.l.b16 %v1099
    %v1170 = vunpack.c.h.b16 %v1099
    %v1171 = vunpack.c.l.b16 %v1100
    %v1172 = vunpack.c.h.b16 %v1100
    %v1173 = vunpack.c.l.b16 %v1101
    %v1174 = vunpack.c.h.b16 %v1101
    %v1175 = vunpack.c.l.b16 %v1102
    %v1176 = vunpack.c.h.b16 %v1102
    %v1177 = vunpack.c.l.b16 %v1103
    %v1178 = vunpack.c.h.b16 %v1103
    %v1179 = vunpack.c.l.b16 %v1104
    %v1180 = vunpack.c.h.b16 %v1104
    %v1181 = vunpack.c.l.b16 %v1105
    %v1182 = vunpack.c.h.b16 %v1105
    %v1183 = vunpack.c.l.b16 %v1106
    %v1184 = vunpack.c.h.b16 %v1106
    %v1185 = vunpack.c.l.b16 %v1107
    %v1186 = vunpack.c.h.b16 %v1107
    %v1187 = vunpack.c.l.b16 %v1108
    %v1188 = vunpack.c.h.b16 %v1108
    %v1189 = vunpack.c.l.b16 %v1109
    %v1190 = vunpack.c.h.b16 %v1109
    %v1191 = vunpack.c.l.b16 %v1110
    %v1192 = vunpack.c.h.b16 %v1110
    %v1193 = vunpack.c.l.b16 %v1111
    %v1194 = vunpack.c.h.b16 %v1111
    %v1195 = vunpack.c.l.b16 %v1112
    %v1196 = vunpack.c.h.b16 %v1112
    %v1197 = vunpack.c.l.b16 %v1113
    %v1198 = vunpack.c.h.b16 %v1113
    %v1199 = vunpack.c.l.b16 %v1114
    %v1200 = vunpack.c.h.b16 %v1114
    %v1201 = vunpack.c.l.b16 %v1115
    %v1202 = vunpack.c.h.b16 %v1115
    %v1203 = vunpack.c.l.b16 %v1116
    %v1204 = vunpack.c.h.b16 %v1116
    %v1205 = vunpack.c.l.b16 %v1117
    %v1206 = vunpack.c.h.b16 %v1117
    %v1207 = vunpack.c.l.b16 %v1118
    %v1208 = vunpack.c.h.b16 %v1118
    %v1209 = vunpack.c.l.b16 %v1119
    %v1210 = vunpack.c.h.b16 %v1119
    %v1211 = vunpack.c.l.b16 %v1120
    %v1212 = vunpack.c.h.b16 %v1120
    %v1213 = vunpack.c.l.b16 %v1121
    %v1214 = vunpack.c.h.b16 %v1121
    %v1215 = vunpack.c.l.b16 %v1122
    %v1216 = vunpack.c.h.b16 %v1122
    %v1217 = vunpack.c.l.b16 %v1123
    %v1218 = vunpack.c.h.b16 %v1123
    %v1219 = vunpack.c.l.b16 %v1124
    %v1220 = vunpack.c.h.b16 %v1124
    %v1221 = vpack.c.b16 %v1159, %v1157
    %v1222 = vpack.c.b16 %v1160, %v1158
    %v1223 = vpack.c.b16 %v1163, %v1161
    %v1224 = vpack.c.b16 %v1164, %v1162
    %v1225 = vpack.c.b16 %v1167, %v1165
    %v1226 = vpack.c.b16 %v1168, %v1166
    %v1227 = vpack.c.b16 %v1171, %v1169
    %v1228 = vpack.c.b16 %v1172, %v1170
    %v1229 = vpack.c.b16 %v1175, %v1173
    %v1230 = vpack.c.b16 %v1176, %v1174
    %v1231 = vpack.c.b16 %v1179, %v1177
    %v1232 = vpack.c.b16 %v1180, %v1178
    %v1233 = vpack.c.b16 %v1183, %v1181
    %v1234 = vpack.c.b16 %v1184, %v1182
    %v1235 = vpack.c.b16 %v1187, %v1185
    %v1236 = vpack.c.b16 %v1188, %v1186
    %v1237 = vpack.c.b16 %v1191, %v1189
    %v1238 = vpack.c.b16 %v1192, %v1190
    %v1239 = vpack.c.b16 %v1195, %v1193
    %v1240 = vpack.c.b16 %v1196, %v1194
    %v1241 = vpack.c.b16 %v1199, %v1197
    %v1242 = vpack.c.b16 %v1200, %v1198
    %v1243 = vpack.c.b16 %v1203, %v1201
    %v1244 = vpack.c.b16 %v1204, %v1202
    %v1245 = vpack.c.b16 %v1207, %v1205
    %v1246 = vpack.c.b16 %v1208, %v1206
    %v1247 = vpack.c.b16 %v1211, %v1209
    %v1248 = vpack.c.b16 %v1212, %v1210
    %v1249 = vpack.c.b16 %v1215, %v1213
    %v1250 = vpack.c.b16 %v1216, %v1214
    %v1251 = vpack.c.b16 %v1219, %v1217
    %v1252 = vpack.c.b16 %v1220, %v1218
    %1285 = vmatprep.subr.bf16.mxu0 %v1236
    %1286 = vmatpush1.bf16.msra.mxu0 %v1235
    %1287 = vmatprep.subr.bf16.mxu0 %v1234
    %1288 = vmatpush1.bf16.msra.mxu0 %v1233
    %1289 = vmatprep.subr.bf16.mxu0 %v1232
    %1290 = vmatpush1.bf16.msra.mxu0 %v1231
    %1291 = vmatprep.subr.bf16.mxu0 %v1230
    %1292 = vmatpush1.bf16.msra.mxu0 %v1229
    %1293 = vmatprep.subr.bf16.mxu0 %v1228
    %1294 = vmatpush1.bf16.msra.mxu0 %v1227
    %1295 = vmatprep.subr.bf16.mxu0 %v1226
    %1296 = vmatpush1.bf16.msra.mxu0 %v1225
    %1297 = vmatprep.subr.bf16.mxu0 %v1224
    %1298 = vmatpush1.bf16.msra.mxu0 %v1223
    %1299 = vmatprep.subr.bf16.mxu0 %v1222
    %1300 = vmatpush1.bf16.msra.mxu0 %v1221
    %1301 = vmatprep.subr.bf16.mxu0 %v1252
    %1302 = vmatpush2.bf16.msra.mxu0 %v1251
    %1303 = vmatprep.subr.bf16.mxu0 %v1250
    %1304 = vmatpush2.bf16.msra.mxu0 %v1249
    %1305 = vmatprep.subr.bf16.mxu0 %v1248
    %1306 = vmatpush2.bf16.msra.mxu0 %v1247
    %1307 = vmatprep.subr.bf16.mxu0 %v1246
    %1308 = vmatpush2.bf16.msra.mxu0 %v1245
    %1309 = vmatprep.subr.bf16.mxu0 %v1244
    %1310 = vmatpush2.bf16.msra.mxu0 %v1243
    %1311 = vmatprep.subr.bf16.mxu0 %v1242
    %1312 = vmatpush2.bf16.msra.mxu0 %v1241
    %1313 = vmatprep.subr.bf16.mxu0 %v1240
    %1314 = vmatpush2.bf16.msra.mxu0 %v1239
    %1315 = vmatprep.subr.bf16.mxu0 %v1238
    %1316 = vmatpush2.bf16.msra.mxu0 %v1237
    %1317 = vmatprep.mubr.bf16.mxu0 %v1085
    %1318 = vmatmul.mubr.bf16.gmra.mxu0 %v1084
    %v1319 = vpop.f32.mrf.mxu0
    %v1320 = vadd.f32 0.0, %v1319
    %v1321 = vpop.f32.mrf.mxu0
    %v1322 = vadd.f32 0.0, %v1321
    %v1323 = vpop.f32.mrf.mxu0
    %v1324 = vadd.f32 0.0, %v1323
    %v1325 = vpop.f32.mrf.mxu0
    %v1326 = vadd.f32 0.0, %v1325
    %1327 = vmatprep.mubr.bf16.mxu0 %v1087
    %1328 = vmatmul.mubr.bf16.gmra.mxu0 %v1086
    %v1329 = vpop.f32.mrf.mxu0
    %v1330 = vadd.f32 0.0, %v1329
    %v1331 = vpop.f32.mrf.mxu0
    %v1332 = vadd.f32 0.0, %v1331
    %v1333 = vpop.f32.mrf.mxu0
    %v1334 = vadd.f32 0.0, %v1333
    %v1335 = vpop.f32.mrf.mxu0
    %v1336 = vadd.f32 0.0, %v1335
    %1337 = vmatprep.mubr.bf16.mxu0 %v1089
    %1338 = vmatmul.mubr.bf16.gmra.mxu0 %v1088
    %v1339 = vpop.f32.mrf.mxu0
    %v1340 = vadd.f32 0.0, %v1339
    %v1341 = vpop.f32.mrf.mxu0
    %v1342 = vadd.f32 0.0, %v1341
    %v1343 = vpop.f32.mrf.mxu0
    %v1344 = vadd.f32 0.0, %v1343
    %v1345 = vpop.f32.mrf.mxu0
    %v1346 = vadd.f32 0.0, %v1345
    %1347 = vmatprep.mubr.bf16.mxu0 %v1091
    %1348 = vmatmul.mubr.bf16.gmra.mxu0 %v1090
    %v1349 = vpop.f32.mrf.mxu0
    %v1350 = vadd.f32 0.0, %v1349
    %v1351 = vpop.f32.mrf.mxu0
    %v1352 = vadd.f32 0.0, %v1351
    %v1353 = vpop.f32.mrf.mxu0
    %v1354 = vadd.f32 0.0, %v1353
    %v1355 = vpop.f32.mrf.mxu0
    %v1356 = vadd.f32 0.0, %v1355
    %1357 = vdwg.mxu0
    %v1358 = vadd.f32 %v924, %v1320
    %v1359 = vadd.f32 %v926, %v1322
    %v1360 = vadd.f32 %v928, %v1324
    %v1361 = vadd.f32 %v930, %v1326
    %v1362 = vadd.f32 %v934, %v1330
    %v1363 = vadd.f32 %v936, %v1332
    %v1364 = vadd.f32 %v938, %v1334
    %v1365 = vadd.f32 %v940, %v1336
    %v1366 = vadd.f32 %v944, %v1340
    %v1367 = vadd.f32 %v946, %v1342
    %v1368 = vadd.f32 %v948, %v1344
    %v1369 = vadd.f32 %v950, %v1346
    %v1370 = vadd.f32 %v954, %v1350
    %v1371 = vadd.f32 %v956, %v1352
    %v1372 = vadd.f32 %v958, %v1354
    %v1373 = vadd.f32 %v960, %v1356
    %v1374 = vld [vmem:[%s11] sm:$0x3]
    %v1375 = vld [vmem:[%s7] sm:$0xff]
    %v1376 = vld [vmem:[%s7 + $0x8] sm:$0xff]
    %v1377 = vld [vmem:[%s7 + $0x10] sm:$0xff]
    %v1378 = vld [vmem:[%s7 + $0x18] sm:$0xff]
    %v1379 = vld [vmem:[%s7 + $0x20] sm:$0xff]
    %v1380 = vld [vmem:[%s7 + $0x28] sm:$0xff]
    %v1381 = vld [vmem:[%s7 + $0x30] sm:$0xff]
    %v1382 = vld [vmem:[%s7 + $0x38] sm:$0xff]
    %v1383 = vld [vmem:[%s7 + $0x40] sm:$0xff]
    %v1384 = vld [vmem:[%s7 + $0x48] sm:$0xff]
    %v1385 = vld [vmem:[%s7 + $0x50] sm:$0xff]
    %v1386 = vld [vmem:[%s7 + $0x58] sm:$0xff]
    %v1387 = vld [vmem:[%s7 + $0x60] sm:$0xff]
    %v1388 = vld [vmem:[%s7 + $0x68] sm:$0xff]
    %v1389 = vld [vmem:[%s7 + $0x70] sm:$0xff]
    %v1390 = vld [vmem:[%s7 + $0x78] sm:$0xff]
    %v1391 = vld [vmem:[%s7 + $0x80] sm:$0xff]
    %v1392 = vld [vmem:[%s7 + $0x88] sm:$0xff]
    %v1393 = vld [vmem:[%s7 + $0x90] sm:$0xff]
    %v1394 = vld [vmem:[%s7 + $0x98] sm:$0xff]
    %v1395 = vld [vmem:[%s7 + $0xa0] sm:$0xff]
    %v1396 = vld [vmem:[%s7 + $0xa8] sm:$0xff]
    %v1397 = vld [vmem:[%s7 + $0xb0] sm:$0xff]
    %v1398 = vld [vmem:[%s7 + $0xb8] sm:$0xff]
    %v1399 = vld [vmem:[%s7 + $0xc0] sm:$0xff]
    %v1400 = vld [vmem:[%s7 + $0xc8] sm:$0xff]
    %v1401 = vld [vmem:[%s7 + $0xd0] sm:$0xff]
    %v1402 = vld [vmem:[%s7 + $0xd8] sm:$0xff]
    %v1403 = vld [vmem:[%s7 + $0xe0] sm:$0xff]
    %v1404 = vld [vmem:[%s7 + $0xe8] sm:$0xff]
    %v1405 = vld [vmem:[%s7 + $0xf0] sm:$0xff]
    %v1406 = vld [vmem:[%s7 + $0xf8] sm:$0xff]
    %1407 = vmatprep.subr.mxu0 0.0
    %1408 = vmatpush1.msra.mxu0 %v1390
    %1409 = vmatprep.subr.mxu0 0.0
    %1410 = vmatpush1.msra.mxu0 %v1389
    %1411 = vmatprep.subr.mxu0 0.0
    %1412 = vmatpush1.msra.mxu0 %v1388
    %1413 = vmatprep.subr.mxu0 0.0
    %1414 = vmatpush1.msra.mxu0 %v1387
    %1415 = vmatprep.subr.mxu0 0.0
    %1416 = vmatpush1.msra.mxu0 %v1386
    %1417 = vmatprep.subr.mxu0 0.0
    %1418 = vmatpush1.msra.mxu0 %v1385
    %1419 = vmatprep.subr.mxu0 0.0
    %1420 = vmatpush1.msra.mxu0 %v1384
    %1421 = vmatprep.subr.mxu0 0.0
    %1422 = vmatpush1.msra.mxu0 %v1383
    %1423 = vmatprep.subr.mxu0 0.0
    %1424 = vmatpush1.msra.mxu0 %v1382
    %1425 = vmatprep.subr.mxu0 0.0
    %1426 = vmatpush1.msra.mxu0 %v1381
    %1427 = vmatprep.subr.mxu0 0.0
    %1428 = vmatpush1.msra.mxu0 %v1380
    %1429 = vmatprep.subr.mxu0 0.0
    %1430 = vmatpush1.msra.mxu0 %v1379
    %1431 = vmatprep.subr.mxu0 0.0
    %1432 = vmatpush1.msra.mxu0 %v1378
    %1433 = vmatprep.subr.mxu0 0.0
    %1434 = vmatpush1.msra.mxu0 %v1377
    %1435 = vmatprep.subr.mxu0 0.0
    %1436 = vmatpush1.msra.mxu0 %v1376
    %1437 = vmatprep.subr.mxu0 0.0
    %1438 = vmatpush1.msra.mxu0 %v1375
    %1439 = vmatprep.subr.mxu0 0.0
    %1440 = vmatpush2.msra.mxu0 %v1406
    %1441 = vmatprep.subr.mxu0 0.0
    %1442 = vmatpush2.msra.mxu0 %v1405
    %1443 = vmatprep.subr.mxu0 0.0
    %1444 = vmatpush2.msra.mxu0 %v1404
    %1445 = vmatprep.subr.mxu0 0.0
    %1446 = vmatpush2.msra.mxu0 %v1403
    %1447 = vmatprep.subr.mxu0 0.0
    %1448 = vmatpush2.msra.mxu0 %v1402
    %1449 = vmatprep.subr.mxu0 0.0
    %1450 = vmatpush2.msra.mxu0 %v1401
    %1451 = vmatprep.subr.mxu0 0.0
    %1452 = vmatpush2.msra.mxu0 %v1400
    %1453 = vmatprep.subr.mxu0 0.0
    %1454 = vmatpush2.msra.mxu0 %v1399
    %1455 = vmatprep.subr.mxu0 0.0
    %1456 = vmatpush2.msra.mxu0 %v1398
    %1457 = vmatprep.subr.mxu0 0.0
    %1458 = vmatpush2.msra.mxu0 %v1397
    %1459 = vmatprep.subr.mxu0 0.0
    %1460 = vmatpush2.msra.mxu0 %v1396
    %1461 = vmatprep.subr.mxu0 0.0
    %1462 = vmatpush2.msra.mxu0 %v1395
    %1463 = vmatprep.subr.mxu0 0.0
    %1464 = vmatpush2.msra.mxu0 %v1394
    %1465 = vmatprep.subr.mxu0 0.0
    %1466 = vmatpush2.msra.mxu0 %v1393
    %1467 = vmatprep.subr.mxu0 0.0
    %1468 = vmatpush2.msra.mxu0 %v1392
    %1469 = vmatprep.subr.mxu0 0.0
    %1470 = vmatpush2.msra.mxu0 %v1391
    %1471 = vmatprep.mubr.f32.mxu0 %v1359
    %1472 = vmatmul.mubr.f32.gmra.mxu0 %v1358
    %v1473 = vpop.f32.mrf.mxu0
    %v1474 = vadd.f32 0.0, %v1473
    %v1475 = vpop.f32.mrf.mxu0
    %1476 = vmatprep.mubr.f32.mxu0 %v1361
    %1477 = vmatmul.mubr.f32.gmra.mxu0 %v1360
    %v1478 = vpop.f32.mrf.mxu0
    %v1479 = vadd.f32 0.0, %v1478
    %v1480 = vpop.f32.mrf.mxu0
    %1481 = vmatprep.mubr.f32.mxu0 %v1363
    %1482 = vmatmul.mubr.f32.gmra.mxu0 %v1362
    %v1483 = vpop.f32.mrf.mxu0
    %v1484 = vadd.f32 0.0, %v1483
    %v1485 = vpop.f32.mrf.mxu0
    %1486 = vmatprep.mubr.f32.mxu0 %v1365
    %1487 = vmatmul.mubr.f32.gmra.mxu0 %v1364
    %v1488 = vpop.f32.mrf.mxu0
    %v1489 = vadd.f32 0.0, %v1488
    %v1490 = vpop.f32.mrf.mxu0
    %1491 = vmatprep.mubr.f32.mxu0 %v1367
    %1492 = vmatmul.mubr.f32.gmra.mxu0 %v1366
    %v1493 = vpop.f32.mrf.mxu0
    %v1494 = vadd.f32 0.0, %v1493
    %v1495 = vpop.f32.mrf.mxu0
    %1496 = vmatprep.mubr.f32.mxu0 %v1369
    %1497 = vmatmul.mubr.f32.gmra.mxu0 %v1368
    %v1498 = vpop.f32.mrf.mxu0
    %v1499 = vadd.f32 0.0, %v1498
    %v1500 = vpop.f32.mrf.mxu0
    %1501 = vmatprep.mubr.f32.mxu0 %v1371
    %1502 = vmatmul.mubr.f32.gmra.mxu0 %v1370
    %v1503 = vpop.f32.mrf.mxu0
    %v1504 = vadd.f32 0.0, %v1503
    %v1505 = vpop.f32.mrf.mxu0
    %1506 = vmatprep.mubr.f32.mxu0 %v1373
    %1507 = vmatmul.mubr.f32.gmra.mxu0 %v1372
    %v1508 = vpop.f32.mrf.mxu0
    %v1509 = vadd.f32 0.0, %v1508
    %v1510 = vpop.f32.mrf.mxu0
    %1511 = vdwg.mxu0
    %v1512 = vmul.f32 %v1358, %v1358
    %v1513 = vmul.f32 %v1359, %v1359
    %v1514 = vmul.f32 %v1360, %v1360
    %v1515 = vmul.f32 %v1361, %v1361
    %v1516 = vmul.f32 %v1362, %v1362
    %v1517 = vmul.f32 %v1363, %v1363
    %v1518 = vmul.f32 %v1364, %v1364
    %v1519 = vmul.f32 %v1365, %v1365
    %v1520 = vmul.f32 %v1366, %v1366
    %v1521 = vmul.f32 %v1367, %v1367
    %v1522 = vmul.f32 %v1368, %v1368
    %v1523 = vmul.f32 %v1369, %v1369
    %v1524 = vmul.f32 %v1370, %v1370
    %v1525 = vmul.f32 %v1371, %v1371
    %v1526 = vmul.f32 %v1372, %v1372
    %v1527 = vmul.f32 %v1373, %v1373
    %1528 = vmatprep.subr.mxu0 0.0
    %1529 = vmatpush1.msra.mxu0 %v1390
    %1530 = vmatprep.subr.mxu0 0.0
    %1531 = vmatpush1.msra.mxu0 %v1389
    %1532 = vmatprep.subr.mxu0 0.0
    %1533 = vmatpush1.msra.mxu0 %v1388
    %1534 = vmatprep.subr.mxu0 0.0
    %1535 = vmatpush1.msra.mxu0 %v1387
    %1536 = vmatprep.subr.mxu0 0.0
    %1537 = vmatpush1.msra.mxu0 %v1386
    %1538 = vmatprep.subr.mxu0 0.0
    %1539 = vmatpush1.msra.mxu0 %v1385
    %1540 = vmatprep.subr.mxu0 0.0
    %1541 = vmatpush1.msra.mxu0 %v1384
    %1542 = vmatprep.subr.mxu0 0.0
    %1543 = vmatpush1.msra.mxu0 %v1383
    %1544 = vmatprep.subr.mxu0 0.0
    %1545 = vmatpush1.msra.mxu0 %v1382
    %1546 = vmatprep.subr.mxu0 0.0
    %1547 = vmatpush1.msra.mxu0 %v1381
    %1548 = vmatprep.subr.mxu0 0.0
    %1549 = vmatpush1.msra.mxu0 %v1380
    %1550 = vmatprep.subr.mxu0 0.0
    %1551 = vmatpush1.msra.mxu0 %v1379
    %1552 = vmatprep.subr.mxu0 0.0
    %1553 = vmatpush1.msra.mxu0 %v1378
    %1554 = vmatprep.subr.mxu0 0.0
    %1555 = vmatpush1.msra.mxu0 %v1377
    %1556 = vmatprep.subr.mxu0 0.0
    %1557 = vmatpush1.msra.mxu0 %v1376
    %1558 = vmatprep.subr.mxu0 0.0
    %1559 = vmatpush1.msra.mxu0 %v1375
    %1560 = vmatprep.subr.mxu0 0.0
    %1561 = vmatpush2.msra.mxu0 %v1406
    %1562 = vmatprep.subr.mxu0 0.0
    %1563 = vmatpush2.msra.mxu0 %v1405
    %1564 = vmatprep.subr.mxu0 0.0
    %1565 = vmatpush2.msra.mxu0 %v1404
    %1566 = vmatprep.subr.mxu0 0.0
    %1567 = vmatpush2.msra.mxu0 %v1403
    %1568 = vmatprep.subr.mxu0 0.0
    %1569 = vmatpush2.msra.mxu0 %v1402
    %1570 = vmatprep.subr.mxu0 0.0
    %1571 = vmatpush2.msra.mxu0 %v1401
    %1572 = vmatprep.subr.mxu0 0.0
    %1573 = vmatpush2.msra.mxu0 %v1400
    %1574 = vmatprep.subr.mxu0 0.0
    %1575 = vmatpush2.msra.mxu0 %v1399
    %1576 = vmatprep.subr.mxu0 0.0
    %1577 = vmatpush2.msra.mxu0 %v1398
    %1578 = vmatprep.subr.mxu0 0.0
    %1579 = vmatpush2.msra.mxu0 %v1397
    %1580 = vmatprep.subr.mxu0 0.0
    %1581 = vmatpush2.msra.mxu0 %v1396
    %1582 = vmatprep.subr.mxu0 0.0
    %1583 = vmatpush2.msra.mxu0 %v1395
    %1584 = vmatprep.subr.mxu0 0.0
    %1585 = vmatpush2.msra.mxu0 %v1394
    %1586 = vmatprep.subr.mxu0 0.0
    %1587 = vmatpush2.msra.mxu0 %v1393
    %1588 = vmatprep.subr.mxu0 0.0
    %1589 = vmatpush2.msra.mxu0 %v1392
    %1590 = vmatprep.subr.mxu0 0.0
    %1591 = vmatpush2.msra.mxu0 %v1391
    %1592 = vmatprep.mubr.f32.mxu0 %v1513
    %1593 = vmatmul.mubr.f32.gmra.mxu0 %v1512
    %v1594 = vpop.f32.mrf.mxu0
    %v1595 = vadd.f32 0.0, %v1594
    %v1596 = vpop.f32.mrf.mxu0
    %1597 = vmatprep.mubr.f32.mxu0 %v1515
    %1598 = vmatmul.mubr.f32.gmra.mxu0 %v1514
    %v1599 = vpop.f32.mrf.mxu0
    %v1600 = vadd.f32 0.0, %v1599
    %v1601 = vpop.f32.mrf.mxu0
    %1602 = vmatprep.mubr.f32.mxu0 %v1517
    %1603 = vmatmul.mubr.f32.gmra.mxu0 %v1516
    %v1604 = vpop.f32.mrf.mxu0
    %v1605 = vadd.f32 0.0, %v1604
    %v1606 = vpop.f32.mrf.mxu0
    %1607 = vmatprep.mubr.f32.mxu0 %v1519
    %1608 = vmatmul.mubr.f32.gmra.mxu0 %v1518
    %v1609 = vpop.f32.mrf.mxu0
    %v1610 = vadd.f32 0.0, %v1609
    %v1611 = vpop.f32.mrf.mxu0
    %1612 = vmatprep.mubr.f32.mxu0 %v1521
    %1613 = vmatmul.mubr.f32.gmra.mxu0 %v1520
    %v1614 = vpop.f32.mrf.mxu0
    %v1615 = vadd.f32 0.0, %v1614
    %v1616 = vpop.f32.mrf.mxu0
    %1617 = vmatprep.mubr.f32.mxu0 %v1523
    %1618 = vmatmul.mubr.f32.gmra.mxu0 %v1522
    %v1619 = vpop.f32.mrf.mxu0
    %v1620 = vadd.f32 0.0, %v1619
    %v1621 = vpop.f32.mrf.mxu0
    %1622 = vmatprep.mubr.f32.mxu0 %v1525
    %1623 = vmatmul.mubr.f32.gmra.mxu0 %v1524
    %v1624 = vpop.f32.mrf.mxu0
    %v1625 = vadd.f32 0.0, %v1624
    %v1626 = vpop.f32.mrf.mxu0
    %1627 = vmatprep.mubr.f32.mxu0 %v1527
    %1628 = vmatmul.mubr.f32.gmra.mxu0 %v1526
    %v1629 = vpop.f32.mrf.mxu0
    %v1630 = vadd.f32 0.0, %v1629
    %v1631 = vpop.f32.mrf.mxu0
    %1632 = vdwg.mxu0
    %vm1633 = vcmask 64512
    %v1634 = vsel %vm1633, %v1474, 0.0
    %v1635 = vsel %vm1633, %v1479, 0.0
    %v1636 = vadd.f32 %v1634, %v1635
    %v1637 = vsel %vm1633, %v1484, 0.0
    %v1638 = vadd.f32 %v1636, %v1637
    %v1639 = vsel %vm1633, %v1489, 0.0
    %v1640 = vadd.f32 %v1638, %v1639
    %v1641 = vsel %vm1633, %v1494, 0.0
    %v1642 = vadd.f32 %v1640, %v1641
    %v1643 = vsel %vm1633, %v1499, 0.0
    %v1644 = vadd.f32 %v1642, %v1643
    %v1645 = vsel %vm1633, %v1504, 0.0
    %v1646 = vadd.f32 %v1644, %v1645
    %v1647 = vsel %vm1633, %v1509, 0.0
    %v1648 = vadd.f32 %v1646, %v1647
    %v1649 = vrot.slane %v1648, 4
    %v1650 = vadd.f32 %v1648, %v1649
    %v1651 = vrot.slane %v1650, 2
    %v1652 = vadd.f32 %v1650, %v1651
    %v1653 = vrot.slane %v1652, 1
    %v1654 = vadd.f32 %v1652, %v1653
    %v1655 = vrcp.pop 2048.0
    %v1656 = vmul.f32 %v1654, %v1655
    %v1657 = vsel %vm1633, %v1595, 0.0
    %v1658 = vsel %vm1633, %v1600, 0.0
    %v1659 = vadd.f32 %v1657, %v1658
    %v1660 = vsel %vm1633, %v1605, 0.0
    %v1661 = vadd.f32 %v1659, %v1660
    %v1662 = vsel %vm1633, %v1610, 0.0
    %v1663 = vadd.f32 %v1661, %v1662
    %v1664 = vsel %vm1633, %v1615, 0.0
    %v1665 = vadd.f32 %v1663, %v1664
    %v1666 = vsel %vm1633, %v1620, 0.0
    %v1667 = vadd.f32 %v1665, %v1666
    %v1668 = vsel %vm1633, %v1625, 0.0
    %v1669 = vadd.f32 %v1667, %v1668
    %v1670 = vsel %vm1633, %v1630, 0.0
    %v1671 = vadd.f32 %v1669, %v1670
    %v1672 = vrot.slane %v1671, 4
    %v1673 = vadd.f32 %v1671, %v1672
    %v1674 = vrot.slane %v1673, 2
    %v1675 = vadd.f32 %v1673, %v1674
    %v1676 = vrot.slane %v1675, 1
    %v1677 = vadd.f32 %v1675, %v1676
    %v1678 = vmul.f32 %v1677, %v1655
    %v1679 = vmul.f32 %v1656, %v1656
    %v1680 = vsub.f32 %v1678, %v1679
    %v1681 = vadd.f32 %v1680, 1e-05
    %v1682 = vrsqrt.pop %v1681
    %v1683 = vmul.f32 %v1374, %v1682
    %v1684 = vmul.f32 %v1656, %v1683
    %v1686 = vrot.slane %v1684, 7
    %v1688 = vsub.f32 %v1374, %v1686
    %v1689 = vlaneseq
    %v1690 = vshrl.u32 %v1689, 7
    %vm1691 = vcmp.eq.s32.totalorder %v1690, 0
    %v1692 = vlaneseq
    %v1693 = vshrl.u32 %v1692, 7
    %v1694 = vsub.s32 0, %v1693
    %v1695 = vrot.slane %v1683, %v1694
    %v1696 = vlaneseq
    %v1697 = vshrl.u32 %v1696, 7
    %v1698 = vsub.s32 1, %v1697
    %v1699 = vrot.slane %v1688, %v1698
    %v1700 = vsel %vm1691, %v1695, %v1699
    %v1701 = vld [vmem:[%s9] sm:$0xff]
    %v1702 = vld [vmem:[%s9 + $0x8] sm:$0xff]
    %v1704 = vsel %vm1633, %v1700, 0
    %1706 = vmatprep.subr.mxu0 0.0
    %1707 = vmatpush1.msra.mxu0 0.0
    %1708 = vmatprep.subr.mxu0 0.0
    %1709 = vmatpush1.msra.mxu0 0.0
    %1710 = vmatprep.subr.mxu0 0.0
    %1711 = vmatpush1.msra.mxu0 0.0
    %1712 = vmatprep.subr.mxu0 0.0
    %1713 = vmatpush1.msra.mxu0 0.0
    %1714 = vmatprep.subr.mxu0 0.0
    %1715 = vmatpush1.msra.mxu0 0.0
    %1716 = vmatprep.subr.mxu0 0.0
    %1717 = vmatpush1.msra.mxu0 0.0
    %1718 = vmatprep.subr.mxu0 0.0
    %1719 = vmatpush1.msra.mxu0 0.0
    %1720 = vmatprep.subr.mxu0 0.0
    %1721 = vmatpush1.msra.mxu0 0.0
    %1722 = vmatprep.subr.mxu0 0.0
    %1723 = vmatpush1.msra.mxu0 0.0
    %1724 = vmatprep.subr.mxu0 0.0
    %1725 = vmatpush1.msra.mxu0 0.0
    %1726 = vmatprep.subr.mxu0 0.0
    %1727 = vmatpush1.msra.mxu0 0.0
    %1728 = vmatprep.subr.mxu0 0.0
    %1729 = vmatpush1.msra.mxu0 0.0
    %1730 = vmatprep.subr.mxu0 0.0
    %1731 = vmatpush1.msra.mxu0 0.0
    %1732 = vmatprep.subr.mxu0 0.0
    %1733 = vmatpush1.msra.mxu0 0.0
    %1734 = vmatprep.subr.mxu0 0.0
    %1735 = vmatpush1.msra.mxu0 0.0
    %1736 = vmatprep.subr.mxu0 %v1702
    %1737 = vmatpush1.msra.mxu0 %v1701
    %1738 = vmatprep.subr.mxu0 0.0
    %1739 = vmatpush2.msra.mxu0 0.0
    %1740 = vmatprep.subr.mxu0 0.0
    %1741 = vmatpush2.msra.mxu0 0.0
    %1742 = vmatprep.subr.mxu0 0.0
    %1743 = vmatpush2.msra.mxu0 0.0
    %1744 = vmatprep.subr.mxu0 0.0
    %1745 = vmatpush2.msra.mxu0 0.0
    %1746 = vmatprep.subr.mxu0 0.0
    %1747 = vmatpush2.msra.mxu0 0.0
    %1748 = vmatprep.subr.mxu0 0.0
    %1749 = vmatpush2.msra.mxu0 0.0
    %1750 = vmatprep.subr.mxu0 0.0
    %1751 = vmatpush2.msra.mxu0 0.0
    %1752 = vmatprep.subr.mxu0 0.0
    %1753 = vmatpush2.msra.mxu0 0.0
    %1754 = vmatprep.subr.mxu0 0.0
    %1755 = vmatpush2.msra.mxu0 0.0
    %1756 = vmatprep.subr.mxu0 0.0
    %1757 = vmatpush2.msra.mxu0 0.0
    %1758 = vmatprep.subr.mxu0 0.0
    %1759 = vmatpush2.msra.mxu0 0.0
    %1760 = vmatprep.subr.mxu0 0.0
    %1761 = vmatpush2.msra.mxu0 0.0
    %1762 = vmatprep.subr.mxu0 0.0
    %1763 = vmatpush2.msra.mxu0 0.0
    %1764 = vmatprep.subr.mxu0 0.0
    %1765 = vmatpush2.msra.mxu0 0.0
    %1766 = vmatprep.subr.mxu0 0.0
    %1767 = vmatpush2.msra.mxu0 0.0
    %1768 = vmatprep.subr.mxu0 0.0
    %1769 = vmatpush2.msra.mxu0 0.0
    %1770 = vmatprep.mubr.f32.mxu0 0.0
    %1771 = vmatmul.mubr.f32.gmra.mxu0 %v1704
    %v1772 = vpop.f32.mrf.mxu0
    %v1773 = vadd.f32 0.0, %v1772
    %v1774 = vpop.f32.mrf.mxu0
    %v1775 = vadd.f32 0.0, %v1774
    %1776 = vdwg.mxu0
    %v1777 = vlaneseq
    %v1778 = vshrl.u32 %v1777, 7
    %v1779 = vsub.s32 0, %v1778
    %v1780 = vrot.slane %v1773, %v1779
    %v1781 = vlaneseq
    %v1782 = vshrl.u32 %v1781, 7
    %v1783 = vsub.s32 0, %v1782
    %v1784 = vrot.slane %v1775, %v1783
    %v1785 = vmul.f32 %v1358, %v1780
    %v1786 = vmul.f32 %v1359, %v1784
    %v1787 = vmul.f32 %v1360, %v1780
    %v1788 = vmul.f32 %v1361, %v1784
    %v1789 = vmul.f32 %v1362, %v1780
    %v1790 = vmul.f32 %v1363, %v1784
    %v1791 = vmul.f32 %v1364, %v1780
    %v1792 = vmul.f32 %v1365, %v1784
    %v1793 = vmul.f32 %v1366, %v1780
    %v1794 = vmul.f32 %v1367, %v1784
    %v1795 = vmul.f32 %v1368, %v1780
    %v1796 = vmul.f32 %v1369, %v1784
    %v1797 = vmul.f32 %v1370, %v1780
    %v1798 = vmul.f32 %v1371, %v1784
    %v1799 = vmul.f32 %v1372, %v1780
    %v1800 = vmul.f32 %v1373, %v1784
    %v1801 = vlaneseq
    %v1802 = vshrl.u32 %v1801, 7
    %v1803 = vsub.s32 1, %v1802
    %v1804 = vrot.slane %v1773, %v1803
    %v1805 = vlaneseq
    %v1806 = vshrl.u32 %v1805, 7
    %v1807 = vsub.s32 1, %v1806
    %v1808 = vrot.slane %v1775, %v1807
    %v1809 = vadd.f32 %v1785, %v1804
    %v1810 = vadd.f32 %v1786, %v1808
    %v1811 = vadd.f32 %v1787, %v1804
    %v1812 = vadd.f32 %v1788, %v1808
    %v1813 = vadd.f32 %v1789, %v1804
    %v1814 = vadd.f32 %v1790, %v1808
    %v1815 = vadd.f32 %v1791, %v1804
    %v1816 = vadd.f32 %v1792, %v1808
    %v1817 = vadd.f32 %v1793, %v1804
    %v1818 = vadd.f32 %v1794, %v1808
    %v1819 = vadd.f32 %v1795, %v1804
    %v1820 = vadd.f32 %v1796, %v1808
    %v1821 = vadd.f32 %v1797, %v1804
    %v1822 = vadd.f32 %v1798, %v1808
    %v1823 = vadd.f32 %v1799, %v1804
    %v1824 = vadd.f32 %v1800, %v1808
    %v1825 = vmax.f32 %v1809, 0.0
    %v1826 = vmax.f32 %v1810, 0.0
    %v1827 = vmax.f32 %v1811, 0.0
    %v1828 = vmax.f32 %v1812, 0.0
    %v1829 = vmax.f32 %v1813, 0.0
    %v1830 = vmax.f32 %v1814, 0.0
    %v1831 = vmax.f32 %v1815, 0.0
    %v1832 = vmax.f32 %v1816, 0.0
    %v1833 = vmax.f32 %v1817, 0.0
    %v1834 = vmax.f32 %v1818, 0.0
    %v1835 = vmax.f32 %v1819, 0.0
    %v1836 = vmax.f32 %v1820, 0.0
    %v1837 = vmax.f32 %v1821, 0.0
    %v1838 = vmax.f32 %v1822, 0.0
    %v1839 = vmax.f32 %v1823, 0.0
    %v1840 = vmax.f32 %v1824, 0.0
    %v1841 = vld [vmem:[%s13] sm:$0xff]
    %v1842 = vld [vmem:[%s13 + $0x8] sm:$0xff]
    %v1843 = vld [vmem:[%s13 + $0x10] sm:$0xff]
    %v1844 = vld [vmem:[%s13 + $0x18] sm:$0xff]
    %vm1845 = vcmask 523264
    %v1847 = vsel %vm1845, %v1841, 0
    %v1850 = vsel %vm1845, %v1842, 0
    %v1853 = vsel %vm1845, %v1843, 0
    %v1856 = vsel %vm1845, %v1844, 0
    %1858 = vmatprep.subr.mxu0 0.0
    %1859 = vmatpush1.msra.mxu0 0.0
    %1860 = vmatprep.subr.mxu0 0.0
    %1861 = vmatpush1.msra.mxu0 0.0
    %1862 = vmatprep.subr.mxu0 0.0
    %1863 = vmatpush1.msra.mxu0 0.0
    %1864 = vmatprep.subr.mxu0 0.0
    %1865 = vmatpush1.msra.mxu0 0.0
    %1866 = vmatprep.subr.mxu0 0.0
    %1867 = vmatpush1.msra.mxu0 0.0
    %1868 = vmatprep.subr.mxu0 0.0
    %1869 = vmatpush1.msra.mxu0 0.0
    %1870 = vmatprep.subr.mxu0 0.0
    %1871 = vmatpush1.msra.mxu0 0.0
    %1872 = vmatprep.subr.mxu0 0.0
    %1873 = vmatpush1.msra.mxu0 0.0
    %1874 = vmatprep.subr.mxu0 %v1840
    %1875 = vmatpush1.msra.mxu0 %v1839
    %1876 = vmatprep.subr.mxu0 %v1838
    %1877 = vmatpush1.msra.mxu0 %v1837
    %1878 = vmatprep.subr.mxu0 %v1836
    %1879 = vmatpush1.msra.mxu0 %v1835
    %1880 = vmatprep.subr.mxu0 %v1834
    %1881 = vmatpush1.msra.mxu0 %v1833
    %1882 = vmatprep.subr.mxu0 %v1832
    %1883 = vmatpush1.msra.mxu0 %v1831
    %1884 = vmatprep.subr.mxu0 %v1830
    %1885 = vmatpush1.msra.mxu0 %v1829
    %1886 = vmatprep.subr.mxu0 %v1828
    %1887 = vmatpush1.msra.mxu0 %v1827
    %1888 = vmatprep.subr.mxu0 %v1826
    %1889 = vmatpush1.msra.mxu0 %v1825
    %1890 = vmatprep.subr.mxu0 0.0
    %1891 = vmatpush2.msra.mxu0 0.0
    %1892 = vmatprep.subr.mxu0 0.0
    %1893 = vmatpush2.msra.mxu0 0.0
    %1894 = vmatprep.subr.mxu0 0.0
    %1895 = vmatpush2.msra.mxu0 0.0
    %1896 = vmatprep.subr.mxu0 0.0
    %1897 = vmatpush2.msra.mxu0 0.0
    %1898 = vmatprep.subr.mxu0 0.0
    %1899 = vmatpush2.msra.mxu0 0.0
    %1900 = vmatprep.subr.mxu0 0.0
    %1901 = vmatpush2.msra.mxu0 0.0
    %1902 = vmatprep.subr.mxu0 0.0
    %1903 = vmatpush2.msra.mxu0 0.0
    %1904 = vmatprep.subr.mxu0 0.0
    %1905 = vmatpush2.msra.mxu0 0.0
    %1906 = vmatprep.subr.mxu0 0.0
    %1907 = vmatpush2.msra.mxu0 0.0
    %1908 = vmatprep.subr.mxu0 0.0
    %1909 = vmatpush2.msra.mxu0 0.0
    %1910 = vmatprep.subr.mxu0 0.0
    %1911 = vmatpush2.msra.mxu0 0.0
    %1912 = vmatprep.subr.mxu0 0.0
    %1913 = vmatpush2.msra.mxu0 0.0
    %1914 = vmatprep.subr.mxu0 0.0
    %1915 = vmatpush2.msra.mxu0 0.0
    %1916 = vmatprep.subr.mxu0 0.0
    %1917 = vmatpush2.msra.mxu0 0.0
    %1918 = vmatprep.subr.mxu0 0.0
    %1919 = vmatpush2.msra.mxu0 0.0
    %1920 = vmatprep.subr.mxu0 0.0
    %1921 = vmatpush2.msra.mxu0 0.0
    %1922 = vmatprep.mubr.f32.mxu0 0.0
    %1923 = vmatmul.mubr.f32.gmra.mxu0 %v1847
    %v1924 = vpop.f32.mrf.mxu0
    %v1925 = vadd.f32 0.0, %v1924
    %v1926 = vpop.f32.mrf.mxu0
    %v1927 = vadd.f32 0.0, %v1926
    %1928 = vmatprep.mubr.f32.mxu0 0.0
    %1929 = vmatmul.mubr.f32.gmra.mxu0 %v1850
    %v1930 = vpop.f32.mrf.mxu0
    %v1931 = vadd.f32 0.0, %v1930
    %v1932 = vpop.f32.mrf.mxu0
    %v1933 = vadd.f32 0.0, %v1932
    %1934 = vmatprep.mubr.f32.mxu0 0.0
    %1935 = vmatmul.mubr.f32.gmra.mxu0 %v1853
    %v1936 = vpop.f32.mrf.mxu0
    %v1937 = vadd.f32 0.0, %v1936
    %v1938 = vpop.f32.mrf.mxu0
    %v1939 = vadd.f32 0.0, %v1938
    %1940 = vmatprep.mubr.f32.mxu0 0.0
    %1941 = vmatmul.mubr.f32.gmra.mxu0 %v1856
    %v1942 = vpop.f32.mrf.mxu0
    %v1943 = vadd.f32 0.0, %v1942
    %v1944 = vpop.f32.mrf.mxu0
    %v1945 = vadd.f32 0.0, %v1944
    %1946 = vdwg.mxu0
    %v1947 = vpack.c.bf16 %v1931, %v1925
    %v1948 = vpack.c.bf16 %v1933, %v1927
    %v1949 = vpack.c.bf16 %v1943, %v1937
    %v1950 = vpack.c.bf16 %v1945, %v1939
    %v1951 = vld [vmem:[%s15] sm:$0xf]
    %v1952 = vld [vmem:[%s15 + $0x4] sm:$0xf]
    %v1953 = vld [vmem:[%s15 + $0x8] sm:$0xf]
    %v1954 = vld [vmem:[%s15 + $0xc] sm:$0xf]
    %v1955 = vld [vmem:[%s15 + $0x10] sm:$0xf]
    %v1956 = vld [vmem:[%s15 + $0x14] sm:$0xf]
    %v1957 = vld [vmem:[%s15 + $0x18] sm:$0xf]
    %v1958 = vld [vmem:[%s15 + $0x1c] sm:$0xf]
    %v1959 = vld [vmem:[%s15 + $0x20] sm:$0xf]
    %v1960 = vld [vmem:[%s15 + $0x24] sm:$0xf]
    %v1961 = vld [vmem:[%s15 + $0x28] sm:$0xf]
    %v1962 = vld [vmem:[%s15 + $0x2c] sm:$0xf]
    %v1963 = vld [vmem:[%s15 + $0x30] sm:$0xf]
    %v1964 = vld [vmem:[%s15 + $0x34] sm:$0xf]
    %v1965 = vld [vmem:[%s15 + $0x38] sm:$0xf]
    %v1966 = vld [vmem:[%s15 + $0x3c] sm:$0xf]
    %v1967 = vld [vmem:[%s15 + $0x40] sm:$0xf]
    %v1968 = vld [vmem:[%s15 + $0x44] sm:$0xf]
    %v1969 = vld [vmem:[%s15 + $0x48] sm:$0xf]
    %v1970 = vld [vmem:[%s15 + $0x4c] sm:$0xf]
    %v1971 = vld [vmem:[%s15 + $0x50] sm:$0xf]
    %v1972 = vld [vmem:[%s15 + $0x54] sm:$0xf]
    %v1973 = vld [vmem:[%s15 + $0x58] sm:$0xf]
    %v1974 = vld [vmem:[%s15 + $0x5c] sm:$0xf]
    %v1975 = vld [vmem:[%s15 + $0x60] sm:$0xf]
    %v1976 = vld [vmem:[%s15 + $0x64] sm:$0xf]
    %v1977 = vld [vmem:[%s15 + $0x68] sm:$0xf]
    %v1978 = vld [vmem:[%s15 + $0x6c] sm:$0xf]
    %v1979 = vld [vmem:[%s15 + $0x70] sm:$0xf]
    %v1980 = vld [vmem:[%s15 + $0x74] sm:$0xf]
    %v1981 = vld [vmem:[%s15 + $0x78] sm:$0xf]
    %v1982 = vld [vmem:[%s15 + $0x7c] sm:$0xf]
    %s1983 = scalar_lea.vmem %s13, 32
    %v1984 = vld [vmem:[%s1983] sm:$0xff]
    %v1985 = vld [vmem:[%s1983 + $0x8] sm:$0xff]
    %v1986 = vld [vmem:[%s1983 + $0x10] sm:$0xff]
    %v1987 = vld [vmem:[%s1983 + $0x18] sm:$0xff]
    %v1989 = vsel %vm1845, %v1984, 0
    %v1992 = vsel %vm1845, %v1985, 0
    %v1995 = vsel %vm1845, %v1986, 0
    %v1998 = vsel %vm1845, %v1987, 0
    %2000 = vmatprep.subr.mxu0 0.0
    %2001 = vmatpush1.msra.mxu0 0.0
    %2002 = vmatprep.subr.mxu0 0.0
    %2003 = vmatpush1.msra.mxu0 0.0
    %2004 = vmatprep.subr.mxu0 0.0
    %2005 = vmatpush1.msra.mxu0 0.0
    %2006 = vmatprep.subr.mxu0 0.0
    %2007 = vmatpush1.msra.mxu0 0.0
    %2008 = vmatprep.subr.mxu0 0.0
    %2009 = vmatpush1.msra.mxu0 0.0
    %2010 = vmatprep.subr.mxu0 0.0
    %2011 = vmatpush1.msra.mxu0 0.0
    %2012 = vmatprep.subr.mxu0 0.0
    %2013 = vmatpush1.msra.mxu0 0.0
    %2014 = vmatprep.subr.mxu0 0.0
    %2015 = vmatpush1.msra.mxu0 0.0
    %2016 = vmatprep.subr.mxu0 %v1840
    %2017 = vmatpush1.msra.mxu0 %v1839
    %2018 = vmatprep.subr.mxu0 %v1838
    %2019 = vmatpush1.msra.mxu0 %v1837
    %2020 = vmatprep.subr.mxu0 %v1836
    %2021 = vmatpush1.msra.mxu0 %v1835
    %2022 = vmatprep.subr.mxu0 %v1834
    %2023 = vmatpush1.msra.mxu0 %v1833
    %2024 = vmatprep.subr.mxu0 %v1832
    %2025 = vmatpush1.msra.mxu0 %v1831
    %2026 = vmatprep.subr.mxu0 %v1830
    %2027 = vmatpush1.msra.mxu0 %v1829
    %2028 = vmatprep.subr.mxu0 %v1828
    %2029 = vmatpush1.msra.mxu0 %v1827
    %2030 = vmatprep.subr.mxu0 %v1826
    %2031 = vmatpush1.msra.mxu0 %v1825
    %2032 = vmatprep.subr.mxu0 0.0
    %2033 = vmatpush2.msra.mxu0 0.0
    %2034 = vmatprep.subr.mxu0 0.0
    %2035 = vmatpush2.msra.mxu0 0.0
    %2036 = vmatprep.subr.mxu0 0.0
    %2037 = vmatpush2.msra.mxu0 0.0
    %2038 = vmatprep.subr.mxu0 0.0
    %2039 = vmatpush2.msra.mxu0 0.0
    %2040 = vmatprep.subr.mxu0 0.0
    %2041 = vmatpush2.msra.mxu0 0.0
    %2042 = vmatprep.subr.mxu0 0.0
    %2043 = vmatpush2.msra.mxu0 0.0
    %2044 = vmatprep.subr.mxu0 0.0
    %2045 = vmatpush2.msra.mxu0 0.0
    %2046 = vmatprep.subr.mxu0 0.0
    %2047 = vmatpush2.msra.mxu0 0.0
    %2048 = vmatprep.subr.mxu0 0.0
    %2049 = vmatpush2.msra.mxu0 0.0
    %2050 = vmatprep.subr.mxu0 0.0
    %2051 = vmatpush2.msra.mxu0 0.0
    %2052 = vmatprep.subr.mxu0 0.0
    %2053 = vmatpush2.msra.mxu0 0.0
    %2054 = vmatprep.subr.mxu0 0.0
    %2055 = vmatpush2.msra.mxu0 0.0
    %2056 = vmatprep.subr.mxu0 0.0
    %2057 = vmatpush2.msra.mxu0 0.0
    %2058 = vmatprep.subr.mxu0 0.0
    %2059 = vmatpush2.msra.mxu0 0.0
    %2060 = vmatprep.subr.mxu0 0.0
    %2061 = vmatpush2.msra.mxu0 0.0
    %2062 = vmatprep.subr.mxu0 0.0
    %2063 = vmatpush2.msra.mxu0 0.0
    %2064 = vmatprep.mubr.f32.mxu0 0.0
    %2065 = vmatmul.mubr.f32.gmra.mxu0 %v1989
    %v2066 = vpop.f32.mrf.mxu0
    %v2067 = vadd.f32 0.0, %v2066
    %v2068 = vpop.f32.mrf.mxu0
    %v2069 = vadd.f32 0.0, %v2068
    %2070 = vmatprep.mubr.f32.mxu0 0.0
    %2071 = vmatmul.mubr.f32.gmra.mxu0 %v1992
    %v2072 = vpop.f32.mrf.mxu0
    %v2073 = vadd.f32 0.0, %v2072
    %v2074 = vpop.f32.mrf.mxu0
    %v2075 = vadd.f32 0.0, %v2074
    %2076 = vmatprep.mubr.f32.mxu0 0.0
    %2077 = vmatmul.mubr.f32.gmra.mxu0 %v1995
    %v2078 = vpop.f32.mrf.mxu0
    %v2079 = vadd.f32 0.0, %v2078
    %v2080 = vpop.f32.mrf.mxu0
    %v2081 = vadd.f32 0.0, %v2080
    %2082 = vmatprep.mubr.f32.mxu0 0.0
    %2083 = vmatmul.mubr.f32.gmra.mxu0 %v1998
    %v2084 = vpop.f32.mrf.mxu0
    %v2085 = vadd.f32 0.0, %v2084
    %v2086 = vpop.f32.mrf.mxu0
    %v2087 = vadd.f32 0.0, %v2086
    %2088 = vdwg.mxu0
    %v2089 = vpack.c.bf16 %v2073, %v2067
    %v2090 = vpack.c.bf16 %v2075, %v2069
    %v2091 = vpack.c.bf16 %v2085, %v2079
    %v2092 = vpack.c.bf16 %v2087, %v2081
    %s2093 = scalar_lea.vmem %s15, 128
    %v2094 = vld [vmem:[%s2093] sm:$0xf]
    %v2095 = vld [vmem:[%s2093 + $0x4] sm:$0xf]
    %v2096 = vld [vmem:[%s2093 + $0x8] sm:$0xf]
    %v2097 = vld [vmem:[%s2093 + $0xc] sm:$0xf]
    %v2098 = vld [vmem:[%s2093 + $0x10] sm:$0xf]
    %v2099 = vld [vmem:[%s2093 + $0x14] sm:$0xf]
    %v2100 = vld [vmem:[%s2093 + $0x18] sm:$0xf]
    %v2101 = vld [vmem:[%s2093 + $0x1c] sm:$0xf]
    %v2102 = vld [vmem:[%s2093 + $0x20] sm:$0xf]
    %v2103 = vld [vmem:[%s2093 + $0x24] sm:$0xf]
    %v2104 = vld [vmem:[%s2093 + $0x28] sm:$0xf]
    %v2105 = vld [vmem:[%s2093 + $0x2c] sm:$0xf]
    %v2106 = vld [vmem:[%s2093 + $0x30] sm:$0xf]
    %v2107 = vld [vmem:[%s2093 + $0x34] sm:$0xf]
    %v2108 = vld [vmem:[%s2093 + $0x38] sm:$0xf]
    %v2109 = vld [vmem:[%s2093 + $0x3c] sm:$0xf]
    %v2110 = vld [vmem:[%s2093 + $0x40] sm:$0xf]
    %v2111 = vld [vmem:[%s2093 + $0x44] sm:$0xf]
    %v2112 = vld [vmem:[%s2093 + $0x48] sm:$0xf]
    %v2113 = vld [vmem:[%s2093 + $0x4c] sm:$0xf]
    %v2114 = vld [vmem:[%s2093 + $0x50] sm:$0xf]
    %v2115 = vld [vmem:[%s2093 + $0x54] sm:$0xf]
    %v2116 = vld [vmem:[%s2093 + $0x58] sm:$0xf]
    %v2117 = vld [vmem:[%s2093 + $0x5c] sm:$0xf]
    %v2118 = vld [vmem:[%s2093 + $0x60] sm:$0xf]
    %v2119 = vld [vmem:[%s2093 + $0x64] sm:$0xf]
    %v2120 = vld [vmem:[%s2093 + $0x68] sm:$0xf]
    %v2121 = vld [vmem:[%s2093 + $0x6c] sm:$0xf]
    %v2122 = vld [vmem:[%s2093 + $0x70] sm:$0xf]
    %v2123 = vld [vmem:[%s2093 + $0x74] sm:$0xf]
    %v2124 = vld [vmem:[%s2093 + $0x78] sm:$0xf]
    %v2125 = vld [vmem:[%s2093 + $0x7c] sm:$0xf]
    %v2158 = vunpack.c.l.b16 %v2094
    %v2159 = vunpack.c.l.b16 %v2095
    %v2160 = vunpack.c.l.b16 %v2096
    %v2161 = vunpack.c.l.b16 %v2097
    %v2162 = vunpack.c.l.b16 %v2098
    %v2163 = vunpack.c.l.b16 %v2099
    %v2164 = vunpack.c.l.b16 %v2100
    %v2165 = vunpack.c.l.b16 %v2101
    %v2166 = vunpack.c.l.b16 %v2102
    %v2167 = vunpack.c.l.b16 %v2103
    %v2168 = vunpack.c.l.b16 %v2104
    %v2169 = vunpack.c.l.b16 %v2105
    %v2170 = vunpack.c.l.b16 %v2106
    %v2171 = vunpack.c.l.b16 %v2107
    %v2172 = vunpack.c.l.b16 %v2108
    %v2173 = vunpack.c.l.b16 %v2109
    %v2174 = vunpack.c.l.b16 %v2110
    %v2175 = vunpack.c.l.b16 %v2111
    %v2176 = vunpack.c.l.b16 %v2112
    %v2177 = vunpack.c.l.b16 %v2113
    %v2178 = vunpack.c.l.b16 %v2114
    %v2179 = vunpack.c.l.b16 %v2115
    %v2180 = vunpack.c.l.b16 %v2116
    %v2181 = vunpack.c.l.b16 %v2117
    %v2182 = vunpack.c.l.b16 %v2118
    %v2183 = vunpack.c.l.b16 %v2119
    %v2184 = vunpack.c.l.b16 %v2120
    %v2185 = vunpack.c.l.b16 %v2121
    %v2186 = vunpack.c.l.b16 %v2122
    %v2187 = vunpack.c.l.b16 %v2123
    %v2188 = vunpack.c.l.b16 %v2124
    %v2189 = vunpack.c.l.b16 %v2125
    %v2190 = vpack.c.b16 %v2159, %v2158
    %v2191 = vpack.c.b16 %v2161, %v2160
    %v2192 = vpack.c.b16 %v2163, %v2162
    %v2193 = vpack.c.b16 %v2165, %v2164
    %v2194 = vpack.c.b16 %v2167, %v2166
    %v2195 = vpack.c.b16 %v2169, %v2168
    %v2196 = vpack.c.b16 %v2171, %v2170
    %v2197 = vpack.c.b16 %v2173, %v2172
    %v2198 = vpack.c.b16 %v2175, %v2174
    %v2199 = vpack.c.b16 %v2177, %v2176
    %v2200 = vpack.c.b16 %v2179, %v2178
    %v2201 = vpack.c.b16 %v2181, %v2180
    %v2202 = vpack.c.b16 %v2183, %v2182
    %v2203 = vpack.c.b16 %v2185, %v2184
    %v2204 = vpack.c.b16 %v2187, %v2186
    %v2205 = vpack.c.b16 %v2189, %v2188
    %2222 = vmatprep.subr.bf16.mxu0 0
    %2223 = vmatpush1.bf16.msra.mxu0 %v2197
    %2224 = vmatprep.subr.bf16.mxu0 0
    %2225 = vmatpush1.bf16.msra.mxu0 %v2196
    %2226 = vmatprep.subr.bf16.mxu0 0
    %2227 = vmatpush1.bf16.msra.mxu0 %v2195
    %2228 = vmatprep.subr.bf16.mxu0 0
    %2229 = vmatpush1.bf16.msra.mxu0 %v2194
    %2230 = vmatprep.subr.bf16.mxu0 0
    %2231 = vmatpush1.bf16.msra.mxu0 %v2193
    %2232 = vmatprep.subr.bf16.mxu0 0
    %2233 = vmatpush1.bf16.msra.mxu0 %v2192
    %2234 = vmatprep.subr.bf16.mxu0 0
    %2235 = vmatpush1.bf16.msra.mxu0 %v2191
    %2236 = vmatprep.subr.bf16.mxu0 0
    %2237 = vmatpush1.bf16.msra.mxu0 %v2190
    %2238 = vmatprep.subr.bf16.mxu0 0
    %2239 = vmatpush2.bf16.msra.mxu0 %v2205
    %2240 = vmatprep.subr.bf16.mxu0 0
    %2241 = vmatpush2.bf16.msra.mxu0 %v2204
    %2242 = vmatprep.subr.bf16.mxu0 0
    %2243 = vmatpush2.bf16.msra.mxu0 %v2203
    %2244 = vmatprep.subr.bf16.mxu0 0
    %2245 = vmatpush2.bf16.msra.mxu0 %v2202
    %2246 = vmatprep.subr.bf16.mxu0 0
    %2247 = vmatpush2.bf16.msra.mxu0 %v2201
    %2248 = vmatprep.subr.bf16.mxu0 0
    %2249 = vmatpush2.bf16.msra.mxu0 %v2200
    %2250 = vmatprep.subr.bf16.mxu0 0
    %2251 = vmatpush2.bf16.msra.mxu0 %v2199
    %2252 = vmatprep.subr.bf16.mxu0 0
    %2253 = vmatpush2.bf16.msra.mxu0 %v2198
    %2254 = vmatprep.mubr.bf16.mxu0 %v2090
    %2255 = vmatmul.mubr.bf16.gmra.mxu0 %v2089
    %v2256 = vpop.f32.mrf.mxu0
    %v2257 = vadd.f32 0.0, %v2256
    %v2258 = vpop.f32.mrf.mxu0
    %v2259 = vpop.f32.mrf.mxu0
    %v2260 = vadd.f32 0.0, %v2259
    %v2261 = vpop.f32.mrf.mxu0
    %2262 = vmatprep.mubr.bf16.mxu0 %v2092
    %2263 = vmatmul.mubr.bf16.gmra.mxu0 %v2091
    %v2264 = vpop.f32.mrf.mxu0
    %v2265 = vadd.f32 0.0, %v2264
    %v2266 = vpop.f32.mrf.mxu0
    %v2267 = vpop.f32.mrf.mxu0
    %v2268 = vadd.f32 0.0, %v2267
    %v2269 = vpop.f32.mrf.mxu0
    %2270 = vdwg.mxu0
    %v2303 = vunpack.c.l.b16 %v1951
    %v2304 = vunpack.c.l.b16 %v1952
    %v2305 = vunpack.c.l.b16 %v1953
    %v2306 = vunpack.c.l.b16 %v1954
    %v2307 = vunpack.c.l.b16 %v1955
    %v2308 = vunpack.c.l.b16 %v1956
    %v2309 = vunpack.c.l.b16 %v1957
    %v2310 = vunpack.c.l.b16 %v1958
    %v2311 = vunpack.c.l.b16 %v1959
    %v2312 = vunpack.c.l.b16 %v1960
    %v2313 = vunpack.c.l.b16 %v1961
    %v2314 = vunpack.c.l.b16 %v1962
    %v2315 = vunpack.c.l.b16 %v1963
    %v2316 = vunpack.c.l.b16 %v1964
    %v2317 = vunpack.c.l.b16 %v1965
    %v2318 = vunpack.c.l.b16 %v1966
    %v2319 = vunpack.c.l.b16 %v1967
    %v2320 = vunpack.c.l.b16 %v1968
    %v2321 = vunpack.c.l.b16 %v1969
    %v2322 = vunpack.c.l.b16 %v1970
    %v2323 = vunpack.c.l.b16 %v1971
    %v2324 = vunpack.c.l.b16 %v1972
    %v2325 = vunpack.c.l.b16 %v1973
    %v2326 = vunpack.c.l.b16 %v1974
    %v2327 = vunpack.c.l.b16 %v1975
    %v2328 = vunpack.c.l.b16 %v1976
    %v2329 = vunpack.c.l.b16 %v1977
    %v2330 = vunpack.c.l.b16 %v1978
    %v2331 = vunpack.c.l.b16 %v1979
    %v2332 = vunpack.c.l.b16 %v1980
    %v2333 = vunpack.c.l.b16 %v1981
    %v2334 = vunpack.c.l.b16 %v1982
    %v2335 = vpack.c.b16 %v2304, %v2303
    %v2336 = vpack.c.b16 %v2306, %v2305
    %v2337 = vpack.c.b16 %v2308, %v2307
    %v2338 = vpack.c.b16 %v2310, %v2309
    %v2339 = vpack.c.b16 %v2312, %v2311
    %v2340 = vpack.c.b16 %v2314, %v2313
    %v2341 = vpack.c.b16 %v2316, %v2315
    %v2342 = vpack.c.b16 %v2318, %v2317
    %v2343 = vpack.c.b16 %v2320, %v2319
    %v2344 = vpack.c.b16 %v2322, %v2321
    %v2345 = vpack.c.b16 %v2324, %v2323
    %v2346 = vpack.c.b16 %v2326, %v2325
    %v2347 = vpack.c.b16 %v2328, %v2327
    %v2348 = vpack.c.b16 %v2330, %v2329
    %v2349 = vpack.c.b16 %v2332, %v2331
    %v2350 = vpack.c.b16 %v2334, %v2333
    %2367 = vmatprep.subr.bf16.mxu0 0
    %2368 = vmatpush1.bf16.msra.mxu0 %v2342
    %2369 = vmatprep.subr.bf16.mxu0 0
    %2370 = vmatpush1.bf16.msra.mxu0 %v2341
    %2371 = vmatprep.subr.bf16.mxu0 0
    %2372 = vmatpush1.bf16.msra.mxu0 %v2340
    %2373 = vmatprep.subr.bf16.mxu0 0
    %2374 = vmatpush1.bf16.msra.mxu0 %v2339
    %2375 = vmatprep.subr.bf16.mxu0 0
    %2376 = vmatpush1.bf16.msra.mxu0 %v2338
    %2377 = vmatprep.subr.bf16.mxu0 0
    %2378 = vmatpush1.bf16.msra.mxu0 %v2337
    %2379 = vmatprep.subr.bf16.mxu0 0
    %2380 = vmatpush1.bf16.msra.mxu0 %v2336
    %2381 = vmatprep.subr.bf16.mxu0 0
    %2382 = vmatpush1.bf16.msra.mxu0 %v2335
    %2383 = vmatprep.subr.bf16.mxu0 0
    %2384 = vmatpush2.bf16.msra.mxu0 %v2350
    %2385 = vmatprep.subr.bf16.mxu0 0
    %2386 = vmatpush2.bf16.msra.mxu0 %v2349
    %2387 = vmatprep.subr.bf16.mxu0 0
    %2388 = vmatpush2.bf16.msra.mxu0 %v2348
    %2389 = vmatprep.subr.bf16.mxu0 0
    %2390 = vmatpush2.bf16.msra.mxu0 %v2347
    %2391 = vmatprep.subr.bf16.mxu0 0
    %2392 = vmatpush2.bf16.msra.mxu0 %v2346
    %2393 = vmatprep.subr.bf16.mxu0 0
    %2394 = vmatpush2.bf16.msra.mxu0 %v2345
    %2395 = vmatprep.subr.bf16.mxu0 0
    %2396 = vmatpush2.bf16.msra.mxu0 %v2344
    %2397 = vmatprep.subr.bf16.mxu0 0
    %2398 = vmatpush2.bf16.msra.mxu0 %v2343
    %2399 = vmatprep.mubr.bf16.mxu0 %v1948
    %2400 = vmatmul.mubr.bf16.gmra.mxu0 %v1947
    %v2401 = vpop.f32.mrf.mxu0
    %v2402 = vadd.f32 %v2257, %v2401
    %v2403 = vpop.f32.mrf.mxu0
    %v2404 = vpop.f32.mrf.mxu0
    %v2405 = vadd.f32 %v2260, %v2404
    %v2406 = vpop.f32.mrf.mxu0
    %2407 = vmatprep.mubr.bf16.mxu0 %v1950
    %2408 = vmatmul.mubr.bf16.gmra.mxu0 %v1949
    %v2409 = vpop.f32.mrf.mxu0
    %v2410 = vadd.f32 %v2265, %v2409
    %v2411 = vpop.f32.mrf.mxu0
    %v2412 = vpop.f32.mrf.mxu0
    %v2413 = vadd.f32 %v2268, %v2412
    %v2414 = vpop.f32.mrf.mxu0
    %2415 = vdwg.mxu0
    %s2416 = scalar_lea.vmem %s13, 64
    %v2417 = vld [vmem:[%s2416] sm:$0xff]
    %v2418 = vld [vmem:[%s2416 + $0x8] sm:$0xff]
    %v2419 = vld [vmem:[%s2416 + $0x10] sm:$0xff]
    %v2420 = vld [vmem:[%s2416 + $0x18] sm:$0xff]
    %v2422 = vsel %vm1845, %v2417, 0
    %v2425 = vsel %vm1845, %v2418, 0
    %v2428 = vsel %vm1845, %v2419, 0
    %v2431 = vsel %vm1845, %v2420, 0
    %2433 = vmatprep.subr.mxu0 0.0
    %2434 = vmatpush1.msra.mxu0 0.0
    %2435 = vmatprep.subr.mxu0 0.0
    %2436 = vmatpush1.msra.mxu0 0.0
    %2437 = vmatprep.subr.mxu0 0.0
    %2438 = vmatpush1.msra.mxu0 0.0
    %2439 = vmatprep.subr.mxu0 0.0
    %2440 = vmatpush1.msra.mxu0 0.0
    %2441 = vmatprep.subr.mxu0 0.0
    %2442 = vmatpush1.msra.mxu0 0.0
    %2443 = vmatprep.subr.mxu0 0.0
    %2444 = vmatpush1.msra.mxu0 0.0
    %2445 = vmatprep.subr.mxu0 0.0
    %2446 = vmatpush1.msra.mxu0 0.0
    %2447 = vmatprep.subr.mxu0 0.0
    %2448 = vmatpush1.msra.mxu0 0.0
    %2449 = vmatprep.subr.mxu0 %v1840
    %2450 = vmatpush1.msra.mxu0 %v1839
    %2451 = vmatprep.subr.mxu0 %v1838
    %2452 = vmatpush1.msra.mxu0 %v1837
    %2453 = vmatprep.subr.mxu0 %v1836
    %2454 = vmatpush1.msra.mxu0 %v1835
    %2455 = vmatprep.subr.mxu0 %v1834
    %2456 = vmatpush1.msra.mxu0 %v1833
    %2457 = vmatprep.subr.mxu0 %v1832
    %2458 = vmatpush1.msra.mxu0 %v1831
    %2459 = vmatprep.subr.mxu0 %v1830
    %2460 = vmatpush1.msra.mxu0 %v1829
    %2461 = vmatprep.subr.mxu0 %v1828
    %2462 = vmatpush1.msra.mxu0 %v1827
    %2463 = vmatprep.subr.mxu0 %v1826
    %2464 = vmatpush1.msra.mxu0 %v1825
    %2465 = vmatprep.subr.mxu0 0.0
    %2466 = vmatpush2.msra.mxu0 0.0
    %2467 = vmatprep.subr.mxu0 0.0
    %2468 = vmatpush2.msra.mxu0 0.0
    %2469 = vmatprep.subr.mxu0 0.0
    %2470 = vmatpush2.msra.mxu0 0.0
    %2471 = vmatprep.subr.mxu0 0.0
    %2472 = vmatpush2.msra.mxu0 0.0
    %2473 = vmatprep.subr.mxu0 0.0
    %2474 = vmatpush2.msra.mxu0 0.0
    %2475 = vmatprep.subr.mxu0 0.0
    %2476 = vmatpush2.msra.mxu0 0.0
    %2477 = vmatprep.subr.mxu0 0.0
    %2478 = vmatpush2.msra.mxu0 0.0
    %2479 = vmatprep.subr.mxu0 0.0
    %2480 = vmatpush2.msra.mxu0 0.0
    %2481 = vmatprep.subr.mxu0 0.0
    %2482 = vmatpush2.msra.mxu0 0.0
    %2483 = vmatprep.subr.mxu0 0.0
    %2484 = vmatpush2.msra.mxu0 0.0
    %2485 = vmatprep.subr.mxu0 0.0
    %2486 = vmatpush2.msra.mxu0 0.0
    %2487 = vmatprep.subr.mxu0 0.0
    %2488 = vmatpush2.msra.mxu0 0.0
    %2489 = vmatprep.subr.mxu0 0.0
    %2490 = vmatpush2.msra.mxu0 0.0
    %2491 = vmatprep.subr.mxu0 0.0
    %2492 = vmatpush2.msra.mxu0 0.0
    %2493 = vmatprep.subr.mxu0 0.0
    %2494 = vmatpush2.msra.mxu0 0.0
    %2495 = vmatprep.subr.mxu0 0.0
    %2496 = vmatpush2.msra.mxu0 0.0
    %2497 = vmatprep.mubr.f32.mxu0 0.0
    %2498 = vmatmul.mubr.f32.gmra.mxu0 %v2422
    %v2499 = vpop.f32.mrf.mxu0
    %v2500 = vadd.f32 0.0, %v2499
    %v2501 = vpop.f32.mrf.mxu0
    %v2502 = vadd.f32 0.0, %v2501
    %2503 = vmatprep.mubr.f32.mxu0 0.0
    %2504 = vmatmul.mubr.f32.gmra.mxu0 %v2425
    %v2505 = vpop.f32.mrf.mxu0
    %v2506 = vadd.f32 0.0, %v2505
    %v2507 = vpop.f32.mrf.mxu0
    %v2508 = vadd.f32 0.0, %v2507
    %2509 = vmatprep.mubr.f32.mxu0 0.0
    %2510 = vmatmul.mubr.f32.gmra.mxu0 %v2428
    %v2511 = vpop.f32.mrf.mxu0
    %v2512 = vadd.f32 0.0, %v2511
    %v2513 = vpop.f32.mrf.mxu0
    %v2514 = vadd.f32 0.0, %v2513
    %2515 = vmatprep.mubr.f32.mxu0 0.0
    %2516 = vmatmul.mubr.f32.gmra.mxu0 %v2431
    %v2517 = vpop.f32.mrf.mxu0
    %v2518 = vadd.f32 0.0, %v2517
    %v2519 = vpop.f32.mrf.mxu0
    %v2520 = vadd.f32 0.0, %v2519
    %2521 = vdwg.mxu0
    %v2522 = vpack.c.bf16 %v2506, %v2500
    %v2523 = vpack.c.bf16 %v2508, %v2502
    %v2524 = vpack.c.bf16 %v2518, %v2512
    %v2525 = vpack.c.bf16 %v2520, %v2514
    %s2526 = scalar_lea.vmem %s15, 256
    %v2527 = vld [vmem:[%s2526] sm:$0xf]
    %v2528 = vld [vmem:[%s2526 + $0x4] sm:$0xf]
    %v2529 = vld [vmem:[%s2526 + $0x8] sm:$0xf]
    %v2530 = vld [vmem:[%s2526 + $0xc] sm:$0xf]
    %v2531 = vld [vmem:[%s2526 + $0x10] sm:$0xf]
    %v2532 = vld [vmem:[%s2526 + $0x14] sm:$0xf]
    %v2533 = vld [vmem:[%s2526 + $0x18] sm:$0xf]
    %v2534 = vld [vmem:[%s2526 + $0x1c] sm:$0xf]
    %v2535 = vld [vmem:[%s2526 + $0x20] sm:$0xf]
    %v2536 = vld [vmem:[%s2526 + $0x24] sm:$0xf]
    %v2537 = vld [vmem:[%s2526 + $0x28] sm:$0xf]
    %v2538 = vld [vmem:[%s2526 + $0x2c] sm:$0xf]
    %v2539 = vld [vmem:[%s2526 + $0x30] sm:$0xf]
    %v2540 = vld [vmem:[%s2526 + $0x34] sm:$0xf]
    %v2541 = vld [vmem:[%s2526 + $0x38] sm:$0xf]
    %v2542 = vld [vmem:[%s2526 + $0x3c] sm:$0xf]
    %v2543 = vld [vmem:[%s2526 + $0x40] sm:$0xf]
    %v2544 = vld [vmem:[%s2526 + $0x44] sm:$0xf]
    %v2545 = vld [vmem:[%s2526 + $0x48] sm:$0xf]
    %v2546 = vld [vmem:[%s2526 + $0x4c] sm:$0xf]
    %v2547 = vld [vmem:[%s2526 + $0x50] sm:$0xf]
    %v2548 = vld [vmem:[%s2526 + $0x54] sm:$0xf]
    %v2549 = vld [vmem:[%s2526 + $0x58] sm:$0xf]
    %v2550 = vld [vmem:[%s2526 + $0x5c] sm:$0xf]
    %v2551 = vld [vmem:[%s2526 + $0x60] sm:$0xf]
    %v2552 = vld [vmem:[%s2526 + $0x64] sm:$0xf]
    %v2553 = vld [vmem:[%s2526 + $0x68] sm:$0xf]
    %v2554 = vld [vmem:[%s2526 + $0x6c] sm:$0xf]
    %v2555 = vld [vmem:[%s2526 + $0x70] sm:$0xf]
    %v2556 = vld [vmem:[%s2526 + $0x74] sm:$0xf]
    %v2557 = vld [vmem:[%s2526 + $0x78] sm:$0xf]
    %v2558 = vld [vmem:[%s2526 + $0x7c] sm:$0xf]
    %v2591 = vunpack.c.l.b16 %v2527
    %v2592 = vunpack.c.l.b16 %v2528
    %v2593 = vunpack.c.l.b16 %v2529
    %v2594 = vunpack.c.l.b16 %v2530
    %v2595 = vunpack.c.l.b16 %v2531
    %v2596 = vunpack.c.l.b16 %v2532
    %v2597 = vunpack.c.l.b16 %v2533
    %v2598 = vunpack.c.l.b16 %v2534
    %v2599 = vunpack.c.l.b16 %v2535
    %v2600 = vunpack.c.l.b16 %v2536
    %v2601 = vunpack.c.l.b16 %v2537
    %v2602 = vunpack.c.l.b16 %v2538
    %v2603 = vunpack.c.l.b16 %v2539
    %v2604 = vunpack.c.l.b16 %v2540
    %v2605 = vunpack.c.l.b16 %v2541
    %v2606 = vunpack.c.l.b16 %v2542
    %v2607 = vunpack.c.l.b16 %v2543
    %v2608 = vunpack.c.l.b16 %v2544
    %v2609 = vunpack.c.l.b16 %v2545
    %v2610 = vunpack.c.l.b16 %v2546
    %v2611 = vunpack.c.l.b16 %v2547
    %v2612 = vunpack.c.l.b16 %v2548
    %v2613 = vunpack.c.l.b16 %v2549
    %v2614 = vunpack.c.l.b16 %v2550
    %v2615 = vunpack.c.l.b16 %v2551
    %v2616 = vunpack.c.l.b16 %v2552
    %v2617 = vunpack.c.l.b16 %v2553
    %v2618 = vunpack.c.l.b16 %v2554
    %v2619 = vunpack.c.l.b16 %v2555
    %v2620 = vunpack.c.l.b16 %v2556
    %v2621 = vunpack.c.l.b16 %v2557
    %v2622 = vunpack.c.l.b16 %v2558
    %v2623 = vpack.c.b16 %v2592, %v2591
    %v2624 = vpack.c.b16 %v2594, %v2593
    %v2625 = vpack.c.b16 %v2596, %v2595
    %v2626 = vpack.c.b16 %v2598, %v2597
    %v2627 = vpack.c.b16 %v2600, %v2599
    %v2628 = vpack.c.b16 %v2602, %v2601
    %v2629 = vpack.c.b16 %v2604, %v2603
    %v2630 = vpack.c.b16 %v2606, %v2605
    %v2631 = vpack.c.b16 %v2608, %v2607
    %v2632 = vpack.c.b16 %v2610, %v2609
    %v2633 = vpack.c.b16 %v2612, %v2611
    %v2634 = vpack.c.b16 %v2614, %v2613
    %v2635 = vpack.c.b16 %v2616, %v2615
    %v2636 = vpack.c.b16 %v2618, %v2617
    %v2637 = vpack.c.b16 %v2620, %v2619
    %v2638 = vpack.c.b16 %v2622, %v2621
    %2655 = vmatprep.subr.bf16.mxu0 0
    %2656 = vmatpush1.bf16.msra.mxu0 %v2630
    %2657 = vmatprep.subr.bf16.mxu0 0
    %2658 = vmatpush1.bf16.msra.mxu0 %v2629
    %2659 = vmatprep.subr.bf16.mxu0 0
    %2660 = vmatpush1.bf16.msra.mxu0 %v2628
    %2661 = vmatprep.subr.bf16.mxu0 0
    %2662 = vmatpush1.bf16.msra.mxu0 %v2627
    %2663 = vmatprep.subr.bf16.mxu0 0
    %2664 = vmatpush1.bf16.msra.mxu0 %v2626
    %2665 = vmatprep.subr.bf16.mxu0 0
    %2666 = vmatpush1.bf16.msra.mxu0 %v2625
    %2667 = vmatprep.subr.bf16.mxu0 0
    %2668 = vmatpush1.bf16.msra.mxu0 %v2624
    %2669 = vmatprep.subr.bf16.mxu0 0
    %2670 = vmatpush1.bf16.msra.mxu0 %v2623
    %2671 = vmatprep.subr.bf16.mxu0 0
    %2672 = vmatpush2.bf16.msra.mxu0 %v2638
    %2673 = vmatprep.subr.bf16.mxu0 0
    %2674 = vmatpush2.bf16.msra.mxu0 %v2637
    %2675 = vmatprep.subr.bf16.mxu0 0
    %2676 = vmatpush2.bf16.msra.mxu0 %v2636
    %2677 = vmatprep.subr.bf16.mxu0 0
    %2678 = vmatpush2.bf16.msra.mxu0 %v2635
    %2679 = vmatprep.subr.bf16.mxu0 0
    %2680 = vmatpush2.bf16.msra.mxu0 %v2634
    %2681 = vmatprep.subr.bf16.mxu0 0
    %2682 = vmatpush2.bf16.msra.mxu0 %v2633
    %2683 = vmatprep.subr.bf16.mxu0 0
    %2684 = vmatpush2.bf16.msra.mxu0 %v2632
    %2685 = vmatprep.subr.bf16.mxu0 0
    %2686 = vmatpush2.bf16.msra.mxu0 %v2631
    %2687 = vmatprep.mubr.bf16.mxu0 %v2523
    %2688 = vmatmul.mubr.bf16.gmra.mxu0 %v2522
    %v2689 = vpop.f32.mrf.mxu0
    %v2690 = vadd.f32 0.0, %v2689
    %v2691 = vpop.f32.mrf.mxu0
    %v2692 = vpop.f32.mrf.mxu0
    %v2693 = vadd.f32 0.0, %v2692
    %v2694 = vpop.f32.mrf.mxu0
    %2695 = vmatprep.mubr.bf16.mxu0 %v2525
    %2696 = vmatmul.mubr.bf16.gmra.mxu0 %v2524
    %v2697 = vpop.f32.mrf.mxu0
    %v2698 = vadd.f32 0.0, %v2697
    %v2699 = vpop.f32.mrf.mxu0
    %v2700 = vpop.f32.mrf.mxu0
    %v2701 = vadd.f32 0.0, %v2700
    %v2702 = vpop.f32.mrf.mxu0
    %2703 = vdwg.mxu0
    %v2704 = vadd.f32 %v2402, %v2690
    %v2705 = vadd.f32 %v2405, %v2693
    %v2706 = vadd.f32 %v2410, %v2698
    %v2707 = vadd.f32 %v2413, %v2701
    %v2708 = vld [vmem:[%s21] sm:$0x3]
    %v2709 = vld [vmem:[%s17] sm:$0xff]
    %v2710 = vld [vmem:[%s17 + $0x8] sm:$0xff]
    %v2711 = vld [vmem:[%s17 + $0x10] sm:$0xff]
    %v2712 = vld [vmem:[%s17 + $0x18] sm:$0xff]
    %v2713 = vld [vmem:[%s17 + $0x20] sm:$0xff]
    %v2714 = vld [vmem:[%s17 + $0x28] sm:$0xff]
    %v2715 = vld [vmem:[%s17 + $0x30] sm:$0xff]
    %v2716 = vld [vmem:[%s17 + $0x38] sm:$0xff]
    %v2717 = vld [vmem:[%s17 + $0x40] sm:$0xff]
    %v2718 = vld [vmem:[%s17 + $0x48] sm:$0xff]
    %v2719 = vld [vmem:[%s17 + $0x50] sm:$0xff]
    %v2720 = vld [vmem:[%s17 + $0x58] sm:$0xff]
    %v2721 = vld [vmem:[%s17 + $0x60] sm:$0xff]
    %v2722 = vld [vmem:[%s17 + $0x68] sm:$0xff]
    %v2723 = vld [vmem:[%s17 + $0x70] sm:$0xff]
    %v2724 = vld [vmem:[%s17 + $0x78] sm:$0xff]
    %2725 = vmatprep.subr.mxu0 0.0
    %2726 = vmatpush1.msra.mxu0 %v2724
    %2727 = vmatprep.subr.mxu0 0.0
    %2728 = vmatpush1.msra.mxu0 %v2723
    %2729 = vmatprep.subr.mxu0 0.0
    %2730 = vmatpush1.msra.mxu0 %v2722
    %2731 = vmatprep.subr.mxu0 0.0
    %2732 = vmatpush1.msra.mxu0 %v2721
    %2733 = vmatprep.subr.mxu0 0.0
    %2734 = vmatpush1.msra.mxu0 %v2720
    %2735 = vmatprep.subr.mxu0 0.0
    %2736 = vmatpush1.msra.mxu0 %v2719
    %2737 = vmatprep.subr.mxu0 0.0
    %2738 = vmatpush1.msra.mxu0 %v2718
    %2739 = vmatprep.subr.mxu0 0.0
    %2740 = vmatpush1.msra.mxu0 %v2717
    %2741 = vmatprep.subr.mxu0 0.0
    %2742 = vmatpush1.msra.mxu0 %v2716
    %2743 = vmatprep.subr.mxu0 0.0
    %2744 = vmatpush1.msra.mxu0 %v2715
    %2745 = vmatprep.subr.mxu0 0.0
    %2746 = vmatpush1.msra.mxu0 %v2714
    %2747 = vmatprep.subr.mxu0 0.0
    %2748 = vmatpush1.msra.mxu0 %v2713
    %2749 = vmatprep.subr.mxu0 0.0
    %2750 = vmatpush1.msra.mxu0 %v2712
    %2751 = vmatprep.subr.mxu0 0.0
    %2752 = vmatpush1.msra.mxu0 %v2711
    %2753 = vmatprep.subr.mxu0 0.0
    %2754 = vmatpush1.msra.mxu0 %v2710
    %2755 = vmatprep.subr.mxu0 0.0
    %2756 = vmatpush1.msra.mxu0 %v2709
    %2757 = vmatprep.subr.mxu0 0.0
    %2758 = vmatpush2.msra.mxu0 0.0
    %2759 = vmatprep.subr.mxu0 0.0
    %2760 = vmatpush2.msra.mxu0 0.0
    %2761 = vmatprep.subr.mxu0 0.0
    %2762 = vmatpush2.msra.mxu0 0.0
    %2763 = vmatprep.subr.mxu0 0.0
    %2764 = vmatpush2.msra.mxu0 0.0
    %2765 = vmatprep.subr.mxu0 0.0
    %2766 = vmatpush2.msra.mxu0 0.0
    %2767 = vmatprep.subr.mxu0 0.0
    %2768 = vmatpush2.msra.mxu0 0.0
    %2769 = vmatprep.subr.mxu0 0.0
    %2770 = vmatpush2.msra.mxu0 0.0
    %2771 = vmatprep.subr.mxu0 0.0
    %2772 = vmatpush2.msra.mxu0 0.0
    %2773 = vmatprep.subr.mxu0 0.0
    %2774 = vmatpush2.msra.mxu0 0.0
    %2775 = vmatprep.subr.mxu0 0.0
    %2776 = vmatpush2.msra.mxu0 0.0
    %2777 = vmatprep.subr.mxu0 0.0
    %2778 = vmatpush2.msra.mxu0 0.0
    %2779 = vmatprep.subr.mxu0 0.0
    %2780 = vmatpush2.msra.mxu0 0.0
    %2781 = vmatprep.subr.mxu0 0.0
    %2782 = vmatpush2.msra.mxu0 0.0
    %2783 = vmatprep.subr.mxu0 0.0
    %2784 = vmatpush2.msra.mxu0 0.0
    %2785 = vmatprep.subr.mxu0 0.0
    %2786 = vmatpush2.msra.mxu0 0.0
    %2787 = vmatprep.subr.mxu0 0.0
    %2788 = vmatpush2.msra.mxu0 0.0
    %2789 = vmatprep.mubr.f32.mxu0 0.0
    %2790 = vmatmul.mubr.f32.gmra.mxu0 %v2704
    %v2791 = vpop.f32.mrf.mxu0
    %v2792 = vadd.f32 0.0, %v2791
    %v2793 = vpop.f32.mrf.mxu0
    %2794 = vmatprep.mubr.f32.mxu0 0.0
    %2795 = vmatmul.mubr.f32.gmra.mxu0 %v2705
    %v2796 = vpop.f32.mrf.mxu0
    %v2797 = vadd.f32 0.0, %v2796
    %v2798 = vpop.f32.mrf.mxu0
    %2799 = vmatprep.mubr.f32.mxu0 0.0
    %2800 = vmatmul.mubr.f32.gmra.mxu0 %v2706
    %v2801 = vpop.f32.mrf.mxu0
    %v2802 = vadd.f32 0.0, %v2801
    %v2803 = vpop.f32.mrf.mxu0
    %2804 = vmatprep.mubr.f32.mxu0 0.0
    %2805 = vmatmul.mubr.f32.gmra.mxu0 %v2707
    %v2806 = vpop.f32.mrf.mxu0
    %v2807 = vadd.f32 0.0, %v2806
    %v2808 = vpop.f32.mrf.mxu0
    %2809 = vdwg.mxu0
    %v2810 = vmul.f32 %v2704, %v2704
    %v2811 = vmul.f32 %v2705, %v2705
    %v2812 = vmul.f32 %v2706, %v2706
    %v2813 = vmul.f32 %v2707, %v2707
    %2814 = vmatprep.subr.mxu0 0.0
    %2815 = vmatpush1.msra.mxu0 %v2724
    %2816 = vmatprep.subr.mxu0 0.0
    %2817 = vmatpush1.msra.mxu0 %v2723
    %2818 = vmatprep.subr.mxu0 0.0
    %2819 = vmatpush1.msra.mxu0 %v2722
    %2820 = vmatprep.subr.mxu0 0.0
    %2821 = vmatpush1.msra.mxu0 %v2721
    %2822 = vmatprep.subr.mxu0 0.0
    %2823 = vmatpush1.msra.mxu0 %v2720
    %2824 = vmatprep.subr.mxu0 0.0
    %2825 = vmatpush1.msra.mxu0 %v2719
    %2826 = vmatprep.subr.mxu0 0.0
    %2827 = vmatpush1.msra.mxu0 %v2718
    %2828 = vmatprep.subr.mxu0 0.0
    %2829 = vmatpush1.msra.mxu0 %v2717
    %2830 = vmatprep.subr.mxu0 0.0
    %2831 = vmatpush1.msra.mxu0 %v2716
    %2832 = vmatprep.subr.mxu0 0.0
    %2833 = vmatpush1.msra.mxu0 %v2715
    %2834 = vmatprep.subr.mxu0 0.0
    %2835 = vmatpush1.msra.mxu0 %v2714
    %2836 = vmatprep.subr.mxu0 0.0
    %2837 = vmatpush1.msra.mxu0 %v2713
    %2838 = vmatprep.subr.mxu0 0.0
    %2839 = vmatpush1.msra.mxu0 %v2712
    %2840 = vmatprep.subr.mxu0 0.0
    %2841 = vmatpush1.msra.mxu0 %v2711
    %2842 = vmatprep.subr.mxu0 0.0
    %2843 = vmatpush1.msra.mxu0 %v2710
    %2844 = vmatprep.subr.mxu0 0.0
    %2845 = vmatpush1.msra.mxu0 %v2709
    %2846 = vmatprep.subr.mxu0 0.0
    %2847 = vmatpush2.msra.mxu0 0.0
    %2848 = vmatprep.subr.mxu0 0.0
    %2849 = vmatpush2.msra.mxu0 0.0
    %2850 = vmatprep.subr.mxu0 0.0
    %2851 = vmatpush2.msra.mxu0 0.0
    %2852 = vmatprep.subr.mxu0 0.0
    %2853 = vmatpush2.msra.mxu0 0.0
    %2854 = vmatprep.subr.mxu0 0.0
    %2855 = vmatpush2.msra.mxu0 0.0
    %2856 = vmatprep.subr.mxu0 0.0
    %2857 = vmatpush2.msra.mxu0 0.0
    %2858 = vmatprep.subr.mxu0 0.0
    %2859 = vmatpush2.msra.mxu0 0.0
    %2860 = vmatprep.subr.mxu0 0.0
    %2861 = vmatpush2.msra.mxu0 0.0
    %2862 = vmatprep.subr.mxu0 0.0
    %2863 = vmatpush2.msra.mxu0 0.0
    %2864 = vmatprep.subr.mxu0 0.0
    %2865 = vmatpush2.msra.mxu0 0.0
    %2866 = vmatprep.subr.mxu0 0.0
    %2867 = vmatpush2.msra.mxu0 0.0
    %2868 = vmatprep.subr.mxu0 0.0
    %2869 = vmatpush2.msra.mxu0 0.0
    %2870 = vmatprep.subr.mxu0 0.0
    %2871 = vmatpush2.msra.mxu0 0.0
    %2872 = vmatprep.subr.mxu0 0.0
    %2873 = vmatpush2.msra.mxu0 0.0
    %2874 = vmatprep.subr.mxu0 0.0
    %2875 = vmatpush2.msra.mxu0 0.0
    %2876 = vmatprep.subr.mxu0 0.0
    %2877 = vmatpush2.msra.mxu0 0.0
    %2878 = vmatprep.mubr.f32.mxu0 0.0
    %2879 = vmatmul.mubr.f32.gmra.mxu0 %v2810
    %v2880 = vpop.f32.mrf.mxu0
    %v2881 = vadd.f32 0.0, %v2880
    %v2882 = vpop.f32.mrf.mxu0
    %2883 = vmatprep.mubr.f32.mxu0 0.0
    %2884 = vmatmul.mubr.f32.gmra.mxu0 %v2811
    %v2885 = vpop.f32.mrf.mxu0
    %v2886 = vadd.f32 0.0, %v2885
    %v2887 = vpop.f32.mrf.mxu0
    %2888 = vmatprep.mubr.f32.mxu0 0.0
    %2889 = vmatmul.mubr.f32.gmra.mxu0 %v2812
    %v2890 = vpop.f32.mrf.mxu0
    %v2891 = vadd.f32 0.0, %v2890
    %v2892 = vpop.f32.mrf.mxu0
    %2893 = vmatprep.mubr.f32.mxu0 0.0
    %2894 = vmatmul.mubr.f32.gmra.mxu0 %v2813
    %v2895 = vpop.f32.mrf.mxu0
    %v2896 = vadd.f32 0.0, %v2895
    %v2897 = vpop.f32.mrf.mxu0
    %2898 = vdwg.mxu0
    %v2899 = vsel %vm1633, %v2792, 0.0
    %v2900 = vsel %vm1633, %v2797, 0.0
    %v2901 = vadd.f32 %v2899, %v2900
    %v2902 = vsel %vm1633, %v2802, 0.0
    %v2903 = vadd.f32 %v2901, %v2902
    %v2904 = vsel %vm1633, %v2807, 0.0
    %v2905 = vadd.f32 %v2903, %v2904
    %v2906 = vrot.slane %v2905, 4
    %v2907 = vadd.f32 %v2905, %v2906
    %v2908 = vrot.slane %v2907, 2
    %v2909 = vadd.f32 %v2907, %v2908
    %v2910 = vrot.slane %v2909, 1
    %v2911 = vadd.f32 %v2909, %v2910
    %v2912 = vrcp.pop 512.0
    %v2913 = vmul.f32 %v2911, %v2912
    %v2914 = vsel %vm1633, %v2881, 0.0
    %v2915 = vsel %vm1633, %v2886, 0.0
    %v2916 = vadd.f32 %v2914, %v2915
    %v2917 = vsel %vm1633, %v2891, 0.0
    %v2918 = vadd.f32 %v2916, %v2917
    %v2919 = vsel %vm1633, %v2896, 0.0
    %v2920 = vadd.f32 %v2918, %v2919
    %v2921 = vrot.slane %v2920, 4
    %v2922 = vadd.f32 %v2920, %v2921
    %v2923 = vrot.slane %v2922, 2
    %v2924 = vadd.f32 %v2922, %v2923
    %v2925 = vrot.slane %v2924, 1
    %v2926 = vadd.f32 %v2924, %v2925
    %v2927 = vmul.f32 %v2926, %v2912
    %v2928 = vmul.f32 %v2913, %v2913
    %v2929 = vsub.f32 %v2927, %v2928
    %v2930 = vadd.f32 %v2929, 1e-05
    %v2931 = vrsqrt.pop %v2930
    %v2932 = vmul.f32 %v2708, %v2931
    %v2933 = vmul.f32 %v2913, %v2932
    %v2935 = vrot.slane %v2933, 7
    %v2937 = vsub.f32 %v2708, %v2935
    %v2938 = vlaneseq
    %v2939 = vshrl.u32 %v2938, 7
    %v2940 = vsub.s32 0, %v2939
    %v2941 = vrot.slane %v2932, %v2940
    %v2942 = vlaneseq
    %v2943 = vshrl.u32 %v2942, 7
    %v2944 = vsub.s32 1, %v2943
    %v2945 = vrot.slane %v2937, %v2944
    %v2946 = vsel %vm1691, %v2941, %v2945
    %v2947 = vld [vmem:[%s19] sm:$0xff]
    %v2949 = vsel %vm1633, %v2946, 0
    %2951 = vmatprep.subr.mxu0 0.0
    %2952 = vmatpush1.msra.mxu0 0.0
    %2953 = vmatprep.subr.mxu0 0.0
    %2954 = vmatpush1.msra.mxu0 0.0
    %2955 = vmatprep.subr.mxu0 0.0
    %2956 = vmatpush1.msra.mxu0 0.0
    %2957 = vmatprep.subr.mxu0 0.0
    %2958 = vmatpush1.msra.mxu0 0.0
    %2959 = vmatprep.subr.mxu0 0.0
    %2960 = vmatpush1.msra.mxu0 0.0
    %2961 = vmatprep.subr.mxu0 0.0
    %2962 = vmatpush1.msra.mxu0 0.0
    %2963 = vmatprep.subr.mxu0 0.0
    %2964 = vmatpush1.msra.mxu0 0.0
    %2965 = vmatprep.subr.mxu0 0.0
    %2966 = vmatpush1.msra.mxu0 0.0
    %2967 = vmatprep.subr.mxu0 0.0
    %2968 = vmatpush1.msra.mxu0 0.0
    %2969 = vmatprep.subr.mxu0 0.0
    %2970 = vmatpush1.msra.mxu0 0.0
    %2971 = vmatprep.subr.mxu0 0.0
    %2972 = vmatpush1.msra.mxu0 0.0
    %2973 = vmatprep.subr.mxu0 0.0
    %2974 = vmatpush1.msra.mxu0 0.0
    %2975 = vmatprep.subr.mxu0 0.0
    %2976 = vmatpush1.msra.mxu0 0.0
    %2977 = vmatprep.subr.mxu0 0.0
    %2978 = vmatpush1.msra.mxu0 0.0
    %2979 = vmatprep.subr.mxu0 0.0
    %2980 = vmatpush1.msra.mxu0 0.0
    %2981 = vmatprep.subr.mxu0 0.0
    %2982 = vmatpush1.msra.mxu0 %v2947
    %2983 = vmatprep.subr.mxu0 0.0
    %2984 = vmatpush2.msra.mxu0 0.0
    %2985 = vmatprep.subr.mxu0 0.0
    %2986 = vmatpush2.msra.mxu0 0.0
    %2987 = vmatprep.subr.mxu0 0.0
    %2988 = vmatpush2.msra.mxu0 0.0
    %2989 = vmatprep.subr.mxu0 0.0
    %2990 = vmatpush2.msra.mxu0 0.0
    %2991 = vmatprep.subr.mxu0 0.0
    %2992 = vmatpush2.msra.mxu0 0.0
    %2993 = vmatprep.subr.mxu0 0.0
    %2994 = vmatpush2.msra.mxu0 0.0
    %2995 = vmatprep.subr.mxu0 0.0
    %2996 = vmatpush2.msra.mxu0 0.0
    %2997 = vmatprep.subr.mxu0 0.0
    %2998 = vmatpush2.msra.mxu0 0.0
    %2999 = vmatprep.subr.mxu0 0.0
    %3000 = vmatpush2.msra.mxu0 0.0
    %3001 = vmatprep.subr.mxu0 0.0
    %3002 = vmatpush2.msra.mxu0 0.0
    %3003 = vmatprep.subr.mxu0 0.0
    %3004 = vmatpush2.msra.mxu0 0.0
    %3005 = vmatprep.subr.mxu0 0.0
    %3006 = vmatpush2.msra.mxu0 0.0
    %3007 = vmatprep.subr.mxu0 0.0
    %3008 = vmatpush2.msra.mxu0 0.0
    %3009 = vmatprep.subr.mxu0 0.0
    %3010 = vmatpush2.msra.mxu0 0.0
    %3011 = vmatprep.subr.mxu0 0.0
    %3012 = vmatpush2.msra.mxu0 0.0
    %3013 = vmatprep.subr.mxu0 0.0
    %3014 = vmatpush2.msra.mxu0 0.0
    %3015 = vmatprep.mubr.f32.mxu0 0.0
    %3016 = vmatmul.mubr.f32.gmra.mxu0 %v2949
    %v3017 = vpop.f32.mrf.mxu0
    %v3018 = vadd.f32 0.0, %v3017
    %v3019 = vpop.f32.mrf.mxu0
    %3020 = vdwg.mxu0
    %v3021 = vlaneseq
    %v3022 = vshrl.u32 %v3021, 7
    %v3023 = vsub.s32 0, %v3022
    %v3024 = vrot.slane %v3018, %v3023
    %v3025 = vmul.f32 %v2704, %v3024
    %v3026 = vmul.f32 %v2705, %v3024
    %v3027 = vmul.f32 %v2706, %v3024
    %v3028 = vmul.f32 %v2707, %v3024
    %v3029 = vlaneseq
    %v3030 = vshrl.u32 %v3029, 7
    %v3031 = vsub.s32 1, %v3030
    %v3032 = vrot.slane %v3018, %v3031
    %v3033 = vadd.f32 %v3025, %v3032
    %v3034 = vadd.f32 %v3026, %v3032
    %v3035 = vadd.f32 %v3027, %v3032
    %v3036 = vadd.f32 %v3028, %v3032
    %v3037 = vmax.f32 %v3033, 0.0
    %v3038 = vmax.f32 %v3034, 0.0
    %v3039 = vmax.f32 %v3035, 0.0
    %v3040 = vmax.f32 %v3036, 0.0
    %v3041 = vld [vmem:[%s23] sm:$0xff]
    %v3042 = vld [vmem:[%s23 + $0x8] sm:$0xff]
    %vm3043 = vcmask 261120
    %v3045 = vsel %vm3043, %v3041, 0
    %v3048 = vsel %vm3043, %v3042, 0
    %3050 = vmatprep.subr.mxu0 0.0
    %3051 = vmatpush1.msra.mxu0 0.0
    %3052 = vmatprep.subr.mxu0 0.0
    %3053 = vmatpush1.msra.mxu0 0.0
    %3054 = vmatprep.subr.mxu0 0.0
    %3055 = vmatpush1.msra.mxu0 0.0
    %3056 = vmatprep.subr.mxu0 0.0
    %3057 = vmatpush1.msra.mxu0 0.0
    %3058 = vmatprep.subr.mxu0 0.0
    %3059 = vmatpush1.msra.mxu0 0.0
    %3060 = vmatprep.subr.mxu0 0.0
    %3061 = vmatpush1.msra.mxu0 0.0
    %3062 = vmatprep.subr.mxu0 0.0
    %3063 = vmatpush1.msra.mxu0 0.0
    %3064 = vmatprep.subr.mxu0 0.0
    %3065 = vmatpush1.msra.mxu0 0.0
    %3066 = vmatprep.subr.mxu0 0.0
    %3067 = vmatpush1.msra.mxu0 0.0
    %3068 = vmatprep.subr.mxu0 0.0
    %3069 = vmatpush1.msra.mxu0 0.0
    %3070 = vmatprep.subr.mxu0 0.0
    %3071 = vmatpush1.msra.mxu0 0.0
    %3072 = vmatprep.subr.mxu0 0.0
    %3073 = vmatpush1.msra.mxu0 0.0
    %3074 = vmatprep.subr.mxu0 0.0
    %3075 = vmatpush1.msra.mxu0 %v3040
    %3076 = vmatprep.subr.mxu0 0.0
    %3077 = vmatpush1.msra.mxu0 %v3039
    %3078 = vmatprep.subr.mxu0 0.0
    %3079 = vmatpush1.msra.mxu0 %v3038
    %3080 = vmatprep.subr.mxu0 0.0
    %3081 = vmatpush1.msra.mxu0 %v3037
    %3082 = vmatprep.subr.mxu0 0.0
    %3083 = vmatpush2.msra.mxu0 0.0
    %3084 = vmatprep.subr.mxu0 0.0
    %3085 = vmatpush2.msra.mxu0 0.0
    %3086 = vmatprep.subr.mxu0 0.0
    %3087 = vmatpush2.msra.mxu0 0.0
    %3088 = vmatprep.subr.mxu0 0.0
    %3089 = vmatpush2.msra.mxu0 0.0
    %3090 = vmatprep.subr.mxu0 0.0
    %3091 = vmatpush2.msra.mxu0 0.0
    %3092 = vmatprep.subr.mxu0 0.0
    %3093 = vmatpush2.msra.mxu0 0.0
    %3094 = vmatprep.subr.mxu0 0.0
    %3095 = vmatpush2.msra.mxu0 0.0
    %3096 = vmatprep.subr.mxu0 0.0
    %3097 = vmatpush2.msra.mxu0 0.0
    %3098 = vmatprep.subr.mxu0 0.0
    %3099 = vmatpush2.msra.mxu0 0.0
    %3100 = vmatprep.subr.mxu0 0.0
    %3101 = vmatpush2.msra.mxu0 0.0
    %3102 = vmatprep.subr.mxu0 0.0
    %3103 = vmatpush2.msra.mxu0 0.0
    %3104 = vmatprep.subr.mxu0 0.0
    %3105 = vmatpush2.msra.mxu0 0.0
    %3106 = vmatprep.subr.mxu0 0.0
    %3107 = vmatpush2.msra.mxu0 0.0
    %3108 = vmatprep.subr.mxu0 0.0
    %3109 = vmatpush2.msra.mxu0 0.0
    %3110 = vmatprep.subr.mxu0 0.0
    %3111 = vmatpush2.msra.mxu0 0.0
    %3112 = vmatprep.subr.mxu0 0.0
    %3113 = vmatpush2.msra.mxu0 0.0
    %3114 = vmatprep.mubr.f32.mxu0 0.0
    %3115 = vmatmul.mubr.f32.gmra.mxu0 %v3045
    %v3116 = vpop.f32.mrf.mxu0
    %v3117 = vadd.f32 0.0, %v3116
    %v3118 = vpop.f32.mrf.mxu0
    %3119 = vmatprep.mubr.f32.mxu0 0.0
    %3120 = vmatmul.mubr.f32.gmra.mxu0 %v3048
    %v3121 = vpop.f32.mrf.mxu0
    %v3122 = vadd.f32 0.0, %v3121
    %v3123 = vpop.f32.mrf.mxu0
    %3124 = vdwg.mxu0
    %v3125 = vpack.c.bf16 %v3122, %v3117
    %v3126 = vld [vmem:[%s25] sm:$0xf]
    %v3127 = vld [vmem:[%s25 + $0x4] sm:$0xf]
    %v3128 = vld [vmem:[%s25 + $0x8] sm:$0xf]
    %v3129 = vld [vmem:[%s25 + $0xc] sm:$0xf]
    %v3130 = vld [vmem:[%s25 + $0x10] sm:$0xf]
    %v3131 = vld [vmem:[%s25 + $0x14] sm:$0xf]
    %v3132 = vld [vmem:[%s25 + $0x18] sm:$0xf]
    %v3133 = vld [vmem:[%s25 + $0x1c] sm:$0xf]
    %v3134 = vld [vmem:[%s25 + $0x20] sm:$0xf]
    %v3135 = vld [vmem:[%s25 + $0x24] sm:$0xf]
    %v3136 = vld [vmem:[%s25 + $0x28] sm:$0xf]
    %v3137 = vld [vmem:[%s25 + $0x2c] sm:$0xf]
    %v3138 = vld [vmem:[%s25 + $0x30] sm:$0xf]
    %v3139 = vld [vmem:[%s25 + $0x34] sm:$0xf]
    %v3140 = vld [vmem:[%s25 + $0x38] sm:$0xf]
    %v3141 = vld [vmem:[%s25 + $0x3c] sm:$0xf]
    %s3142 = scalar_lea.vmem %s23, 16
    %v3143 = vld [vmem:[%s3142] sm:$0xff]
    %v3144 = vld [vmem:[%s3142 + $0x8] sm:$0xff]
    %v3146 = vsel %vm3043, %v3143, 0
    %v3149 = vsel %vm3043, %v3144, 0
    %3151 = vmatprep.subr.mxu0 0.0
    %3152 = vmatpush1.msra.mxu0 0.0
    %3153 = vmatprep.subr.mxu0 0.0
    %3154 = vmatpush1.msra.mxu0 0.0
    %3155 = vmatprep.subr.mxu0 0.0
    %3156 = vmatpush1.msra.mxu0 0.0
    %3157 = vmatprep.subr.mxu0 0.0
    %3158 = vmatpush1.msra.mxu0 0.0
    %3159 = vmatprep.subr.mxu0 0.0
    %3160 = vmatpush1.msra.mxu0 0.0
    %3161 = vmatprep.subr.mxu0 0.0
    %3162 = vmatpush1.msra.mxu0 0.0
    %3163 = vmatprep.subr.mxu0 0.0
    %3164 = vmatpush1.msra.mxu0 0.0
    %3165 = vmatprep.subr.mxu0 0.0
    %3166 = vmatpush1.msra.mxu0 0.0
    %3167 = vmatprep.subr.mxu0 0.0
    %3168 = vmatpush1.msra.mxu0 0.0
    %3169 = vmatprep.subr.mxu0 0.0
    %3170 = vmatpush1.msra.mxu0 0.0
    %3171 = vmatprep.subr.mxu0 0.0
    %3172 = vmatpush1.msra.mxu0 0.0
    %3173 = vmatprep.subr.mxu0 0.0
    %3174 = vmatpush1.msra.mxu0 0.0
    %3175 = vmatprep.subr.mxu0 0.0
    %3176 = vmatpush1.msra.mxu0 %v3040
    %3177 = vmatprep.subr.mxu0 0.0
    %3178 = vmatpush1.msra.mxu0 %v3039
    %3179 = vmatprep.subr.mxu0 0.0
    %3180 = vmatpush1.msra.mxu0 %v3038
    %3181 = vmatprep.subr.mxu0 0.0
    %3182 = vmatpush1.msra.mxu0 %v3037
    %3183 = vmatprep.subr.mxu0 0.0
    %3184 = vmatpush2.msra.mxu0 0.0
    %3185 = vmatprep.subr.mxu0 0.0
    %3186 = vmatpush2.msra.mxu0 0.0
    %3187 = vmatprep.subr.mxu0 0.0
    %3188 = vmatpush2.msra.mxu0 0.0
    %3189 = vmatprep.subr.mxu0 0.0
    %3190 = vmatpush2.msra.mxu0 0.0
    %3191 = vmatprep.subr.mxu0 0.0
    %3192 = vmatpush2.msra.mxu0 0.0
    %3193 = vmatprep.subr.mxu0 0.0
    %3194 = vmatpush2.msra.mxu0 0.0
    %3195 = vmatprep.subr.mxu0 0.0
    %3196 = vmatpush2.msra.mxu0 0.0
    %3197 = vmatprep.subr.mxu0 0.0
    %3198 = vmatpush2.msra.mxu0 0.0
    %3199 = vmatprep.subr.mxu0 0.0
    %3200 = vmatpush2.msra.mxu0 0.0
    %3201 = vmatprep.subr.mxu0 0.0
    %3202 = vmatpush2.msra.mxu0 0.0
    %3203 = vmatprep.subr.mxu0 0.0
    %3204 = vmatpush2.msra.mxu0 0.0
    %3205 = vmatprep.subr.mxu0 0.0
    %3206 = vmatpush2.msra.mxu0 0.0
    %3207 = vmatprep.subr.mxu0 0.0
    %3208 = vmatpush2.msra.mxu0 0.0
    %3209 = vmatprep.subr.mxu0 0.0
    %3210 = vmatpush2.msra.mxu0 0.0
    %3211 = vmatprep.subr.mxu0 0.0
    %3212 = vmatpush2.msra.mxu0 0.0
    %3213 = vmatprep.subr.mxu0 0.0
    %3214 = vmatpush2.msra.mxu0 0.0
    %3215 = vmatprep.mubr.f32.mxu0 0.0
    %3216 = vmatmul.mubr.f32.gmra.mxu0 %v3146
    %v3217 = vpop.f32.mrf.mxu0
    %v3218 = vadd.f32 0.0, %v3217
    %v3219 = vpop.f32.mrf.mxu0
    %3220 = vmatprep.mubr.f32.mxu0 0.0
    %3221 = vmatmul.mubr.f32.gmra.mxu0 %v3149
    %v3222 = vpop.f32.mrf.mxu0
    %v3223 = vadd.f32 0.0, %v3222
    %v3224 = vpop.f32.mrf.mxu0
    %3225 = vdwg.mxu0
    %v3226 = vpack.c.bf16 %v3223, %v3218
    %s3227 = scalar_lea.vmem %s25, 64
    %v3228 = vld [vmem:[%s3227] sm:$0xf]
    %v3229 = vld [vmem:[%s3227 + $0x4] sm:$0xf]
    %v3230 = vld [vmem:[%s3227 + $0x8] sm:$0xf]
    %v3231 = vld [vmem:[%s3227 + $0xc] sm:$0xf]
    %v3232 = vld [vmem:[%s3227 + $0x10] sm:$0xf]
    %v3233 = vld [vmem:[%s3227 + $0x14] sm:$0xf]
    %v3234 = vld [vmem:[%s3227 + $0x18] sm:$0xf]
    %v3235 = vld [vmem:[%s3227 + $0x1c] sm:$0xf]
    %v3236 = vld [vmem:[%s3227 + $0x20] sm:$0xf]
    %v3237 = vld [vmem:[%s3227 + $0x24] sm:$0xf]
    %v3238 = vld [vmem:[%s3227 + $0x28] sm:$0xf]
    %v3239 = vld [vmem:[%s3227 + $0x2c] sm:$0xf]
    %v3240 = vld [vmem:[%s3227 + $0x30] sm:$0xf]
    %v3241 = vld [vmem:[%s3227 + $0x34] sm:$0xf]
    %v3242 = vld [vmem:[%s3227 + $0x38] sm:$0xf]
    %v3243 = vld [vmem:[%s3227 + $0x3c] sm:$0xf]
    %v3260 = vunpack.c.l.b16 %v3228
    %v3261 = vunpack.c.l.b16 %v3229
    %v3262 = vunpack.c.l.b16 %v3230
    %v3263 = vunpack.c.l.b16 %v3231
    %v3264 = vunpack.c.l.b16 %v3232
    %v3265 = vunpack.c.l.b16 %v3233
    %v3266 = vunpack.c.l.b16 %v3234
    %v3267 = vunpack.c.l.b16 %v3235
    %v3268 = vunpack.c.l.b16 %v3236
    %v3269 = vunpack.c.l.b16 %v3237
    %v3270 = vunpack.c.l.b16 %v3238
    %v3271 = vunpack.c.l.b16 %v3239
    %v3272 = vunpack.c.l.b16 %v3240
    %v3273 = vunpack.c.l.b16 %v3241
    %v3274 = vunpack.c.l.b16 %v3242
    %v3275 = vunpack.c.l.b16 %v3243
    %v3276 = vpack.c.b16 %v3261, %v3260
    %v3277 = vpack.c.b16 %v3263, %v3262
    %v3278 = vpack.c.b16 %v3265, %v3264
    %v3279 = vpack.c.b16 %v3267, %v3266
    %v3280 = vpack.c.b16 %v3269, %v3268
    %v3281 = vpack.c.b16 %v3271, %v3270
    %v3282 = vpack.c.b16 %v3273, %v3272
    %v3283 = vpack.c.b16 %v3275, %v3274
    %3292 = vmatprep.subr.bf16.mxu0 0
    %3293 = vmatpush1.bf16.msra.mxu0 %v3283
    %3294 = vmatprep.subr.bf16.mxu0 0
    %3295 = vmatpush1.bf16.msra.mxu0 %v3282
    %3296 = vmatprep.subr.bf16.mxu0 0
    %3297 = vmatpush1.bf16.msra.mxu0 %v3281
    %3298 = vmatprep.subr.bf16.mxu0 0
    %3299 = vmatpush1.bf16.msra.mxu0 %v3280
    %3300 = vmatprep.subr.bf16.mxu0 0
    %3301 = vmatpush1.bf16.msra.mxu0 %v3279
    %3302 = vmatprep.subr.bf16.mxu0 0
    %3303 = vmatpush1.bf16.msra.mxu0 %v3278
    %3304 = vmatprep.subr.bf16.mxu0 0
    %3305 = vmatpush1.bf16.msra.mxu0 %v3277
    %3306 = vmatprep.subr.bf16.mxu0 0
    %3307 = vmatpush1.bf16.msra.mxu0 %v3276
    %3308 = vmatprep.subr.bf16.mxu0 0
    %3309 = vmatpush2.bf16.msra.mxu0 0
    %3310 = vmatprep.subr.bf16.mxu0 0
    %3311 = vmatpush2.bf16.msra.mxu0 0
    %3312 = vmatprep.subr.bf16.mxu0 0
    %3313 = vmatpush2.bf16.msra.mxu0 0
    %3314 = vmatprep.subr.bf16.mxu0 0
    %3315 = vmatpush2.bf16.msra.mxu0 0
    %3316 = vmatprep.subr.bf16.mxu0 0
    %3317 = vmatpush2.bf16.msra.mxu0 0
    %3318 = vmatprep.subr.bf16.mxu0 0
    %3319 = vmatpush2.bf16.msra.mxu0 0
    %3320 = vmatprep.subr.bf16.mxu0 0
    %3321 = vmatpush2.bf16.msra.mxu0 0
    %3322 = vmatprep.subr.bf16.mxu0 0
    %3323 = vmatpush2.bf16.msra.mxu0 0
    %3324 = vmatprep.mubr.bf16.mxu0 0
    %3325 = vmatmul.mubr.bf16.gmra.mxu0 %v3226
    %v3326 = vpop.f32.mrf.mxu0
    %v3327 = vadd.f32 0.0, %v3326
    %v3328 = vpop.f32.mrf.mxu0
    %v3329 = vpop.f32.mrf.mxu0
    %v3330 = vadd.f32 0.0, %v3329
    %v3331 = vpop.f32.mrf.mxu0
    %3332 = vdwg.mxu0
    %v3349 = vunpack.c.l.b16 %v3126
    %v3350 = vunpack.c.l.b16 %v3127
    %v3351 = vunpack.c.l.b16 %v3128
    %v3352 = vunpack.c.l.b16 %v3129
    %v3353 = vunpack.c.l.b16 %v3130
    %v3354 = vunpack.c.l.b16 %v3131
    %v3355 = vunpack.c.l.b16 %v3132
    %v3356 = vunpack.c.l.b16 %v3133
    %v3357 = vunpack.c.l.b16 %v3134
    %v3358 = vunpack.c.l.b16 %v3135
    %v3359 = vunpack.c.l.b16 %v3136
    %v3360 = vunpack.c.l.b16 %v3137
    %v3361 = vunpack.c.l.b16 %v3138
    %v3362 = vunpack.c.l.b16 %v3139
    %v3363 = vunpack.c.l.b16 %v3140
    %v3364 = vunpack.c.l.b16 %v3141
    %v3365 = vpack.c.b16 %v3350, %v3349
    %v3366 = vpack.c.b16 %v3352, %v3351
    %v3367 = vpack.c.b16 %v3354, %v3353
    %v3368 = vpack.c.b16 %v3356, %v3355
    %v3369 = vpack.c.b16 %v3358, %v3357
    %v3370 = vpack.c.b16 %v3360, %v3359
    %v3371 = vpack.c.b16 %v3362, %v3361
    %v3372 = vpack.c.b16 %v3364, %v3363
    %3381 = vmatprep.subr.bf16.mxu0 0
    %3382 = vmatpush1.bf16.msra.mxu0 %v3372
    %3383 = vmatprep.subr.bf16.mxu0 0
    %3384 = vmatpush1.bf16.msra.mxu0 %v3371
    %3385 = vmatprep.subr.bf16.mxu0 0
    %3386 = vmatpush1.bf16.msra.mxu0 %v3370
    %3387 = vmatprep.subr.bf16.mxu0 0
    %3388 = vmatpush1.bf16.msra.mxu0 %v3369
    %3389 = vmatprep.subr.bf16.mxu0 0
    %3390 = vmatpush1.bf16.msra.mxu0 %v3368
    %3391 = vmatprep.subr.bf16.mxu0 0
    %3392 = vmatpush1.bf16.msra.mxu0 %v3367
    %3393 = vmatprep.subr.bf16.mxu0 0
    %3394 = vmatpush1.bf16.msra.mxu0 %v3366
    %3395 = vmatprep.subr.bf16.mxu0 0
    %3396 = vmatpush1.bf16.msra.mxu0 %v3365
    %3397 = vmatprep.subr.bf16.mxu0 0
    %3398 = vmatpush2.bf16.msra.mxu0 0
    %3399 = vmatprep.subr.bf16.mxu0 0
    %3400 = vmatpush2.bf16.msra.mxu0 0
    %3401 = vmatprep.subr.bf16.mxu0 0
    %3402 = vmatpush2.bf16.msra.mxu0 0
    %3403 = vmatprep.subr.bf16.mxu0 0
    %3404 = vmatpush2.bf16.msra.mxu0 0
    %3405 = vmatprep.subr.bf16.mxu0 0
    %3406 = vmatpush2.bf16.msra.mxu0 0
    %3407 = vmatprep.subr.bf16.mxu0 0
    %3408 = vmatpush2.bf16.msra.mxu0 0
    %3409 = vmatprep.subr.bf16.mxu0 0
    %3410 = vmatpush2.bf16.msra.mxu0 0
    %3411 = vmatprep.subr.bf16.mxu0 0
    %3412 = vmatpush2.bf16.msra.mxu0 0
    %3413 = vmatprep.mubr.bf16.mxu0 0
    %3414 = vmatmul.mubr.bf16.gmra.mxu0 %v3125
    %v3415 = vpop.f32.mrf.mxu0
    %v3416 = vadd.f32 %v3327, %v3415
    %v3417 = vpop.f32.mrf.mxu0
    %v3418 = vpop.f32.mrf.mxu0
    %v3419 = vadd.f32 %v3330, %v3418
    %v3420 = vpop.f32.mrf.mxu0
    %3421 = vdwg.mxu0
    %s3422 = scalar_lea.vmem %s23, 32
    %v3423 = vld [vmem:[%s3422] sm:$0xff]
    %v3424 = vld [vmem:[%s3422 + $0x8] sm:$0xff]
    %v3426 = vsel %vm3043, %v3423, 0
    %v3429 = vsel %vm3043, %v3424, 0
    %3431 = vmatprep.subr.mxu0 0.0
    %3432 = vmatpush1.msra.mxu0 0.0
    %3433 = vmatprep.subr.mxu0 0.0
    %3434 = vmatpush1.msra.mxu0 0.0
    %3435 = vmatprep.subr.mxu0 0.0
    %3436 = vmatpush1.msra.mxu0 0.0
    %3437 = vmatprep.subr.mxu0 0.0
    %3438 = vmatpush1.msra.mxu0 0.0
    %3439 = vmatprep.subr.mxu0 0.0
    %3440 = vmatpush1.msra.mxu0 0.0
    %3441 = vmatprep.subr.mxu0 0.0
    %3442 = vmatpush1.msra.mxu0 0.0
    %3443 = vmatprep.subr.mxu0 0.0
    %3444 = vmatpush1.msra.mxu0 0.0
    %3445 = vmatprep.subr.mxu0 0.0
    %3446 = vmatpush1.msra.mxu0 0.0
    %3447 = vmatprep.subr.mxu0 0.0
    %3448 = vmatpush1.msra.mxu0 0.0
    %3449 = vmatprep.subr.mxu0 0.0
    %3450 = vmatpush1.msra.mxu0 0.0
    %3451 = vmatprep.subr.mxu0 0.0
    %3452 = vmatpush1.msra.mxu0 0.0
    %3453 = vmatprep.subr.mxu0 0.0
    %3454 = vmatpush1.msra.mxu0 0.0
    %3455 = vmatprep.subr.mxu0 0.0
    %3456 = vmatpush1.msra.mxu0 %v3040
    %3457 = vmatprep.subr.mxu0 0.0
    %3458 = vmatpush1.msra.mxu0 %v3039
    %3459 = vmatprep.subr.mxu0 0.0
    %3460 = vmatpush1.msra.mxu0 %v3038
    %3461 = vmatprep.subr.mxu0 0.0
    %3462 = vmatpush1.msra.mxu0 %v3037
    %3463 = vmatprep.subr.mxu0 0.0
    %3464 = vmatpush2.msra.mxu0 0.0
    %3465 = vmatprep.subr.mxu0 0.0
    %3466 = vmatpush2.msra.mxu0 0.0
    %3467 = vmatprep.subr.mxu0 0.0
    %3468 = vmatpush2.msra.mxu0 0.0
    %3469 = vmatprep.subr.mxu0 0.0
    %3470 = vmatpush2.msra.mxu0 0.0
    %3471 = vmatprep.subr.mxu0 0.0
    %3472 = vmatpush2.msra.mxu0 0.0
    %3473 = vmatprep.subr.mxu0 0.0
    %3474 = vmatpush2.msra.mxu0 0.0
    %3475 = vmatprep.subr.mxu0 0.0
    %3476 = vmatpush2.msra.mxu0 0.0
    %3477 = vmatprep.subr.mxu0 0.0
    %3478 = vmatpush2.msra.mxu0 0.0
    %3479 = vmatprep.subr.mxu0 0.0
    %3480 = vmatpush2.msra.mxu0 0.0
    %3481 = vmatprep.subr.mxu0 0.0
    %3482 = vmatpush2.msra.mxu0 0.0
    %3483 = vmatprep.subr.mxu0 0.0
    %3484 = vmatpush2.msra.mxu0 0.0
    %3485 = vmatprep.subr.mxu0 0.0
    %3486 = vmatpush2.msra.mxu0 0.0
    %3487 = vmatprep.subr.mxu0 0.0
    %3488 = vmatpush2.msra.mxu0 0.0
    %3489 = vmatprep.subr.mxu0 0.0
    %3490 = vmatpush2.msra.mxu0 0.0
    %3491 = vmatprep.subr.mxu0 0.0
    %3492 = vmatpush2.msra.mxu0 0.0
    %3493 = vmatprep.subr.mxu0 0.0
    %3494 = vmatpush2.msra.mxu0 0.0
    %3495 = vmatprep.mubr.f32.mxu0 0.0
    %3496 = vmatmul.mubr.f32.gmra.mxu0 %v3426
    %v3497 = vpop.f32.mrf.mxu0
    %v3498 = vadd.f32 0.0, %v3497
    %v3499 = vpop.f32.mrf.mxu0
    %3500 = vmatprep.mubr.f32.mxu0 0.0
    %3501 = vmatmul.mubr.f32.gmra.mxu0 %v3429
    %v3502 = vpop.f32.mrf.mxu0
    %v3503 = vadd.f32 0.0, %v3502
    %v3504 = vpop.f32.mrf.mxu0
    %3505 = vdwg.mxu0
    %v3506 = vpack.c.bf16 %v3503, %v3498
    %s3507 = scalar_lea.vmem %s25, 128
    %v3508 = vld [vmem:[%s3507] sm:$0xf]
    %v3509 = vld [vmem:[%s3507 + $0x4] sm:$0xf]
    %v3510 = vld [vmem:[%s3507 + $0x8] sm:$0xf]
    %v3511 = vld [vmem:[%s3507 + $0xc] sm:$0xf]
    %v3512 = vld [vmem:[%s3507 + $0x10] sm:$0xf]
    %v3513 = vld [vmem:[%s3507 + $0x14] sm:$0xf]
    %v3514 = vld [vmem:[%s3507 + $0x18] sm:$0xf]
    %v3515 = vld [vmem:[%s3507 + $0x1c] sm:$0xf]
    %v3516 = vld [vmem:[%s3507 + $0x20] sm:$0xf]
    %v3517 = vld [vmem:[%s3507 + $0x24] sm:$0xf]
    %v3518 = vld [vmem:[%s3507 + $0x28] sm:$0xf]
    %v3519 = vld [vmem:[%s3507 + $0x2c] sm:$0xf]
    %v3520 = vld [vmem:[%s3507 + $0x30] sm:$0xf]
    %v3521 = vld [vmem:[%s3507 + $0x34] sm:$0xf]
    %v3522 = vld [vmem:[%s3507 + $0x38] sm:$0xf]
    %v3523 = vld [vmem:[%s3507 + $0x3c] sm:$0xf]
    %v3540 = vunpack.c.l.b16 %v3508
    %v3541 = vunpack.c.l.b16 %v3509
    %v3542 = vunpack.c.l.b16 %v3510
    %v3543 = vunpack.c.l.b16 %v3511
    %v3544 = vunpack.c.l.b16 %v3512
    %v3545 = vunpack.c.l.b16 %v3513
    %v3546 = vunpack.c.l.b16 %v3514
    %v3547 = vunpack.c.l.b16 %v3515
    %v3548 = vunpack.c.l.b16 %v3516
    %v3549 = vunpack.c.l.b16 %v3517
    %v3550 = vunpack.c.l.b16 %v3518
    %v3551 = vunpack.c.l.b16 %v3519
    %v3552 = vunpack.c.l.b16 %v3520
    %v3553 = vunpack.c.l.b16 %v3521
    %v3554 = vunpack.c.l.b16 %v3522
    %v3555 = vunpack.c.l.b16 %v3523
    %v3556 = vpack.c.b16 %v3541, %v3540
    %v3557 = vpack.c.b16 %v3543, %v3542
    %v3558 = vpack.c.b16 %v3545, %v3544
    %v3559 = vpack.c.b16 %v3547, %v3546
    %v3560 = vpack.c.b16 %v3549, %v3548
    %v3561 = vpack.c.b16 %v3551, %v3550
    %v3562 = vpack.c.b16 %v3553, %v3552
    %v3563 = vpack.c.b16 %v3555, %v3554
    %3572 = vmatprep.subr.bf16.mxu0 0
    %3573 = vmatpush1.bf16.msra.mxu0 %v3563
    %3574 = vmatprep.subr.bf16.mxu0 0
    %3575 = vmatpush1.bf16.msra.mxu0 %v3562
    %3576 = vmatprep.subr.bf16.mxu0 0
    %3577 = vmatpush1.bf16.msra.mxu0 %v3561
    %3578 = vmatprep.subr.bf16.mxu0 0
    %3579 = vmatpush1.bf16.msra.mxu0 %v3560
    %3580 = vmatprep.subr.bf16.mxu0 0
    %3581 = vmatpush1.bf16.msra.mxu0 %v3559
    %3582 = vmatprep.subr.bf16.mxu0 0
    %3583 = vmatpush1.bf16.msra.mxu0 %v3558
    %3584 = vmatprep.subr.bf16.mxu0 0
    %3585 = vmatpush1.bf16.msra.mxu0 %v3557
    %3586 = vmatprep.subr.bf16.mxu0 0
    %3587 = vmatpush1.bf16.msra.mxu0 %v3556
    %3588 = vmatprep.subr.bf16.mxu0 0
    %3589 = vmatpush2.bf16.msra.mxu0 0
    %3590 = vmatprep.subr.bf16.mxu0 0
    %3591 = vmatpush2.bf16.msra.mxu0 0
    %3592 = vmatprep.subr.bf16.mxu0 0
    %3593 = vmatpush2.bf16.msra.mxu0 0
    %3594 = vmatprep.subr.bf16.mxu0 0
    %3595 = vmatpush2.bf16.msra.mxu0 0
    %3596 = vmatprep.subr.bf16.mxu0 0
    %3597 = vmatpush2.bf16.msra.mxu0 0
    %3598 = vmatprep.subr.bf16.mxu0 0
    %3599 = vmatpush2.bf16.msra.mxu0 0
    %3600 = vmatprep.subr.bf16.mxu0 0
    %3601 = vmatpush2.bf16.msra.mxu0 0
    %3602 = vmatprep.subr.bf16.mxu0 0
    %3603 = vmatpush2.bf16.msra.mxu0 0
    %3604 = vmatprep.mubr.bf16.mxu0 0
    %3605 = vmatmul.mubr.bf16.gmra.mxu0 %v3506
    %v3606 = vpop.f32.mrf.mxu0
    %v3607 = vadd.f32 0.0, %v3606
    %v3608 = vpop.f32.mrf.mxu0
    %v3609 = vpop.f32.mrf.mxu0
    %v3610 = vadd.f32 0.0, %v3609
    %v3611 = vpop.f32.mrf.mxu0
    %3612 = vdwg.mxu0
    %v3613 = vadd.f32 %v3416, %v3607
    %v3614 = vadd.f32 %v3419, %v3610
    %v3615 = vld [vmem:[%s31] sm:$0x3]
    %v3616 = vld [vmem:[%s27] sm:$0xff]
    %v3617 = vld [vmem:[%s27 + $0x8] sm:$0xff]
    %v3618 = vld [vmem:[%s27 + $0x10] sm:$0xff]
    %v3619 = vld [vmem:[%s27 + $0x18] sm:$0xff]
    %v3620 = vld [vmem:[%s27 + $0x20] sm:$0xff]
    %v3621 = vld [vmem:[%s27 + $0x28] sm:$0xff]
    %v3622 = vld [vmem:[%s27 + $0x30] sm:$0xff]
    %v3623 = vld [vmem:[%s27 + $0x38] sm:$0xff]
    %v3625 = vsel %vm1845, %v3613, 0
    %v3628 = vsel %vm1845, %v3614, 0
    %3630 = vmatprep.subr.mxu0 0.0
    %3631 = vmatpush1.msra.mxu0 0.0
    %3632 = vmatprep.subr.mxu0 0.0
    %3633 = vmatpush1.msra.mxu0 0.0
    %3634 = vmatprep.subr.mxu0 0.0
    %3635 = vmatpush1.msra.mxu0 0.0
    %3636 = vmatprep.subr.mxu0 0.0
    %3637 = vmatpush1.msra.mxu0 0.0
    %3638 = vmatprep.subr.mxu0 0.0
    %3639 = vmatpush1.msra.mxu0 0.0
    %3640 = vmatprep.subr.mxu0 0.0
    %3641 = vmatpush1.msra.mxu0 0.0
    %3642 = vmatprep.subr.mxu0 0.0
    %3643 = vmatpush1.msra.mxu0 0.0
    %3644 = vmatprep.subr.mxu0 0.0
    %3645 = vmatpush1.msra.mxu0 0.0
    %3646 = vmatprep.subr.mxu0 0.0
    %3647 = vmatpush1.msra.mxu0 %v3623
    %3648 = vmatprep.subr.mxu0 0.0
    %3649 = vmatpush1.msra.mxu0 %v3622
    %3650 = vmatprep.subr.mxu0 0.0
    %3651 = vmatpush1.msra.mxu0 %v3621
    %3652 = vmatprep.subr.mxu0 0.0
    %3653 = vmatpush1.msra.mxu0 %v3620
    %3654 = vmatprep.subr.mxu0 0.0
    %3655 = vmatpush1.msra.mxu0 %v3619
    %3656 = vmatprep.subr.mxu0 0.0
    %3657 = vmatpush1.msra.mxu0 %v3618
    %3658 = vmatprep.subr.mxu0 0.0
    %3659 = vmatpush1.msra.mxu0 %v3617
    %3660 = vmatprep.subr.mxu0 0.0
    %3661 = vmatpush1.msra.mxu0 %v3616
    %3662 = vmatprep.subr.mxu0 0.0
    %3663 = vmatpush2.msra.mxu0 0.0
    %3664 = vmatprep.subr.mxu0 0.0
    %3665 = vmatpush2.msra.mxu0 0.0
    %3666 = vmatprep.subr.mxu0 0.0
    %3667 = vmatpush2.msra.mxu0 0.0
    %3668 = vmatprep.subr.mxu0 0.0
    %3669 = vmatpush2.msra.mxu0 0.0
    %3670 = vmatprep.subr.mxu0 0.0
    %3671 = vmatpush2.msra.mxu0 0.0
    %3672 = vmatprep.subr.mxu0 0.0
    %3673 = vmatpush2.msra.mxu0 0.0
    %3674 = vmatprep.subr.mxu0 0.0
    %3675 = vmatpush2.msra.mxu0 0.0
    %3676 = vmatprep.subr.mxu0 0.0
    %3677 = vmatpush2.msra.mxu0 0.0
    %3678 = vmatprep.subr.mxu0 0.0
    %3679 = vmatpush2.msra.mxu0 0.0
    %3680 = vmatprep.subr.mxu0 0.0
    %3681 = vmatpush2.msra.mxu0 0.0
    %3682 = vmatprep.subr.mxu0 0.0
    %3683 = vmatpush2.msra.mxu0 0.0
    %3684 = vmatprep.subr.mxu0 0.0
    %3685 = vmatpush2.msra.mxu0 0.0
    %3686 = vmatprep.subr.mxu0 0.0
    %3687 = vmatpush2.msra.mxu0 0.0
    %3688 = vmatprep.subr.mxu0 0.0
    %3689 = vmatpush2.msra.mxu0 0.0
    %3690 = vmatprep.subr.mxu0 0.0
    %3691 = vmatpush2.msra.mxu0 0.0
    %3692 = vmatprep.subr.mxu0 0.0
    %3693 = vmatpush2.msra.mxu0 0.0
    %3694 = vmatprep.mubr.f32.mxu0 0.0
    %3695 = vmatmul.mubr.f32.gmra.mxu0 %v3625
    %v3696 = vpop.f32.mrf.mxu0
    %v3697 = vadd.f32 0.0, %v3696
    %v3698 = vpop.f32.mrf.mxu0
    %3699 = vmatprep.mubr.f32.mxu0 0.0
    %3700 = vmatmul.mubr.f32.gmra.mxu0 %v3628
    %v3701 = vpop.f32.mrf.mxu0
    %v3702 = vadd.f32 0.0, %v3701
    %v3703 = vpop.f32.mrf.mxu0
    %3704 = vdwg.mxu0
    %v3705 = vmul.f32 %v3613, %v3613
    %v3706 = vmul.f32 %v3614, %v3614
    %v3708 = vsel %vm1845, %v3705, 0
    %v3711 = vsel %vm1845, %v3706, 0
    %3713 = vmatprep.subr.mxu0 0.0
    %3714 = vmatpush1.msra.mxu0 0.0
    %3715 = vmatprep.subr.mxu0 0.0
    %3716 = vmatpush1.msra.mxu0 0.0
    %3717 = vmatprep.subr.mxu0 0.0
    %3718 = vmatpush1.msra.mxu0 0.0
    %3719 = vmatprep.subr.mxu0 0.0
    %3720 = vmatpush1.msra.mxu0 0.0
    %3721 = vmatprep.subr.mxu0 0.0
    %3722 = vmatpush1.msra.mxu0 0.0
    %3723 = vmatprep.subr.mxu0 0.0
    %3724 = vmatpush1.msra.mxu0 0.0
    %3725 = vmatprep.subr.mxu0 0.0
    %3726 = vmatpush1.msra.mxu0 0.0
    %3727 = vmatprep.subr.mxu0 0.0
    %3728 = vmatpush1.msra.mxu0 0.0
    %3729 = vmatprep.subr.mxu0 0.0
    %3730 = vmatpush1.msra.mxu0 %v3623
    %3731 = vmatprep.subr.mxu0 0.0
    %3732 = vmatpush1.msra.mxu0 %v3622
    %3733 = vmatprep.subr.mxu0 0.0
    %3734 = vmatpush1.msra.mxu0 %v3621
    %3735 = vmatprep.subr.mxu0 0.0
    %3736 = vmatpush1.msra.mxu0 %v3620
    %3737 = vmatprep.subr.mxu0 0.0
    %3738 = vmatpush1.msra.mxu0 %v3619
    %3739 = vmatprep.subr.mxu0 0.0
    %3740 = vmatpush1.msra.mxu0 %v3618
    %3741 = vmatprep.subr.mxu0 0.0
    %3742 = vmatpush1.msra.mxu0 %v3617
    %3743 = vmatprep.subr.mxu0 0.0
    %3744 = vmatpush1.msra.mxu0 %v3616
    %3745 = vmatprep.subr.mxu0 0.0
    %3746 = vmatpush2.msra.mxu0 0.0
    %3747 = vmatprep.subr.mxu0 0.0
    %3748 = vmatpush2.msra.mxu0 0.0
    %3749 = vmatprep.subr.mxu0 0.0
    %3750 = vmatpush2.msra.mxu0 0.0
    %3751 = vmatprep.subr.mxu0 0.0
    %3752 = vmatpush2.msra.mxu0 0.0
    %3753 = vmatprep.subr.mxu0 0.0
    %3754 = vmatpush2.msra.mxu0 0.0
    %3755 = vmatprep.subr.mxu0 0.0
    %3756 = vmatpush2.msra.mxu0 0.0
    %3757 = vmatprep.subr.mxu0 0.0
    %3758 = vmatpush2.msra.mxu0 0.0
    %3759 = vmatprep.subr.mxu0 0.0
    %3760 = vmatpush2.msra.mxu0 0.0
    %3761 = vmatprep.subr.mxu0 0.0
    %3762 = vmatpush2.msra.mxu0 0.0
    %3763 = vmatprep.subr.mxu0 0.0
    %3764 = vmatpush2.msra.mxu0 0.0
    %3765 = vmatprep.subr.mxu0 0.0
    %3766 = vmatpush2.msra.mxu0 0.0
    %3767 = vmatprep.subr.mxu0 0.0
    %3768 = vmatpush2.msra.mxu0 0.0
    %3769 = vmatprep.subr.mxu0 0.0
    %3770 = vmatpush2.msra.mxu0 0.0
    %3771 = vmatprep.subr.mxu0 0.0
    %3772 = vmatpush2.msra.mxu0 0.0
    %3773 = vmatprep.subr.mxu0 0.0
    %3774 = vmatpush2.msra.mxu0 0.0
    %3775 = vmatprep.subr.mxu0 0.0
    %3776 = vmatpush2.msra.mxu0 0.0
    %3777 = vmatprep.mubr.f32.mxu0 0.0
    %3778 = vmatmul.mubr.f32.gmra.mxu0 %v3708
    %v3779 = vpop.f32.mrf.mxu0
    %v3780 = vadd.f32 0.0, %v3779
    %v3781 = vpop.f32.mrf.mxu0
    %3782 = vmatprep.mubr.f32.mxu0 0.0
    %3783 = vmatmul.mubr.f32.gmra.mxu0 %v3711
    %v3784 = vpop.f32.mrf.mxu0
    %v3785 = vadd.f32 0.0, %v3784
    %v3786 = vpop.f32.mrf.mxu0
    %3787 = vdwg.mxu0
    %v3788 = vsel %vm1633, %v3697, 0.0
    %v3789 = vsel %vm1633, %v3702, 0.0
    %v3790 = vadd.f32 %v3788, %v3789
    %v3791 = vrot.slane %v3790, 4
    %v3792 = vadd.f32 %v3790, %v3791
    %v3793 = vrot.slane %v3792, 2
    %v3794 = vadd.f32 %v3792, %v3793
    %v3795 = vrot.slane %v3794, 1
    %v3796 = vadd.f32 %v3794, %v3795
    %v3797 = vrcp.pop 128.0
    %v3798 = vmul.f32 %v3796, %v3797
    %v3799 = vsel %vm1633, %v3780, 0.0
    %v3800 = vsel %vm1633, %v3785, 0.0
    %v3801 = vadd.f32 %v3799, %v3800
    %v3802 = vrot.slane %v3801, 4
    %v3803 = vadd.f32 %v3801, %v3802
    %v3804 = vrot.slane %v3803, 2
    %v3805 = vadd.f32 %v3803, %v3804
    %v3806 = vrot.slane %v3805, 1
    %v3807 = vadd.f32 %v3805, %v3806
    %v3808 = vmul.f32 %v3807, %v3797
    %v3809 = vmul.f32 %v3798, %v3798
    %v3810 = vsub.f32 %v3808, %v3809
    %v3811 = vadd.f32 %v3810, 1e-05
    %v3812 = vrsqrt.pop %v3811
    %v3813 = vmul.f32 %v3615, %v3812
    %v3814 = vmul.f32 %v3798, %v3813
    %v3816 = vrot.slane %v3814, 7
    %v3818 = vsub.f32 %v3615, %v3816
    %v3819 = vlaneseq
    %v3820 = vshrl.u32 %v3819, 7
    %v3821 = vsub.s32 0, %v3820
    %v3822 = vrot.slane %v3813, %v3821
    %v3823 = vlaneseq
    %v3824 = vshrl.u32 %v3823, 7
    %v3825 = vsub.s32 1, %v3824
    %v3826 = vrot.slane %v3818, %v3825
    %v3827 = vsel %vm1691, %v3822, %v3826
    %v3828 = vld [vmem:[%s29] sm:$0xff]
    %v3830 = vsel %vm1633, %v3827, 0
    %3832 = vmatprep.subr.mxu0 0.0
    %3833 = vmatpush1.msra.mxu0 0.0
    %3834 = vmatprep.subr.mxu0 0.0
    %3835 = vmatpush1.msra.mxu0 0.0
    %3836 = vmatprep.subr.mxu0 0.0
    %3837 = vmatpush1.msra.mxu0 0.0
    %3838 = vmatprep.subr.mxu0 0.0
    %3839 = vmatpush1.msra.mxu0 0.0
    %3840 = vmatprep.subr.mxu0 0.0
    %3841 = vmatpush1.msra.mxu0 0.0
    %3842 = vmatprep.subr.mxu0 0.0
    %3843 = vmatpush1.msra.mxu0 0.0
    %3844 = vmatprep.subr.mxu0 0.0
    %3845 = vmatpush1.msra.mxu0 0.0
    %3846 = vmatprep.subr.mxu0 0.0
    %3847 = vmatpush1.msra.mxu0 0.0
    %3848 = vmatprep.subr.mxu0 0.0
    %3849 = vmatpush1.msra.mxu0 0.0
    %3850 = vmatprep.subr.mxu0 0.0
    %3851 = vmatpush1.msra.mxu0 0.0
    %3852 = vmatprep.subr.mxu0 0.0
    %3853 = vmatpush1.msra.mxu0 0.0
    %3854 = vmatprep.subr.mxu0 0.0
    %3855 = vmatpush1.msra.mxu0 0.0
    %3856 = vmatprep.subr.mxu0 0.0
    %3857 = vmatpush1.msra.mxu0 0.0
    %3858 = vmatprep.subr.mxu0 0.0
    %3859 = vmatpush1.msra.mxu0 0.0
    %3860 = vmatprep.subr.mxu0 0.0
    %3861 = vmatpush1.msra.mxu0 0.0
    %3862 = vmatprep.subr.mxu0 0.0
    %3863 = vmatpush1.msra.mxu0 %v3828
    %3864 = vmatprep.subr.mxu0 0.0
    %3865 = vmatpush2.msra.mxu0 0.0
    %3866 = vmatprep.subr.mxu0 0.0
    %3867 = vmatpush2.msra.mxu0 0.0
    %3868 = vmatprep.subr.mxu0 0.0
    %3869 = vmatpush2.msra.mxu0 0.0
    %3870 = vmatprep.subr.mxu0 0.0
    %3871 = vmatpush2.msra.mxu0 0.0
    %3872 = vmatprep.subr.mxu0 0.0
    %3873 = vmatpush2.msra.mxu0 0.0
    %3874 = vmatprep.subr.mxu0 0.0
    %3875 = vmatpush2.msra.mxu0 0.0
    %3876 = vmatprep.subr.mxu0 0.0
    %3877 = vmatpush2.msra.mxu0 0.0
    %3878 = vmatprep.subr.mxu0 0.0
    %3879 = vmatpush2.msra.mxu0 0.0
    %3880 = vmatprep.subr.mxu0 0.0
    %3881 = vmatpush2.msra.mxu0 0.0
    %3882 = vmatprep.subr.mxu0 0.0
    %3883 = vmatpush2.msra.mxu0 0.0
    %3884 = vmatprep.subr.mxu0 0.0
    %3885 = vmatpush2.msra.mxu0 0.0
    %3886 = vmatprep.subr.mxu0 0.0
    %3887 = vmatpush2.msra.mxu0 0.0
    %3888 = vmatprep.subr.mxu0 0.0
    %3889 = vmatpush2.msra.mxu0 0.0
    %3890 = vmatprep.subr.mxu0 0.0
    %3891 = vmatpush2.msra.mxu0 0.0
    %3892 = vmatprep.subr.mxu0 0.0
    %3893 = vmatpush2.msra.mxu0 0.0
    %3894 = vmatprep.subr.mxu0 0.0
    %3895 = vmatpush2.msra.mxu0 0.0
    %3896 = vmatprep.mubr.f32.mxu0 0.0
    %3897 = vmatmul.mubr.f32.gmra.mxu0 %v3830
    %v3898 = vpop.f32.mrf.mxu0
    %v3899 = vadd.f32 0.0, %v3898
    %v3900 = vpop.f32.mrf.mxu0
    %3901 = vdwg.mxu0
    %v3902 = vlaneseq
    %v3903 = vshrl.u32 %v3902, 7
    %v3904 = vsub.s32 0, %v3903
    %v3905 = vrot.slane %v3899, %v3904
    %v3906 = vmul.f32 %v3613, %v3905
    %v3907 = vmul.f32 %v3614, %v3905
    %v3908 = vlaneseq
    %v3909 = vshrl.u32 %v3908, 7
    %v3910 = vsub.s32 1, %v3909
    %v3911 = vrot.slane %v3899, %v3910
    %v3912 = vadd.f32 %v3906, %v3911
    %v3913 = vadd.f32 %v3907, %v3911
    %v3914 = vmax.f32 %v3912, 0.0
    %v3915 = vmax.f32 %v3913, 0.0
    %v3916 = vld [vmem:[%s33] sm:$0xff]
    %vm3917 = vcmask 130048
    %v3919 = vsel %vm3917, %v3916, 0
    %3921 = vmatprep.subr.mxu0 0.0
    %3922 = vmatpush1.msra.mxu0 0.0
    %3923 = vmatprep.subr.mxu0 0.0
    %3924 = vmatpush1.msra.mxu0 0.0
    %3925 = vmatprep.subr.mxu0 0.0
    %3926 = vmatpush1.msra.mxu0 0.0
    %3927 = vmatprep.subr.mxu0 0.0
    %3928 = vmatpush1.msra.mxu0 0.0
    %3929 = vmatprep.subr.mxu0 0.0
    %3930 = vmatpush1.msra.mxu0 0.0
    %3931 = vmatprep.subr.mxu0 0.0
    %3932 = vmatpush1.msra.mxu0 0.0
    %3933 = vmatprep.subr.mxu0 0.0
    %3934 = vmatpush1.msra.mxu0 0.0
    %3935 = vmatprep.subr.mxu0 0.0
    %3936 = vmatpush1.msra.mxu0 0.0
    %3937 = vmatprep.subr.mxu0 0.0
    %3938 = vmatpush1.msra.mxu0 0.0
    %3939 = vmatprep.subr.mxu0 0.0
    %3940 = vmatpush1.msra.mxu0 0.0
    %3941 = vmatprep.subr.mxu0 0.0
    %3942 = vmatpush1.msra.mxu0 0.0
    %3943 = vmatprep.subr.mxu0 0.0
    %3944 = vmatpush1.msra.mxu0 0.0
    %3945 = vmatprep.subr.mxu0 0.0
    %3946 = vmatpush1.msra.mxu0 0.0
    %3947 = vmatprep.subr.mxu0 0.0
    %3948 = vmatpush1.msra.mxu0 0.0
    %3949 = vmatprep.subr.mxu0 0.0
    %3950 = vmatpush1.msra.mxu0 %v3915
    %3951 = vmatprep.subr.mxu0 0.0
    %3952 = vmatpush1.msra.mxu0 %v3914
    %3953 = vmatprep.subr.mxu0 0.0
    %3954 = vmatpush2.msra.mxu0 0.0
    %3955 = vmatprep.subr.mxu0 0.0
    %3956 = vmatpush2.msra.mxu0 0.0
    %3957 = vmatprep.subr.mxu0 0.0
    %3958 = vmatpush2.msra.mxu0 0.0
    %3959 = vmatprep.subr.mxu0 0.0
    %3960 = vmatpush2.msra.mxu0 0.0
    %3961 = vmatprep.subr.mxu0 0.0
    %3962 = vmatpush2.msra.mxu0 0.0
    %3963 = vmatprep.subr.mxu0 0.0
    %3964 = vmatpush2.msra.mxu0 0.0
    %3965 = vmatprep.subr.mxu0 0.0
    %3966 = vmatpush2.msra.mxu0 0.0
    %3967 = vmatprep.subr.mxu0 0.0
    %3968 = vmatpush2.msra.mxu0 0.0
    %3969 = vmatprep.subr.mxu0 0.0
    %3970 = vmatpush2.msra.mxu0 0.0
    %3971 = vmatprep.subr.mxu0 0.0
    %3972 = vmatpush2.msra.mxu0 0.0
    %3973 = vmatprep.subr.mxu0 0.0
    %3974 = vmatpush2.msra.mxu0 0.0
    %3975 = vmatprep.subr.mxu0 0.0
    %3976 = vmatpush2.msra.mxu0 0.0
    %3977 = vmatprep.subr.mxu0 0.0
    %3978 = vmatpush2.msra.mxu0 0.0
    %3979 = vmatprep.subr.mxu0 0.0
    %3980 = vmatpush2.msra.mxu0 0.0
    %3981 = vmatprep.subr.mxu0 0.0
    %3982 = vmatpush2.msra.mxu0 0.0
    %3983 = vmatprep.subr.mxu0 0.0
    %3984 = vmatpush2.msra.mxu0 0.0
    %3985 = vmatprep.mubr.f32.mxu0 0.0
    %3986 = vmatmul.mubr.f32.gmra.mxu0 %v3919
    %v3987 = vpop.f32.mrf.mxu0
    %v3988 = vadd.f32 0.0, %v3987
    %v3989 = vpop.f32.mrf.mxu0
    %3990 = vdwg.mxu0
    %v3991 = vpack.c.bf16 %v3988, %v3988
    %v3992 = vld [vmem:[%s35] sm:$0xf]
    %v3993 = vld [vmem:[%s35 + $0x4] sm:$0xf]
    %v3994 = vld [vmem:[%s35 + $0x8] sm:$0xf]
    %v3995 = vld [vmem:[%s35 + $0xc] sm:$0xf]
    %v3996 = vld [vmem:[%s35 + $0x10] sm:$0xf]
    %v3997 = vld [vmem:[%s35 + $0x14] sm:$0xf]
    %v3998 = vld [vmem:[%s35 + $0x18] sm:$0xf]
    %v3999 = vld [vmem:[%s35 + $0x1c] sm:$0xf]
    %s4000 = scalar_lea.vmem %s33, 8
    %v4001 = vld [vmem:[%s4000] sm:$0xff]
    %v4003 = vsel %vm3917, %v4001, 0
    %4005 = vmatprep.subr.mxu0 0.0
    %4006 = vmatpush1.msra.mxu0 0.0
    %4007 = vmatprep.subr.mxu0 0.0
    %4008 = vmatpush1.msra.mxu0 0.0
    %4009 = vmatprep.subr.mxu0 0.0
    %4010 = vmatpush1.msra.mxu0 0.0
    %4011 = vmatprep.subr.mxu0 0.0
    %4012 = vmatpush1.msra.mxu0 0.0
    %4013 = vmatprep.subr.mxu0 0.0
    %4014 = vmatpush1.msra.mxu0 0.0
    %4015 = vmatprep.subr.mxu0 0.0
    %4016 = vmatpush1.msra.mxu0 0.0
    %4017 = vmatprep.subr.mxu0 0.0
    %4018 = vmatpush1.msra.mxu0 0.0
    %4019 = vmatprep.subr.mxu0 0.0
    %4020 = vmatpush1.msra.mxu0 0.0
    %4021 = vmatprep.subr.mxu0 0.0
    %4022 = vmatpush1.msra.mxu0 0.0
    %4023 = vmatprep.subr.mxu0 0.0
    %4024 = vmatpush1.msra.mxu0 0.0
    %4025 = vmatprep.subr.mxu0 0.0
    %4026 = vmatpush1.msra.mxu0 0.0
    %4027 = vmatprep.subr.mxu0 0.0
    %4028 = vmatpush1.msra.mxu0 0.0
    %4029 = vmatprep.subr.mxu0 0.0
    %4030 = vmatpush1.msra.mxu0 0.0
    %4031 = vmatprep.subr.mxu0 0.0
    %4032 = vmatpush1.msra.mxu0 0.0
    %4033 = vmatprep.subr.mxu0 0.0
    %4034 = vmatpush1.msra.mxu0 %v3915
    %4035 = vmatprep.subr.mxu0 0.0
    %4036 = vmatpush1.msra.mxu0 %v3914
    %4037 = vmatprep.subr.mxu0 0.0
    %4038 = vmatpush2.msra.mxu0 0.0
    %4039 = vmatprep.subr.mxu0 0.0
    %4040 = vmatpush2.msra.mxu0 0.0
    %4041 = vmatprep.subr.mxu0 0.0
    %4042 = vmatpush2.msra.mxu0 0.0
    %4043 = vmatprep.subr.mxu0 0.0
    %4044 = vmatpush2.msra.mxu0 0.0
    %4045 = vmatprep.subr.mxu0 0.0
    %4046 = vmatpush2.msra.mxu0 0.0
    %4047 = vmatprep.subr.mxu0 0.0
    %4048 = vmatpush2.msra.mxu0 0.0
    %4049 = vmatprep.subr.mxu0 0.0
    %4050 = vmatpush2.msra.mxu0 0.0
    %4051 = vmatprep.subr.mxu0 0.0
    %4052 = vmatpush2.msra.mxu0 0.0
    %4053 = vmatprep.subr.mxu0 0.0
    %4054 = vmatpush2.msra.mxu0 0.0
    %4055 = vmatprep.subr.mxu0 0.0
    %4056 = vmatpush2.msra.mxu0 0.0
    %4057 = vmatprep.subr.mxu0 0.0
    %4058 = vmatpush2.msra.mxu0 0.0
    %4059 = vmatprep.subr.mxu0 0.0
    %4060 = vmatpush2.msra.mxu0 0.0
    %4061 = vmatprep.subr.mxu0 0.0
    %4062 = vmatpush2.msra.mxu0 0.0
    %4063 = vmatprep.subr.mxu0 0.0
    %4064 = vmatpush2.msra.mxu0 0.0
    %4065 = vmatprep.subr.mxu0 0.0
    %4066 = vmatpush2.msra.mxu0 0.0
    %4067 = vmatprep.subr.mxu0 0.0
    %4068 = vmatpush2.msra.mxu0 0.0
    %4069 = vmatprep.mubr.f32.mxu0 0.0
    %4070 = vmatmul.mubr.f32.gmra.mxu0 %v4003
    %v4071 = vpop.f32.mrf.mxu0
    %v4072 = vadd.f32 0.0, %v4071
    %v4073 = vpop.f32.mrf.mxu0
    %4074 = vdwg.mxu0
    %v4075 = vpack.c.bf16 %v4072, %v4072
    %s4076 = scalar_lea.vmem %s35, 32
    %v4077 = vld [vmem:[%s4076] sm:$0xf]
    %v4078 = vld [vmem:[%s4076 + $0x4] sm:$0xf]
    %v4079 = vld [vmem:[%s4076 + $0x8] sm:$0xf]
    %v4080 = vld [vmem:[%s4076 + $0xc] sm:$0xf]
    %v4081 = vld [vmem:[%s4076 + $0x10] sm:$0xf]
    %v4082 = vld [vmem:[%s4076 + $0x14] sm:$0xf]
    %v4083 = vld [vmem:[%s4076 + $0x18] sm:$0xf]
    %v4084 = vld [vmem:[%s4076 + $0x1c] sm:$0xf]
    %v4093 = vunpack.c.l.b16 %v4077
    %v4094 = vunpack.c.l.b16 %v4078
    %v4095 = vunpack.c.l.b16 %v4079
    %v4096 = vunpack.c.l.b16 %v4080
    %v4097 = vunpack.c.l.b16 %v4081
    %v4098 = vunpack.c.l.b16 %v4082
    %v4099 = vunpack.c.l.b16 %v4083
    %v4100 = vunpack.c.l.b16 %v4084
    %v4101 = vpack.c.b16 %v4094, %v4093
    %v4102 = vpack.c.b16 %v4096, %v4095
    %v4103 = vpack.c.b16 %v4098, %v4097
    %v4104 = vpack.c.b16 %v4100, %v4099
    %v4110 = vsel %vm1845, %v4075, 0
    %4112 = vmatprep.subr.bf16.mxu0 0
    %4113 = vmatpush1.bf16.msra.mxu0 0
    %4114 = vmatprep.subr.bf16.mxu0 0
    %4115 = vmatpush1.bf16.msra.mxu0 0
    %4116 = vmatprep.subr.bf16.mxu0 0
    %4117 = vmatpush1.bf16.msra.mxu0 0
    %4118 = vmatprep.subr.bf16.mxu0 0
    %4119 = vmatpush1.bf16.msra.mxu0 0
    %4120 = vmatprep.subr.bf16.mxu0 0
    %4121 = vmatpush1.bf16.msra.mxu0 %v4104
    %4122 = vmatprep.subr.bf16.mxu0 0
    %4123 = vmatpush1.bf16.msra.mxu0 %v4103
    %4124 = vmatprep.subr.bf16.mxu0 0
    %4125 = vmatpush1.bf16.msra.mxu0 %v4102
    %4126 = vmatprep.subr.bf16.mxu0 0
    %4127 = vmatpush1.bf16.msra.mxu0 %v4101
    %4128 = vmatprep.subr.bf16.mxu0 0
    %4129 = vmatpush2.bf16.msra.mxu0 0
    %4130 = vmatprep.subr.bf16.mxu0 0
    %4131 = vmatpush2.bf16.msra.mxu0 0
    %4132 = vmatprep.subr.bf16.mxu0 0
    %4133 = vmatpush2.bf16.msra.mxu0 0
    %4134 = vmatprep.subr.bf16.mxu0 0
    %4135 = vmatpush2.bf16.msra.mxu0 0
    %4136 = vmatprep.subr.bf16.mxu0 0
    %4137 = vmatpush2.bf16.msra.mxu0 0
    %4138 = vmatprep.subr.bf16.mxu0 0
    %4139 = vmatpush2.bf16.msra.mxu0 0
    %4140 = vmatprep.subr.bf16.mxu0 0
    %4141 = vmatpush2.bf16.msra.mxu0 0
    %4142 = vmatprep.subr.bf16.mxu0 0
    %4143 = vmatpush2.bf16.msra.mxu0 0
    %4144 = vmatprep.mubr.bf16.mxu0 0
    %4145 = vmatmul.mubr.bf16.gmra.mxu0 %v4110
    %v4146 = vpop.f32.mrf.mxu0
    %v4147 = vadd.f32 0.0, %v4146
    %v4148 = vpop.f32.mrf.mxu0
    %v4149 = vpop.f32.mrf.mxu0
    %v4150 = vpop.f32.mrf.mxu0
    %4151 = vdwg.mxu0
    %v4160 = vunpack.c.l.b16 %v3992
    %v4161 = vunpack.c.l.b16 %v3993
    %v4162 = vunpack.c.l.b16 %v3994
    %v4163 = vunpack.c.l.b16 %v3995
    %v4164 = vunpack.c.l.b16 %v3996
    %v4165 = vunpack.c.l.b16 %v3997
    %v4166 = vunpack.c.l.b16 %v3998
    %v4167 = vunpack.c.l.b16 %v3999
    %v4168 = vpack.c.b16 %v4161, %v4160
    %v4169 = vpack.c.b16 %v4163, %v4162
    %v4170 = vpack.c.b16 %v4165, %v4164
    %v4171 = vpack.c.b16 %v4167, %v4166
    %v4177 = vsel %vm1845, %v3991, 0
    %4179 = vmatprep.subr.bf16.mxu0 0
    %4180 = vmatpush1.bf16.msra.mxu0 0
    %4181 = vmatprep.subr.bf16.mxu0 0
    %4182 = vmatpush1.bf16.msra.mxu0 0
    %4183 = vmatprep.subr.bf16.mxu0 0
    %4184 = vmatpush1.bf16.msra.mxu0 0
    %4185 = vmatprep.subr.bf16.mxu0 0
    %4186 = vmatpush1.bf16.msra.mxu0 0
    %4187 = vmatprep.subr.bf16.mxu0 0
    %4188 = vmatpush1.bf16.msra.mxu0 %v4171
    %4189 = vmatprep.subr.bf16.mxu0 0
    %4190 = vmatpush1.bf16.msra.mxu0 %v4170
    %4191 = vmatprep.subr.bf16.mxu0 0
    %4192 = vmatpush1.bf16.msra.mxu0 %v4169
    %4193 = vmatprep.subr.bf16.mxu0 0
    %4194 = vmatpush1.bf16.msra.mxu0 %v4168
    %4195 = vmatprep.subr.bf16.mxu0 0
    %4196 = vmatpush2.bf16.msra.mxu0 0
    %4197 = vmatprep.subr.bf16.mxu0 0
    %4198 = vmatpush2.bf16.msra.mxu0 0
    %4199 = vmatprep.subr.bf16.mxu0 0
    %4200 = vmatpush2.bf16.msra.mxu0 0
    %4201 = vmatprep.subr.bf16.mxu0 0
    %4202 = vmatpush2.bf16.msra.mxu0 0
    %4203 = vmatprep.subr.bf16.mxu0 0
    %4204 = vmatpush2.bf16.msra.mxu0 0
    %4205 = vmatprep.subr.bf16.mxu0 0
    %4206 = vmatpush2.bf16.msra.mxu0 0
    %4207 = vmatprep.subr.bf16.mxu0 0
    %4208 = vmatpush2.bf16.msra.mxu0 0
    %4209 = vmatprep.subr.bf16.mxu0 0
    %4210 = vmatpush2.bf16.msra.mxu0 0
    %4211 = vmatprep.mubr.bf16.mxu0 0
    %4212 = vmatmul.mubr.bf16.gmra.mxu0 %v4177
    %v4213 = vpop.f32.mrf.mxu0
    %v4214 = vadd.f32 %v4147, %v4213
    %v4215 = vpop.f32.mrf.mxu0
    %v4216 = vpop.f32.mrf.mxu0
    %v4217 = vpop.f32.mrf.mxu0
    %4218 = vdwg.mxu0
    %s4219 = scalar_lea.vmem %s33, 16
    %v4220 = vld [vmem:[%s4219] sm:$0xff]
    %v4222 = vsel %vm3917, %v4220, 0
    %4224 = vmatprep.subr.mxu0 0.0
    %4225 = vmatpush1.msra.mxu0 0.0
    %4226 = vmatprep.subr.mxu0 0.0
    %4227 = vmatpush1.msra.mxu0 0.0
    %4228 = vmatprep.subr.mxu0 0.0
    %4229 = vmatpush1.msra.mxu0 0.0
    %4230 = vmatprep.subr.mxu0 0.0
    %4231 = vmatpush1.msra.mxu0 0.0
    %4232 = vmatprep.subr.mxu0 0.0
    %4233 = vmatpush1.msra.mxu0 0.0
    %4234 = vmatprep.subr.mxu0 0.0
    %4235 = vmatpush1.msra.mxu0 0.0
    %4236 = vmatprep.subr.mxu0 0.0
    %4237 = vmatpush1.msra.mxu0 0.0
    %4238 = vmatprep.subr.mxu0 0.0
    %4239 = vmatpush1.msra.mxu0 0.0
    %4240 = vmatprep.subr.mxu0 0.0
    %4241 = vmatpush1.msra.mxu0 0.0
    %4242 = vmatprep.subr.mxu0 0.0
    %4243 = vmatpush1.msra.mxu0 0.0
    %4244 = vmatprep.subr.mxu0 0.0
    %4245 = vmatpush1.msra.mxu0 0.0
    %4246 = vmatprep.subr.mxu0 0.0
    %4247 = vmatpush1.msra.mxu0 0.0
    %4248 = vmatprep.subr.mxu0 0.0
    %4249 = vmatpush1.msra.mxu0 0.0
    %4250 = vmatprep.subr.mxu0 0.0
    %4251 = vmatpush1.msra.mxu0 0.0
    %4252 = vmatprep.subr.mxu0 0.0
    %4253 = vmatpush1.msra.mxu0 %v3915
    %4254 = vmatprep.subr.mxu0 0.0
    %4255 = vmatpush1.msra.mxu0 %v3914
    %4256 = vmatprep.subr.mxu0 0.0
    %4257 = vmatpush2.msra.mxu0 0.0
    %4258 = vmatprep.subr.mxu0 0.0
    %4259 = vmatpush2.msra.mxu0 0.0
    %4260 = vmatprep.subr.mxu0 0.0
    %4261 = vmatpush2.msra.mxu0 0.0
    %4262 = vmatprep.subr.mxu0 0.0
    %4263 = vmatpush2.msra.mxu0 0.0
    %4264 = vmatprep.subr.mxu0 0.0
    %4265 = vmatpush2.msra.mxu0 0.0
    %4266 = vmatprep.subr.mxu0 0.0
    %4267 = vmatpush2.msra.mxu0 0.0
    %4268 = vmatprep.subr.mxu0 0.0
    %4269 = vmatpush2.msra.mxu0 0.0
    %4270 = vmatprep.subr.mxu0 0.0
    %4271 = vmatpush2.msra.mxu0 0.0
    %4272 = vmatprep.subr.mxu0 0.0
    %4273 = vmatpush2.msra.mxu0 0.0
    %4274 = vmatprep.subr.mxu0 0.0
    %4275 = vmatpush2.msra.mxu0 0.0
    %4276 = vmatprep.subr.mxu0 0.0
    %4277 = vmatpush2.msra.mxu0 0.0
    %4278 = vmatprep.subr.mxu0 0.0
    %4279 = vmatpush2.msra.mxu0 0.0
    %4280 = vmatprep.subr.mxu0 0.0
    %4281 = vmatpush2.msra.mxu0 0.0
    %4282 = vmatprep.subr.mxu0 0.0
    %4283 = vmatpush2.msra.mxu0 0.0
    %4284 = vmatprep.subr.mxu0 0.0
    %4285 = vmatpush2.msra.mxu0 0.0
    %4286 = vmatprep.subr.mxu0 0.0
    %4287 = vmatpush2.msra.mxu0 0.0
    %4288 = vmatprep.mubr.f32.mxu0 0.0
    %4289 = vmatmul.mubr.f32.gmra.mxu0 %v4222
    %v4290 = vpop.f32.mrf.mxu0
    %v4291 = vadd.f32 0.0, %v4290
    %v4292 = vpop.f32.mrf.mxu0
    %4293 = vdwg.mxu0
    %v4294 = vpack.c.bf16 %v4291, %v4291
    %s4295 = scalar_lea.vmem %s35, 64
    %v4296 = vld [vmem:[%s4295] sm:$0xf]
    %v4297 = vld [vmem:[%s4295 + $0x4] sm:$0xf]
    %v4298 = vld [vmem:[%s4295 + $0x8] sm:$0xf]
    %v4299 = vld [vmem:[%s4295 + $0xc] sm:$0xf]
    %v4300 = vld [vmem:[%s4295 + $0x10] sm:$0xf]
    %v4301 = vld [vmem:[%s4295 + $0x14] sm:$0xf]
    %v4302 = vld [vmem:[%s4295 + $0x18] sm:$0xf]
    %v4303 = vld [vmem:[%s4295 + $0x1c] sm:$0xf]
    %v4312 = vunpack.c.l.b16 %v4296
    %v4313 = vunpack.c.l.b16 %v4297
    %v4314 = vunpack.c.l.b16 %v4298
    %v4315 = vunpack.c.l.b16 %v4299
    %v4316 = vunpack.c.l.b16 %v4300
    %v4317 = vunpack.c.l.b16 %v4301
    %v4318 = vunpack.c.l.b16 %v4302
    %v4319 = vunpack.c.l.b16 %v4303
    %v4320 = vpack.c.b16 %v4313, %v4312
    %v4321 = vpack.c.b16 %v4315, %v4314
    %v4322 = vpack.c.b16 %v4317, %v4316
    %v4323 = vpack.c.b16 %v4319, %v4318
    %v4329 = vsel %vm1845, %v4294, 0
    %4331 = vmatprep.subr.bf16.mxu0 0
    %4332 = vmatpush1.bf16.msra.mxu0 0
    %4333 = vmatprep.subr.bf16.mxu0 0
    %4334 = vmatpush1.bf16.msra.mxu0 0
    %4335 = vmatprep.subr.bf16.mxu0 0
    %4336 = vmatpush1.bf16.msra.mxu0 0
    %4337 = vmatprep.subr.bf16.mxu0 0
    %4338 = vmatpush1.bf16.msra.mxu0 0
    %4339 = vmatprep.subr.bf16.mxu0 0
    %4340 = vmatpush1.bf16.msra.mxu0 %v4323
    %4341 = vmatprep.subr.bf16.mxu0 0
    %4342 = vmatpush1.bf16.msra.mxu0 %v4322
    %4343 = vmatprep.subr.bf16.mxu0 0
    %4344 = vmatpush1.bf16.msra.mxu0 %v4321
    %4345 = vmatprep.subr.bf16.mxu0 0
    %4346 = vmatpush1.bf16.msra.mxu0 %v4320
    %4347 = vmatprep.subr.bf16.mxu0 0
    %4348 = vmatpush2.bf16.msra.mxu0 0
    %4349 = vmatprep.subr.bf16.mxu0 0
    %4350 = vmatpush2.bf16.msra.mxu0 0
    %4351 = vmatprep.subr.bf16.mxu0 0
    %4352 = vmatpush2.bf16.msra.mxu0 0
    %4353 = vmatprep.subr.bf16.mxu0 0
    %4354 = vmatpush2.bf16.msra.mxu0 0
    %4355 = vmatprep.subr.bf16.mxu0 0
    %4356 = vmatpush2.bf16.msra.mxu0 0
    %4357 = vmatprep.subr.bf16.mxu0 0
    %4358 = vmatpush2.bf16.msra.mxu0 0
    %4359 = vmatprep.subr.bf16.mxu0 0
    %4360 = vmatpush2.bf16.msra.mxu0 0
    %4361 = vmatprep.subr.bf16.mxu0 0
    %4362 = vmatpush2.bf16.msra.mxu0 0
    %4363 = vmatprep.mubr.bf16.mxu0 0
    %4364 = vmatmul.mubr.bf16.gmra.mxu0 %v4329
    %v4365 = vpop.f32.mrf.mxu0
    %v4366 = vadd.f32 0.0, %v4365
    %v4367 = vpop.f32.mrf.mxu0
    %v4368 = vpop.f32.mrf.mxu0
    %v4369 = vpop.f32.mrf.mxu0
    %4370 = vdwg.mxu0
    %v4371 = vadd.f32 %v4214, %v4366
    %v4372 = vld [vmem:[%s41] sm:$0x3]
    %v4373 = vld [vmem:[%s37] sm:$0xff]
    %v4374 = vld [vmem:[%s37 + $0x8] sm:$0xff]
    %v4375 = vld [vmem:[%s37 + $0x10] sm:$0xff]
    %v4376 = vld [vmem:[%s37 + $0x18] sm:$0xff]
    %v4378 = vsel %vm3043, %v4371, 0
    %4380 = vmatprep.subr.mxu0 0.0
    %4381 = vmatpush1.msra.mxu0 0.0
    %4382 = vmatprep.subr.mxu0 0.0
    %4383 = vmatpush1.msra.mxu0 0.0
    %4384 = vmatprep.subr.mxu0 0.0
    %4385 = vmatpush1.msra.mxu0 0.0
    %4386 = vmatprep.subr.mxu0 0.0
    %4387 = vmatpush1.msra.mxu0 0.0
    %4388 = vmatprep.subr.mxu0 0.0
    %4389 = vmatpush1.msra.mxu0 0.0
    %4390 = vmatprep.subr.mxu0 0.0
    %4391 = vmatpush1.msra.mxu0 0.0
    %4392 = vmatprep.subr.mxu0 0.0
    %4393 = vmatpush1.msra.mxu0 0.0
    %4394 = vmatprep.subr.mxu0 0.0
    %4395 = vmatpush1.msra.mxu0 0.0
    %4396 = vmatprep.subr.mxu0 0.0
    %4397 = vmatpush1.msra.mxu0 0.0
    %4398 = vmatprep.subr.mxu0 0.0
    %4399 = vmatpush1.msra.mxu0 0.0
    %4400 = vmatprep.subr.mxu0 0.0
    %4401 = vmatpush1.msra.mxu0 0.0
    %4402 = vmatprep.subr.mxu0 0.0
    %4403 = vmatpush1.msra.mxu0 0.0
    %4404 = vmatprep.subr.mxu0 0.0
    %4405 = vmatpush1.msra.mxu0 %v4376
    %4406 = vmatprep.subr.mxu0 0.0
    %4407 = vmatpush1.msra.mxu0 %v4375
    %4408 = vmatprep.subr.mxu0 0.0
    %4409 = vmatpush1.msra.mxu0 %v4374
    %4410 = vmatprep.subr.mxu0 0.0
    %4411 = vmatpush1.msra.mxu0 %v4373
    %4412 = vmatprep.subr.mxu0 0.0
    %4413 = vmatpush2.msra.mxu0 0.0
    %4414 = vmatprep.subr.mxu0 0.0
    %4415 = vmatpush2.msra.mxu0 0.0
    %4416 = vmatprep.subr.mxu0 0.0
    %4417 = vmatpush2.msra.mxu0 0.0
    %4418 = vmatprep.subr.mxu0 0.0
    %4419 = vmatpush2.msra.mxu0 0.0
    %4420 = vmatprep.subr.mxu0 0.0
    %4421 = vmatpush2.msra.mxu0 0.0
    %4422 = vmatprep.subr.mxu0 0.0
    %4423 = vmatpush2.msra.mxu0 0.0
    %4424 = vmatprep.subr.mxu0 0.0
    %4425 = vmatpush2.msra.mxu0 0.0
    %4426 = vmatprep.subr.mxu0 0.0
    %4427 = vmatpush2.msra.mxu0 0.0
    %4428 = vmatprep.subr.mxu0 0.0
    %4429 = vmatpush2.msra.mxu0 0.0
    %4430 = vmatprep.subr.mxu0 0.0
    %4431 = vmatpush2.msra.mxu0 0.0
    %4432 = vmatprep.subr.mxu0 0.0
    %4433 = vmatpush2.msra.mxu0 0.0
    %4434 = vmatprep.subr.mxu0 0.0
    %4435 = vmatpush2.msra.mxu0 0.0
    %4436 = vmatprep.subr.mxu0 0.0
    %4437 = vmatpush2.msra.mxu0 0.0
    %4438 = vmatprep.subr.mxu0 0.0
    %4439 = vmatpush2.msra.mxu0 0.0
    %4440 = vmatprep.subr.mxu0 0.0
    %4441 = vmatpush2.msra.mxu0 0.0
    %4442 = vmatprep.subr.mxu0 0.0
    %4443 = vmatpush2.msra.mxu0 0.0
    %4444 = vmatprep.mubr.f32.mxu0 0.0
    %4445 = vmatmul.mubr.f32.gmra.mxu0 %v4378
    %v4446 = vpop.f32.mrf.mxu0
    %v4447 = vadd.f32 0.0, %v4446
    %v4448 = vpop.f32.mrf.mxu0
    %4449 = vdwg.mxu0
    %v4450 = vmul.f32 %v4371, %v4371
    %v4452 = vsel %vm3043, %v4450, 0
    %4454 = vmatprep.subr.mxu0 0.0
    %4455 = vmatpush1.msra.mxu0 0.0
    %4456 = vmatprep.subr.mxu0 0.0
    %4457 = vmatpush1.msra.mxu0 0.0
    %4458 = vmatprep.subr.mxu0 0.0
    %4459 = vmatpush1.msra.mxu0 0.0
    %4460 = vmatprep.subr.mxu0 0.0
    %4461 = vmatpush1.msra.mxu0 0.0
    %4462 = vmatprep.subr.mxu0 0.0
    %4463 = vmatpush1.msra.mxu0 0.0
    %4464 = vmatprep.subr.mxu0 0.0
    %4465 = vmatpush1.msra.mxu0 0.0
    %4466 = vmatprep.subr.mxu0 0.0
    %4467 = vmatpush1.msra.mxu0 0.0
    %4468 = vmatprep.subr.mxu0 0.0
    %4469 = vmatpush1.msra.mxu0 0.0
    %4470 = vmatprep.subr.mxu0 0.0
    %4471 = vmatpush1.msra.mxu0 0.0
    %4472 = vmatprep.subr.mxu0 0.0
    %4473 = vmatpush1.msra.mxu0 0.0
    %4474 = vmatprep.subr.mxu0 0.0
    %4475 = vmatpush1.msra.mxu0 0.0
    %4476 = vmatprep.subr.mxu0 0.0
    %4477 = vmatpush1.msra.mxu0 0.0
    %4478 = vmatprep.subr.mxu0 0.0
    %4479 = vmatpush1.msra.mxu0 %v4376
    %4480 = vmatprep.subr.mxu0 0.0
    %4481 = vmatpush1.msra.mxu0 %v4375
    %4482 = vmatprep.subr.mxu0 0.0
    %4483 = vmatpush1.msra.mxu0 %v4374
    %4484 = vmatprep.subr.mxu0 0.0
    %4485 = vmatpush1.msra.mxu0 %v4373
    %4486 = vmatprep.subr.mxu0 0.0
    %4487 = vmatpush2.msra.mxu0 0.0
    %4488 = vmatprep.subr.mxu0 0.0
    %4489 = vmatpush2.msra.mxu0 0.0
    %4490 = vmatprep.subr.mxu0 0.0
    %4491 = vmatpush2.msra.mxu0 0.0
    %4492 = vmatprep.subr.mxu0 0.0
    %4493 = vmatpush2.msra.mxu0 0.0
    %4494 = vmatprep.subr.mxu0 0.0
    %4495 = vmatpush2.msra.mxu0 0.0
    %4496 = vmatprep.subr.mxu0 0.0
    %4497 = vmatpush2.msra.mxu0 0.0
    %4498 = vmatprep.subr.mxu0 0.0
    %4499 = vmatpush2.msra.mxu0 0.0
    %4500 = vmatprep.subr.mxu0 0.0
    %4501 = vmatpush2.msra.mxu0 0.0
    %4502 = vmatprep.subr.mxu0 0.0
    %4503 = vmatpush2.msra.mxu0 0.0
    %4504 = vmatprep.subr.mxu0 0.0
    %4505 = vmatpush2.msra.mxu0 0.0
    %4506 = vmatprep.subr.mxu0 0.0
    %4507 = vmatpush2.msra.mxu0 0.0
    %4508 = vmatprep.subr.mxu0 0.0
    %4509 = vmatpush2.msra.mxu0 0.0
    %4510 = vmatprep.subr.mxu0 0.0
    %4511 = vmatpush2.msra.mxu0 0.0
    %4512 = vmatprep.subr.mxu0 0.0
    %4513 = vmatpush2.msra.mxu0 0.0
    %4514 = vmatprep.subr.mxu0 0.0
    %4515 = vmatpush2.msra.mxu0 0.0
    %4516 = vmatprep.subr.mxu0 0.0
    %4517 = vmatpush2.msra.mxu0 0.0
    %4518 = vmatprep.mubr.f32.mxu0 0.0
    %4519 = vmatmul.mubr.f32.gmra.mxu0 %v4452
    %v4520 = vpop.f32.mrf.mxu0
    %v4521 = vadd.f32 0.0, %v4520
    %v4522 = vpop.f32.mrf.mxu0
    %4523 = vdwg.mxu0
    %v4524 = vsel %vm1633, %v4447, 0.0
    %v4525 = vrot.slane %v4524, 4
    %v4526 = vadd.f32 %v4524, %v4525
    %v4527 = vrot.slane %v4526, 2
    %v4528 = vadd.f32 %v4526, %v4527
    %v4529 = vrot.slane %v4528, 1
    %v4530 = vadd.f32 %v4528, %v4529
    %v4531 = vrcp.pop 32.0
    %v4532 = vmul.f32 %v4530, %v4531
    %v4533 = vsel %vm1633, %v4521, 0.0
    %v4534 = vrot.slane %v4533, 4
    %v4535 = vadd.f32 %v4533, %v4534
    %v4536 = vrot.slane %v4535, 2
    %v4537 = vadd.f32 %v4535, %v4536
    %v4538 = vrot.slane %v4537, 1
    %v4539 = vadd.f32 %v4537, %v4538
    %v4540 = vmul.f32 %v4539, %v4531
    %v4541 = vmul.f32 %v4532, %v4532
    %v4542 = vsub.f32 %v4540, %v4541
    %v4543 = vadd.f32 %v4542, 1e-05
    %v4544 = vrsqrt.pop %v4543
    %v4545 = vmul.f32 %v4372, %v4544
    %v4546 = vmul.f32 %v4532, %v4545
    %v4548 = vrot.slane %v4546, 7
    %v4550 = vsub.f32 %v4372, %v4548
    %v4551 = vlaneseq
    %v4552 = vshrl.u32 %v4551, 7
    %v4553 = vsub.s32 0, %v4552
    %v4554 = vrot.slane %v4545, %v4553
    %v4555 = vlaneseq
    %v4556 = vshrl.u32 %v4555, 7
    %v4557 = vsub.s32 1, %v4556
    %v4558 = vrot.slane %v4550, %v4557
    %v4559 = vsel %vm1691, %v4554, %v4558
    %v4560 = vld [vmem:[%s39] sm:$0xff]
    %v4562 = vsel %vm1633, %v4559, 0
    %4564 = vmatprep.subr.mxu0 0.0
    %4565 = vmatpush1.msra.mxu0 0.0
    %4566 = vmatprep.subr.mxu0 0.0
    %4567 = vmatpush1.msra.mxu0 0.0
    %4568 = vmatprep.subr.mxu0 0.0
    %4569 = vmatpush1.msra.mxu0 0.0
    %4570 = vmatprep.subr.mxu0 0.0
    %4571 = vmatpush1.msra.mxu0 0.0
    %4572 = vmatprep.subr.mxu0 0.0
    %4573 = vmatpush1.msra.mxu0 0.0
    %4574 = vmatprep.subr.mxu0 0.0
    %4575 = vmatpush1.msra.mxu0 0.0
    %4576 = vmatprep.subr.mxu0 0.0
    %4577 = vmatpush1.msra.mxu0 0.0
    %4578 = vmatprep.subr.mxu0 0.0
    %4579 = vmatpush1.msra.mxu0 0.0
    %4580 = vmatprep.subr.mxu0 0.0
    %4581 = vmatpush1.msra.mxu0 0.0
    %4582 = vmatprep.subr.mxu0 0.0
    %4583 = vmatpush1.msra.mxu0 0.0
    %4584 = vmatprep.subr.mxu0 0.0
    %4585 = vmatpush1.msra.mxu0 0.0
    %4586 = vmatprep.subr.mxu0 0.0
    %4587 = vmatpush1.msra.mxu0 0.0
    %4588 = vmatprep.subr.mxu0 0.0
    %4589 = vmatpush1.msra.mxu0 0.0
    %4590 = vmatprep.subr.mxu0 0.0
    %4591 = vmatpush1.msra.mxu0 0.0
    %4592 = vmatprep.subr.mxu0 0.0
    %4593 = vmatpush1.msra.mxu0 0.0
    %4594 = vmatprep.subr.mxu0 0.0
    %4595 = vmatpush1.msra.mxu0 %v4560
    %4596 = vmatprep.subr.mxu0 0.0
    %4597 = vmatpush2.msra.mxu0 0.0
    %4598 = vmatprep.subr.mxu0 0.0
    %4599 = vmatpush2.msra.mxu0 0.0
    %4600 = vmatprep.subr.mxu0 0.0
    %4601 = vmatpush2.msra.mxu0 0.0
    %4602 = vmatprep.subr.mxu0 0.0
    %4603 = vmatpush2.msra.mxu0 0.0
    %4604 = vmatprep.subr.mxu0 0.0
    %4605 = vmatpush2.msra.mxu0 0.0
    %4606 = vmatprep.subr.mxu0 0.0
    %4607 = vmatpush2.msra.mxu0 0.0
    %4608 = vmatprep.subr.mxu0 0.0
    %4609 = vmatpush2.msra.mxu0 0.0
    %4610 = vmatprep.subr.mxu0 0.0
    %4611 = vmatpush2.msra.mxu0 0.0
    %4612 = vmatprep.subr.mxu0 0.0
    %4613 = vmatpush2.msra.mxu0 0.0
    %4614 = vmatprep.subr.mxu0 0.0
    %4615 = vmatpush2.msra.mxu0 0.0
    %4616 = vmatprep.subr.mxu0 0.0
    %4617 = vmatpush2.msra.mxu0 0.0
    %4618 = vmatprep.subr.mxu0 0.0
    %4619 = vmatpush2.msra.mxu0 0.0
    %4620 = vmatprep.subr.mxu0 0.0
    %4621 = vmatpush2.msra.mxu0 0.0
    %4622 = vmatprep.subr.mxu0 0.0
    %4623 = vmatpush2.msra.mxu0 0.0
    %4624 = vmatprep.subr.mxu0 0.0
    %4625 = vmatpush2.msra.mxu0 0.0
    %4626 = vmatprep.subr.mxu0 0.0
    %4627 = vmatpush2.msra.mxu0 0.0
    %4628 = vmatprep.mubr.f32.mxu0 0.0
    %4629 = vmatmul.mubr.f32.gmra.mxu0 %v4562
    %v4630 = vpop.f32.mrf.mxu0
    %v4631 = vadd.f32 0.0, %v4630
    %v4632 = vpop.f32.mrf.mxu0
    %4633 = vdwg.mxu0
    %v4634 = vlaneseq
    %v4635 = vshrl.u32 %v4634, 7
    %v4636 = vsub.s32 0, %v4635
    %v4637 = vrot.slane %v4631, %v4636
    %v4638 = vmul.f32 %v4371, %v4637
    %v4639 = vlaneseq
    %v4640 = vshrl.u32 %v4639, 7
    %v4641 = vsub.s32 1, %v4640
    %v4642 = vrot.slane %v4631, %v4641
    %v4643 = vadd.f32 %v4638, %v4642
    %v4644 = vmax.f32 %v4643, 0.0
    %v4645 = vld [vmem:[%s43] sm:$0xf]
    %v4647 = vsel %vm1633, %v4645, 0
    %4649 = vmatprep.subr.mxu0 0.0
    %4650 = vmatpush1.msra.mxu0 0.0
    %4651 = vmatprep.subr.mxu0 0.0
    %4652 = vmatpush1.msra.mxu0 0.0
    %4653 = vmatprep.subr.mxu0 0.0
    %4654 = vmatpush1.msra.mxu0 0.0
    %4655 = vmatprep.subr.mxu0 0.0
    %4656 = vmatpush1.msra.mxu0 0.0
    %4657 = vmatprep.subr.mxu0 0.0
    %4658 = vmatpush1.msra.mxu0 0.0
    %4659 = vmatprep.subr.mxu0 0.0
    %4660 = vmatpush1.msra.mxu0 0.0
    %4661 = vmatprep.subr.mxu0 0.0
    %4662 = vmatpush1.msra.mxu0 0.0
    %4663 = vmatprep.subr.mxu0 0.0
    %4664 = vmatpush1.msra.mxu0 0.0
    %4665 = vmatprep.subr.mxu0 0.0
    %4666 = vmatpush1.msra.mxu0 0.0
    %4667 = vmatprep.subr.mxu0 0.0
    %4668 = vmatpush1.msra.mxu0 0.0
    %4669 = vmatprep.subr.mxu0 0.0
    %4670 = vmatpush1.msra.mxu0 0.0
    %4671 = vmatprep.subr.mxu0 0.0
    %4672 = vmatpush1.msra.mxu0 0.0
    %4673 = vmatprep.subr.mxu0 0.0
    %4674 = vmatpush1.msra.mxu0 0.0
    %4675 = vmatprep.subr.mxu0 0.0
    %4676 = vmatpush1.msra.mxu0 0.0
    %4677 = vmatprep.subr.mxu0 0.0
    %4678 = vmatpush1.msra.mxu0 0.0
    %4679 = vmatprep.subr.mxu0 0.0
    %4680 = vmatpush1.msra.mxu0 %v4644
    %4681 = vmatprep.subr.mxu0 0.0
    %4682 = vmatpush2.msra.mxu0 0.0
    %4683 = vmatprep.subr.mxu0 0.0
    %4684 = vmatpush2.msra.mxu0 0.0
    %4685 = vmatprep.subr.mxu0 0.0
    %4686 = vmatpush2.msra.mxu0 0.0
    %4687 = vmatprep.subr.mxu0 0.0
    %4688 = vmatpush2.msra.mxu0 0.0
    %4689 = vmatprep.subr.mxu0 0.0
    %4690 = vmatpush2.msra.mxu0 0.0
    %4691 = vmatprep.subr.mxu0 0.0
    %4692 = vmatpush2.msra.mxu0 0.0
    %4693 = vmatprep.subr.mxu0 0.0
    %4694 = vmatpush2.msra.mxu0 0.0
    %4695 = vmatprep.subr.mxu0 0.0
    %4696 = vmatpush2.msra.mxu0 0.0
    %4697 = vmatprep.subr.mxu0 0.0
    %4698 = vmatpush2.msra.mxu0 0.0
    %4699 = vmatprep.subr.mxu0 0.0
    %4700 = vmatpush2.msra.mxu0 0.0
    %4701 = vmatprep.subr.mxu0 0.0
    %4702 = vmatpush2.msra.mxu0 0.0
    %4703 = vmatprep.subr.mxu0 0.0
    %4704 = vmatpush2.msra.mxu0 0.0
    %4705 = vmatprep.subr.mxu0 0.0
    %4706 = vmatpush2.msra.mxu0 0.0
    %4707 = vmatprep.subr.mxu0 0.0
    %4708 = vmatpush2.msra.mxu0 0.0
    %4709 = vmatprep.subr.mxu0 0.0
    %4710 = vmatpush2.msra.mxu0 0.0
    %4711 = vmatprep.subr.mxu0 0.0
    %4712 = vmatpush2.msra.mxu0 0.0
    %4713 = vmatprep.mubr.f32.mxu0 0.0
    %4714 = vmatmul.mubr.f32.gmra.mxu0 %v4647
    %v4715 = vpop.f32.mrf.mxu0
    %v4716 = vadd.f32 0.0, %v4715
    %v4717 = vpop.f32.mrf.mxu0
    %4718 = vdwg.mxu0
    %v4719 = vpack.c.bf16 %v4716, %v4716
    %v4720 = vld [vmem:[%s45] sm:$0xf]
    %v4721 = vld [vmem:[%s45 + $0x4] sm:$0xf]
    %v4722 = vld [vmem:[%s45 + $0x8] sm:$0xf]
    %v4723 = vld [vmem:[%s45 + $0xc] sm:$0xf]
    %s4724 = scalar_lea.vmem %s43, 4
    %v4725 = vld [vmem:[%s4724] sm:$0xf]
    %v4727 = vsel %vm1633, %v4725, 0
    %4729 = vmatprep.subr.mxu0 0.0
    %4730 = vmatpush1.msra.mxu0 0.0
    %4731 = vmatprep.subr.mxu0 0.0
    %4732 = vmatpush1.msra.mxu0 0.0
    %4733 = vmatprep.subr.mxu0 0.0
    %4734 = vmatpush1.msra.mxu0 0.0
    %4735 = vmatprep.subr.mxu0 0.0
    %4736 = vmatpush1.msra.mxu0 0.0
    %4737 = vmatprep.subr.mxu0 0.0
    %4738 = vmatpush1.msra.mxu0 0.0
    %4739 = vmatprep.subr.mxu0 0.0
    %4740 = vmatpush1.msra.mxu0 0.0
    %4741 = vmatprep.subr.mxu0 0.0
    %4742 = vmatpush1.msra.mxu0 0.0
    %4743 = vmatprep.subr.mxu0 0.0
    %4744 = vmatpush1.msra.mxu0 0.0
    %4745 = vmatprep.subr.mxu0 0.0
    %4746 = vmatpush1.msra.mxu0 0.0
    %4747 = vmatprep.subr.mxu0 0.0
    %4748 = vmatpush1.msra.mxu0 0.0
    %4749 = vmatprep.subr.mxu0 0.0
    %4750 = vmatpush1.msra.mxu0 0.0
    %4751 = vmatprep.subr.mxu0 0.0
    %4752 = vmatpush1.msra.mxu0 0.0
    %4753 = vmatprep.subr.mxu0 0.0
    %4754 = vmatpush1.msra.mxu0 0.0
    %4755 = vmatprep.subr.mxu0 0.0
    %4756 = vmatpush1.msra.mxu0 0.0
    %4757 = vmatprep.subr.mxu0 0.0
    %4758 = vmatpush1.msra.mxu0 0.0
    %4759 = vmatprep.subr.mxu0 0.0
    %4760 = vmatpush1.msra.mxu0 %v4644
    %4761 = vmatprep.subr.mxu0 0.0
    %4762 = vmatpush2.msra.mxu0 0.0
    %4763 = vmatprep.subr.mxu0 0.0
    %4764 = vmatpush2.msra.mxu0 0.0
    %4765 = vmatprep.subr.mxu0 0.0
    %4766 = vmatpush2.msra.mxu0 0.0
    %4767 = vmatprep.subr.mxu0 0.0
    %4768 = vmatpush2.msra.mxu0 0.0
    %4769 = vmatprep.subr.mxu0 0.0
    %4770 = vmatpush2.msra.mxu0 0.0
    %4771 = vmatprep.subr.mxu0 0.0
    %4772 = vmatpush2.msra.mxu0 0.0
    %4773 = vmatprep.subr.mxu0 0.0
    %4774 = vmatpush2.msra.mxu0 0.0
    %4775 = vmatprep.subr.mxu0 0.0
    %4776 = vmatpush2.msra.mxu0 0.0
    %4777 = vmatprep.subr.mxu0 0.0
    %4778 = vmatpush2.msra.mxu0 0.0
    %4779 = vmatprep.subr.mxu0 0.0
    %4780 = vmatpush2.msra.mxu0 0.0
    %4781 = vmatprep.subr.mxu0 0.0
    %4782 = vmatpush2.msra.mxu0 0.0
    %4783 = vmatprep.subr.mxu0 0.0
    %4784 = vmatpush2.msra.mxu0 0.0
    %4785 = vmatprep.subr.mxu0 0.0
    %4786 = vmatpush2.msra.mxu0 0.0
    %4787 = vmatprep.subr.mxu0 0.0
    %4788 = vmatpush2.msra.mxu0 0.0
    %4789 = vmatprep.subr.mxu0 0.0
    %4790 = vmatpush2.msra.mxu0 0.0
    %4791 = vmatprep.subr.mxu0 0.0
    %4792 = vmatpush2.msra.mxu0 0.0
    %4793 = vmatprep.mubr.f32.mxu0 0.0
    %4794 = vmatmul.mubr.f32.gmra.mxu0 %v4727
    %v4795 = vpop.f32.mrf.mxu0
    %v4796 = vadd.f32 0.0, %v4795
    %v4797 = vpop.f32.mrf.mxu0
    %4798 = vdwg.mxu0
    %v4799 = vpack.c.bf16 %v4796, %v4796
    %s4800 = scalar_lea.vmem %s45, 16
    %v4801 = vld [vmem:[%s4800] sm:$0xf]
    %v4802 = vld [vmem:[%s4800 + $0x4] sm:$0xf]
    %v4803 = vld [vmem:[%s4800 + $0x8] sm:$0xf]
    %v4804 = vld [vmem:[%s4800 + $0xc] sm:$0xf]
    %v4809 = vunpack.c.l.b16 %v4801
    %v4810 = vunpack.c.l.b16 %v4802
    %v4811 = vunpack.c.l.b16 %v4803
    %v4812 = vunpack.c.l.b16 %v4804
    %v4813 = vpack.c.b16 %v4810, %v4809
    %v4814 = vpack.c.b16 %v4812, %v4811
    %v4818 = vsel %vm3043, %v4799, 0
    %4820 = vmatprep.subr.bf16.mxu0 0
    %4821 = vmatpush1.bf16.msra.mxu0 0
    %4822 = vmatprep.subr.bf16.mxu0 0
    %4823 = vmatpush1.bf16.msra.mxu0 0
    %4824 = vmatprep.subr.bf16.mxu0 0
    %4825 = vmatpush1.bf16.msra.mxu0 0
    %4826 = vmatprep.subr.bf16.mxu0 0
    %4827 = vmatpush1.bf16.msra.mxu0 0
    %4828 = vmatprep.subr.bf16.mxu0 0
    %4829 = vmatpush1.bf16.msra.mxu0 0
    %4830 = vmatprep.subr.bf16.mxu0 0
    %4831 = vmatpush1.bf16.msra.mxu0 0
    %4832 = vmatprep.subr.bf16.mxu0 0
    %4833 = vmatpush1.bf16.msra.mxu0 %v4814
    %4834 = vmatprep.subr.bf16.mxu0 0
    %4835 = vmatpush1.bf16.msra.mxu0 %v4813
    %4836 = vmatprep.subr.bf16.mxu0 0
    %4837 = vmatpush2.bf16.msra.mxu0 0
    %4838 = vmatprep.subr.bf16.mxu0 0
    %4839 = vmatpush2.bf16.msra.mxu0 0
    %4840 = vmatprep.subr.bf16.mxu0 0
    %4841 = vmatpush2.bf16.msra.mxu0 0
    %4842 = vmatprep.subr.bf16.mxu0 0
    %4843 = vmatpush2.bf16.msra.mxu0 0
    %4844 = vmatprep.subr.bf16.mxu0 0
    %4845 = vmatpush2.bf16.msra.mxu0 0
    %4846 = vmatprep.subr.bf16.mxu0 0
    %4847 = vmatpush2.bf16.msra.mxu0 0
    %4848 = vmatprep.subr.bf16.mxu0 0
    %4849 = vmatpush2.bf16.msra.mxu0 0
    %4850 = vmatprep.subr.bf16.mxu0 0
    %4851 = vmatpush2.bf16.msra.mxu0 0
    %4852 = vmatprep.mubr.bf16.mxu0 0
    %4853 = vmatmul.mubr.bf16.gmra.mxu0 %v4818
    %v4854 = vpop.f32.mrf.mxu0
    %v4855 = vadd.f32 0.0, %v4854
    %v4856 = vpop.f32.mrf.mxu0
    %v4857 = vpop.f32.mrf.mxu0
    %v4858 = vpop.f32.mrf.mxu0
    %4859 = vdwg.mxu0
    %v4864 = vunpack.c.l.b16 %v4720
    %v4865 = vunpack.c.l.b16 %v4721
    %v4866 = vunpack.c.l.b16 %v4722
    %v4867 = vunpack.c.l.b16 %v4723
    %v4868 = vpack.c.b16 %v4865, %v4864
    %v4869 = vpack.c.b16 %v4867, %v4866
    %v4873 = vsel %vm3043, %v4719, 0
    %4875 = vmatprep.subr.bf16.mxu0 0
    %4876 = vmatpush1.bf16.msra.mxu0 0
    %4877 = vmatprep.subr.bf16.mxu0 0
    %4878 = vmatpush1.bf16.msra.mxu0 0
    %4879 = vmatprep.subr.bf16.mxu0 0
    %4880 = vmatpush1.bf16.msra.mxu0 0
    %4881 = vmatprep.subr.bf16.mxu0 0
    %4882 = vmatpush1.bf16.msra.mxu0 0
    %4883 = vmatprep.subr.bf16.mxu0 0
    %4884 = vmatpush1.bf16.msra.mxu0 0
    %4885 = vmatprep.subr.bf16.mxu0 0
    %4886 = vmatpush1.bf16.msra.mxu0 0
    %4887 = vmatprep.subr.bf16.mxu0 0
    %4888 = vmatpush1.bf16.msra.mxu0 %v4869
    %4889 = vmatprep.subr.bf16.mxu0 0
    %4890 = vmatpush1.bf16.msra.mxu0 %v4868
    %4891 = vmatprep.subr.bf16.mxu0 0
    %4892 = vmatpush2.bf16.msra.mxu0 0
    %4893 = vmatprep.subr.bf16.mxu0 0
    %4894 = vmatpush2.bf16.msra.mxu0 0
    %4895 = vmatprep.subr.bf16.mxu0 0
    %4896 = vmatpush2.bf16.msra.mxu0 0
    %4897 = vmatprep.subr.bf16.mxu0 0
    %4898 = vmatpush2.bf16.msra.mxu0 0
    %4899 = vmatprep.subr.bf16.mxu0 0
    %4900 = vmatpush2.bf16.msra.mxu0 0
    %4901 = vmatprep.subr.bf16.mxu0 0
    %4902 = vmatpush2.bf16.msra.mxu0 0
    %4903 = vmatprep.subr.bf16.mxu0 0
    %4904 = vmatpush2.bf16.msra.mxu0 0
    %4905 = vmatprep.subr.bf16.mxu0 0
    %4906 = vmatpush2.bf16.msra.mxu0 0
    %4907 = vmatprep.mubr.bf16.mxu0 0
    %4908 = vmatmul.mubr.bf16.gmra.mxu0 %v4873
    %v4909 = vpop.f32.mrf.mxu0
    %v4910 = vadd.f32 %v4855, %v4909
    %v4911 = vpop.f32.mrf.mxu0
    %v4912 = vpop.f32.mrf.mxu0
    %v4913 = vpop.f32.mrf.mxu0
    %4914 = vdwg.mxu0
    %s4915 = scalar_lea.vmem %s43, 8
    %v4916 = vld [vmem:[%s4915] sm:$0xf]
    %v4918 = vsel %vm1633, %v4916, 0
    %4920 = vmatprep.subr.mxu0 0.0
    %4921 = vmatpush1.msra.mxu0 0.0
    %4922 = vmatprep.subr.mxu0 0.0
    %4923 = vmatpush1.msra.mxu0 0.0
    %4924 = vmatprep.subr.mxu0 0.0
    %4925 = vmatpush1.msra.mxu0 0.0
    %4926 = vmatprep.subr.mxu0 0.0
    %4927 = vmatpush1.msra.mxu0 0.0
    %4928 = vmatprep.subr.mxu0 0.0
    %4929 = vmatpush1.msra.mxu0 0.0
    %4930 = vmatprep.subr.mxu0 0.0
    %4931 = vmatpush1.msra.mxu0 0.0
    %4932 = vmatprep.subr.mxu0 0.0
    %4933 = vmatpush1.msra.mxu0 0.0
    %4934 = vmatprep.subr.mxu0 0.0
    %4935 = vmatpush1.msra.mxu0 0.0
    %4936 = vmatprep.subr.mxu0 0.0
    %4937 = vmatpush1.msra.mxu0 0.0
    %4938 = vmatprep.subr.mxu0 0.0
    %4939 = vmatpush1.msra.mxu0 0.0
    %4940 = vmatprep.subr.mxu0 0.0
    %4941 = vmatpush1.msra.mxu0 0.0
    %4942 = vmatprep.subr.mxu0 0.0
    %4943 = vmatpush1.msra.mxu0 0.0
    %4944 = vmatprep.subr.mxu0 0.0
    %4945 = vmatpush1.msra.mxu0 0.0
    %4946 = vmatprep.subr.mxu0 0.0
    %4947 = vmatpush1.msra.mxu0 0.0
    %4948 = vmatprep.subr.mxu0 0.0
    %4949 = vmatpush1.msra.mxu0 0.0
    %4950 = vmatprep.subr.mxu0 0.0
    %4951 = vmatpush1.msra.mxu0 %v4644
    %4952 = vmatprep.subr.mxu0 0.0
    %4953 = vmatpush2.msra.mxu0 0.0
    %4954 = vmatprep.subr.mxu0 0.0
    %4955 = vmatpush2.msra.mxu0 0.0
    %4956 = vmatprep.subr.mxu0 0.0
    %4957 = vmatpush2.msra.mxu0 0.0
    %4958 = vmatprep.subr.mxu0 0.0
    %4959 = vmatpush2.msra.mxu0 0.0
    %4960 = vmatprep.subr.mxu0 0.0
    %4961 = vmatpush2.msra.mxu0 0.0
    %4962 = vmatprep.subr.mxu0 0.0
    %4963 = vmatpush2.msra.mxu0 0.0
    %4964 = vmatprep.subr.mxu0 0.0
    %4965 = vmatpush2.msra.mxu0 0.0
    %4966 = vmatprep.subr.mxu0 0.0
    %4967 = vmatpush2.msra.mxu0 0.0
    %4968 = vmatprep.subr.mxu0 0.0
    %4969 = vmatpush2.msra.mxu0 0.0
    %4970 = vmatprep.subr.mxu0 0.0
    %4971 = vmatpush2.msra.mxu0 0.0
    %4972 = vmatprep.subr.mxu0 0.0
    %4973 = vmatpush2.msra.mxu0 0.0
    %4974 = vmatprep.subr.mxu0 0.0
    %4975 = vmatpush2.msra.mxu0 0.0
    %4976 = vmatprep.subr.mxu0 0.0
    %4977 = vmatpush2.msra.mxu0 0.0
    %4978 = vmatprep.subr.mxu0 0.0
    %4979 = vmatpush2.msra.mxu0 0.0
    %4980 = vmatprep.subr.mxu0 0.0
    %4981 = vmatpush2.msra.mxu0 0.0
    %4982 = vmatprep.subr.mxu0 0.0
    %4983 = vmatpush2.msra.mxu0 0.0
    %4984 = vmatprep.mubr.f32.mxu0 0.0
    %4985 = vmatmul.mubr.f32.gmra.mxu0 %v4918
    %v4986 = vpop.f32.mrf.mxu0
    %v4987 = vadd.f32 0.0, %v4986
    %v4988 = vpop.f32.mrf.mxu0
    %4989 = vdwg.mxu0
    %v4990 = vpack.c.bf16 %v4987, %v4987
    %s4991 = scalar_lea.vmem %s45, 32
    %v4992 = vld [vmem:[%s4991] sm:$0xf]
    %v4993 = vld [vmem:[%s4991 + $0x4] sm:$0xf]
    %v4994 = vld [vmem:[%s4991 + $0x8] sm:$0xf]
    %v4995 = vld [vmem:[%s4991 + $0xc] sm:$0xf]
    %v5000 = vunpack.c.l.b16 %v4992
    %v5001 = vunpack.c.l.b16 %v4993
    %v5002 = vunpack.c.l.b16 %v4994
    %v5003 = vunpack.c.l.b16 %v4995
    %v5004 = vpack.c.b16 %v5001, %v5000
    %v5005 = vpack.c.b16 %v5003, %v5002
    %v5009 = vsel %vm3043, %v4990, 0
    %5011 = vmatprep.subr.bf16.mxu0 0
    %5012 = vmatpush1.bf16.msra.mxu0 0
    %5013 = vmatprep.subr.bf16.mxu0 0
    %5014 = vmatpush1.bf16.msra.mxu0 0
    %5015 = vmatprep.subr.bf16.mxu0 0
    %5016 = vmatpush1.bf16.msra.mxu0 0
    %5017 = vmatprep.subr.bf16.mxu0 0
    %5018 = vmatpush1.bf16.msra.mxu0 0
    %5019 = vmatprep.subr.bf16.mxu0 0
    %5020 = vmatpush1.bf16.msra.mxu0 0
    %5021 = vmatprep.subr.bf16.mxu0 0
    %5022 = vmatpush1.bf16.msra.mxu0 0
    %5023 = vmatprep.subr.bf16.mxu0 0
    %5024 = vmatpush1.bf16.msra.mxu0 %v5005
    %5025 = vmatprep.subr.bf16.mxu0 0
    %5026 = vmatpush1.bf16.msra.mxu0 %v5004
    %5027 = vmatprep.subr.bf16.mxu0 0
    %5028 = vmatpush2.bf16.msra.mxu0 0
    %5029 = vmatprep.subr.bf16.mxu0 0
    %5030 = vmatpush2.bf16.msra.mxu0 0
    %5031 = vmatprep.subr.bf16.mxu0 0
    %5032 = vmatpush2.bf16.msra.mxu0 0
    %5033 = vmatprep.subr.bf16.mxu0 0
    %5034 = vmatpush2.bf16.msra.mxu0 0
    %5035 = vmatprep.subr.bf16.mxu0 0
    %5036 = vmatpush2.bf16.msra.mxu0 0
    %5037 = vmatprep.subr.bf16.mxu0 0
    %5038 = vmatpush2.bf16.msra.mxu0 0
    %5039 = vmatprep.subr.bf16.mxu0 0
    %5040 = vmatpush2.bf16.msra.mxu0 0
    %5041 = vmatprep.subr.bf16.mxu0 0
    %5042 = vmatpush2.bf16.msra.mxu0 0
    %5043 = vmatprep.mubr.bf16.mxu0 0
    %5044 = vmatmul.mubr.bf16.gmra.mxu0 %v5009
    %v5045 = vpop.f32.mrf.mxu0
    %v5046 = vadd.f32 0.0, %v5045
    %v5047 = vpop.f32.mrf.mxu0
    %v5048 = vpop.f32.mrf.mxu0
    %v5049 = vpop.f32.mrf.mxu0
    %5050 = vdwg.mxu0
    %v5051 = vadd.f32 %v4910, %v5046
    %v5052 = vld [vmem:[%s51] sm:$0x3]
    %v5053 = vld [vmem:[%s47] sm:$0xff]
    %v5054 = vld [vmem:[%s47 + $0x8] sm:$0xff]
    %v5055 = vld [vmem:[%s47 + $0x10] sm:$0xff]
    %v5056 = vld [vmem:[%s47 + $0x18] sm:$0xff]
    %v5058 = vsel %vm3043, %v5051, 0
    %5060 = vmatprep.subr.mxu0 0.0
    %5061 = vmatpush1.msra.mxu0 0.0
    %5062 = vmatprep.subr.mxu0 0.0
    %5063 = vmatpush1.msra.mxu0 0.0
    %5064 = vmatprep.subr.mxu0 0.0
    %5065 = vmatpush1.msra.mxu0 0.0
    %5066 = vmatprep.subr.mxu0 0.0
    %5067 = vmatpush1.msra.mxu0 0.0
    %5068 = vmatprep.subr.mxu0 0.0
    %5069 = vmatpush1.msra.mxu0 0.0
    %5070 = vmatprep.subr.mxu0 0.0
    %5071 = vmatpush1.msra.mxu0 0.0
    %5072 = vmatprep.subr.mxu0 0.0
    %5073 = vmatpush1.msra.mxu0 0.0
    %5074 = vmatprep.subr.mxu0 0.0
    %5075 = vmatpush1.msra.mxu0 0.0
    %5076 = vmatprep.subr.mxu0 0.0
    %5077 = vmatpush1.msra.mxu0 0.0
    %5078 = vmatprep.subr.mxu0 0.0
    %5079 = vmatpush1.msra.mxu0 0.0
    %5080 = vmatprep.subr.mxu0 0.0
    %5081 = vmatpush1.msra.mxu0 0.0
    %5082 = vmatprep.subr.mxu0 0.0
    %5083 = vmatpush1.msra.mxu0 0.0
    %5084 = vmatprep.subr.mxu0 0.0
    %5085 = vmatpush1.msra.mxu0 %v5056
    %5086 = vmatprep.subr.mxu0 0.0
    %5087 = vmatpush1.msra.mxu0 %v5055
    %5088 = vmatprep.subr.mxu0 0.0
    %5089 = vmatpush1.msra.mxu0 %v5054
    %5090 = vmatprep.subr.mxu0 0.0
    %5091 = vmatpush1.msra.mxu0 %v5053
    %5092 = vmatprep.subr.mxu0 0.0
    %5093 = vmatpush2.msra.mxu0 0.0
    %5094 = vmatprep.subr.mxu0 0.0
    %5095 = vmatpush2.msra.mxu0 0.0
    %5096 = vmatprep.subr.mxu0 0.0
    %5097 = vmatpush2.msra.mxu0 0.0
    %5098 = vmatprep.subr.mxu0 0.0
    %5099 = vmatpush2.msra.mxu0 0.0
    %5100 = vmatprep.subr.mxu0 0.0
    %5101 = vmatpush2.msra.mxu0 0.0
    %5102 = vmatprep.subr.mxu0 0.0
    %5103 = vmatpush2.msra.mxu0 0.0
    %5104 = vmatprep.subr.mxu0 0.0
    %5105 = vmatpush2.msra.mxu0 0.0
    %5106 = vmatprep.subr.mxu0 0.0
    %5107 = vmatpush2.msra.mxu0 0.0
    %5108 = vmatprep.subr.mxu0 0.0
    %5109 = vmatpush2.msra.mxu0 0.0
    %5110 = vmatprep.subr.mxu0 0.0
    %5111 = vmatpush2.msra.mxu0 0.0
    %5112 = vmatprep.subr.mxu0 0.0
    %5113 = vmatpush2.msra.mxu0 0.0
    %5114 = vmatprep.subr.mxu0 0.0
    %5115 = vmatpush2.msra.mxu0 0.0
    %5116 = vmatprep.subr.mxu0 0.0
    %5117 = vmatpush2.msra.mxu0 0.0
    %5118 = vmatprep.subr.mxu0 0.0
    %5119 = vmatpush2.msra.mxu0 0.0
    %5120 = vmatprep.subr.mxu0 0.0
    %5121 = vmatpush2.msra.mxu0 0.0
    %5122 = vmatprep.subr.mxu0 0.0
    %5123 = vmatpush2.msra.mxu0 0.0
    %5124 = vmatprep.mubr.f32.mxu0 0.0
    %5125 = vmatmul.mubr.f32.gmra.mxu0 %v5058
    %v5126 = vpop.f32.mrf.mxu0
    %v5127 = vadd.f32 0.0, %v5126
    %v5128 = vpop.f32.mrf.mxu0
    %5129 = vdwg.mxu0
    %v5130 = vmul.f32 %v5051, %v5051
    %v5132 = vsel %vm3043, %v5130, 0
    %5134 = vmatprep.subr.mxu0 0.0
    %5135 = vmatpush1.msra.mxu0 0.0
    %5136 = vmatprep.subr.mxu0 0.0
    %5137 = vmatpush1.msra.mxu0 0.0
    %5138 = vmatprep.subr.mxu0 0.0
    %5139 = vmatpush1.msra.mxu0 0.0
    %5140 = vmatprep.subr.mxu0 0.0
    %5141 = vmatpush1.msra.mxu0 0.0
    %5142 = vmatprep.subr.mxu0 0.0
    %5143 = vmatpush1.msra.mxu0 0.0
    %5144 = vmatprep.subr.mxu0 0.0
    %5145 = vmatpush1.msra.mxu0 0.0
    %5146 = vmatprep.subr.mxu0 0.0
    %5147 = vmatpush1.msra.mxu0 0.0
    %5148 = vmatprep.subr.mxu0 0.0
    %5149 = vmatpush1.msra.mxu0 0.0
    %5150 = vmatprep.subr.mxu0 0.0
    %5151 = vmatpush1.msra.mxu0 0.0
    %5152 = vmatprep.subr.mxu0 0.0
    %5153 = vmatpush1.msra.mxu0 0.0
    %5154 = vmatprep.subr.mxu0 0.0
    %5155 = vmatpush1.msra.mxu0 0.0
    %5156 = vmatprep.subr.mxu0 0.0
    %5157 = vmatpush1.msra.mxu0 0.0
    %5158 = vmatprep.subr.mxu0 0.0
    %5159 = vmatpush1.msra.mxu0 %v5056
    %5160 = vmatprep.subr.mxu0 0.0
    %5161 = vmatpush1.msra.mxu0 %v5055
    %5162 = vmatprep.subr.mxu0 0.0
    %5163 = vmatpush1.msra.mxu0 %v5054
    %5164 = vmatprep.subr.mxu0 0.0
    %5165 = vmatpush1.msra.mxu0 %v5053
    %5166 = vmatprep.subr.mxu0 0.0
    %5167 = vmatpush2.msra.mxu0 0.0
    %5168 = vmatprep.subr.mxu0 0.0
    %5169 = vmatpush2.msra.mxu0 0.0
    %5170 = vmatprep.subr.mxu0 0.0
    %5171 = vmatpush2.msra.mxu0 0.0
    %5172 = vmatprep.subr.mxu0 0.0
    %5173 = vmatpush2.msra.mxu0 0.0
    %5174 = vmatprep.subr.mxu0 0.0
    %5175 = vmatpush2.msra.mxu0 0.0
    %5176 = vmatprep.subr.mxu0 0.0
    %5177 = vmatpush2.msra.mxu0 0.0
    %5178 = vmatprep.subr.mxu0 0.0
    %5179 = vmatpush2.msra.mxu0 0.0
    %5180 = vmatprep.subr.mxu0 0.0
    %5181 = vmatpush2.msra.mxu0 0.0
    %5182 = vmatprep.subr.mxu0 0.0
    %5183 = vmatpush2.msra.mxu0 0.0
    %5184 = vmatprep.subr.mxu0 0.0
    %5185 = vmatpush2.msra.mxu0 0.0
    %5186 = vmatprep.subr.mxu0 0.0
    %5187 = vmatpush2.msra.mxu0 0.0
    %5188 = vmatprep.subr.mxu0 0.0
    %5189 = vmatpush2.msra.mxu0 0.0
    %5190 = vmatprep.subr.mxu0 0.0
    %5191 = vmatpush2.msra.mxu0 0.0
    %5192 = vmatprep.subr.mxu0 0.0
    %5193 = vmatpush2.msra.mxu0 0.0
    %5194 = vmatprep.subr.mxu0 0.0
    %5195 = vmatpush2.msra.mxu0 0.0
    %5196 = vmatprep.subr.mxu0 0.0
    %5197 = vmatpush2.msra.mxu0 0.0
    %5198 = vmatprep.mubr.f32.mxu0 0.0
    %5199 = vmatmul.mubr.f32.gmra.mxu0 %v5132
    %v5200 = vpop.f32.mrf.mxu0
    %v5201 = vadd.f32 0.0, %v5200
    %v5202 = vpop.f32.mrf.mxu0
    %5203 = vdwg.mxu0
    %vm5204 = vcmask 125952
    %v5205 = vsel %vm5204, %v5127, 0.0
    %v5206 = vrot.slane %v5205, 4
    %v5207 = vadd.f32 %v5205, %v5206
    %v5208 = vrot.slane %v5207, 2
    %v5209 = vadd.f32 %v5207, %v5208
    %v5210 = vrot.slane %v5209, 1
    %v5211 = vadd.f32 %v5209, %v5210
    %v5212 = vrcp.pop 8.0
    %v5213 = vmul.f32 %v5211, %v5212
    %v5214 = vsel %vm5204, %v5201, 0.0
    %v5215 = vrot.slane %v5214, 4
    %v5216 = vadd.f32 %v5214, %v5215
    %v5217 = vrot.slane %v5216, 2
    %v5218 = vadd.f32 %v5216, %v5217
    %v5219 = vrot.slane %v5218, 1
    %v5220 = vadd.f32 %v5218, %v5219
    %v5221 = vmul.f32 %v5220, %v5212
    %v5222 = vmul.f32 %v5213, %v5213
    %v5223 = vsub.f32 %v5221, %v5222
    %v5224 = vadd.f32 %v5223, 1e-05
    %v5225 = vrsqrt.pop %v5224
    %v5226 = vmul.f32 %v5052, %v5225
    %v5227 = vmul.f32 %v5213, %v5226
    %v5229 = vrot.slane %v5227, 7
    %v5231 = vsub.f32 %v5052, %v5229
    %v5232 = vlaneseq
    %v5233 = vshrl.u32 %v5232, 7
    %v5234 = vsub.s32 0, %v5233
    %v5235 = vrot.slane %v5226, %v5234
    %v5236 = vlaneseq
    %v5237 = vshrl.u32 %v5236, 7
    %v5238 = vsub.s32 1, %v5237
    %v5239 = vrot.slane %v5231, %v5238
    %v5240 = vsel %vm1691, %v5235, %v5239
    %v5241 = vld [vmem:[%s49] sm:$0xff]
    %v5242 = vld [vmem:[%s49 + $0x8] sm:$0xff]
    %v5244 = vsel %vm3917, %v5240, 0
    %5246 = vmatprep.subr.mxu0 0.0
    %5247 = vmatpush1.msra.mxu0 0.0
    %5248 = vmatprep.subr.mxu0 0.0
    %5249 = vmatpush1.msra.mxu0 0.0
    %5250 = vmatprep.subr.mxu0 0.0
    %5251 = vmatpush1.msra.mxu0 0.0
    %5252 = vmatprep.subr.mxu0 0.0
    %5253 = vmatpush1.msra.mxu0 0.0
    %5254 = vmatprep.subr.mxu0 0.0
    %5255 = vmatpush1.msra.mxu0 0.0
    %5256 = vmatprep.subr.mxu0 0.0
    %5257 = vmatpush1.msra.mxu0 0.0
    %5258 = vmatprep.subr.mxu0 0.0
    %5259 = vmatpush1.msra.mxu0 0.0
    %5260 = vmatprep.subr.mxu0 0.0
    %5261 = vmatpush1.msra.mxu0 0.0
    %5262 = vmatprep.subr.mxu0 0.0
    %5263 = vmatpush1.msra.mxu0 0.0
    %5264 = vmatprep.subr.mxu0 0.0
    %5265 = vmatpush1.msra.mxu0 0.0
    %5266 = vmatprep.subr.mxu0 0.0
    %5267 = vmatpush1.msra.mxu0 0.0
    %5268 = vmatprep.subr.mxu0 0.0
    %5269 = vmatpush1.msra.mxu0 0.0
    %5270 = vmatprep.subr.mxu0 0.0
    %5271 = vmatpush1.msra.mxu0 0.0
    %5272 = vmatprep.subr.mxu0 0.0
    %5273 = vmatpush1.msra.mxu0 0.0
    %5274 = vmatprep.subr.mxu0 0.0
    %5275 = vmatpush1.msra.mxu0 %v5242
    %5276 = vmatprep.subr.mxu0 0.0
    %5277 = vmatpush1.msra.mxu0 %v5241
    %5278 = vmatprep.subr.mxu0 0.0
    %5279 = vmatpush2.msra.mxu0 0.0
    %5280 = vmatprep.subr.mxu0 0.0
    %5281 = vmatpush2.msra.mxu0 0.0
    %5282 = vmatprep.subr.mxu0 0.0
    %5283 = vmatpush2.msra.mxu0 0.0
    %5284 = vmatprep.subr.mxu0 0.0
    %5285 = vmatpush2.msra.mxu0 0.0
    %5286 = vmatprep.subr.mxu0 0.0
    %5287 = vmatpush2.msra.mxu0 0.0
    %5288 = vmatprep.subr.mxu0 0.0
    %5289 = vmatpush2.msra.mxu0 0.0
    %5290 = vmatprep.subr.mxu0 0.0
    %5291 = vmatpush2.msra.mxu0 0.0
    %5292 = vmatprep.subr.mxu0 0.0
    %5293 = vmatpush2.msra.mxu0 0.0
    %5294 = vmatprep.subr.mxu0 0.0
    %5295 = vmatpush2.msra.mxu0 0.0
    %5296 = vmatprep.subr.mxu0 0.0
    %5297 = vmatpush2.msra.mxu0 0.0
    %5298 = vmatprep.subr.mxu0 0.0
    %5299 = vmatpush2.msra.mxu0 0.0
    %5300 = vmatprep.subr.mxu0 0.0
    %5301 = vmatpush2.msra.mxu0 0.0
    %5302 = vmatprep.subr.mxu0 0.0
    %5303 = vmatpush2.msra.mxu0 0.0
    %5304 = vmatprep.subr.mxu0 0.0
    %5305 = vmatpush2.msra.mxu0 0.0
    %5306 = vmatprep.subr.mxu0 0.0
    %5307 = vmatpush2.msra.mxu0 0.0
    %5308 = vmatprep.subr.mxu0 0.0
    %5309 = vmatpush2.msra.mxu0 0.0
    %5310 = vmatprep.mubr.f32.mxu0 0.0
    %5311 = vmatmul.mubr.f32.gmra.mxu0 %v5244
    %v5312 = vpop.f32.mrf.mxu0
    %v5313 = vadd.f32 0.0, %v5312
    %v5314 = vpop.f32.mrf.mxu0
    %5315 = vdwg.mxu0
    %v5316 = vlaneseq
    %v5317 = vshrl.u32 %v5316, 7
    %v5318 = vsub.s32 0, %v5317
    %v5319 = vrot.slane %v5313, %v5318
    %v5320 = vmul.f32 %v5051, %v5319
    %v5321 = vlaneseq
    %v5322 = vshrl.u32 %v5321, 7
    %v5323 = vsub.s32 1, %v5322
    %v5324 = vrot.slane %v5313, %v5323
    %v5325 = vadd.f32 %v5320, %v5324
    %v5326 = vmax.f32 %v5325, 0.0
    %v5327 = vld [vmem:[%s53] sm:$0x3]
    %vm5328 = vcmask 31744
    %v5330 = vsel %vm5328, %v5327, 0
    %vm5332 = vcmask 1043456
    %v5334 = vsel %vm5332, %v5326, 0
    %5336 = vmatprep.subr.mxu0 0.0
    %5337 = vmatpush1.msra.mxu0 0.0
    %5338 = vmatprep.subr.mxu0 0.0
    %5339 = vmatpush1.msra.mxu0 0.0
    %5340 = vmatprep.subr.mxu0 0.0
    %5341 = vmatpush1.msra.mxu0 0.0
    %5342 = vmatprep.subr.mxu0 0.0
    %5343 = vmatpush1.msra.mxu0 0.0
    %5344 = vmatprep.subr.mxu0 0.0
    %5345 = vmatpush1.msra.mxu0 0.0
    %5346 = vmatprep.subr.mxu0 0.0
    %5347 = vmatpush1.msra.mxu0 0.0
    %5348 = vmatprep.subr.mxu0 0.0
    %5349 = vmatpush1.msra.mxu0 0.0
    %5350 = vmatprep.subr.mxu0 0.0
    %5351 = vmatpush1.msra.mxu0 0.0
    %5352 = vmatprep.subr.mxu0 0.0
    %5353 = vmatpush1.msra.mxu0 0.0
    %5354 = vmatprep.subr.mxu0 0.0
    %5355 = vmatpush1.msra.mxu0 0.0
    %5356 = vmatprep.subr.mxu0 0.0
    %5357 = vmatpush1.msra.mxu0 0.0
    %5358 = vmatprep.subr.mxu0 0.0
    %5359 = vmatpush1.msra.mxu0 0.0
    %5360 = vmatprep.subr.mxu0 0.0
    %5361 = vmatpush1.msra.mxu0 0.0
    %5362 = vmatprep.subr.mxu0 0.0
    %5363 = vmatpush1.msra.mxu0 0.0
    %5364 = vmatprep.subr.mxu0 0.0
    %5365 = vmatpush1.msra.mxu0 0.0
    %5366 = vmatprep.subr.mxu0 0.0
    %5367 = vmatpush1.msra.mxu0 %v5334
    %5368 = vmatprep.subr.mxu0 0.0
    %5369 = vmatpush2.msra.mxu0 0.0
    %5370 = vmatprep.subr.mxu0 0.0
    %5371 = vmatpush2.msra.mxu0 0.0
    %5372 = vmatprep.subr.mxu0 0.0
    %5373 = vmatpush2.msra.mxu0 0.0
    %5374 = vmatprep.subr.mxu0 0.0
    %5375 = vmatpush2.msra.mxu0 0.0
    %5376 = vmatprep.subr.mxu0 0.0
    %5377 = vmatpush2.msra.mxu0 0.0
    %5378 = vmatprep.subr.mxu0 0.0
    %5379 = vmatpush2.msra.mxu0 0.0
    %5380 = vmatprep.subr.mxu0 0.0
    %5381 = vmatpush2.msra.mxu0 0.0
    %5382 = vmatprep.subr.mxu0 0.0
    %5383 = vmatpush2.msra.mxu0 0.0
    %5384 = vmatprep.subr.mxu0 0.0
    %5385 = vmatpush2.msra.mxu0 0.0
    %5386 = vmatprep.subr.mxu0 0.0
    %5387 = vmatpush2.msra.mxu0 0.0
    %5388 = vmatprep.subr.mxu0 0.0
    %5389 = vmatpush2.msra.mxu0 0.0
    %5390 = vmatprep.subr.mxu0 0.0
    %5391 = vmatpush2.msra.mxu0 0.0
    %5392 = vmatprep.subr.mxu0 0.0
    %5393 = vmatpush2.msra.mxu0 0.0
    %5394 = vmatprep.subr.mxu0 0.0
    %5395 = vmatpush2.msra.mxu0 0.0
    %5396 = vmatprep.subr.mxu0 0.0
    %5397 = vmatpush2.msra.mxu0 0.0
    %5398 = vmatprep.subr.mxu0 0.0
    %5399 = vmatpush2.msra.mxu0 0.0
    %5400 = vmatprep.mubr.f32.mxu0 0.0
    %5401 = vmatmul.mubr.f32.gmra.mxu0 %v5330
    %v5402 = vpop.f32.mrf.mxu0
    %v5403 = vadd.f32 0.0, %v5402
    %v5404 = vpop.f32.mrf.mxu0
    %5405 = vdwg.mxu0
    %v5406 = vld [vmem:[%s55] sm:$0x3]
    %v5408 = vsel %vm5328, %v5406, 0
    %5410 = vmatprep.subr.mxu0 0.0
    %5411 = vmatpush1.msra.mxu0 0.0
    %5412 = vmatprep.subr.mxu0 0.0
    %5413 = vmatpush1.msra.mxu0 0.0
    %5414 = vmatprep.subr.mxu0 0.0
    %5415 = vmatpush1.msra.mxu0 0.0
    %5416 = vmatprep.subr.mxu0 0.0
    %5417 = vmatpush1.msra.mxu0 0.0
    %5418 = vmatprep.subr.mxu0 0.0
    %5419 = vmatpush1.msra.mxu0 0.0
    %5420 = vmatprep.subr.mxu0 0.0
    %5421 = vmatpush1.msra.mxu0 0.0
    %5422 = vmatprep.subr.mxu0 0.0
    %5423 = vmatpush1.msra.mxu0 0.0
    %5424 = vmatprep.subr.mxu0 0.0
    %5425 = vmatpush1.msra.mxu0 0.0
    %5426 = vmatprep.subr.mxu0 0.0
    %5427 = vmatpush1.msra.mxu0 0.0
    %5428 = vmatprep.subr.mxu0 0.0
    %5429 = vmatpush1.msra.mxu0 0.0
    %5430 = vmatprep.subr.mxu0 0.0
    %5431 = vmatpush1.msra.mxu0 0.0
    %5432 = vmatprep.subr.mxu0 0.0
    %5433 = vmatpush1.msra.mxu0 0.0
    %5434 = vmatprep.subr.mxu0 0.0
    %5435 = vmatpush1.msra.mxu0 0.0
    %5436 = vmatprep.subr.mxu0 0.0
    %5437 = vmatpush1.msra.mxu0 0.0
    %5438 = vmatprep.subr.mxu0 0.0
    %5439 = vmatpush1.msra.mxu0 0.0
    %5440 = vmatprep.subr.mxu0 0.0
    %5441 = vmatpush1.msra.mxu0 %v5334
    %5442 = vmatprep.subr.mxu0 0.0
    %5443 = vmatpush2.msra.mxu0 0.0
    %5444 = vmatprep.subr.mxu0 0.0
    %5445 = vmatpush2.msra.mxu0 0.0
    %5446 = vmatprep.subr.mxu0 0.0
    %5447 = vmatpush2.msra.mxu0 0.0
    %5448 = vmatprep.subr.mxu0 0.0
    %5449 = vmatpush2.msra.mxu0 0.0
    %5450 = vmatprep.subr.mxu0 0.0
    %5451 = vmatpush2.msra.mxu0 0.0
    %5452 = vmatprep.subr.mxu0 0.0
    %5453 = vmatpush2.msra.mxu0 0.0
    %5454 = vmatprep.subr.mxu0 0.0
    %5455 = vmatpush2.msra.mxu0 0.0
    %5456 = vmatprep.subr.mxu0 0.0
    %5457 = vmatpush2.msra.mxu0 0.0
    %5458 = vmatprep.subr.mxu0 0.0
    %5459 = vmatpush2.msra.mxu0 0.0
    %5460 = vmatprep.subr.mxu0 0.0
    %5461 = vmatpush2.msra.mxu0 0.0
    %5462 = vmatprep.subr.mxu0 0.0
    %5463 = vmatpush2.msra.mxu0 0.0
    %5464 = vmatprep.subr.mxu0 0.0
    %5465 = vmatpush2.msra.mxu0 0.0
    %5466 = vmatprep.subr.mxu0 0.0
    %5467 = vmatpush2.msra.mxu0 0.0
    %5468 = vmatprep.subr.mxu0 0.0
    %5469 = vmatpush2.msra.mxu0 0.0
    %5470 = vmatprep.subr.mxu0 0.0
    %5471 = vmatpush2.msra.mxu0 0.0
    %5472 = vmatprep.subr.mxu0 0.0
    %5473 = vmatpush2.msra.mxu0 0.0
    %5474 = vmatprep.mubr.f32.mxu0 0.0
    %5475 = vmatmul.mubr.f32.gmra.mxu0 %v5408
    %v5476 = vpop.f32.mrf.mxu0
    %v5477 = vadd.f32 0.0, %v5476
    %v5478 = vpop.f32.mrf.mxu0
    %5479 = vdwg.mxu0
    %v5480 = vmax.f32 %v5403, %v5477
    %5482 = vrot.lane.b32.xlu0 %v5480, 112
    %v5483 = vpop.permute.xlu0 %5482
    %v5485 = vmax.f32 %v5480, %v5483
    %vm5486 = vcmask 123904
    %5487 = vst.msk [vmem:[#allocation4] sm:$0x3] %vm5486, %v5485
    %v5488 = vpack.c.bf16 %v5485, %v5485
    %v5489 = vld [vmem:[%s57] sm:$0xf]
    %v5490 = vld [vmem:[%s57 + $0x4] sm:$0xf]
    %v5493 = vunpack.c.l.b16 %v5489
    %v5494 = vunpack.c.l.b16 %v5490
    %v5495 = vpack.c.b16 %v5494, %v5493
    %v5498 = vsel %vm3917, %v5488, 0
    %5500 = vmatprep.subr.bf16.mxu0 0
    %5501 = vmatpush1.bf16.msra.mxu0 0
    %5502 = vmatprep.subr.bf16.mxu0 0
    %5503 = vmatpush1.bf16.msra.mxu0 0
    %5504 = vmatprep.subr.bf16.mxu0 0
    %5505 = vmatpush1.bf16.msra.mxu0 0
    %5506 = vmatprep.subr.bf16.mxu0 0
    %5507 = vmatpush1.bf16.msra.mxu0 0
    %5508 = vmatprep.subr.bf16.mxu0 0
    %5509 = vmatpush1.bf16.msra.mxu0 0
    %5510 = vmatprep.subr.bf16.mxu0 0
    %5511 = vmatpush1.bf16.msra.mxu0 0
    %5512 = vmatprep.subr.bf16.mxu0 0
    %5513 = vmatpush1.bf16.msra.mxu0 0
    %5514 = vmatprep.subr.bf16.mxu0 0
    %5515 = vmatpush1.bf16.msra.mxu0 %v5495
    %5516 = vmatprep.subr.bf16.mxu0 0
    %5517 = vmatpush2.bf16.msra.mxu0 0
    %5518 = vmatprep.subr.bf16.mxu0 0
    %5519 = vmatpush2.bf16.msra.mxu0 0
    %5520 = vmatprep.subr.bf16.mxu0 0
    %5521 = vmatpush2.bf16.msra.mxu0 0
    %5522 = vmatprep.subr.bf16.mxu0 0
    %5523 = vmatpush2.bf16.msra.mxu0 0
    %5524 = vmatprep.subr.bf16.mxu0 0
    %5525 = vmatpush2.bf16.msra.mxu0 0
    %5526 = vmatprep.subr.bf16.mxu0 0
    %5527 = vmatpush2.bf16.msra.mxu0 0
    %5528 = vmatprep.subr.bf16.mxu0 0
    %5529 = vmatpush2.bf16.msra.mxu0 0
    %5530 = vmatprep.subr.bf16.mxu0 0
    %5531 = vmatpush2.bf16.msra.mxu0 0
    %5532 = vmatprep.mubr.bf16.mxu0 0
    %5533 = vmatmul.mubr.bf16.gmra.mxu0 %v5498
    %v5534 = vpop.f32.mrf.mxu0
    %v5535 = vadd.f32 0.0, %v5534
    %v5536 = vpop.f32.mrf.mxu0
    %v5537 = vpop.f32.mrf.mxu0
    %v5538 = vpop.f32.mrf.mxu0
    %5539 = vdwg.mxu0
    %vm5540 = vcmask 254976
    %v5541 = vsel %vm5540, %v5535, 0.0
    %v5542 = vrot.slane %v5541, 4
    %v5543 = vadd.f32 %v5541, %v5542
    %v5544 = vrot.slane %v5543, 2
    %v5545 = vadd.f32 %v5543, %v5544
    %v5546 = vrot.slane %v5545, 1
    %v5547 = vadd.f32 %v5545, %v5546
    %v5548 = vrcp.pop 2.0
    %v5549 = vmul.f32 %v5547, %v5548
    %v5550 = vmul.f32 %v5535, %v5535
    %v5551 = vsel %vm5540, %v5550, 0.0
    %v5552 = vrot.slane %v5551, 4
    %v5553 = vadd.f32 %v5551, %v5552
    %v5554 = vrot.slane %v5553, 2
    %v5555 = vadd.f32 %v5553, %v5554
    %v5556 = vrot.slane %v5555, 1
    %v5557 = vadd.f32 %v5555, %v5556
    %v5558 = vmul.f32 %v5557, %v5548
    %v5559 = vmul.f32 %v5549, %v5549
    %v5560 = vsub.f32 %v5558, %v5559
    %v5561 = vld [vmem:[%s59] sm:$0x3]
    %v5562 = vsub.f32 %v5535, %v5549
    %v5563 = vadd.f32 %v5560, 1e-05
    %v5564 = vrsqrt.pop %v5563
    %v5565 = vmul.f32 %v5562, %v5564
    %v5566 = vlaneseq
    %v5567 = vshrl.u32 %v5566, 7
    %v5568 = vsub.s32 0, %v5567
    %v5569 = vrot.slane %v5561, %v5568
    %v5570 = vmul.f32 %v5565, %v5569
    %v5571 = vlaneseq
    %v5572 = vshrl.u32 %v5571, 7
    %v5573 = vsub.s32 1, %v5572
    %v5574 = vrot.slane %v5561, %v5573
    %v5575 = vadd.f32 %v5570, %v5574
    %v5576 = vmax.f32 %v5575, 0.0
    %v5577 = vpack.c.bf16 %v5576, %v5576
    %v5578 = vld [vmem:[%s61] sm:$0xf]
    %v5579 = vld [vmem:[%s61 + $0x4] sm:$0xf]
    %v5580 = vld [vmem:[%s61 + $0x8] sm:$0xf]
    %v5581 = vld [vmem:[%s61 + $0xc] sm:$0xf]
    %v5582 = vld [vmem:[%s63] sm:$0x1]
    %v5584 = vlaneseq
    %v5585 = vshrl.u32 %v5584, 7
    %v5586 = vsub.s32 0, %v5585
    %v5587 = vrot.slane %v5582, %v5586
    %v5593 = vunpack.c.l.b16 %v5578
    %v5594 = vunpack.c.l.b16 %v5579
    %v5595 = vunpack.c.l.b16 %v5580
    %v5596 = vunpack.c.l.b16 %v5581
    %v5597 = vpack.c.b16 %v5594, %v5593
    %v5598 = vpack.c.b16 %v5596, %v5595
    %v5602 = vsel %vm3043, %v5577, 0
    %5604 = vmatprep.subr.bf16.mxu0 0
    %5605 = vmatpush1.bf16.msra.mxu0 0
    %5606 = vmatprep.subr.bf16.mxu0 0
    %5607 = vmatpush1.bf16.msra.mxu0 0
    %5608 = vmatprep.subr.bf16.mxu0 0
    %5609 = vmatpush1.bf16.msra.mxu0 0
    %5610 = vmatprep.subr.bf16.mxu0 0
    %5611 = vmatpush1.bf16.msra.mxu0 0
    %5612 = vmatprep.subr.bf16.mxu0 0
    %5613 = vmatpush1.bf16.msra.mxu0 0
    %5614 = vmatprep.subr.bf16.mxu0 0
    %5615 = vmatpush1.bf16.msra.mxu0 0
    %5616 = vmatprep.subr.bf16.mxu0 0
    %5617 = vmatpush1.bf16.msra.mxu0 %v5598
    %5618 = vmatprep.subr.bf16.mxu0 0
    %5619 = vmatpush1.bf16.msra.mxu0 %v5597
    %5620 = vmatprep.subr.bf16.mxu0 0
    %5621 = vmatpush2.bf16.msra.mxu0 0
    %5622 = vmatprep.subr.bf16.mxu0 0
    %5623 = vmatpush2.bf16.msra.mxu0 0
    %5624 = vmatprep.subr.bf16.mxu0 0
    %5625 = vmatpush2.bf16.msra.mxu0 0
    %5626 = vmatprep.subr.bf16.mxu0 0
    %5627 = vmatpush2.bf16.msra.mxu0 0
    %5628 = vmatprep.subr.bf16.mxu0 0
    %5629 = vmatpush2.bf16.msra.mxu0 0
    %5630 = vmatprep.subr.bf16.mxu0 0
    %5631 = vmatpush2.bf16.msra.mxu0 0
    %5632 = vmatprep.subr.bf16.mxu0 0
    %5633 = vmatpush2.bf16.msra.mxu0 0
    %5634 = vmatprep.subr.bf16.mxu0 0
    %5635 = vmatpush2.bf16.msra.mxu0 0
    %5636 = vmatprep.mubr.bf16.mxu0 0
    %5637 = vmatmul.mubr.bf16.gmra.mxu0 %v5602
    %v5638 = vpop.f32.mrf.mxu0
    %v5639 = vadd.f32 %v5587, %v5638
    %v5640 = vpop.f32.mrf.mxu0
    %v5641 = vpop.f32.mrf.mxu0
    %v5642 = vpop.f32.mrf.mxu0
    %5643 = vdwg.mxu0
    %vm5644 = vcmask 58368
    %5645 = vst.msk [vmem:[#allocation2] sm:$0x3] %vm5644, %v5639
    // Predicated region
    $region130: #{encoder_forward.1} parent=1 // pred_check
      _
    $region131: #{encoder_forward.1} parent=1 // pred_check_branch
      %5647 = sbr.rel (0) target = $region133
    $region132: #{encoder_forward.1} parent=1 // pred_region
      %s5649 = ssub.s32 32, 32
      %5650 = vsyncadd [#allocation3], %s5649
      %s5652 = sshll.u32 [#allocation2], 4
      %s5653 = int_to_ptr.vmem [resolvable:$true] %s5652
      %5655 = dma.vmem_to_hbm [thread:$0]  %s5653, 32, %s65, [#allocation3]
    $region133: #{encoder_forward.1} parent=1 // pred_fallthru
      _
    // Predicated region
    $region134: #{encoder_forward.1} parent=1 // pred_check
      _
    $region135: #{encoder_forward.1} parent=1 // pred_check_branch
      %5657 = sbr.rel (0) target = $region137
    $region136: #{encoder_forward.1} parent=1 // pred_region
      %s5659 = ssub.s32 32, 32
      %5660 = vsyncadd [#allocation5], %s5659
      %s5662 = sshll.u32 [#allocation4], 4
      %s5663 = int_to_ptr.vmem [resolvable:$true] %s5662
      %5665 = dma.vmem_to_hbm [thread:$0]  %s5663, 32, %s67, [#allocation5]
    $region137: #{encoder_forward.1} parent=1 // pred_fallthru
      _
    // Predicated region
    $region138: #{encoder_forward.1} parent=1 // pred_check
      _
    $region139: #{encoder_forward.1} parent=1 // pred_check_branch
      %5667 = sbr.rel (0) target = $region141
    $region140: #{encoder_forward.1} parent=1 // pred_region
      %5668 = dma.done [#allocation3], 32
    $region141: #{encoder_forward.1} parent=1 // pred_fallthru
      _
    // Predicated region
    $region142: #{encoder_forward.1} parent=1 // pred_check
      _
    $region143: #{encoder_forward.1} parent=1 // pred_check_branch
      %5670 = sbr.rel (0) target = $region145
    $region144: #{encoder_forward.1} parent=1 // pred_region
      %5671 = dma.done [#allocation5], 32
    $region145: #{encoder_forward.1} parent=1 // pred_fallthru
      _
    %5672 = vsyncpa [#allocation3], 1
    %5673 = vsyncpa [#allocation5], 1

</llo_original>
